<compile_context>
chip_gen: v7x
topology: tpu7x:2x2x1
jax: 0.10.0
libtpu: 0.0.40
codegen_flags: <defaults>
</compile_context>

<pallas_src>
import numpy as np
import jax
import jax.numpy as jnp
from jax import lax
from jax.experimental import pallas as pl
from jax.experimental.pallas import tpu as pltpu


def _upsample_matrix(n: int) -> np.ndarray:
    """1-D transposed-conv matrix (2n, n): kernel [.25,.75,.75,.25], stride 2, pad 1."""
    u = np.zeros((2 * n, n), dtype=np.float64)
    for m in range(n):
        u[2 * m, m] = 0.75
        if m - 1 >= 0:
            u[2 * m, m - 1] = 0.25
        u[2 * m + 1, m] = 0.75
        if m + 1 < n:
            u[2 * m + 1, m + 1] = 0.25
    return u


def _bilinear_deconv_kernel(a_ref, bt_ref, x_ref, o_ref):
    # a_ref : (2H, H)  f32   left (row) upsample matrix  U_H
    # bt_ref: (W, 2W)  f32   right (col) upsample matrix U_W^T
    # x_ref : (TB, H, W)
    # o_ref : (TB, 2H, 2W)
    tb = x_ref.shape[0]
    a = a_ref[...]
    bt = bt_ref[...]

    def body(b, carry):
        xb = x_ref[b].astype(jnp.float32)                       # (H, W)
        t = jnp.dot(xb, bt, preferred_element_type=jnp.float32,
                    precision=lax.Precision.HIGHEST)            # (H, 2W)
        yb = jnp.dot(a, t, preferred_element_type=jnp.float32,
                     precision=lax.Precision.HIGHEST)           # (2H, 2W)
        o_ref[b] = yb.astype(o_ref.dtype)
        return carry

    lax.fori_loop(0, tb, body, 0, unroll=(tb <= 16))


def learned_bilinear_deconv(x, *, vmem_budget_bytes=8 * 1024 * 1024):
    """Forward of _LearnedBilinearDeconvModule: (N, C, H, W) -> (N, C, 2H, 2W)."""
    # TODO(synk): only the module's constructed parameters are implemented
    # (diagonal bilinear filter, zero bias); arbitrary *trained* cross-channel
    # ConvTranspose2d weights would require a full channel-mixing deconv kernel.
    N, C, H, W = x.shape
    NC, Ho, Wo = N * C, 2 * H, 2 * W
    dtype = x.dtype
    esz = jnp.dtype(dtype).itemsize

    a = jnp.asarray(_upsample_matrix(H), dtype=jnp.float32)      # (2H, H)
    bt = jnp.asarray(_upsample_matrix(W).T, dtype=jnp.float32)   # (W, 2W)

    # Batch as many planes per grid step as a conservative double-buffered VMEM
    # budget allows (fits default scoped limits on v5e/v6e/v7x).
    per_plane = (H * W + Ho * Wo) * esz
    tb = int(max(1, min(NC, vmem_budget_bytes // (2 * per_plane))))
    grid = (pl.cdiv(NC, tb),)

    x2 = x.reshape(NC, H, W)   # leading-dim reshape only: no data movement

    flops = int(NC * (2 * H * W * Wo + 2 * Ho * H * Wo))
    bytes_accessed = int(NC * (H * W + Ho * Wo) * esz + (a.size + bt.size) * 4)
    cost = pl.CostEstimate(flops=flops, transcendentals=0,
                           bytes_accessed=bytes_accessed)

    out = pl.pallas_call(
        _bilinear_deconv_kernel,
        out_shape=jax.ShapeDtypeStruct((NC, Ho, Wo), dtype),
        grid=grid,
        in_specs=[
            pl.BlockSpec((Ho, H), lambda i: (0, 0)),
            pl.BlockSpec((W, Wo), lambda i: (0, 0)),
            pl.BlockSpec((tb, H, W), lambda i: (i, 0, 0)),
        ],
        out_specs=pl.BlockSpec((tb, Ho, Wo), lambda i: (i, 0, 0)),
        compiler_params=pltpu.CompilerParams(
            dimension_semantics=("parallel",),
            vmem_limit_bytes=32 * 1024 * 1024,
        ),
        cost_estimate=cost,
    )(a, bt, x2)

    return out.reshape(N, C, Ho, Wo)


def learned_bilinear_deconv_reference(x):
    """Pure-JAX reference replicating the PyTorch module's forward exactly."""
    N, C, H, W = x.shape
    size = 4
    factor = (size + 1) // 2          # 2
    center = factor - 0.5             # size is even -> 1.5
    og = np.ogrid[:size, :size]
    filt = (1 - abs(og[0] - center) / factor) * (1 - abs(og[1] - center) / factor)
    w = np.zeros((C, C, size, size), dtype=np.float64)   # (in, out, kh, kw)
    for i in range(C):
        w[i, i] = filt
    # ConvTranspose2d(stride=2, padding=1) == conv_general_dilated with
    # lhs_dilation=2, padding=k-1-p=2, spatially flipped kernel, (in,out)->(out,in).
    w_conv = np.flip(np.transpose(w, (1, 0, 2, 3)), axis=(2, 3)).copy()
    out = lax.conv_general_dilated(
        x.astype(jnp.float32),
        jnp.asarray(w_conv, dtype=jnp.float32),
        window_strides=(1, 1),
        padding=((2, 2), (2, 2)),
        lhs_dilation=(2, 2),
        rhs_dilation=(1, 1),
        dimension_numbers=("NCHW", "OIHW", "NCHW"),
        precision=lax.Precision.HIGHEST,
    )
    return out.astype(x.dtype)   # bias is zero-initialized in the module


if __name__ == "__main__":
    key = jax.random.PRNGKey(0)
    x = jax.random.normal(key, (2, 4, 16, 16), dtype=jnp.float32)

    out = learned_bilinear_deconv(x)
    out = jax.block_until_ready(out)

    ref = learned_bilinear_deconv_reference(x)
    assert out.shape == ref.shape == (2, 4, 32, 32), (out.shape, ref.shape)
    np.testing.assert_allclose(np.asarray(out), np.asarray(ref),
                               rtol=1e-4, atol=1e-4)

    print("KERNEL_OK")
</pallas_src>

<mosaic_0001>
module attributes {stable_mosaic.version = 11 : i64} {
  func.func @_bilinear_deconv_kernel(%arg0: i32, %arg1: memref<32x16xf32, #tpu.memory_space<vmem>>, %arg2: memref<16x32xf32, #tpu.memory_space<vmem>>, %arg3: memref<8x16x16xf32, #tpu.memory_space<vmem>>, %arg4: memref<8x32x32xf32, #tpu.memory_space<vmem>>) attributes {dimension_semantics = [#tpu.dimension_semantics<parallel>], iteration_bounds = array<i64: 1>, scalar_prefetch = 0 : i64, scratch_operands = 0 : i64, tpu.core_type = #tpu.core_type<tc>, window_params = [{pipeline_mode = #tpu.pipeline_mode<synchronous>, transform_indices = @transform_0, window_bounds = array<i64: 32, 16>}, {pipeline_mode = #tpu.pipeline_mode<synchronous>, transform_indices = @transform_1, window_bounds = array<i64: 16, 32>}, {transform_indices = @transform_2, window_bounds = array<i64: 8, 16, 16>}, {transform_indices = @transform_3, window_bounds = array<i64: 8, 32, 32>}]} {
    %c0 = arith.constant 0 : index
    %c0_0 = arith.constant 0 : index
    %0 = vector.load %arg1[%c0, %c0_0] : memref<32x16xf32, #tpu.memory_space<vmem>>, vector<32x16xf32>
    %c0_1 = arith.constant 0 : index
    %c0_2 = arith.constant 0 : index
    %1 = vector.load %arg2[%c0_1, %c0_2] : memref<16x32xf32, #tpu.memory_space<vmem>>, vector<16x32xf32>
    %c0_i32 = arith.constant 0 : i32
    %2 = arith.index_cast %c0_i32 : i32 to index
    %c0_3 = arith.constant 0 : index
    %c0_4 = arith.constant 0 : index
    %3 = vector.load %arg3[%2, %c0_3, %c0_4] : memref<8x16x16xf32, #tpu.memory_space<vmem>>, vector<1x16x16xf32>
    %4 = vector.shape_cast %3 : vector<1x16x16xf32> to vector<16x16xf32>
    %cst = arith.constant dense<0.000000e+00> : vector<16x32xf32>
    %5 = tpu.matmul %4, %1, %cst {dimension_numbers = #tpu.dot_dimension_numbers<[1], [0], [0], [1], [0, 0, 1, 1], [], []>, precision = #tpu.contract_precision<fp32>} : vector<16x16xf32>, vector<16x32xf32>, vector<16x32xf32> -> vector<16x32xf32>
    %cst_5 = arith.constant dense<0.000000e+00> : vector<32x32xf32>
    %6 = tpu.matmul %0, %5, %cst_5 {dimension_numbers = #tpu.dot_dimension_numbers<[1], [0], [0], [1], [0, 0, 1, 1], [], []>, precision = #tpu.contract_precision<fp32>} : vector<32x16xf32>, vector<16x32xf32>, vector<32x32xf32> -> vector<32x32xf32>
    %7 = arith.index_cast %c0_i32 : i32 to index
    %c0_6 = arith.constant 0 : index
    %c0_7 = arith.constant 0 : index
    %8 = vector.load %arg4[%7, %c0_6, %c0_7] : memref<8x32x32xf32, #tpu.memory_space<vmem>>, vector<1x32x32xf32>
    %9 = vector.shape_cast %8 : vector<1x32x32xf32> to vector<32x32xf32>
    %10 = vector.shape_cast %6 : vector<32x32xf32> to vector<1x32x32xf32>
    tpu.vector_store %arg4[%7, %c0_6, %c0_7], %10 {strides = array<i32>} : memref<8x32x32xf32, #tpu.memory_space<vmem>>, vector<1x32x32xf32>,
    %c1_i32 = arith.constant 1 : i32
    %11 = arith.index_cast %c1_i32 : i32 to index
    %c0_8 = arith.constant 0 : index
    %c0_9 = arith.constant 0 : index
    %12 = vector.load %arg3[%11, %c0_8, %c0_9] : memref<8x16x16xf32, #tpu.memory_space<vmem>>, vector<1x16x16xf32>
    %13 = vector.shape_cast %12 : vector<1x16x16xf32> to vector<16x16xf32>
    %cst_10 = arith.constant dense<0.000000e+00> : vector<16x32xf32>
    %14 = tpu.matmul %13, %1, %cst_10 {dimension_numbers = #tpu.dot_dimension_numbers<[1], [0], [0], [1], [0, 0, 1, 1], [], []>, precision = #tpu.contract_precision<fp32>} : vector<16x16xf32>, vector<16x32xf32>, vector<16x32xf32> -> vector<16x32xf32>
    %cst_11 = arith.constant dense<0.000000e+00> : vector<32x32xf32>
    %15 = tpu.matmul %0, %14, %cst_11 {dimension_numbers = #tpu.dot_dimension_numbers<[1], [0], [0], [1], [0, 0, 1, 1], [], []>, precision = #tpu.contract_precision<fp32>} : vector<32x16xf32>, vector<16x32xf32>, vector<32x32xf32> -> vector<32x32xf32>
    %16 = arith.index_cast %c1_i32 : i32 to index
    %c0_12 = arith.constant 0 : index
    %c0_13 = arith.constant 0 : index
    %17 = vector.load %arg4[%16, %c0_12, %c0_13] : memref<8x32x32xf32, #tpu.memory_space<vmem>>, vector<1x32x32xf32>
    %18 = vector.shape_cast %17 : vector<1x32x32xf32> to vector<32x32xf32>
    %19 = vector.shape_cast %15 : vector<32x32xf32> to vector<1x32x32xf32>
    tpu.vector_store %arg4[%16, %c0_12, %c0_13], %19 {strides = array<i32>} : memref<8x32x32xf32, #tpu.memory_space<vmem>>, vector<1x32x32xf32>,
    %c2_i32 = arith.constant 2 : i32
    %20 = arith.index_cast %c2_i32 : i32 to index
    %c0_14 = arith.constant 0 : index
    %c0_15 = arith.constant 0 : index
    %21 = vector.load %arg3[%20, %c0_14, %c0_15] : memref<8x16x16xf32, #tpu.memory_space<vmem>>, vector<1x16x16xf32>
    %22 = vector.shape_cast %21 : vector<1x16x16xf32> to vector<16x16xf32>
    %cst_16 = arith.constant dense<0.000000e+00> : vector<16x32xf32>
    %23 = tpu.matmul %22, %1, %cst_16 {dimension_numbers = #tpu.dot_dimension_numbers<[1], [0], [0], [1], [0, 0, 1, 1], [], []>, precision = #tpu.contract_precision<fp32>} : vector<16x16xf32>, vector<16x32xf32>, vector<16x32xf32> -> vector<16x32xf32>
    %cst_17 = arith.constant dense<0.000000e+00> : vector<32x32xf32>
    %24 = tpu.matmul %0, %23, %cst_17 {dimension_numbers = #tpu.dot_dimension_numbers<[1], [0], [0], [1], [0, 0, 1, 1], [], []>, precision = #tpu.contract_precision<fp32>} : vector<32x16xf32>, vector<16x32xf32>, vector<32x32xf32> -> vector<32x32xf32>
    %25 = arith.index_cast %c2_i32 : i32 to index
    %c0_18 = arith.constant 0 : index
    %c0_19 = arith.constant 0 : index
    %26 = vector.load %arg4[%25, %c0_18, %c0_19] : memref<8x32x32xf32, #tpu.memory_space<vmem>>, vector<1x32x32xf32>
    %27 = vector.shape_cast %26 : vector<1x32x32xf32> to vector<32x32xf32>
    %28 = vector.shape_cast %24 : vector<32x32xf32> to vector<1x32x32xf32>
    tpu.vector_store %arg4[%25, %c0_18, %c0_19], %28 {strides = array<i32>} : memref<8x32x32xf32, #tpu.memory_space<vmem>>, vector<1x32x32xf32>,
    %c3_i32 = arith.constant 3 : i32
    %29 = arith.index_cast %c3_i32 : i32 to index
    %c0_20 = arith.constant 0 : index
    %c0_21 = arith.constant 0 : index
    %30 = vector.load %arg3[%29, %c0_20, %c0_21] : memref<8x16x16xf32, #tpu.memory_space<vmem>>, vector<1x16x16xf32>
    %31 = vector.shape_cast %30 : vector<1x16x16xf32> to vector<16x16xf32>
    %cst_22 = arith.constant dense<0.000000e+00> : vector<16x32xf32>
    %32 = tpu.matmul %31, %1, %cst_22 {dimension_numbers = #tpu.dot_dimension_numbers<[1], [0], [0], [1], [0, 0, 1, 1], [], []>, precision = #tpu.contract_precision<fp32>} : vector<16x16xf32>, vector<16x32xf32>, vector<16x32xf32> -> vector<16x32xf32>
    %cst_23 = arith.constant dense<0.000000e+00> : vector<32x32xf32>
    %33 = tpu.matmul %0, %32, %cst_23 {dimension_numbers = #tpu.dot_dimension_numbers<[1], [0], [0], [1], [0, 0, 1, 1], [], []>, precision = #tpu.contract_precision<fp32>} : vector<32x16xf32>, vector<16x32xf32>, vector<32x32xf32> -> vector<32x32xf32>
    %34 = arith.index_cast %c3_i32 : i32 to index
    %c0_24 = arith.constant 0 : index
    %c0_25 = arith.constant 0 : index
    %35 = vector.load %arg4[%34, %c0_24, %c0_25] : memref<8x32x32xf32, #tpu.memory_space<vmem>>, vector<1x32x32xf32>
    %36 = vector.shape_cast %35 : vector<1x32x32xf32> to vector<32x32xf32>
    %37 = vector.shape_cast %33 : vector<32x32xf32> to vector<1x32x32xf32>
    tpu.vector_store %arg4[%34, %c0_24, %c0_25], %37 {strides = array<i32>} : memref<8x32x32xf32, #tpu.memory_space<vmem>>, vector<1x32x32xf32>,
    %c4_i32 = arith.constant 4 : i32
    %38 = arith.index_cast %c4_i32 : i32 to index
    %c0_26 = arith.constant 0 : index
    %c0_27 = arith.constant 0 : index
    %39 = vector.load %arg3[%38, %c0_26, %c0_27] : memref<8x16x16xf32, #tpu.memory_space<vmem>>, vector<1x16x16xf32>
    %40 = vector.shape_cast %39 : vector<1x16x16xf32> to vector<16x16xf32>
    %cst_28 = arith.constant dense<0.000000e+00> : vector<16x32xf32>
    %41 = tpu.matmul %40, %1, %cst_28 {dimension_numbers = #tpu.dot_dimension_numbers<[1], [0], [0], [1], [0, 0, 1, 1], [], []>, precision = #tpu.contract_precision<fp32>} : vector<16x16xf32>, vector<16x32xf32>, vector<16x32xf32> -> vector<16x32xf32>
    %cst_29 = arith.constant dense<0.000000e+00> : vector<32x32xf32>
    %42 = tpu.matmul %0, %41, %cst_29 {dimension_numbers = #tpu.dot_dimension_numbers<[1], [0], [0], [1], [0, 0, 1, 1], [], []>, precision = #tpu.contract_precision<fp32>} : vector<32x16xf32>, vector<16x32xf32>, vector<32x32xf32> -> vector<32x32xf32>
    %43 = arith.index_cast %c4_i32 : i32 to index
    %c0_30 = arith.constant 0 : index
    %c0_31 = arith.constant 0 : index
    %44 = vector.load %arg4[%43, %c0_30, %c0_31] : memref<8x32x32xf32, #tpu.memory_space<vmem>>, vector<1x32x32xf32>
    %45 = vector.shape_cast %44 : vector<1x32x32xf32> to vector<32x32xf32>
    %46 = vector.shape_cast %42 : vector<32x32xf32> to vector<1x32x32xf32>
    tpu.vector_store %arg4[%43, %c0_30, %c0_31], %46 {strides = array<i32>} : memref<8x32x32xf32, #tpu.memory_space<vmem>>, vector<1x32x32xf32>,
    %c5_i32 = arith.constant 5 : i32
    %47 = arith.index_cast %c5_i32 : i32 to index
    %c0_32 = arith.constant 0 : index
    %c0_33 = arith.constant 0 : index
    %48 = vector.load %arg3[%47, %c0_32, %c0_33] : memref<8x16x16xf32, #tpu.memory_space<vmem>>, vector<1x16x16xf32>
    %49 = vector.shape_cast %48 : vector<1x16x16xf32> to vector<16x16xf32>
    %cst_34 = arith.constant dense<0.000000e+00> : vector<16x32xf32>
    %50 = tpu.matmul %49, %1, %cst_34 {dimension_numbers = #tpu.dot_dimension_numbers<[1], [0], [0], [1], [0, 0, 1, 1], [], []>, precision = #tpu.contract_precision<fp32>} : vector<16x16xf32>, vector<16x32xf32>, vector<16x32xf32> -> vector<16x32xf32>
    %cst_35 = arith.constant dense<0.000000e+00> : vector<32x32xf32>
    %51 = tpu.matmul %0, %50, %cst_35 {dimension_numbers = #tpu.dot_dimension_numbers<[1], [0], [0], [1], [0, 0, 1, 1], [], []>, precision = #tpu.contract_precision<fp32>} : vector<32x16xf32>, vector<16x32xf32>, vector<32x32xf32> -> vector<32x32xf32>
    %52 = arith.index_cast %c5_i32 : i32 to index
    %c0_36 = arith.constant 0 : index
    %c0_37 = arith.constant 0 : index
    %53 = vector.load %arg4[%52, %c0_36, %c0_37] : memref<8x32x32xf32, #tpu.memory_space<vmem>>, vector<1x32x32xf32>
    %54 = vector.shape_cast %53 : vector<1x32x32xf32> to vector<32x32xf32>
    %55 = vector.shape_cast %51 : vector<32x32xf32> to vector<1x32x32xf32>
    tpu.vector_store %arg4[%52, %c0_36, %c0_37], %55 {strides = array<i32>} : memref<8x32x32xf32, #tpu.memory_space<vmem>>, vector<1x32x32xf32>,
    %c6_i32 = arith.constant 6 : i32
    %56 = arith.index_cast %c6_i32 : i32 to index
    %c0_38 = arith.constant 0 : index
    %c0_39 = arith.constant 0 : index
    %57 = vector.load %arg3[%56, %c0_38, %c0_39] : memref<8x16x16xf32, #tpu.memory_space<vmem>>, vector<1x16x16xf32>
    %58 = vector.shape_cast %57 : vector<1x16x16xf32> to vector<16x16xf32>
    %cst_40 = arith.constant dense<0.000000e+00> : vector<16x32xf32>
    %59 = tpu.matmul %58, %1, %cst_40 {dimension_numbers = #tpu.dot_dimension_numbers<[1], [0], [0], [1], [0, 0, 1, 1], [], []>, precision = #tpu.contract_precision<fp32>} : vector<16x16xf32>, vector<16x32xf32>, vector<16x32xf32> -> vector<16x32xf32>
    %cst_41 = arith.constant dense<0.000000e+00> : vector<32x32xf32>
    %60 = tpu.matmul %0, %59, %cst_41 {dimension_numbers = #tpu.dot_dimension_numbers<[1], [0], [0], [1], [0, 0, 1, 1], [], []>, precision = #tpu.contract_precision<fp32>} : vector<32x16xf32>, vector<16x32xf32>, vector<32x32xf32> -> vector<32x32xf32>
    %61 = arith.index_cast %c6_i32 : i32 to index
    %c0_42 = arith.constant 0 : index
    %c0_43 = arith.constant 0 : index
    %62 = vector.load %arg4[%61, %c0_42, %c0_43] : memref<8x32x32xf32, #tpu.memory_space<vmem>>, vector<1x32x32xf32>
    %63 = vector.shape_cast %62 : vector<1x32x32xf32> to vector<32x32xf32>
    %64 = vector.shape_cast %60 : vector<32x32xf32> to vector<1x32x32xf32>
    tpu.vector_store %arg4[%61, %c0_42, %c0_43], %64 {strides = array<i32>} : memref<8x32x32xf32, #tpu.memory_space<vmem>>, vector<1x32x32xf32>,
    %c7_i32 = arith.constant 7 : i32
    %65 = arith.index_cast %c7_i32 : i32 to index
    %c0_44 = arith.constant 0 : index
    %c0_45 = arith.constant 0 : index
    %66 = vector.load %arg3[%65, %c0_44, %c0_45] : memref<8x16x16xf32, #tpu.memory_space<vmem>>, vector<1x16x16xf32>
    %67 = vector.shape_cast %66 : vector<1x16x16xf32> to vector<16x16xf32>
    %cst_46 = arith.constant dense<0.000000e+00> : vector<16x32xf32>
    %68 = tpu.matmul %67, %1, %cst_46 {dimension_numbers = #tpu.dot_dimension_numbers<[1], [0], [0], [1], [0, 0, 1, 1], [], []>, precision = #tpu.contract_precision<fp32>} : vector<16x16xf32>, vector<16x32xf32>, vector<16x32xf32> -> vector<16x32xf32>
    %cst_47 = arith.constant dense<0.000000e+00> : vector<32x32xf32>
    %69 = tpu.matmul %0, %68, %cst_47 {dimension_numbers = #tpu.dot_dimension_numbers<[1], [0], [0], [1], [0, 0, 1, 1], [], []>, precision = #tpu.contract_precision<fp32>} : vector<32x16xf32>, vector<16x32xf32>, vector<32x32xf32> -> vector<32x32xf32>
    %70 = arith.index_cast %c7_i32 : i32 to index
    %c0_48 = arith.constant 0 : index
    %c0_49 = arith.constant 0 : index
    %71 = vector.load %arg4[%70, %c0_48, %c0_49] : memref<8x32x32xf32, #tpu.memory_space<vmem>>, vector<1x32x32xf32>
    %72 = vector.shape_cast %71 : vector<1x32x32xf32> to vector<32x32xf32>
    %73 = vector.shape_cast %69 : vector<32x32xf32> to vector<1x32x32xf32>
    tpu.vector_store %arg4[%70, %c0_48, %c0_49], %73 {strides = array<i32>} : memref<8x32x32xf32, #tpu.memory_space<vmem>>, vector<1x32x32xf32>,
    %c8_i32 = arith.constant 8 : i32
    return
  }
  func.func @transform_0(%arg0: i32) -> (i32, i32) {
    %c0_i32 = arith.constant 0 : i32
    %c0_i32_0 = arith.constant 0 : i32
    %c0_i32_1 = arith.constant 0 : i32
    return %c0_i32, %c0_i32_0 : i32, i32
  }
  func.func @transform_1(%arg0: i32) -> (i32, i32) {
    %c0_i32 = arith.constant 0 : i32
    %c0_i32_0 = arith.constant 0 : i32
    %c0_i32_1 = arith.constant 0 : i32
    return %c0_i32, %c0_i32_0 : i32, i32
  }
  func.func @transform_2(%arg0: i32) -> (i32, i32, i32) {
    %c0_i32 = arith.constant 0 : i32
    %c0_i32_0 = arith.constant 0 : i32
    %c0_i32_1 = arith.constant 0 : i32
    return %arg0, %c0_i32, %c0_i32_0 : i32, i32, i32
  }
  func.func @transform_3(%arg0: i32) -> (i32, i32, i32) {
    %c0_i32 = arith.constant 0 : i32
    %c0_i32_0 = arith.constant 0 : i32
    %c0_i32_1 = arith.constant 0 : i32
    return %arg0, %c0_i32, %c0_i32_0 : i32, i32, i32
  }
}

</mosaic_0001>

<llo_original>
// kernel: tpu_custom_call.1
$region0: #{tpu_custom_call.1}
  #allocation0 [shape = 'u32[]', space=smem, size = 0x4, offset = 0x4, fixed_abs, tag = 'smem constant byte address 0x4 - core index']
  #allocation1 [shape = 'u32[144,128]{1,0:T(1,128)}', space=vmem, size = 0x12000, scoped, tag = 'internal scratch']
  %s0 = inlined_call_operand.vmem [shape: f32[32,16], index: 0, kind: input, shape index: {}]
  %s1 = inlined_call_operand.vmem [shape: f32[16,32], index: 1, kind: input, shape index: {}]
  %s2 = inlined_call_operand.hbm [shape: f32[8,16,16], index: 2, kind: input, shape index: {}]
  %s3 = inlined_call_operand.hbm [shape: f32[8,32,32], index: 3, kind: output, shape index: {}]
  %s4 = sld [smem:[#allocation0]]
  $region26: #{tpu_custom_call.1} parent=0
    _
  %s6 = ssub.s32 1, %s4
  %s7 = scalar_select 0, %s6, %s4
  $region1: #{tpu_custom_call.1} parent=0
    #allocation2 [shape = 'u8[65536]{0}', space=vmem, size = 0x10000, scoped, tag = 'input window, operand 2, single buffered']
    #allocation3 [shape = 's32[1]{0}', space=sflag, size = 0x4, scoped, tag = 'scoped memory for tpu_custom_call.1']
    #allocation4 [shape = 's32[1]{0}', space=sflag, size = 0x4, scoped, tag = 'scoped memory for tpu_custom_call.1']
    #allocation5 [shape = 'u8[131072]{0}', space=vmem, size = 0x20000, scoped, tag = 'output window, operand 0, single buffered']
    %8 = vsyncpa [#allocation3], 0
    %9 = vsyncpa [#allocation4], 0
    // Predicated region
    $region2: #{tpu_custom_call.1} parent=1 // pred_check
      _
    $region3: #{tpu_custom_call.1} parent=1 // pred_check_branch
      %11 = sbr.rel (0) target = $region5
    $region4: #{tpu_custom_call.1} parent=1 // pred_region
      _
    $region5: #{tpu_custom_call.1} parent=1 // pred_fallthru
      _
    // Predicated region
    $region6: #{tpu_custom_call.1} parent=1 // pred_check
      _
    $region7: #{tpu_custom_call.1} parent=1 // pred_check_branch
      %13 = sbr.rel (0) target = $region9
    $region8: #{tpu_custom_call.1} parent=1 // pred_region
      _
    $region9: #{tpu_custom_call.1} parent=1 // pred_fallthru
      _
    // Predicated region
    $region10: #{tpu_custom_call.1} parent=1 // pred_check
      _
    $region11: #{tpu_custom_call.1} parent=1 // pred_check_branch
      %15 = sbr.rel (0) target = $region13
    $region12: #{tpu_custom_call.1} parent=1 // pred_region
      %s17 = ssub.s32 2048, 2048
      %18 = vsyncadd [#allocation3], %s17
      %s19 = sshll.u32 [#allocation2], 4
      %s20 = int_to_ptr.vmem [resolvable:$true] %s19
      %25 = dma.hbm_to_vmem [thread:$0]  %s2, 2048, %s20, [#allocation3], 128, 128, 8
    $region13: #{tpu_custom_call.1} parent=1 // pred_fallthru
      _
    // Predicated region
    $region14: #{tpu_custom_call.1} parent=1 // pred_check
      _
    $region15: #{tpu_custom_call.1} parent=1 // pred_check_branch
      %27 = sbr.rel (0) target = $region17
    $region16: #{tpu_custom_call.1} parent=1 // pred_region
      %28 = dma.done [#allocation3], 2048
    $region17: #{tpu_custom_call.1} parent=1 // pred_fallthru
      _
    %v29 = vld [vmem:[%s0] sm:$0xff]
    %v30 = vld [vmem:[%s0 + $0x8] sm:$0xff]
    %v31 = vld [vmem:[%s0 + $0x10] sm:$0xff]
    %v32 = vld [vmem:[%s0 + $0x18] sm:$0xff]
    %v33 = vld [vmem:[%s1] sm:$0xff]
    %v34 = vld [vmem:[%s1 + $0x8] sm:$0xff]
    %v35 = vld [vmem:[#allocation2] sm:$0xff]
    %v36 = vld [vmem:[#allocation2 + $0x8] sm:$0xff]
    %vm37 = vcmask 130048
    %v39 = vsel %vm37, %v35, 0
    %v42 = vsel %vm37, %v36, 0
    %44 = vmatprep.subr.mxu0 0.0
    %v45 = vand.u32 %v33, 4294901760
    %46 = vmatpush1.msra.mxu0 %v45
    %47 = vmatprep.subr.mxu0 0.0
    %v48 = vand.u32 %v34, 4294901760
    %49 = vmatpush1.msra.mxu0 %v48
    %50 = vmatprep.subr.mxu0 0.0
    %51 = vmatpush1.msra.mxu0 0.0
    %52 = vmatprep.subr.mxu0 0.0
    %53 = vmatpush1.msra.mxu0 0.0
    %54 = vmatprep.subr.mxu0 0.0
    %55 = vmatpush1.msra.mxu0 0.0
    %56 = vmatprep.subr.mxu0 0.0
    %57 = vmatpush1.msra.mxu0 0.0
    %58 = vmatprep.subr.mxu0 0.0
    %59 = vmatpush1.msra.mxu0 0.0
    %60 = vmatprep.subr.mxu0 0.0
    %61 = vmatpush1.msra.mxu0 0.0
    %62 = vmatprep.subr.mxu0 0.0
    %63 = vmatpush1.msra.mxu0 0.0
    %64 = vmatprep.subr.mxu0 0.0
    %65 = vmatpush1.msra.mxu0 0.0
    %66 = vmatprep.subr.mxu0 0.0
    %67 = vmatpush1.msra.mxu0 0.0
    %68 = vmatprep.subr.mxu0 0.0
    %69 = vmatpush1.msra.mxu0 0.0
    %70 = vmatprep.subr.mxu0 0.0
    %71 = vmatpush1.msra.mxu0 0.0
    %72 = vmatprep.subr.mxu0 0.0
    %73 = vmatpush1.msra.mxu0 0.0
    %74 = vmatprep.subr.mxu0 0.0
    %75 = vmatpush1.msra.mxu0 0.0
    %76 = vmatprep.subr.mxu0 0.0
    %77 = vmatpush1.msra.mxu0 0.0
    %78 = vmatprep.subr.mxu0 0.0
    %79 = vmatpush1.msra.mxu0 0.0
    %80 = vmatprep.subr.mxu0 0.0
    %81 = vmatpush1.msra.mxu0 0.0
    %82 = vmatprep.subr.mxu0 0.0
    %83 = vmatpush1.msra.mxu0 0.0
    %84 = vmatprep.subr.mxu0 0.0
    %85 = vmatpush1.msra.mxu0 0.0
    %86 = vmatprep.subr.mxu0 0.0
    %87 = vmatpush1.msra.mxu0 0.0
    %88 = vmatprep.subr.mxu0 0.0
    %89 = vmatpush1.msra.mxu0 0.0
    %90 = vmatprep.subr.mxu0 0.0
    %91 = vmatpush1.msra.mxu0 0.0
    %92 = vmatprep.subr.mxu0 0.0
    %93 = vmatpush1.msra.mxu0 0.0
    %94 = vmatprep.subr.mxu0 0.0
    %95 = vmatpush1.msra.mxu0 0.0
    %96 = vmatprep.subr.mxu0 0.0
    %97 = vmatpush1.msra.mxu0 0.0
    %98 = vmatprep.subr.mxu0 0.0
    %99 = vmatpush1.msra.mxu0 0.0
    %100 = vmatprep.subr.mxu0 0.0
    %101 = vmatpush1.msra.mxu0 0.0
    %102 = vmatprep.subr.mxu0 0.0
    %103 = vmatpush1.msra.mxu0 0.0
    %104 = vmatprep.subr.mxu0 0.0
    %105 = vmatpush1.msra.mxu0 0.0
    %106 = vmatprep.subr.mxu0 0.0
    %107 = vmatpush1.msra.mxu0 0.0
    %108 = vmatprep.subr.mxu0 0.0
    %109 = vmatpush1.msra.mxu0 0.0
    %110 = vmatprep.mubr.f32.mxu0 0.0
    %v111 = vand.u32 %v39, 4294901760
    %v112 = vsub.f32 %v39, %v111
    %v113 = vand.u32 %v112, 4294901760
    %v114 = vsub.f32 %v112, %v113
    %v115 = vand.u32 %v114, 4294901760
    %116 = vmatmul.mubr.f32.gmra.mrb[0].mxu0 %v115
    %v117 = vpop.f32.mrb[0].mxu0
    %v118 = vadd.f32 0.0, %v117
    %v119 = vpop.f32.mrb[0].mxu0
    %120 = vmatprep.mubr.f32.mxu0 0.0
    %v121 = vand.u32 %v42, 4294901760
    %v122 = vsub.f32 %v42, %v121
    %v123 = vand.u32 %v122, 4294901760
    %v124 = vsub.f32 %v122, %v123
    %v125 = vand.u32 %v124, 4294901760
    %126 = vmatmul.mubr.f32.gmra.mrb[0].mxu0 %v125
    %v127 = vpop.f32.mrb[0].mxu0
    %v128 = vadd.f32 0.0, %v127
    %v129 = vpop.f32.mrb[0].mxu0
    %130 = vdwg.mxu0
    %131 = vmatprep.subr.mxu0 0.0
    %v132 = vand.u32 %v33, 4294901760
    %v133 = vsub.f32 %v33, %v132
    %v134 = vand.u32 %v133, 4294901760
    %v135 = vsub.f32 %v133, %v134
    %v136 = vand.u32 %v135, 4294901760
    %137 = vmatpush1.msra.mxu0 %v136
    %138 = vmatprep.subr.mxu0 0.0
    %v139 = vand.u32 %v34, 4294901760
    %v140 = vsub.f32 %v34, %v139
    %v141 = vand.u32 %v140, 4294901760
    %v142 = vsub.f32 %v140, %v141
    %v143 = vand.u32 %v142, 4294901760
    %144 = vmatpush1.msra.mxu0 %v143
    %145 = vmatprep.subr.mxu0 0.0
    %146 = vmatpush1.msra.mxu0 0.0
    %147 = vmatprep.subr.mxu0 0.0
    %148 = vmatpush1.msra.mxu0 0.0
    %149 = vmatprep.subr.mxu0 0.0
    %150 = vmatpush1.msra.mxu0 0.0
    %151 = vmatprep.subr.mxu0 0.0
    %152 = vmatpush1.msra.mxu0 0.0
    %153 = vmatprep.subr.mxu0 0.0
    %154 = vmatpush1.msra.mxu0 0.0
    %155 = vmatprep.subr.mxu0 0.0
    %156 = vmatpush1.msra.mxu0 0.0
    %157 = vmatprep.subr.mxu0 0.0
    %158 = vmatpush1.msra.mxu0 0.0
    %159 = vmatprep.subr.mxu0 0.0
    %160 = vmatpush1.msra.mxu0 0.0
    %161 = vmatprep.subr.mxu0 0.0
    %162 = vmatpush1.msra.mxu0 0.0
    %163 = vmatprep.subr.mxu0 0.0
    %164 = vmatpush1.msra.mxu0 0.0
    %165 = vmatprep.subr.mxu0 0.0
    %166 = vmatpush1.msra.mxu0 0.0
    %167 = vmatprep.subr.mxu0 0.0
    %168 = vmatpush1.msra.mxu0 0.0
    %169 = vmatprep.subr.mxu0 0.0
    %170 = vmatpush1.msra.mxu0 0.0
    %171 = vmatprep.subr.mxu0 0.0
    %172 = vmatpush1.msra.mxu0 0.0
    %173 = vmatprep.subr.mxu0 0.0
    %174 = vmatpush1.msra.mxu0 0.0
    %175 = vmatprep.subr.mxu0 0.0
    %176 = vmatpush1.msra.mxu0 0.0
    %177 = vmatprep.subr.mxu0 0.0
    %178 = vmatpush1.msra.mxu0 0.0
    %179 = vmatprep.subr.mxu0 0.0
    %180 = vmatpush1.msra.mxu0 0.0
    %181 = vmatprep.subr.mxu0 0.0
    %182 = vmatpush1.msra.mxu0 0.0
    %183 = vmatprep.subr.mxu0 0.0
    %184 = vmatpush1.msra.mxu0 0.0
    %185 = vmatprep.subr.mxu0 0.0
    %186 = vmatpush1.msra.mxu0 0.0
    %187 = vmatprep.subr.mxu0 0.0
    %188 = vmatpush1.msra.mxu0 0.0
    %189 = vmatprep.subr.mxu0 0.0
    %190 = vmatpush1.msra.mxu0 0.0
    %191 = vmatprep.subr.mxu0 0.0
    %192 = vmatpush1.msra.mxu0 0.0
    %193 = vmatprep.subr.mxu0 0.0
    %194 = vmatpush1.msra.mxu0 0.0
    %195 = vmatprep.subr.mxu0 0.0
    %196 = vmatpush1.msra.mxu0 0.0
    %197 = vmatprep.subr.mxu0 0.0
    %198 = vmatpush1.msra.mxu0 0.0
    %199 = vmatprep.subr.mxu0 0.0
    %200 = vmatpush1.msra.mxu0 0.0
    %201 = vmatprep.subr.mxu0 0.0
    %202 = vmatpush1.msra.mxu0 0.0
    %203 = vmatprep.subr.mxu0 0.0
    %204 = vmatpush1.msra.mxu0 0.0
    %205 = vmatprep.mubr.f32.mxu0 0.0
    %v206 = vand.u32 %v39, 4294901760
    %207 = vmatmul.mubr.f32.gmra.mrb[0].mxu0 %v206
    %v208 = vpop.f32.mrb[0].mxu0
    %v209 = vadd.f32 %v118, %v208
    %v210 = vpop.f32.mrb[0].mxu0
    %211 = vmatprep.mubr.f32.mxu0 0.0
    %v212 = vand.u32 %v42, 4294901760
    %213 = vmatmul.mubr.f32.gmra.mrb[0].mxu0 %v212
    %v214 = vpop.f32.mrb[0].mxu0
    %v215 = vadd.f32 %v128, %v214
    %v216 = vpop.f32.mrb[0].mxu0
    %217 = vdwg.mxu0
    %218 = vmatprep.subr.mxu0 0.0
    %v219 = vand.u32 %v33, 4294901760
    %v220 = vsub.f32 %v33, %v219
    %221 = vmatpush1.msra.mxu0 %v220
    %222 = vmatprep.subr.mxu0 0.0
    %v223 = vand.u32 %v34, 4294901760
    %v224 = vsub.f32 %v34, %v223
    %225 = vmatpush1.msra.mxu0 %v224
    %226 = vmatprep.subr.mxu0 0.0
    %227 = vmatpush1.msra.mxu0 0.0
    %228 = vmatprep.subr.mxu0 0.0
    %229 = vmatpush1.msra.mxu0 0.0
    %230 = vmatprep.subr.mxu0 0.0
    %231 = vmatpush1.msra.mxu0 0.0
    %232 = vmatprep.subr.mxu0 0.0
    %233 = vmatpush1.msra.mxu0 0.0
    %234 = vmatprep.subr.mxu0 0.0
    %235 = vmatpush1.msra.mxu0 0.0
    %236 = vmatprep.subr.mxu0 0.0
    %237 = vmatpush1.msra.mxu0 0.0
    %238 = vmatprep.subr.mxu0 0.0
    %239 = vmatpush1.msra.mxu0 0.0
    %240 = vmatprep.subr.mxu0 0.0
    %241 = vmatpush1.msra.mxu0 0.0
    %242 = vmatprep.subr.mxu0 0.0
    %243 = vmatpush1.msra.mxu0 0.0
    %244 = vmatprep.subr.mxu0 0.0
    %245 = vmatpush1.msra.mxu0 0.0
    %246 = vmatprep.subr.mxu0 0.0
    %247 = vmatpush1.msra.mxu0 0.0
    %248 = vmatprep.subr.mxu0 0.0
    %249 = vmatpush1.msra.mxu0 0.0
    %250 = vmatprep.subr.mxu0 0.0
    %251 = vmatpush1.msra.mxu0 0.0
    %252 = vmatprep.subr.mxu0 0.0
    %253 = vmatpush1.msra.mxu0 0.0
    %254 = vmatprep.subr.mxu0 0.0
    %255 = vmatpush1.msra.mxu0 0.0
    %256 = vmatprep.subr.mxu0 0.0
    %257 = vmatpush1.msra.mxu0 0.0
    %258 = vmatprep.subr.mxu0 0.0
    %259 = vmatpush1.msra.mxu0 0.0
    %260 = vmatprep.subr.mxu0 0.0
    %261 = vmatpush1.msra.mxu0 0.0
    %262 = vmatprep.subr.mxu0 0.0
    %263 = vmatpush1.msra.mxu0 0.0
    %264 = vmatprep.subr.mxu0 0.0
    %265 = vmatpush1.msra.mxu0 0.0
    %266 = vmatprep.subr.mxu0 0.0
    %267 = vmatpush1.msra.mxu0 0.0
    %268 = vmatprep.subr.mxu0 0.0
    %269 = vmatpush1.msra.mxu0 0.0
    %270 = vmatprep.subr.mxu0 0.0
    %271 = vmatpush1.msra.mxu0 0.0
    %272 = vmatprep.subr.mxu0 0.0
    %273 = vmatpush1.msra.mxu0 0.0
    %274 = vmatprep.subr.mxu0 0.0
    %275 = vmatpush1.msra.mxu0 0.0
    %276 = vmatprep.subr.mxu0 0.0
    %277 = vmatpush1.msra.mxu0 0.0
    %278 = vmatprep.subr.mxu0 0.0
    %279 = vmatpush1.msra.mxu0 0.0
    %280 = vmatprep.subr.mxu0 0.0
    %281 = vmatpush1.msra.mxu0 0.0
    %282 = vmatprep.subr.mxu0 0.0
    %283 = vmatpush1.msra.mxu0 0.0
    %284 = vmatprep.subr.mxu0 0.0
    %285 = vmatpush1.msra.mxu0 0.0
    %286 = vmatprep.mubr.f32.mxu0 0.0
    %v287 = vand.u32 %v39, 4294901760
    %v288 = vsub.f32 %v39, %v287
    %289 = vmatmul.mubr.f32.gmra.mrb[0].mxu0 %v288
    %v290 = vpop.f32.mrb[0].mxu0
    %v291 = vadd.f32 %v209, %v290
    %v292 = vpop.f32.mrb[0].mxu0
    %293 = vmatprep.mubr.f32.mxu0 0.0
    %v294 = vand.u32 %v42, 4294901760
    %v295 = vsub.f32 %v42, %v294
    %296 = vmatmul.mubr.f32.gmra.mrb[0].mxu0 %v295
    %v297 = vpop.f32.mrb[0].mxu0
    %v298 = vadd.f32 %v215, %v297
    %v299 = vpop.f32.mrb[0].mxu0
    %300 = vdwg.mxu0
    %301 = vmatprep.subr.mxu0 0.0
    %v302 = vand.u32 %v33, 4294901760
    %303 = vmatpush1.msra.mxu0 %v302
    %304 = vmatprep.subr.mxu0 0.0
    %v305 = vand.u32 %v34, 4294901760
    %306 = vmatpush1.msra.mxu0 %v305
    %307 = vmatprep.subr.mxu0 0.0
    %308 = vmatpush1.msra.mxu0 0.0
    %309 = vmatprep.subr.mxu0 0.0
    %310 = vmatpush1.msra.mxu0 0.0
    %311 = vmatprep.subr.mxu0 0.0
    %312 = vmatpush1.msra.mxu0 0.0
    %313 = vmatprep.subr.mxu0 0.0
    %314 = vmatpush1.msra.mxu0 0.0
    %315 = vmatprep.subr.mxu0 0.0
    %316 = vmatpush1.msra.mxu0 0.0
    %317 = vmatprep.subr.mxu0 0.0
    %318 = vmatpush1.msra.mxu0 0.0
    %319 = vmatprep.subr.mxu0 0.0
    %320 = vmatpush1.msra.mxu0 0.0
    %321 = vmatprep.subr.mxu0 0.0
    %322 = vmatpush1.msra.mxu0 0.0
    %323 = vmatprep.subr.mxu0 0.0
    %324 = vmatpush1.msra.mxu0 0.0
    %325 = vmatprep.subr.mxu0 0.0
    %326 = vmatpush1.msra.mxu0 0.0
    %327 = vmatprep.subr.mxu0 0.0
    %328 = vmatpush1.msra.mxu0 0.0
    %329 = vmatprep.subr.mxu0 0.0
    %330 = vmatpush1.msra.mxu0 0.0
    %331 = vmatprep.subr.mxu0 0.0
    %332 = vmatpush1.msra.mxu0 0.0
    %333 = vmatprep.subr.mxu0 0.0
    %334 = vmatpush1.msra.mxu0 0.0
    %335 = vmatprep.subr.mxu0 0.0
    %336 = vmatpush1.msra.mxu0 0.0
    %337 = vmatprep.subr.mxu0 0.0
    %338 = vmatpush1.msra.mxu0 0.0
    %339 = vmatprep.subr.mxu0 0.0
    %340 = vmatpush1.msra.mxu0 0.0
    %341 = vmatprep.subr.mxu0 0.0
    %342 = vmatpush1.msra.mxu0 0.0
    %343 = vmatprep.subr.mxu0 0.0
    %344 = vmatpush1.msra.mxu0 0.0
    %345 = vmatprep.subr.mxu0 0.0
    %346 = vmatpush1.msra.mxu0 0.0
    %347 = vmatprep.subr.mxu0 0.0
    %348 = vmatpush1.msra.mxu0 0.0
    %349 = vmatprep.subr.mxu0 0.0
    %350 = vmatpush1.msra.mxu0 0.0
    %351 = vmatprep.subr.mxu0 0.0
    %352 = vmatpush1.msra.mxu0 0.0
    %353 = vmatprep.subr.mxu0 0.0
    %354 = vmatpush1.msra.mxu0 0.0
    %355 = vmatprep.subr.mxu0 0.0
    %356 = vmatpush1.msra.mxu0 0.0
    %357 = vmatprep.subr.mxu0 0.0
    %358 = vmatpush1.msra.mxu0 0.0
    %359 = vmatprep.subr.mxu0 0.0
    %360 = vmatpush1.msra.mxu0 0.0
    %361 = vmatprep.subr.mxu0 0.0
    %362 = vmatpush1.msra.mxu0 0.0
    %363 = vmatprep.subr.mxu0 0.0
    %364 = vmatpush1.msra.mxu0 0.0
    %365 = vmatprep.subr.mxu0 0.0
    %366 = vmatpush1.msra.mxu0 0.0
    %367 = vmatprep.mubr.f32.mxu0 0.0
    %v368 = vand.u32 %v39, 4294901760
    %v369 = vsub.f32 %v39, %v368
    %v370 = vand.u32 %v369, 4294901760
    %371 = vmatmul.mubr.f32.gmra.mrb[0].mxu0 %v370
    %v372 = vpop.f32.mrb[0].mxu0
    %v373 = vadd.f32 %v291, %v372
    %v374 = vpop.f32.mrb[0].mxu0
    %375 = vmatprep.mubr.f32.mxu0 0.0
    %v376 = vand.u32 %v42, 4294901760
    %v377 = vsub.f32 %v42, %v376
    %v378 = vand.u32 %v377, 4294901760
    %379 = vmatmul.mubr.f32.gmra.mrb[0].mxu0 %v378
    %v380 = vpop.f32.mrb[0].mxu0
    %v381 = vadd.f32 %v298, %v380
    %v382 = vpop.f32.mrb[0].mxu0
    %383 = vdwg.mxu0
    %384 = vmatprep.subr.mxu0 0.0
    %v385 = vand.u32 %v33, 4294901760
    %v386 = vsub.f32 %v33, %v385
    %v387 = vand.u32 %v386, 4294901760
    %388 = vmatpush1.msra.mxu0 %v387
    %389 = vmatprep.subr.mxu0 0.0
    %v390 = vand.u32 %v34, 4294901760
    %v391 = vsub.f32 %v34, %v390
    %v392 = vand.u32 %v391, 4294901760
    %393 = vmatpush1.msra.mxu0 %v392
    %394 = vmatprep.subr.mxu0 0.0
    %395 = vmatpush1.msra.mxu0 0.0
    %396 = vmatprep.subr.mxu0 0.0
    %397 = vmatpush1.msra.mxu0 0.0
    %398 = vmatprep.subr.mxu0 0.0
    %399 = vmatpush1.msra.mxu0 0.0
    %400 = vmatprep.subr.mxu0 0.0
    %401 = vmatpush1.msra.mxu0 0.0
    %402 = vmatprep.subr.mxu0 0.0
    %403 = vmatpush1.msra.mxu0 0.0
    %404 = vmatprep.subr.mxu0 0.0
    %405 = vmatpush1.msra.mxu0 0.0
    %406 = vmatprep.subr.mxu0 0.0
    %407 = vmatpush1.msra.mxu0 0.0
    %408 = vmatprep.subr.mxu0 0.0
    %409 = vmatpush1.msra.mxu0 0.0
    %410 = vmatprep.subr.mxu0 0.0
    %411 = vmatpush1.msra.mxu0 0.0
    %412 = vmatprep.subr.mxu0 0.0
    %413 = vmatpush1.msra.mxu0 0.0
    %414 = vmatprep.subr.mxu0 0.0
    %415 = vmatpush1.msra.mxu0 0.0
    %416 = vmatprep.subr.mxu0 0.0
    %417 = vmatpush1.msra.mxu0 0.0
    %418 = vmatprep.subr.mxu0 0.0
    %419 = vmatpush1.msra.mxu0 0.0
    %420 = vmatprep.subr.mxu0 0.0
    %421 = vmatpush1.msra.mxu0 0.0
    %422 = vmatprep.subr.mxu0 0.0
    %423 = vmatpush1.msra.mxu0 0.0
    %424 = vmatprep.subr.mxu0 0.0
    %425 = vmatpush1.msra.mxu0 0.0
    %426 = vmatprep.subr.mxu0 0.0
    %427 = vmatpush1.msra.mxu0 0.0
    %428 = vmatprep.subr.mxu0 0.0
    %429 = vmatpush1.msra.mxu0 0.0
    %430 = vmatprep.subr.mxu0 0.0
    %431 = vmatpush1.msra.mxu0 0.0
    %432 = vmatprep.subr.mxu0 0.0
    %433 = vmatpush1.msra.mxu0 0.0
    %434 = vmatprep.subr.mxu0 0.0
    %435 = vmatpush1.msra.mxu0 0.0
    %436 = vmatprep.subr.mxu0 0.0
    %437 = vmatpush1.msra.mxu0 0.0
    %438 = vmatprep.subr.mxu0 0.0
    %439 = vmatpush1.msra.mxu0 0.0
    %440 = vmatprep.subr.mxu0 0.0
    %441 = vmatpush1.msra.mxu0 0.0
    %442 = vmatprep.subr.mxu0 0.0
    %443 = vmatpush1.msra.mxu0 0.0
    %444 = vmatprep.subr.mxu0 0.0
    %445 = vmatpush1.msra.mxu0 0.0
    %446 = vmatprep.subr.mxu0 0.0
    %447 = vmatpush1.msra.mxu0 0.0
    %448 = vmatprep.subr.mxu0 0.0
    %449 = vmatpush1.msra.mxu0 0.0
    %450 = vmatprep.subr.mxu0 0.0
    %451 = vmatpush1.msra.mxu0 0.0
    %452 = vmatprep.subr.mxu0 0.0
    %453 = vmatpush1.msra.mxu0 0.0
    %454 = vmatprep.mubr.f32.mxu0 0.0
    %v455 = vand.u32 %v39, 4294901760
    %456 = vmatmul.mubr.f32.gmra.mrb[0].mxu0 %v455
    %v457 = vpop.f32.mrb[0].mxu0
    %v458 = vadd.f32 %v373, %v457
    %v459 = vpop.f32.mrb[0].mxu0
    %460 = vmatprep.mubr.f32.mxu0 0.0
    %v461 = vand.u32 %v42, 4294901760
    %462 = vmatmul.mubr.f32.gmra.mrb[0].mxu0 %v461
    %v463 = vpop.f32.mrb[0].mxu0
    %v464 = vadd.f32 %v381, %v463
    %v465 = vpop.f32.mrb[0].mxu0
    %466 = vdwg.mxu0
    %467 = vmatprep.subr.mxu0 0.0
    %v468 = vand.u32 %v33, 4294901760
    %469 = vmatpush1.msra.mxu0 %v468
    %470 = vmatprep.subr.mxu0 0.0
    %v471 = vand.u32 %v34, 4294901760
    %472 = vmatpush1.msra.mxu0 %v471
    %473 = vmatprep.subr.mxu0 0.0
    %474 = vmatpush1.msra.mxu0 0.0
    %475 = vmatprep.subr.mxu0 0.0
    %476 = vmatpush1.msra.mxu0 0.0
    %477 = vmatprep.subr.mxu0 0.0
    %478 = vmatpush1.msra.mxu0 0.0
    %479 = vmatprep.subr.mxu0 0.0
    %480 = vmatpush1.msra.mxu0 0.0
    %481 = vmatprep.subr.mxu0 0.0
    %482 = vmatpush1.msra.mxu0 0.0
    %483 = vmatprep.subr.mxu0 0.0
    %484 = vmatpush1.msra.mxu0 0.0
    %485 = vmatprep.subr.mxu0 0.0
    %486 = vmatpush1.msra.mxu0 0.0
    %487 = vmatprep.subr.mxu0 0.0
    %488 = vmatpush1.msra.mxu0 0.0
    %489 = vmatprep.subr.mxu0 0.0
    %490 = vmatpush1.msra.mxu0 0.0
    %491 = vmatprep.subr.mxu0 0.0
    %492 = vmatpush1.msra.mxu0 0.0
    %493 = vmatprep.subr.mxu0 0.0
    %494 = vmatpush1.msra.mxu0 0.0
    %495 = vmatprep.subr.mxu0 0.0
    %496 = vmatpush1.msra.mxu0 0.0
    %497 = vmatprep.subr.mxu0 0.0
    %498 = vmatpush1.msra.mxu0 0.0
    %499 = vmatprep.subr.mxu0 0.0
    %500 = vmatpush1.msra.mxu0 0.0
    %501 = vmatprep.subr.mxu0 0.0
    %502 = vmatpush1.msra.mxu0 0.0
    %503 = vmatprep.subr.mxu0 0.0
    %504 = vmatpush1.msra.mxu0 0.0
    %505 = vmatprep.subr.mxu0 0.0
    %506 = vmatpush1.msra.mxu0 0.0
    %507 = vmatprep.subr.mxu0 0.0
    %508 = vmatpush1.msra.mxu0 0.0
    %509 = vmatprep.subr.mxu0 0.0
    %510 = vmatpush1.msra.mxu0 0.0
    %511 = vmatprep.subr.mxu0 0.0
    %512 = vmatpush1.msra.mxu0 0.0
    %513 = vmatprep.subr.mxu0 0.0
    %514 = vmatpush1.msra.mxu0 0.0
    %515 = vmatprep.subr.mxu0 0.0
    %516 = vmatpush1.msra.mxu0 0.0
    %517 = vmatprep.subr.mxu0 0.0
    %518 = vmatpush1.msra.mxu0 0.0
    %519 = vmatprep.subr.mxu0 0.0
    %520 = vmatpush1.msra.mxu0 0.0
    %521 = vmatprep.subr.mxu0 0.0
    %522 = vmatpush1.msra.mxu0 0.0
    %523 = vmatprep.subr.mxu0 0.0
    %524 = vmatpush1.msra.mxu0 0.0
    %525 = vmatprep.subr.mxu0 0.0
    %526 = vmatpush1.msra.mxu0 0.0
    %527 = vmatprep.subr.mxu0 0.0
    %528 = vmatpush1.msra.mxu0 0.0
    %529 = vmatprep.subr.mxu0 0.0
    %530 = vmatpush1.msra.mxu0 0.0
    %531 = vmatprep.subr.mxu0 0.0
    %532 = vmatpush1.msra.mxu0 0.0
    %533 = vmatprep.mubr.f32.mxu0 0.0
    %v534 = vand.u32 %v39, 4294901760
    %535 = vmatmul.mubr.f32.gmra.mrb[0].mxu0 %v534
    %v536 = vpop.f32.mrb[0].mxu0
    %v537 = vadd.f32 %v458, %v536
    %v538 = vpop.f32.mrb[0].mxu0
    %539 = vmatprep.mubr.f32.mxu0 0.0
    %v540 = vand.u32 %v42, 4294901760
    %541 = vmatmul.mubr.f32.gmra.mrb[0].mxu0 %v540
    %v542 = vpop.f32.mrb[0].mxu0
    %v543 = vadd.f32 %v464, %v542
    %v544 = vpop.f32.mrb[0].mxu0
    %545 = vdwg.mxu0
    %v547 = vsel %vm37, %v29, 0
    %v550 = vsel %vm37, %v30, 0
    %v553 = vsel %vm37, %v31, 0
    %v556 = vsel %vm37, %v32, 0
    %558 = vmatprep.subr.mxu0 0.0
    %v559 = vand.u32 %v537, 4294901760
    %560 = vmatpush1.msra.mxu0 %v559
    %561 = vmatprep.subr.mxu0 0.0
    %v562 = vand.u32 %v543, 4294901760
    %563 = vmatpush1.msra.mxu0 %v562
    %564 = vmatprep.subr.mxu0 0.0
    %565 = vmatpush1.msra.mxu0 0.0
    %566 = vmatprep.subr.mxu0 0.0
    %567 = vmatpush1.msra.mxu0 0.0
    %568 = vmatprep.subr.mxu0 0.0
    %569 = vmatpush1.msra.mxu0 0.0
    %570 = vmatprep.subr.mxu0 0.0
    %571 = vmatpush1.msra.mxu0 0.0
    %572 = vmatprep.subr.mxu0 0.0
    %573 = vmatpush1.msra.mxu0 0.0
    %574 = vmatprep.subr.mxu0 0.0
    %575 = vmatpush1.msra.mxu0 0.0
    %576 = vmatprep.subr.mxu0 0.0
    %577 = vmatpush1.msra.mxu0 0.0
    %578 = vmatprep.subr.mxu0 0.0
    %579 = vmatpush1.msra.mxu0 0.0
    %580 = vmatprep.subr.mxu0 0.0
    %581 = vmatpush1.msra.mxu0 0.0
    %582 = vmatprep.subr.mxu0 0.0
    %583 = vmatpush1.msra.mxu0 0.0
    %584 = vmatprep.subr.mxu0 0.0
    %585 = vmatpush1.msra.mxu0 0.0
    %586 = vmatprep.subr.mxu0 0.0
    %587 = vmatpush1.msra.mxu0 0.0
    %588 = vmatprep.subr.mxu0 0.0
    %589 = vmatpush1.msra.mxu0 0.0
    %590 = vmatprep.subr.mxu0 0.0
    %591 = vmatpush1.msra.mxu0 0.0
    %592 = vmatprep.subr.mxu0 0.0
    %593 = vmatpush1.msra.mxu0 0.0
    %594 = vmatprep.subr.mxu0 0.0
    %595 = vmatpush1.msra.mxu0 0.0
    %596 = vmatprep.subr.mxu0 0.0
    %597 = vmatpush1.msra.mxu0 0.0
    %598 = vmatprep.subr.mxu0 0.0
    %599 = vmatpush1.msra.mxu0 0.0
    %600 = vmatprep.subr.mxu0 0.0
    %601 = vmatpush1.msra.mxu0 0.0
    %602 = vmatprep.subr.mxu0 0.0
    %603 = vmatpush1.msra.mxu0 0.0
    %604 = vmatprep.subr.mxu0 0.0
    %605 = vmatpush1.msra.mxu0 0.0
    %606 = vmatprep.subr.mxu0 0.0
    %607 = vmatpush1.msra.mxu0 0.0
    %608 = vmatprep.subr.mxu0 0.0
    %609 = vmatpush1.msra.mxu0 0.0
    %610 = vmatprep.subr.mxu0 0.0
    %611 = vmatpush1.msra.mxu0 0.0
    %612 = vmatprep.subr.mxu0 0.0
    %613 = vmatpush1.msra.mxu0 0.0
    %614 = vmatprep.subr.mxu0 0.0
    %615 = vmatpush1.msra.mxu0 0.0
    %616 = vmatprep.subr.mxu0 0.0
    %617 = vmatpush1.msra.mxu0 0.0
    %618 = vmatprep.subr.mxu0 0.0
    %619 = vmatpush1.msra.mxu0 0.0
    %620 = vmatprep.subr.mxu0 0.0
    %621 = vmatpush1.msra.mxu0 0.0
    %622 = vmatprep.subr.mxu0 0.0
    %623 = vmatpush1.msra.mxu0 0.0
    %624 = vmatprep.mubr.f32.mxu0 0.0
    %v625 = vand.u32 %v547, 4294901760
    %v626 = vsub.f32 %v547, %v625
    %v627 = vand.u32 %v626, 4294901760
    %v628 = vsub.f32 %v626, %v627
    %v629 = vand.u32 %v628, 4294901760
    %630 = vmatmul.mubr.f32.gmra.mrb[0].mxu0 %v629
    %v631 = vpop.f32.mrb[0].mxu0
    %v632 = vadd.f32 0.0, %v631
    %v633 = vpop.f32.mrb[0].mxu0
    %634 = vmatprep.mubr.f32.mxu0 0.0
    %v635 = vand.u32 %v550, 4294901760
    %v636 = vsub.f32 %v550, %v635
    %v637 = vand.u32 %v636, 4294901760
    %v638 = vsub.f32 %v636, %v637
    %v639 = vand.u32 %v638, 4294901760
    %640 = vmatmul.mubr.f32.gmra.mrb[0].mxu0 %v639
    %v641 = vpop.f32.mrb[0].mxu0
    %v642 = vadd.f32 0.0, %v641
    %v643 = vpop.f32.mrb[0].mxu0
    %644 = vmatprep.mubr.f32.mxu0 0.0
    %v645 = vand.u32 %v553, 4294901760
    %v646 = vsub.f32 %v553, %v645
    %v647 = vand.u32 %v646, 4294901760
    %v648 = vsub.f32 %v646, %v647
    %v649 = vand.u32 %v648, 4294901760
    %650 = vmatmul.mubr.f32.gmra.mrb[0].mxu0 %v649
    %v651 = vpop.f32.mrb[0].mxu0
    %v652 = vadd.f32 0.0, %v651
    %v653 = vpop.f32.mrb[0].mxu0
    %654 = vmatprep.mubr.f32.mxu0 0.0
    %v655 = vand.u32 %v556, 4294901760
    %v656 = vsub.f32 %v556, %v655
    %v657 = vand.u32 %v656, 4294901760
    %v658 = vsub.f32 %v656, %v657
    %v659 = vand.u32 %v658, 4294901760
    %660 = vmatmul.mubr.f32.gmra.mrb[0].mxu0 %v659
    %v661 = vpop.f32.mrb[0].mxu0
    %v662 = vadd.f32 0.0, %v661
    %v663 = vpop.f32.mrb[0].mxu0
    %664 = vdwg.mxu0
    %665 = vmatprep.subr.mxu0 0.0
    %v666 = vand.u32 %v537, 4294901760
    %v667 = vsub.f32 %v537, %v666
    %v668 = vand.u32 %v667, 4294901760
    %v669 = vsub.f32 %v667, %v668
    %v670 = vand.u32 %v669, 4294901760
    %671 = vmatpush1.msra.mxu0 %v670
    %672 = vmatprep.subr.mxu0 0.0
    %v673 = vand.u32 %v543, 4294901760
    %v674 = vsub.f32 %v543, %v673
    %v675 = vand.u32 %v674, 4294901760
    %v676 = vsub.f32 %v674, %v675
    %v677 = vand.u32 %v676, 4294901760
    %678 = vmatpush1.msra.mxu0 %v677
    %679 = vmatprep.subr.mxu0 0.0
    %680 = vmatpush1.msra.mxu0 0.0
    %681 = vmatprep.subr.mxu0 0.0
    %682 = vmatpush1.msra.mxu0 0.0
    %683 = vmatprep.subr.mxu0 0.0
    %684 = vmatpush1.msra.mxu0 0.0
    %685 = vmatprep.subr.mxu0 0.0
    %686 = vmatpush1.msra.mxu0 0.0
    %687 = vmatprep.subr.mxu0 0.0
    %688 = vmatpush1.msra.mxu0 0.0
    %689 = vmatprep.subr.mxu0 0.0
    %690 = vmatpush1.msra.mxu0 0.0
    %691 = vmatprep.subr.mxu0 0.0
    %692 = vmatpush1.msra.mxu0 0.0
    %693 = vmatprep.subr.mxu0 0.0
    %694 = vmatpush1.msra.mxu0 0.0
    %695 = vmatprep.subr.mxu0 0.0
    %696 = vmatpush1.msra.mxu0 0.0
    %697 = vmatprep.subr.mxu0 0.0
    %698 = vmatpush1.msra.mxu0 0.0
    %699 = vmatprep.subr.mxu0 0.0
    %700 = vmatpush1.msra.mxu0 0.0
    %701 = vmatprep.subr.mxu0 0.0
    %702 = vmatpush1.msra.mxu0 0.0
    %703 = vmatprep.subr.mxu0 0.0
    %704 = vmatpush1.msra.mxu0 0.0
    %705 = vmatprep.subr.mxu0 0.0
    %706 = vmatpush1.msra.mxu0 0.0
    %707 = vmatprep.subr.mxu0 0.0
    %708 = vmatpush1.msra.mxu0 0.0
    %709 = vmatprep.subr.mxu0 0.0
    %710 = vmatpush1.msra.mxu0 0.0
    %711 = vmatprep.subr.mxu0 0.0
    %712 = vmatpush1.msra.mxu0 0.0
    %713 = vmatprep.subr.mxu0 0.0
    %714 = vmatpush1.msra.mxu0 0.0
    %715 = vmatprep.subr.mxu0 0.0
    %716 = vmatpush1.msra.mxu0 0.0
    %717 = vmatprep.subr.mxu0 0.0
    %718 = vmatpush1.msra.mxu0 0.0
    %719 = vmatprep.subr.mxu0 0.0
    %720 = vmatpush1.msra.mxu0 0.0
    %721 = vmatprep.subr.mxu0 0.0
    %722 = vmatpush1.msra.mxu0 0.0
    %723 = vmatprep.subr.mxu0 0.0
    %724 = vmatpush1.msra.mxu0 0.0
    %725 = vmatprep.subr.mxu0 0.0
    %726 = vmatpush1.msra.mxu0 0.0
    %727 = vmatprep.subr.mxu0 0.0
    %728 = vmatpush1.msra.mxu0 0.0
    %729 = vmatprep.subr.mxu0 0.0
    %730 = vmatpush1.msra.mxu0 0.0
    %731 = vmatprep.subr.mxu0 0.0
    %732 = vmatpush1.msra.mxu0 0.0
    %733 = vmatprep.subr.mxu0 0.0
    %734 = vmatpush1.msra.mxu0 0.0
    %735 = vmatprep.subr.mxu0 0.0
    %736 = vmatpush1.msra.mxu0 0.0
    %737 = vmatprep.subr.mxu0 0.0
    %738 = vmatpush1.msra.mxu0 0.0
    %739 = vmatprep.mubr.f32.mxu0 0.0
    %v740 = vand.u32 %v547, 4294901760
    %741 = vmatmul.mubr.f32.gmra.mrb[0].mxu0 %v740
    %v742 = vpop.f32.mrb[0].mxu0
    %v743 = vadd.f32 %v632, %v742
    %v744 = vpop.f32.mrb[0].mxu0
    %745 = vmatprep.mubr.f32.mxu0 0.0
    %v746 = vand.u32 %v550, 4294901760
    %747 = vmatmul.mubr.f32.gmra.mrb[0].mxu0 %v746
    %v748 = vpop.f32.mrb[0].mxu0
    %v749 = vadd.f32 %v642, %v748
    %v750 = vpop.f32.mrb[0].mxu0
    %751 = vmatprep.mubr.f32.mxu0 0.0
    %v752 = vand.u32 %v553, 4294901760
    %753 = vmatmul.mubr.f32.gmra.mrb[0].mxu0 %v752
    %v754 = vpop.f32.mrb[0].mxu0
    %v755 = vadd.f32 %v652, %v754
    %v756 = vpop.f32.mrb[0].mxu0
    %757 = vmatprep.mubr.f32.mxu0 0.0
    %v758 = vand.u32 %v556, 4294901760
    %759 = vmatmul.mubr.f32.gmra.mrb[0].mxu0 %v758
    %v760 = vpop.f32.mrb[0].mxu0
    %v761 = vadd.f32 %v662, %v760
    %v762 = vpop.f32.mrb[0].mxu0
    %763 = vdwg.mxu0
    %764 = vmatprep.subr.mxu0 0.0
    %v765 = vand.u32 %v537, 4294901760
    %v766 = vsub.f32 %v537, %v765
    %767 = vmatpush1.msra.mxu0 %v766
    %768 = vmatprep.subr.mxu0 0.0
    %v769 = vand.u32 %v543, 4294901760
    %v770 = vsub.f32 %v543, %v769
    %771 = vmatpush1.msra.mxu0 %v770
    %772 = vmatprep.subr.mxu0 0.0
    %773 = vmatpush1.msra.mxu0 0.0
    %774 = vmatprep.subr.mxu0 0.0
    %775 = vmatpush1.msra.mxu0 0.0
    %776 = vmatprep.subr.mxu0 0.0
    %777 = vmatpush1.msra.mxu0 0.0
    %778 = vmatprep.subr.mxu0 0.0
    %779 = vmatpush1.msra.mxu0 0.0
    %780 = vmatprep.subr.mxu0 0.0
    %781 = vmatpush1.msra.mxu0 0.0
    %782 = vmatprep.subr.mxu0 0.0
    %783 = vmatpush1.msra.mxu0 0.0
    %784 = vmatprep.subr.mxu0 0.0
    %785 = vmatpush1.msra.mxu0 0.0
    %786 = vmatprep.subr.mxu0 0.0
    %787 = vmatpush1.msra.mxu0 0.0
    %788 = vmatprep.subr.mxu0 0.0
    %789 = vmatpush1.msra.mxu0 0.0
    %790 = vmatprep.subr.mxu0 0.0
    %791 = vmatpush1.msra.mxu0 0.0
    %792 = vmatprep.subr.mxu0 0.0
    %793 = vmatpush1.msra.mxu0 0.0
    %794 = vmatprep.subr.mxu0 0.0
    %795 = vmatpush1.msra.mxu0 0.0
    %796 = vmatprep.subr.mxu0 0.0
    %797 = vmatpush1.msra.mxu0 0.0
    %798 = vmatprep.subr.mxu0 0.0
    %799 = vmatpush1.msra.mxu0 0.0
    %800 = vmatprep.subr.mxu0 0.0
    %801 = vmatpush1.msra.mxu0 0.0
    %802 = vmatprep.subr.mxu0 0.0
    %803 = vmatpush1.msra.mxu0 0.0
    %804 = vmatprep.subr.mxu0 0.0
    %805 = vmatpush1.msra.mxu0 0.0
    %806 = vmatprep.subr.mxu0 0.0
    %807 = vmatpush1.msra.mxu0 0.0
    %808 = vmatprep.subr.mxu0 0.0
    %809 = vmatpush1.msra.mxu0 0.0
    %810 = vmatprep.subr.mxu0 0.0
    %811 = vmatpush1.msra.mxu0 0.0
    %812 = vmatprep.subr.mxu0 0.0
    %813 = vmatpush1.msra.mxu0 0.0
    %814 = vmatprep.subr.mxu0 0.0
    %815 = vmatpush1.msra.mxu0 0.0
    %816 = vmatprep.subr.mxu0 0.0
    %817 = vmatpush1.msra.mxu0 0.0
    %818 = vmatprep.subr.mxu0 0.0
    %819 = vmatpush1.msra.mxu0 0.0
    %820 = vmatprep.subr.mxu0 0.0
    %821 = vmatpush1.msra.mxu0 0.0
    %822 = vmatprep.subr.mxu0 0.0
    %823 = vmatpush1.msra.mxu0 0.0
    %824 = vmatprep.subr.mxu0 0.0
    %825 = vmatpush1.msra.mxu0 0.0
    %826 = vmatprep.subr.mxu0 0.0
    %827 = vmatpush1.msra.mxu0 0.0
    %828 = vmatprep.subr.mxu0 0.0
    %829 = vmatpush1.msra.mxu0 0.0
    %830 = vmatprep.subr.mxu0 0.0
    %831 = vmatpush1.msra.mxu0 0.0
    %832 = vmatprep.mubr.f32.mxu0 0.0
    %v833 = vand.u32 %v547, 4294901760
    %v834 = vsub.f32 %v547, %v833
    %835 = vmatmul.mubr.f32.gmra.mrb[0].mxu0 %v834
    %v836 = vpop.f32.mrb[0].mxu0
    %v837 = vadd.f32 %v743, %v836
    %v838 = vpop.f32.mrb[0].mxu0
    %839 = vmatprep.mubr.f32.mxu0 0.0
    %v840 = vand.u32 %v550, 4294901760
    %v841 = vsub.f32 %v550, %v840
    %842 = vmatmul.mubr.f32.gmra.mrb[0].mxu0 %v841
    %v843 = vpop.f32.mrb[0].mxu0
    %v844 = vadd.f32 %v749, %v843
    %v845 = vpop.f32.mrb[0].mxu0
    %846 = vmatprep.mubr.f32.mxu0 0.0
    %v847 = vand.u32 %v553, 4294901760
    %v848 = vsub.f32 %v553, %v847
    %849 = vmatmul.mubr.f32.gmra.mrb[0].mxu0 %v848
    %v850 = vpop.f32.mrb[0].mxu0
    %v851 = vadd.f32 %v755, %v850
    %v852 = vpop.f32.mrb[0].mxu0
    %853 = vmatprep.mubr.f32.mxu0 0.0
    %v854 = vand.u32 %v556, 4294901760
    %v855 = vsub.f32 %v556, %v854
    %856 = vmatmul.mubr.f32.gmra.mrb[0].mxu0 %v855
    %v857 = vpop.f32.mrb[0].mxu0
    %v858 = vadd.f32 %v761, %v857
    %v859 = vpop.f32.mrb[0].mxu0
    %860 = vdwg.mxu0
    %861 = vmatprep.subr.mxu0 0.0
    %v862 = vand.u32 %v537, 4294901760
    %863 = vmatpush1.msra.mxu0 %v862
    %864 = vmatprep.subr.mxu0 0.0
    %v865 = vand.u32 %v543, 4294901760
    %866 = vmatpush1.msra.mxu0 %v865
    %867 = vmatprep.subr.mxu0 0.0
    %868 = vmatpush1.msra.mxu0 0.0
    %869 = vmatprep.subr.mxu0 0.0
    %870 = vmatpush1.msra.mxu0 0.0
    %871 = vmatprep.subr.mxu0 0.0
    %872 = vmatpush1.msra.mxu0 0.0
    %873 = vmatprep.subr.mxu0 0.0
    %874 = vmatpush1.msra.mxu0 0.0
    %875 = vmatprep.subr.mxu0 0.0
    %876 = vmatpush1.msra.mxu0 0.0
    %877 = vmatprep.subr.mxu0 0.0
    %878 = vmatpush1.msra.mxu0 0.0
    %879 = vmatprep.subr.mxu0 0.0
    %880 = vmatpush1.msra.mxu0 0.0
    %881 = vmatprep.subr.mxu0 0.0
    %882 = vmatpush1.msra.mxu0 0.0
    %883 = vmatprep.subr.mxu0 0.0
    %884 = vmatpush1.msra.mxu0 0.0
    %885 = vmatprep.subr.mxu0 0.0
    %886 = vmatpush1.msra.mxu0 0.0
    %887 = vmatprep.subr.mxu0 0.0
    %888 = vmatpush1.msra.mxu0 0.0
    %889 = vmatprep.subr.mxu0 0.0
    %890 = vmatpush1.msra.mxu0 0.0
    %891 = vmatprep.subr.mxu0 0.0
    %892 = vmatpush1.msra.mxu0 0.0
    %893 = vmatprep.subr.mxu0 0.0
    %894 = vmatpush1.msra.mxu0 0.0
    %895 = vmatprep.subr.mxu0 0.0
    %896 = vmatpush1.msra.mxu0 0.0
    %897 = vmatprep.subr.mxu0 0.0
    %898 = vmatpush1.msra.mxu0 0.0
    %899 = vmatprep.subr.mxu0 0.0
    %900 = vmatpush1.msra.mxu0 0.0
    %901 = vmatprep.subr.mxu0 0.0
    %902 = vmatpush1.msra.mxu0 0.0
    %903 = vmatprep.subr.mxu0 0.0
    %904 = vmatpush1.msra.mxu0 0.0
    %905 = vmatprep.subr.mxu0 0.0
    %906 = vmatpush1.msra.mxu0 0.0
    %907 = vmatprep.subr.mxu0 0.0
    %908 = vmatpush1.msra.mxu0 0.0
    %909 = vmatprep.subr.mxu0 0.0
    %910 = vmatpush1.msra.mxu0 0.0
    %911 = vmatprep.subr.mxu0 0.0
    %912 = vmatpush1.msra.mxu0 0.0
    %913 = vmatprep.subr.mxu0 0.0
    %914 = vmatpush1.msra.mxu0 0.0
    %915 = vmatprep.subr.mxu0 0.0
    %916 = vmatpush1.msra.mxu0 0.0
    %917 = vmatprep.subr.mxu0 0.0
    %918 = vmatpush1.msra.mxu0 0.0
    %919 = vmatprep.subr.mxu0 0.0
    %920 = vmatpush1.msra.mxu0 0.0
    %921 = vmatprep.subr.mxu0 0.0
    %922 = vmatpush1.msra.mxu0 0.0
    %923 = vmatprep.subr.mxu0 0.0
    %924 = vmatpush1.msra.mxu0 0.0
    %925 = vmatprep.subr.mxu0 0.0
    %926 = vmatpush1.msra.mxu0 0.0
    %927 = vmatprep.mubr.f32.mxu0 0.0
    %v928 = vand.u32 %v547, 4294901760
    %v929 = vsub.f32 %v547, %v928
    %v930 = vand.u32 %v929, 4294901760
    %931 = vmatmul.mubr.f32.gmra.mrb[0].mxu0 %v930
    %v932 = vpop.f32.mrb[0].mxu0
    %v933 = vadd.f32 %v837, %v932
    %v934 = vpop.f32.mrb[0].mxu0
    %935 = vmatprep.mubr.f32.mxu0 0.0
    %v936 = vand.u32 %v550, 4294901760
    %v937 = vsub.f32 %v550, %v936
    %v938 = vand.u32 %v937, 4294901760
    %939 = vmatmul.mubr.f32.gmra.mrb[0].mxu0 %v938
    %v940 = vpop.f32.mrb[0].mxu0
    %v941 = vadd.f32 %v844, %v940
    %v942 = vpop.f32.mrb[0].mxu0
    %943 = vmatprep.mubr.f32.mxu0 0.0
    %v944 = vand.u32 %v553, 4294901760
    %v945 = vsub.f32 %v553, %v944
    %v946 = vand.u32 %v945, 4294901760
    %947 = vmatmul.mubr.f32.gmra.mrb[0].mxu0 %v946
    %v948 = vpop.f32.mrb[0].mxu0
    %v949 = vadd.f32 %v851, %v948
    %v950 = vpop.f32.mrb[0].mxu0
    %951 = vmatprep.mubr.f32.mxu0 0.0
    %v952 = vand.u32 %v556, 4294901760
    %v953 = vsub.f32 %v556, %v952
    %v954 = vand.u32 %v953, 4294901760
    %955 = vmatmul.mubr.f32.gmra.mrb[0].mxu0 %v954
    %v956 = vpop.f32.mrb[0].mxu0
    %v957 = vadd.f32 %v858, %v956
    %v958 = vpop.f32.mrb[0].mxu0
    %959 = vdwg.mxu0
    %960 = vmatprep.subr.mxu0 0.0
    %v961 = vand.u32 %v537, 4294901760
    %v962 = vsub.f32 %v537, %v961
    %v963 = vand.u32 %v962, 4294901760
    %964 = vmatpush1.msra.mxu0 %v963
    %965 = vmatprep.subr.mxu0 0.0
    %v966 = vand.u32 %v543, 4294901760
    %v967 = vsub.f32 %v543, %v966
    %v968 = vand.u32 %v967, 4294901760
    %969 = vmatpush1.msra.mxu0 %v968
    %970 = vmatprep.subr.mxu0 0.0
    %971 = vmatpush1.msra.mxu0 0.0
    %972 = vmatprep.subr.mxu0 0.0
    %973 = vmatpush1.msra.mxu0 0.0
    %974 = vmatprep.subr.mxu0 0.0
    %975 = vmatpush1.msra.mxu0 0.0
    %976 = vmatprep.subr.mxu0 0.0
    %977 = vmatpush1.msra.mxu0 0.0
    %978 = vmatprep.subr.mxu0 0.0
    %979 = vmatpush1.msra.mxu0 0.0
    %980 = vmatprep.subr.mxu0 0.0
    %981 = vmatpush1.msra.mxu0 0.0
    %982 = vmatprep.subr.mxu0 0.0
    %983 = vmatpush1.msra.mxu0 0.0
    %984 = vmatprep.subr.mxu0 0.0
    %985 = vmatpush1.msra.mxu0 0.0
    %986 = vmatprep.subr.mxu0 0.0
    %987 = vmatpush1.msra.mxu0 0.0
    %988 = vmatprep.subr.mxu0 0.0
    %989 = vmatpush1.msra.mxu0 0.0
    %990 = vmatprep.subr.mxu0 0.0
    %991 = vmatpush1.msra.mxu0 0.0
    %992 = vmatprep.subr.mxu0 0.0
    %993 = vmatpush1.msra.mxu0 0.0
    %994 = vmatprep.subr.mxu0 0.0
    %995 = vmatpush1.msra.mxu0 0.0
    %996 = vmatprep.subr.mxu0 0.0
    %997 = vmatpush1.msra.mxu0 0.0
    %998 = vmatprep.subr.mxu0 0.0
    %999 = vmatpush1.msra.mxu0 0.0
    %1000 = vmatprep.subr.mxu0 0.0
    %1001 = vmatpush1.msra.mxu0 0.0
    %1002 = vmatprep.subr.mxu0 0.0
    %1003 = vmatpush1.msra.mxu0 0.0
    %1004 = vmatprep.subr.mxu0 0.0
    %1005 = vmatpush1.msra.mxu0 0.0
    %1006 = vmatprep.subr.mxu0 0.0
    %1007 = vmatpush1.msra.mxu0 0.0
    %1008 = vmatprep.subr.mxu0 0.0
    %1009 = vmatpush1.msra.mxu0 0.0
    %1010 = vmatprep.subr.mxu0 0.0
    %1011 = vmatpush1.msra.mxu0 0.0
    %1012 = vmatprep.subr.mxu0 0.0
    %1013 = vmatpush1.msra.mxu0 0.0
    %1014 = vmatprep.subr.mxu0 0.0
    %1015 = vmatpush1.msra.mxu0 0.0
    %1016 = vmatprep.subr.mxu0 0.0
    %1017 = vmatpush1.msra.mxu0 0.0
    %1018 = vmatprep.subr.mxu0 0.0
    %1019 = vmatpush1.msra.mxu0 0.0
    %1020 = vmatprep.subr.mxu0 0.0
    %1021 = vmatpush1.msra.mxu0 0.0
    %1022 = vmatprep.subr.mxu0 0.0
    %1023 = vmatpush1.msra.mxu0 0.0
    %1024 = vmatprep.subr.mxu0 0.0
    %1025 = vmatpush1.msra.mxu0 0.0
    %1026 = vmatprep.subr.mxu0 0.0
    %1027 = vmatpush1.msra.mxu0 0.0
    %1028 = vmatprep.subr.mxu0 0.0
    %1029 = vmatpush1.msra.mxu0 0.0
    %1030 = vmatprep.mubr.f32.mxu0 0.0
    %v1031 = vand.u32 %v547, 4294901760
    %1032 = vmatmul.mubr.f32.gmra.mrb[0].mxu0 %v1031
    %v1033 = vpop.f32.mrb[0].mxu0
    %v1034 = vadd.f32 %v933, %v1033
    %v1035 = vpop.f32.mrb[0].mxu0
    %1036 = vmatprep.mubr.f32.mxu0 0.0
    %v1037 = vand.u32 %v550, 4294901760
    %1038 = vmatmul.mubr.f32.gmra.mrb[0].mxu0 %v1037
    %v1039 = vpop.f32.mrb[0].mxu0
    %v1040 = vadd.f32 %v941, %v1039
    %v1041 = vpop.f32.mrb[0].mxu0
    %1042 = vmatprep.mubr.f32.mxu0 0.0
    %v1043 = vand.u32 %v553, 4294901760
    %1044 = vmatmul.mubr.f32.gmra.mrb[0].mxu0 %v1043
    %v1045 = vpop.f32.mrb[0].mxu0
    %v1046 = vadd.f32 %v949, %v1045
    %v1047 = vpop.f32.mrb[0].mxu0
    %1048 = vmatprep.mubr.f32.mxu0 0.0
    %v1049 = vand.u32 %v556, 4294901760
    %1050 = vmatmul.mubr.f32.gmra.mrb[0].mxu0 %v1049
    %v1051 = vpop.f32.mrb[0].mxu0
    %v1052 = vadd.f32 %v957, %v1051
    %v1053 = vpop.f32.mrb[0].mxu0
    %1054 = vdwg.mxu0
    %1055 = vmatprep.subr.mxu0 0.0
    %v1056 = vand.u32 %v537, 4294901760
    %1057 = vmatpush1.msra.mxu0 %v1056
    %1058 = vmatprep.subr.mxu0 0.0
    %v1059 = vand.u32 %v543, 4294901760
    %1060 = vmatpush1.msra.mxu0 %v1059
    %1061 = vmatprep.subr.mxu0 0.0
    %1062 = vmatpush1.msra.mxu0 0.0
    %1063 = vmatprep.subr.mxu0 0.0
    %1064 = vmatpush1.msra.mxu0 0.0
    %1065 = vmatprep.subr.mxu0 0.0
    %1066 = vmatpush1.msra.mxu0 0.0
    %1067 = vmatprep.subr.mxu0 0.0
    %1068 = vmatpush1.msra.mxu0 0.0
    %1069 = vmatprep.subr.mxu0 0.0
    %1070 = vmatpush1.msra.mxu0 0.0
    %1071 = vmatprep.subr.mxu0 0.0
    %1072 = vmatpush1.msra.mxu0 0.0
    %1073 = vmatprep.subr.mxu0 0.0
    %1074 = vmatpush1.msra.mxu0 0.0
    %1075 = vmatprep.subr.mxu0 0.0
    %1076 = vmatpush1.msra.mxu0 0.0
    %1077 = vmatprep.subr.mxu0 0.0
    %1078 = vmatpush1.msra.mxu0 0.0
    %1079 = vmatprep.subr.mxu0 0.0
    %1080 = vmatpush1.msra.mxu0 0.0
    %1081 = vmatprep.subr.mxu0 0.0
    %1082 = vmatpush1.msra.mxu0 0.0
    %1083 = vmatprep.subr.mxu0 0.0
    %1084 = vmatpush1.msra.mxu0 0.0
    %1085 = vmatprep.subr.mxu0 0.0
    %1086 = vmatpush1.msra.mxu0 0.0
    %1087 = vmatprep.subr.mxu0 0.0
    %1088 = vmatpush1.msra.mxu0 0.0
    %1089 = vmatprep.subr.mxu0 0.0
    %1090 = vmatpush1.msra.mxu0 0.0
    %1091 = vmatprep.subr.mxu0 0.0
    %1092 = vmatpush1.msra.mxu0 0.0
    %1093 = vmatprep.subr.mxu0 0.0
    %1094 = vmatpush1.msra.mxu0 0.0
    %1095 = vmatprep.subr.mxu0 0.0
    %1096 = vmatpush1.msra.mxu0 0.0
    %1097 = vmatprep.subr.mxu0 0.0
    %1098 = vmatpush1.msra.mxu0 0.0
    %1099 = vmatprep.subr.mxu0 0.0
    %1100 = vmatpush1.msra.mxu0 0.0
    %1101 = vmatprep.subr.mxu0 0.0
    %1102 = vmatpush1.msra.mxu0 0.0
    %1103 = vmatprep.subr.mxu0 0.0
    %1104 = vmatpush1.msra.mxu0 0.0
    %1105 = vmatprep.subr.mxu0 0.0
    %1106 = vmatpush1.msra.mxu0 0.0
    %1107 = vmatprep.subr.mxu0 0.0
    %1108 = vmatpush1.msra.mxu0 0.0
    %1109 = vmatprep.subr.mxu0 0.0
    %1110 = vmatpush1.msra.mxu0 0.0
    %1111 = vmatprep.subr.mxu0 0.0
    %1112 = vmatpush1.msra.mxu0 0.0
    %1113 = vmatprep.subr.mxu0 0.0
    %1114 = vmatpush1.msra.mxu0 0.0
    %1115 = vmatprep.subr.mxu0 0.0
    %1116 = vmatpush1.msra.mxu0 0.0
    %1117 = vmatprep.subr.mxu0 0.0
    %1118 = vmatpush1.msra.mxu0 0.0
    %1119 = vmatprep.subr.mxu0 0.0
    %1120 = vmatpush1.msra.mxu0 0.0
    %1121 = vmatprep.mubr.f32.mxu0 0.0
    %v1122 = vand.u32 %v547, 4294901760
    %1123 = vmatmul.mubr.f32.gmra.mrb[0].mxu0 %v1122
    %v1124 = vpop.f32.mrb[0].mxu0
    %v1125 = vadd.f32 %v1034, %v1124
    %v1126 = vpop.f32.mrb[0].mxu0
    %1127 = vmatprep.mubr.f32.mxu0 0.0
    %v1128 = vand.u32 %v550, 4294901760
    %1129 = vmatmul.mubr.f32.gmra.mrb[0].mxu0 %v1128
    %v1130 = vpop.f32.mrb[0].mxu0
    %v1131 = vadd.f32 %v1040, %v1130
    %v1132 = vpop.f32.mrb[0].mxu0
    %1133 = vmatprep.mubr.f32.mxu0 0.0
    %v1134 = vand.u32 %v553, 4294901760
    %1135 = vmatmul.mubr.f32.gmra.mrb[0].mxu0 %v1134
    %v1136 = vpop.f32.mrb[0].mxu0
    %v1137 = vadd.f32 %v1046, %v1136
    %v1138 = vpop.f32.mrb[0].mxu0
    %1139 = vmatprep.mubr.f32.mxu0 0.0
    %v1140 = vand.u32 %v556, 4294901760
    %1141 = vmatmul.mubr.f32.gmra.mrb[0].mxu0 %v1140
    %v1142 = vpop.f32.mrb[0].mxu0
    %v1143 = vadd.f32 %v1052, %v1142
    %v1144 = vpop.f32.mrb[0].mxu0
    %1145 = vdwg.mxu0
    %vm1146 = vcmask 261120
    %1147 = vst.msk [vmem:[#allocation5] sm:$0xff] %vm1146, %v1125
    %1148 = vst.msk [vmem:[#allocation5 + $0x8] sm:$0xff] %vm1146, %v1131
    %1149 = vst.msk [vmem:[#allocation5 + $0x10] sm:$0xff] %vm1146, %v1137
    %1150 = vst.msk [vmem:[#allocation5 + $0x18] sm:$0xff] %vm1146, %v1143
    %s1151 = scalar_lea.vmem [#allocation2], 16
    %v1152 = vld [vmem:[%s1151] sm:$0xff]
    %v1153 = vld [vmem:[%s1151 + $0x8] sm:$0xff]
    %v1155 = vsel %vm37, %v1152, 0
    %v1158 = vsel %vm37, %v1153, 0
    %1160 = vmatprep.subr.mxu0 0.0
    %v1161 = vand.u32 %v33, 4294901760
    %1162 = vmatpush1.msra.mxu0 %v1161
    %1163 = vmatprep.subr.mxu0 0.0
    %v1164 = vand.u32 %v34, 4294901760
    %1165 = vmatpush1.msra.mxu0 %v1164
    %1166 = vmatprep.subr.mxu0 0.0
    %1167 = vmatpush1.msra.mxu0 0.0
    %1168 = vmatprep.subr.mxu0 0.0
    %1169 = vmatpush1.msra.mxu0 0.0
    %1170 = vmatprep.subr.mxu0 0.0
    %1171 = vmatpush1.msra.mxu0 0.0
    %1172 = vmatprep.subr.mxu0 0.0
    %1173 = vmatpush1.msra.mxu0 0.0
    %1174 = vmatprep.subr.mxu0 0.0
    %1175 = vmatpush1.msra.mxu0 0.0
    %1176 = vmatprep.subr.mxu0 0.0
    %1177 = vmatpush1.msra.mxu0 0.0
    %1178 = vmatprep.subr.mxu0 0.0
    %1179 = vmatpush1.msra.mxu0 0.0
    %1180 = vmatprep.subr.mxu0 0.0
    %1181 = vmatpush1.msra.mxu0 0.0
    %1182 = vmatprep.subr.mxu0 0.0
    %1183 = vmatpush1.msra.mxu0 0.0
    %1184 = vmatprep.subr.mxu0 0.0
    %1185 = vmatpush1.msra.mxu0 0.0
    %1186 = vmatprep.subr.mxu0 0.0
    %1187 = vmatpush1.msra.mxu0 0.0
    %1188 = vmatprep.subr.mxu0 0.0
    %1189 = vmatpush1.msra.mxu0 0.0
    %1190 = vmatprep.subr.mxu0 0.0
    %1191 = vmatpush1.msra.mxu0 0.0
    %1192 = vmatprep.subr.mxu0 0.0
    %1193 = vmatpush1.msra.mxu0 0.0
    %1194 = vmatprep.subr.mxu0 0.0
    %1195 = vmatpush1.msra.mxu0 0.0
    %1196 = vmatprep.subr.mxu0 0.0
    %1197 = vmatpush1.msra.mxu0 0.0
    %1198 = vmatprep.subr.mxu0 0.0
    %1199 = vmatpush1.msra.mxu0 0.0
    %1200 = vmatprep.subr.mxu0 0.0
    %1201 = vmatpush1.msra.mxu0 0.0
    %1202 = vmatprep.subr.mxu0 0.0
    %1203 = vmatpush1.msra.mxu0 0.0
    %1204 = vmatprep.subr.mxu0 0.0
    %1205 = vmatpush1.msra.mxu0 0.0
    %1206 = vmatprep.subr.mxu0 0.0
    %1207 = vmatpush1.msra.mxu0 0.0
    %1208 = vmatprep.subr.mxu0 0.0
    %1209 = vmatpush1.msra.mxu0 0.0
    %1210 = vmatprep.subr.mxu0 0.0
    %1211 = vmatpush1.msra.mxu0 0.0
    %1212 = vmatprep.subr.mxu0 0.0
    %1213 = vmatpush1.msra.mxu0 0.0
    %1214 = vmatprep.subr.mxu0 0.0
    %1215 = vmatpush1.msra.mxu0 0.0
    %1216 = vmatprep.subr.mxu0 0.0
    %1217 = vmatpush1.msra.mxu0 0.0
    %1218 = vmatprep.subr.mxu0 0.0
    %1219 = vmatpush1.msra.mxu0 0.0
    %1220 = vmatprep.subr.mxu0 0.0
    %1221 = vmatpush1.msra.mxu0 0.0
    %1222 = vmatprep.subr.mxu0 0.0
    %1223 = vmatpush1.msra.mxu0 0.0
    %1224 = vmatprep.subr.mxu0 0.0
    %1225 = vmatpush1.msra.mxu0 0.0
    %1226 = vmatprep.mubr.f32.mxu0 0.0
    %v1227 = vand.u32 %v1155, 4294901760
    %v1228 = vsub.f32 %v1155, %v1227
    %v1229 = vand.u32 %v1228, 4294901760
    %v1230 = vsub.f32 %v1228, %v1229
    %v1231 = vand.u32 %v1230, 4294901760
    %1232 = vmatmul.mubr.f32.gmra.mrb[0].mxu0 %v1231
    %v1233 = vpop.f32.mrb[0].mxu0
    %v1234 = vadd.f32 0.0, %v1233
    %v1235 = vpop.f32.mrb[0].mxu0
    %1236 = vmatprep.mubr.f32.mxu0 0.0
    %v1237 = vand.u32 %v1158, 4294901760
    %v1238 = vsub.f32 %v1158, %v1237
    %v1239 = vand.u32 %v1238, 4294901760
    %v1240 = vsub.f32 %v1238, %v1239
    %v1241 = vand.u32 %v1240, 4294901760
    %1242 = vmatmul.mubr.f32.gmra.mrb[0].mxu0 %v1241
    %v1243 = vpop.f32.mrb[0].mxu0
    %v1244 = vadd.f32 0.0, %v1243
    %v1245 = vpop.f32.mrb[0].mxu0
    %1246 = vdwg.mxu0
    %1247 = vmatprep.subr.mxu0 0.0
    %v1248 = vand.u32 %v33, 4294901760
    %v1249 = vsub.f32 %v33, %v1248
    %v1250 = vand.u32 %v1249, 4294901760
    %v1251 = vsub.f32 %v1249, %v1250
    %v1252 = vand.u32 %v1251, 4294901760
    %1253 = vmatpush1.msra.mxu0 %v1252
    %1254 = vmatprep.subr.mxu0 0.0
    %v1255 = vand.u32 %v34, 4294901760
    %v1256 = vsub.f32 %v34, %v1255
    %v1257 = vand.u32 %v1256, 4294901760
    %v1258 = vsub.f32 %v1256, %v1257
    %v1259 = vand.u32 %v1258, 4294901760
    %1260 = vmatpush1.msra.mxu0 %v1259
    %1261 = vmatprep.subr.mxu0 0.0
    %1262 = vmatpush1.msra.mxu0 0.0
    %1263 = vmatprep.subr.mxu0 0.0
    %1264 = vmatpush1.msra.mxu0 0.0
    %1265 = vmatprep.subr.mxu0 0.0
    %1266 = vmatpush1.msra.mxu0 0.0
    %1267 = vmatprep.subr.mxu0 0.0
    %1268 = vmatpush1.msra.mxu0 0.0
    %1269 = vmatprep.subr.mxu0 0.0
    %1270 = vmatpush1.msra.mxu0 0.0
    %1271 = vmatprep.subr.mxu0 0.0
    %1272 = vmatpush1.msra.mxu0 0.0
    %1273 = vmatprep.subr.mxu0 0.0
    %1274 = vmatpush1.msra.mxu0 0.0
    %1275 = vmatprep.subr.mxu0 0.0
    %1276 = vmatpush1.msra.mxu0 0.0
    %1277 = vmatprep.subr.mxu0 0.0
    %1278 = vmatpush1.msra.mxu0 0.0
    %1279 = vmatprep.subr.mxu0 0.0
    %1280 = vmatpush1.msra.mxu0 0.0
    %1281 = vmatprep.subr.mxu0 0.0
    %1282 = vmatpush1.msra.mxu0 0.0
    %1283 = vmatprep.subr.mxu0 0.0
    %1284 = vmatpush1.msra.mxu0 0.0
    %1285 = vmatprep.subr.mxu0 0.0
    %1286 = vmatpush1.msra.mxu0 0.0
    %1287 = vmatprep.subr.mxu0 0.0
    %1288 = vmatpush1.msra.mxu0 0.0
    %1289 = vmatprep.subr.mxu0 0.0
    %1290 = vmatpush1.msra.mxu0 0.0
    %1291 = vmatprep.subr.mxu0 0.0
    %1292 = vmatpush1.msra.mxu0 0.0
    %1293 = vmatprep.subr.mxu0 0.0
    %1294 = vmatpush1.msra.mxu0 0.0
    %1295 = vmatprep.subr.mxu0 0.0
    %1296 = vmatpush1.msra.mxu0 0.0
    %1297 = vmatprep.subr.mxu0 0.0
    %1298 = vmatpush1.msra.mxu0 0.0
    %1299 = vmatprep.subr.mxu0 0.0
    %1300 = vmatpush1.msra.mxu0 0.0
    %1301 = vmatprep.subr.mxu0 0.0
    %1302 = vmatpush1.msra.mxu0 0.0
    %1303 = vmatprep.subr.mxu0 0.0
    %1304 = vmatpush1.msra.mxu0 0.0
    %1305 = vmatprep.subr.mxu0 0.0
    %1306 = vmatpush1.msra.mxu0 0.0
    %1307 = vmatprep.subr.mxu0 0.0
    %1308 = vmatpush1.msra.mxu0 0.0
    %1309 = vmatprep.subr.mxu0 0.0
    %1310 = vmatpush1.msra.mxu0 0.0
    %1311 = vmatprep.subr.mxu0 0.0
    %1312 = vmatpush1.msra.mxu0 0.0
    %1313 = vmatprep.subr.mxu0 0.0
    %1314 = vmatpush1.msra.mxu0 0.0
    %1315 = vmatprep.subr.mxu0 0.0
    %1316 = vmatpush1.msra.mxu0 0.0
    %1317 = vmatprep.subr.mxu0 0.0
    %1318 = vmatpush1.msra.mxu0 0.0
    %1319 = vmatprep.subr.mxu0 0.0
    %1320 = vmatpush1.msra.mxu0 0.0
    %1321 = vmatprep.mubr.f32.mxu0 0.0
    %v1322 = vand.u32 %v1155, 4294901760
    %1323 = vmatmul.mubr.f32.gmra.mrb[0].mxu0 %v1322
    %v1324 = vpop.f32.mrb[0].mxu0
    %v1325 = vadd.f32 %v1234, %v1324
    %v1326 = vpop.f32.mrb[0].mxu0
    %1327 = vmatprep.mubr.f32.mxu0 0.0
    %v1328 = vand.u32 %v1158, 4294901760
    %1329 = vmatmul.mubr.f32.gmra.mrb[0].mxu0 %v1328
    %v1330 = vpop.f32.mrb[0].mxu0
    %v1331 = vadd.f32 %v1244, %v1330
    %v1332 = vpop.f32.mrb[0].mxu0
    %1333 = vdwg.mxu0
    %1334 = vmatprep.subr.mxu0 0.0
    %v1335 = vand.u32 %v33, 4294901760
    %v1336 = vsub.f32 %v33, %v1335
    %1337 = vmatpush1.msra.mxu0 %v1336
    %1338 = vmatprep.subr.mxu0 0.0
    %v1339 = vand.u32 %v34, 4294901760
    %v1340 = vsub.f32 %v34, %v1339
    %1341 = vmatpush1.msra.mxu0 %v1340
    %1342 = vmatprep.subr.mxu0 0.0
    %1343 = vmatpush1.msra.mxu0 0.0
    %1344 = vmatprep.subr.mxu0 0.0
    %1345 = vmatpush1.msra.mxu0 0.0
    %1346 = vmatprep.subr.mxu0 0.0
    %1347 = vmatpush1.msra.mxu0 0.0
    %1348 = vmatprep.subr.mxu0 0.0
    %1349 = vmatpush1.msra.mxu0 0.0
    %1350 = vmatprep.subr.mxu0 0.0
    %1351 = vmatpush1.msra.mxu0 0.0
    %1352 = vmatprep.subr.mxu0 0.0
    %1353 = vmatpush1.msra.mxu0 0.0
    %1354 = vmatprep.subr.mxu0 0.0
    %1355 = vmatpush1.msra.mxu0 0.0
    %1356 = vmatprep.subr.mxu0 0.0
    %1357 = vmatpush1.msra.mxu0 0.0
    %1358 = vmatprep.subr.mxu0 0.0
    %1359 = vmatpush1.msra.mxu0 0.0
    %1360 = vmatprep.subr.mxu0 0.0
    %1361 = vmatpush1.msra.mxu0 0.0
    %1362 = vmatprep.subr.mxu0 0.0
    %1363 = vmatpush1.msra.mxu0 0.0
    %1364 = vmatprep.subr.mxu0 0.0
    %1365 = vmatpush1.msra.mxu0 0.0
    %1366 = vmatprep.subr.mxu0 0.0
    %1367 = vmatpush1.msra.mxu0 0.0
    %1368 = vmatprep.subr.mxu0 0.0
    %1369 = vmatpush1.msra.mxu0 0.0
    %1370 = vmatprep.subr.mxu0 0.0
    %1371 = vmatpush1.msra.mxu0 0.0
    %1372 = vmatprep.subr.mxu0 0.0
    %1373 = vmatpush1.msra.mxu0 0.0
    %1374 = vmatprep.subr.mxu0 0.0
    %1375 = vmatpush1.msra.mxu0 0.0
    %1376 = vmatprep.subr.mxu0 0.0
    %1377 = vmatpush1.msra.mxu0 0.0
    %1378 = vmatprep.subr.mxu0 0.0
    %1379 = vmatpush1.msra.mxu0 0.0
    %1380 = vmatprep.subr.mxu0 0.0
    %1381 = vmatpush1.msra.mxu0 0.0
    %1382 = vmatprep.subr.mxu0 0.0
    %1383 = vmatpush1.msra.mxu0 0.0
    %1384 = vmatprep.subr.mxu0 0.0
    %1385 = vmatpush1.msra.mxu0 0.0
    %1386 = vmatprep.subr.mxu0 0.0
    %1387 = vmatpush1.msra.mxu0 0.0
    %1388 = vmatprep.subr.mxu0 0.0
    %1389 = vmatpush1.msra.mxu0 0.0
    %1390 = vmatprep.subr.mxu0 0.0
    %1391 = vmatpush1.msra.mxu0 0.0
    %1392 = vmatprep.subr.mxu0 0.0
    %1393 = vmatpush1.msra.mxu0 0.0
    %1394 = vmatprep.subr.mxu0 0.0
    %1395 = vmatpush1.msra.mxu0 0.0
    %1396 = vmatprep.subr.mxu0 0.0
    %1397 = vmatpush1.msra.mxu0 0.0
    %1398 = vmatprep.subr.mxu0 0.0
    %1399 = vmatpush1.msra.mxu0 0.0
    %1400 = vmatprep.subr.mxu0 0.0
    %1401 = vmatpush1.msra.mxu0 0.0
    %1402 = vmatprep.mubr.f32.mxu0 0.0
    %v1403 = vand.u32 %v1155, 4294901760
    %v1404 = vsub.f32 %v1155, %v1403
    %1405 = vmatmul.mubr.f32.gmra.mrb[0].mxu0 %v1404
    %v1406 = vpop.f32.mrb[0].mxu0
    %v1407 = vadd.f32 %v1325, %v1406
    %v1408 = vpop.f32.mrb[0].mxu0
    %1409 = vmatprep.mubr.f32.mxu0 0.0
    %v1410 = vand.u32 %v1158, 4294901760
    %v1411 = vsub.f32 %v1158, %v1410
    %1412 = vmatmul.mubr.f32.gmra.mrb[0].mxu0 %v1411
    %v1413 = vpop.f32.mrb[0].mxu0
    %v1414 = vadd.f32 %v1331, %v1413
    %v1415 = vpop.f32.mrb[0].mxu0
    %1416 = vdwg.mxu0
    %1417 = vmatprep.subr.mxu0 0.0
    %v1418 = vand.u32 %v33, 4294901760
    %1419 = vmatpush1.msra.mxu0 %v1418
    %1420 = vmatprep.subr.mxu0 0.0
    %v1421 = vand.u32 %v34, 4294901760
    %1422 = vmatpush1.msra.mxu0 %v1421
    %1423 = vmatprep.subr.mxu0 0.0
    %1424 = vmatpush1.msra.mxu0 0.0
    %1425 = vmatprep.subr.mxu0 0.0
    %1426 = vmatpush1.msra.mxu0 0.0
    %1427 = vmatprep.subr.mxu0 0.0
    %1428 = vmatpush1.msra.mxu0 0.0
    %1429 = vmatprep.subr.mxu0 0.0
    %1430 = vmatpush1.msra.mxu0 0.0
    %1431 = vmatprep.subr.mxu0 0.0
    %1432 = vmatpush1.msra.mxu0 0.0
    %1433 = vmatprep.subr.mxu0 0.0
    %1434 = vmatpush1.msra.mxu0 0.0
    %1435 = vmatprep.subr.mxu0 0.0
    %1436 = vmatpush1.msra.mxu0 0.0
    %1437 = vmatprep.subr.mxu0 0.0
    %1438 = vmatpush1.msra.mxu0 0.0
    %1439 = vmatprep.subr.mxu0 0.0
    %1440 = vmatpush1.msra.mxu0 0.0
    %1441 = vmatprep.subr.mxu0 0.0
    %1442 = vmatpush1.msra.mxu0 0.0
    %1443 = vmatprep.subr.mxu0 0.0
    %1444 = vmatpush1.msra.mxu0 0.0
    %1445 = vmatprep.subr.mxu0 0.0
    %1446 = vmatpush1.msra.mxu0 0.0
    %1447 = vmatprep.subr.mxu0 0.0
    %1448 = vmatpush1.msra.mxu0 0.0
    %1449 = vmatprep.subr.mxu0 0.0
    %1450 = vmatpush1.msra.mxu0 0.0
    %1451 = vmatprep.subr.mxu0 0.0
    %1452 = vmatpush1.msra.mxu0 0.0
    %1453 = vmatprep.subr.mxu0 0.0
    %1454 = vmatpush1.msra.mxu0 0.0
    %1455 = vmatprep.subr.mxu0 0.0
    %1456 = vmatpush1.msra.mxu0 0.0
    %1457 = vmatprep.subr.mxu0 0.0
    %1458 = vmatpush1.msra.mxu0 0.0
    %1459 = vmatprep.subr.mxu0 0.0
    %1460 = vmatpush1.msra.mxu0 0.0
    %1461 = vmatprep.subr.mxu0 0.0
    %1462 = vmatpush1.msra.mxu0 0.0
    %1463 = vmatprep.subr.mxu0 0.0
    %1464 = vmatpush1.msra.mxu0 0.0
    %1465 = vmatprep.subr.mxu0 0.0
    %1466 = vmatpush1.msra.mxu0 0.0
    %1467 = vmatprep.subr.mxu0 0.0
    %1468 = vmatpush1.msra.mxu0 0.0
    %1469 = vmatprep.subr.mxu0 0.0
    %1470 = vmatpush1.msra.mxu0 0.0
    %1471 = vmatprep.subr.mxu0 0.0
    %1472 = vmatpush1.msra.mxu0 0.0
    %1473 = vmatprep.subr.mxu0 0.0
    %1474 = vmatpush1.msra.mxu0 0.0
    %1475 = vmatprep.subr.mxu0 0.0
    %1476 = vmatpush1.msra.mxu0 0.0
    %1477 = vmatprep.subr.mxu0 0.0
    %1478 = vmatpush1.msra.mxu0 0.0
    %1479 = vmatprep.subr.mxu0 0.0
    %1480 = vmatpush1.msra.mxu0 0.0
    %1481 = vmatprep.subr.mxu0 0.0
    %1482 = vmatpush1.msra.mxu0 0.0
    %1483 = vmatprep.mubr.f32.mxu0 0.0
    %v1484 = vand.u32 %v1155, 4294901760
    %v1485 = vsub.f32 %v1155, %v1484
    %v1486 = vand.u32 %v1485, 4294901760
    %1487 = vmatmul.mubr.f32.gmra.mrb[0].mxu0 %v1486
    %v1488 = vpop.f32.mrb[0].mxu0
    %v1489 = vadd.f32 %v1407, %v1488
    %v1490 = vpop.f32.mrb[0].mxu0
    %1491 = vmatprep.mubr.f32.mxu0 0.0
    %v1492 = vand.u32 %v1158, 4294901760
    %v1493 = vsub.f32 %v1158, %v1492
    %v1494 = vand.u32 %v1493, 4294901760
    %1495 = vmatmul.mubr.f32.gmra.mrb[0].mxu0 %v1494
    %v1496 = vpop.f32.mrb[0].mxu0
    %v1497 = vadd.f32 %v1414, %v1496
    %v1498 = vpop.f32.mrb[0].mxu0
    %1499 = vdwg.mxu0
    %1500 = vmatprep.subr.mxu0 0.0
    %v1501 = vand.u32 %v33, 4294901760
    %v1502 = vsub.f32 %v33, %v1501
    %v1503 = vand.u32 %v1502, 4294901760
    %1504 = vmatpush1.msra.mxu0 %v1503
    %1505 = vmatprep.subr.mxu0 0.0
    %v1506 = vand.u32 %v34, 4294901760
    %v1507 = vsub.f32 %v34, %v1506
    %v1508 = vand.u32 %v1507, 4294901760
    %1509 = vmatpush1.msra.mxu0 %v1508
    %1510 = vmatprep.subr.mxu0 0.0
    %1511 = vmatpush1.msra.mxu0 0.0
    %1512 = vmatprep.subr.mxu0 0.0
    %1513 = vmatpush1.msra.mxu0 0.0
    %1514 = vmatprep.subr.mxu0 0.0
    %1515 = vmatpush1.msra.mxu0 0.0
    %1516 = vmatprep.subr.mxu0 0.0
    %1517 = vmatpush1.msra.mxu0 0.0
    %1518 = vmatprep.subr.mxu0 0.0
    %1519 = vmatpush1.msra.mxu0 0.0
    %1520 = vmatprep.subr.mxu0 0.0
    %1521 = vmatpush1.msra.mxu0 0.0
    %1522 = vmatprep.subr.mxu0 0.0
    %1523 = vmatpush1.msra.mxu0 0.0
    %1524 = vmatprep.subr.mxu0 0.0
    %1525 = vmatpush1.msra.mxu0 0.0
    %1526 = vmatprep.subr.mxu0 0.0
    %1527 = vmatpush1.msra.mxu0 0.0
    %1528 = vmatprep.subr.mxu0 0.0
    %1529 = vmatpush1.msra.mxu0 0.0
    %1530 = vmatprep.subr.mxu0 0.0
    %1531 = vmatpush1.msra.mxu0 0.0
    %1532 = vmatprep.subr.mxu0 0.0
    %1533 = vmatpush1.msra.mxu0 0.0
    %1534 = vmatprep.subr.mxu0 0.0
    %1535 = vmatpush1.msra.mxu0 0.0
    %1536 = vmatprep.subr.mxu0 0.0
    %1537 = vmatpush1.msra.mxu0 0.0
    %1538 = vmatprep.subr.mxu0 0.0
    %1539 = vmatpush1.msra.mxu0 0.0
    %1540 = vmatprep.subr.mxu0 0.0
    %1541 = vmatpush1.msra.mxu0 0.0
    %1542 = vmatprep.subr.mxu0 0.0
    %1543 = vmatpush1.msra.mxu0 0.0
    %1544 = vmatprep.subr.mxu0 0.0
    %1545 = vmatpush1.msra.mxu0 0.0
    %1546 = vmatprep.subr.mxu0 0.0
    %1547 = vmatpush1.msra.mxu0 0.0
    %1548 = vmatprep.subr.mxu0 0.0
    %1549 = vmatpush1.msra.mxu0 0.0
    %1550 = vmatprep.subr.mxu0 0.0
    %1551 = vmatpush1.msra.mxu0 0.0
    %1552 = vmatprep.subr.mxu0 0.0
    %1553 = vmatpush1.msra.mxu0 0.0
    %1554 = vmatprep.subr.mxu0 0.0
    %1555 = vmatpush1.msra.mxu0 0.0
    %1556 = vmatprep.subr.mxu0 0.0
    %1557 = vmatpush1.msra.mxu0 0.0
    %1558 = vmatprep.subr.mxu0 0.0
    %1559 = vmatpush1.msra.mxu0 0.0
    %1560 = vmatprep.subr.mxu0 0.0
    %1561 = vmatpush1.msra.mxu0 0.0
    %1562 = vmatprep.subr.mxu0 0.0
    %1563 = vmatpush1.msra.mxu0 0.0
    %1564 = vmatprep.subr.mxu0 0.0
    %1565 = vmatpush1.msra.mxu0 0.0
    %1566 = vmatprep.subr.mxu0 0.0
    %1567 = vmatpush1.msra.mxu0 0.0
    %1568 = vmatprep.subr.mxu0 0.0
    %1569 = vmatpush1.msra.mxu0 0.0
    %1570 = vmatprep.mubr.f32.mxu0 0.0
    %v1571 = vand.u32 %v1155, 4294901760
    %1572 = vmatmul.mubr.f32.gmra.mrb[0].mxu0 %v1571
    %v1573 = vpop.f32.mrb[0].mxu0
    %v1574 = vadd.f32 %v1489, %v1573
    %v1575 = vpop.f32.mrb[0].mxu0
    %1576 = vmatprep.mubr.f32.mxu0 0.0
    %v1577 = vand.u32 %v1158, 4294901760
    %1578 = vmatmul.mubr.f32.gmra.mrb[0].mxu0 %v1577
    %v1579 = vpop.f32.mrb[0].mxu0
    %v1580 = vadd.f32 %v1497, %v1579
    %v1581 = vpop.f32.mrb[0].mxu0
    %1582 = vdwg.mxu0
    %1583 = vmatprep.subr.mxu0 0.0
    %v1584 = vand.u32 %v33, 4294901760
    %1585 = vmatpush1.msra.mxu0 %v1584
    %1586 = vmatprep.subr.mxu0 0.0
    %v1587 = vand.u32 %v34, 4294901760
    %1588 = vmatpush1.msra.mxu0 %v1587
    %1589 = vmatprep.subr.mxu0 0.0
    %1590 = vmatpush1.msra.mxu0 0.0
    %1591 = vmatprep.subr.mxu0 0.0
    %1592 = vmatpush1.msra.mxu0 0.0
    %1593 = vmatprep.subr.mxu0 0.0
    %1594 = vmatpush1.msra.mxu0 0.0
    %1595 = vmatprep.subr.mxu0 0.0
    %1596 = vmatpush1.msra.mxu0 0.0
    %1597 = vmatprep.subr.mxu0 0.0
    %1598 = vmatpush1.msra.mxu0 0.0
    %1599 = vmatprep.subr.mxu0 0.0
    %1600 = vmatpush1.msra.mxu0 0.0
    %1601 = vmatprep.subr.mxu0 0.0
    %1602 = vmatpush1.msra.mxu0 0.0
    %1603 = vmatprep.subr.mxu0 0.0
    %1604 = vmatpush1.msra.mxu0 0.0
    %1605 = vmatprep.subr.mxu0 0.0
    %1606 = vmatpush1.msra.mxu0 0.0
    %1607 = vmatprep.subr.mxu0 0.0
    %1608 = vmatpush1.msra.mxu0 0.0
    %1609 = vmatprep.subr.mxu0 0.0
    %1610 = vmatpush1.msra.mxu0 0.0
    %1611 = vmatprep.subr.mxu0 0.0
    %1612 = vmatpush1.msra.mxu0 0.0
    %1613 = vmatprep.subr.mxu0 0.0
    %1614 = vmatpush1.msra.mxu0 0.0
    %1615 = vmatprep.subr.mxu0 0.0
    %1616 = vmatpush1.msra.mxu0 0.0
    %1617 = vmatprep.subr.mxu0 0.0
    %1618 = vmatpush1.msra.mxu0 0.0
    %1619 = vmatprep.subr.mxu0 0.0
    %1620 = vmatpush1.msra.mxu0 0.0
    %1621 = vmatprep.subr.mxu0 0.0
    %1622 = vmatpush1.msra.mxu0 0.0
    %1623 = vmatprep.subr.mxu0 0.0
    %1624 = vmatpush1.msra.mxu0 0.0
    %1625 = vmatprep.subr.mxu0 0.0
    %1626 = vmatpush1.msra.mxu0 0.0
    %1627 = vmatprep.subr.mxu0 0.0
    %1628 = vmatpush1.msra.mxu0 0.0
    %1629 = vmatprep.subr.mxu0 0.0
    %1630 = vmatpush1.msra.mxu0 0.0
    %1631 = vmatprep.subr.mxu0 0.0
    %1632 = vmatpush1.msra.mxu0 0.0
    %1633 = vmatprep.subr.mxu0 0.0
    %1634 = vmatpush1.msra.mxu0 0.0
    %1635 = vmatprep.subr.mxu0 0.0
    %1636 = vmatpush1.msra.mxu0 0.0
    %1637 = vmatprep.subr.mxu0 0.0
    %1638 = vmatpush1.msra.mxu0 0.0
    %1639 = vmatprep.subr.mxu0 0.0
    %1640 = vmatpush1.msra.mxu0 0.0
    %1641 = vmatprep.subr.mxu0 0.0
    %1642 = vmatpush1.msra.mxu0 0.0
    %1643 = vmatprep.subr.mxu0 0.0
    %1644 = vmatpush1.msra.mxu0 0.0
    %1645 = vmatprep.subr.mxu0 0.0
    %1646 = vmatpush1.msra.mxu0 0.0
    %1647 = vmatprep.subr.mxu0 0.0
    %1648 = vmatpush1.msra.mxu0 0.0
    %1649 = vmatprep.mubr.f32.mxu0 0.0
    %v1650 = vand.u32 %v1155, 4294901760
    %1651 = vmatmul.mubr.f32.gmra.mrb[0].mxu0 %v1650
    %v1652 = vpop.f32.mrb[0].mxu0
    %v1653 = vadd.f32 %v1574, %v1652
    %v1654 = vpop.f32.mrb[0].mxu0
    %1655 = vmatprep.mubr.f32.mxu0 0.0
    %v1656 = vand.u32 %v1158, 4294901760
    %1657 = vmatmul.mubr.f32.gmra.mrb[0].mxu0 %v1656
    %v1658 = vpop.f32.mrb[0].mxu0
    %v1659 = vadd.f32 %v1580, %v1658
    %v1660 = vpop.f32.mrb[0].mxu0
    %1661 = vdwg.mxu0
    %1662 = vmatprep.subr.mxu0 0.0
    %v1663 = vand.u32 %v1653, 4294901760
    %1664 = vmatpush1.msra.mxu0 %v1663
    %1665 = vmatprep.subr.mxu0 0.0
    %v1666 = vand.u32 %v1659, 4294901760
    %1667 = vmatpush1.msra.mxu0 %v1666
    %1668 = vmatprep.subr.mxu0 0.0
    %1669 = vmatpush1.msra.mxu0 0.0
    %1670 = vmatprep.subr.mxu0 0.0
    %1671 = vmatpush1.msra.mxu0 0.0
    %1672 = vmatprep.subr.mxu0 0.0
    %1673 = vmatpush1.msra.mxu0 0.0
    %1674 = vmatprep.subr.mxu0 0.0
    %1675 = vmatpush1.msra.mxu0 0.0
    %1676 = vmatprep.subr.mxu0 0.0
    %1677 = vmatpush1.msra.mxu0 0.0
    %1678 = vmatprep.subr.mxu0 0.0
    %1679 = vmatpush1.msra.mxu0 0.0
    %1680 = vmatprep.subr.mxu0 0.0
    %1681 = vmatpush1.msra.mxu0 0.0
    %1682 = vmatprep.subr.mxu0 0.0
    %1683 = vmatpush1.msra.mxu0 0.0
    %1684 = vmatprep.subr.mxu0 0.0
    %1685 = vmatpush1.msra.mxu0 0.0
    %1686 = vmatprep.subr.mxu0 0.0
    %1687 = vmatpush1.msra.mxu0 0.0
    %1688 = vmatprep.subr.mxu0 0.0
    %1689 = vmatpush1.msra.mxu0 0.0
    %1690 = vmatprep.subr.mxu0 0.0
    %1691 = vmatpush1.msra.mxu0 0.0
    %1692 = vmatprep.subr.mxu0 0.0
    %1693 = vmatpush1.msra.mxu0 0.0
    %1694 = vmatprep.subr.mxu0 0.0
    %1695 = vmatpush1.msra.mxu0 0.0
    %1696 = vmatprep.subr.mxu0 0.0
    %1697 = vmatpush1.msra.mxu0 0.0
    %1698 = vmatprep.subr.mxu0 0.0
    %1699 = vmatpush1.msra.mxu0 0.0
    %1700 = vmatprep.subr.mxu0 0.0
    %1701 = vmatpush1.msra.mxu0 0.0
    %1702 = vmatprep.subr.mxu0 0.0
    %1703 = vmatpush1.msra.mxu0 0.0
    %1704 = vmatprep.subr.mxu0 0.0
    %1705 = vmatpush1.msra.mxu0 0.0
    %1706 = vmatprep.subr.mxu0 0.0
    %1707 = vmatpush1.msra.mxu0 0.0
    %1708 = vmatprep.subr.mxu0 0.0
    %1709 = vmatpush1.msra.mxu0 0.0
    %1710 = vmatprep.subr.mxu0 0.0
    %1711 = vmatpush1.msra.mxu0 0.0
    %1712 = vmatprep.subr.mxu0 0.0
    %1713 = vmatpush1.msra.mxu0 0.0
    %1714 = vmatprep.subr.mxu0 0.0
    %1715 = vmatpush1.msra.mxu0 0.0
    %1716 = vmatprep.subr.mxu0 0.0
    %1717 = vmatpush1.msra.mxu0 0.0
    %1718 = vmatprep.subr.mxu0 0.0
    %1719 = vmatpush1.msra.mxu0 0.0
    %1720 = vmatprep.subr.mxu0 0.0
    %1721 = vmatpush1.msra.mxu0 0.0
    %1722 = vmatprep.subr.mxu0 0.0
    %1723 = vmatpush1.msra.mxu0 0.0
    %1724 = vmatprep.subr.mxu0 0.0
    %1725 = vmatpush1.msra.mxu0 0.0
    %1726 = vmatprep.subr.mxu0 0.0
    %1727 = vmatpush1.msra.mxu0 0.0
    %1728 = vmatprep.mubr.f32.mxu0 0.0
    %v1729 = vand.u32 %v547, 4294901760
    %v1730 = vsub.f32 %v547, %v1729
    %v1731 = vand.u32 %v1730, 4294901760
    %v1732 = vsub.f32 %v1730, %v1731
    %v1733 = vand.u32 %v1732, 4294901760
    %1734 = vmatmul.mubr.f32.gmra.mrb[0].mxu0 %v1733
    %v1735 = vpop.f32.mrb[0].mxu0
    %v1736 = vadd.f32 0.0, %v1735
    %v1737 = vpop.f32.mrb[0].mxu0
    %1738 = vmatprep.mubr.f32.mxu0 0.0
    %v1739 = vand.u32 %v550, 4294901760
    %v1740 = vsub.f32 %v550, %v1739
    %v1741 = vand.u32 %v1740, 4294901760
    %v1742 = vsub.f32 %v1740, %v1741
    %v1743 = vand.u32 %v1742, 4294901760
    %1744 = vmatmul.mubr.f32.gmra.mrb[0].mxu0 %v1743
    %v1745 = vpop.f32.mrb[0].mxu0
    %v1746 = vadd.f32 0.0, %v1745
    %v1747 = vpop.f32.mrb[0].mxu0
    %1748 = vmatprep.mubr.f32.mxu0 0.0
    %v1749 = vand.u32 %v553, 4294901760
    %v1750 = vsub.f32 %v553, %v1749
    %v1751 = vand.u32 %v1750, 4294901760
    %v1752 = vsub.f32 %v1750, %v1751
    %v1753 = vand.u32 %v1752, 4294901760
    %1754 = vmatmul.mubr.f32.gmra.mrb[0].mxu0 %v1753
    %v1755 = vpop.f32.mrb[0].mxu0
    %v1756 = vadd.f32 0.0, %v1755
    %v1757 = vpop.f32.mrb[0].mxu0
    %1758 = vmatprep.mubr.f32.mxu0 0.0
    %v1759 = vand.u32 %v556, 4294901760
    %v1760 = vsub.f32 %v556, %v1759
    %v1761 = vand.u32 %v1760, 4294901760
    %v1762 = vsub.f32 %v1760, %v1761
    %v1763 = vand.u32 %v1762, 4294901760
    %1764 = vmatmul.mubr.f32.gmra.mrb[0].mxu0 %v1763
    %v1765 = vpop.f32.mrb[0].mxu0
    %v1766 = vadd.f32 0.0, %v1765
    %v1767 = vpop.f32.mrb[0].mxu0
    %1768 = vdwg.mxu0
    %1769 = vmatprep.subr.mxu0 0.0
    %v1770 = vand.u32 %v1653, 4294901760
    %v1771 = vsub.f32 %v1653, %v1770
    %v1772 = vand.u32 %v1771, 4294901760
    %v1773 = vsub.f32 %v1771, %v1772
    %v1774 = vand.u32 %v1773, 4294901760
    %1775 = vmatpush1.msra.mxu0 %v1774
    %1776 = vmatprep.subr.mxu0 0.0
    %v1777 = vand.u32 %v1659, 4294901760
    %v1778 = vsub.f32 %v1659, %v1777
    %v1779 = vand.u32 %v1778, 4294901760
    %v1780 = vsub.f32 %v1778, %v1779
    %v1781 = vand.u32 %v1780, 4294901760
    %1782 = vmatpush1.msra.mxu0 %v1781
    %1783 = vmatprep.subr.mxu0 0.0
    %1784 = vmatpush1.msra.mxu0 0.0
    %1785 = vmatprep.subr.mxu0 0.0
    %1786 = vmatpush1.msra.mxu0 0.0
    %1787 = vmatprep.subr.mxu0 0.0
    %1788 = vmatpush1.msra.mxu0 0.0
    %1789 = vmatprep.subr.mxu0 0.0
    %1790 = vmatpush1.msra.mxu0 0.0
    %1791 = vmatprep.subr.mxu0 0.0
    %1792 = vmatpush1.msra.mxu0 0.0
    %1793 = vmatprep.subr.mxu0 0.0
    %1794 = vmatpush1.msra.mxu0 0.0
    %1795 = vmatprep.subr.mxu0 0.0
    %1796 = vmatpush1.msra.mxu0 0.0
    %1797 = vmatprep.subr.mxu0 0.0
    %1798 = vmatpush1.msra.mxu0 0.0
    %1799 = vmatprep.subr.mxu0 0.0
    %1800 = vmatpush1.msra.mxu0 0.0
    %1801 = vmatprep.subr.mxu0 0.0
    %1802 = vmatpush1.msra.mxu0 0.0
    %1803 = vmatprep.subr.mxu0 0.0
    %1804 = vmatpush1.msra.mxu0 0.0
    %1805 = vmatprep.subr.mxu0 0.0
    %1806 = vmatpush1.msra.mxu0 0.0
    %1807 = vmatprep.subr.mxu0 0.0
    %1808 = vmatpush1.msra.mxu0 0.0
    %1809 = vmatprep.subr.mxu0 0.0
    %1810 = vmatpush1.msra.mxu0 0.0
    %1811 = vmatprep.subr.mxu0 0.0
    %1812 = vmatpush1.msra.mxu0 0.0
    %1813 = vmatprep.subr.mxu0 0.0
    %1814 = vmatpush1.msra.mxu0 0.0
    %1815 = vmatprep.subr.mxu0 0.0
    %1816 = vmatpush1.msra.mxu0 0.0
    %1817 = vmatprep.subr.mxu0 0.0
    %1818 = vmatpush1.msra.mxu0 0.0
    %1819 = vmatprep.subr.mxu0 0.0
    %1820 = vmatpush1.msra.mxu0 0.0
    %1821 = vmatprep.subr.mxu0 0.0
    %1822 = vmatpush1.msra.mxu0 0.0
    %1823 = vmatprep.subr.mxu0 0.0
    %1824 = vmatpush1.msra.mxu0 0.0
    %1825 = vmatprep.subr.mxu0 0.0
    %1826 = vmatpush1.msra.mxu0 0.0
    %1827 = vmatprep.subr.mxu0 0.0
    %1828 = vmatpush1.msra.mxu0 0.0
    %1829 = vmatprep.subr.mxu0 0.0
    %1830 = vmatpush1.msra.mxu0 0.0
    %1831 = vmatprep.subr.mxu0 0.0
    %1832 = vmatpush1.msra.mxu0 0.0
    %1833 = vmatprep.subr.mxu0 0.0
    %1834 = vmatpush1.msra.mxu0 0.0
    %1835 = vmatprep.subr.mxu0 0.0
    %1836 = vmatpush1.msra.mxu0 0.0
    %1837 = vmatprep.subr.mxu0 0.0
    %1838 = vmatpush1.msra.mxu0 0.0
    %1839 = vmatprep.subr.mxu0 0.0
    %1840 = vmatpush1.msra.mxu0 0.0
    %1841 = vmatprep.subr.mxu0 0.0
    %1842 = vmatpush1.msra.mxu0 0.0
    %1843 = vmatprep.mubr.f32.mxu0 0.0
    %v1844 = vand.u32 %v547, 4294901760
    %1845 = vmatmul.mubr.f32.gmra.mrb[0].mxu0 %v1844
    %v1846 = vpop.f32.mrb[0].mxu0
    %v1847 = vadd.f32 %v1736, %v1846
    %v1848 = vpop.f32.mrb[0].mxu0
    %1849 = vmatprep.mubr.f32.mxu0 0.0
    %v1850 = vand.u32 %v550, 4294901760
    %1851 = vmatmul.mubr.f32.gmra.mrb[0].mxu0 %v1850
    %v1852 = vpop.f32.mrb[0].mxu0
    %v1853 = vadd.f32 %v1746, %v1852
    %v1854 = vpop.f32.mrb[0].mxu0
    %1855 = vmatprep.mubr.f32.mxu0 0.0
    %v1856 = vand.u32 %v553, 4294901760
    %1857 = vmatmul.mubr.f32.gmra.mrb[0].mxu0 %v1856
    %v1858 = vpop.f32.mrb[0].mxu0
    %v1859 = vadd.f32 %v1756, %v1858
    %v1860 = vpop.f32.mrb[0].mxu0
    %1861 = vmatprep.mubr.f32.mxu0 0.0
    %v1862 = vand.u32 %v556, 4294901760
    %1863 = vmatmul.mubr.f32.gmra.mrb[0].mxu0 %v1862
    %v1864 = vpop.f32.mrb[0].mxu0
    %v1865 = vadd.f32 %v1766, %v1864
    %v1866 = vpop.f32.mrb[0].mxu0
    %1867 = vdwg.mxu0
    %1868 = vmatprep.subr.mxu0 0.0
    %v1869 = vand.u32 %v1653, 4294901760
    %v1870 = vsub.f32 %v1653, %v1869
    %1871 = vmatpush1.msra.mxu0 %v1870
    %1872 = vmatprep.subr.mxu0 0.0
    %v1873 = vand.u32 %v1659, 4294901760
    %v1874 = vsub.f32 %v1659, %v1873
    %1875 = vmatpush1.msra.mxu0 %v1874
    %1876 = vmatprep.subr.mxu0 0.0
    %1877 = vmatpush1.msra.mxu0 0.0
    %1878 = vmatprep.subr.mxu0 0.0
    %1879 = vmatpush1.msra.mxu0 0.0
    %1880 = vmatprep.subr.mxu0 0.0
    %1881 = vmatpush1.msra.mxu0 0.0
    %1882 = vmatprep.subr.mxu0 0.0
    %1883 = vmatpush1.msra.mxu0 0.0
    %1884 = vmatprep.subr.mxu0 0.0
    %1885 = vmatpush1.msra.mxu0 0.0
    %1886 = vmatprep.subr.mxu0 0.0
    %1887 = vmatpush1.msra.mxu0 0.0
    %1888 = vmatprep.subr.mxu0 0.0
    %1889 = vmatpush1.msra.mxu0 0.0
    %1890 = vmatprep.subr.mxu0 0.0
    %1891 = vmatpush1.msra.mxu0 0.0
    %1892 = vmatprep.subr.mxu0 0.0
    %1893 = vmatpush1.msra.mxu0 0.0
    %1894 = vmatprep.subr.mxu0 0.0
    %1895 = vmatpush1.msra.mxu0 0.0
    %1896 = vmatprep.subr.mxu0 0.0
    %1897 = vmatpush1.msra.mxu0 0.0
    %1898 = vmatprep.subr.mxu0 0.0
    %1899 = vmatpush1.msra.mxu0 0.0
    %1900 = vmatprep.subr.mxu0 0.0
    %1901 = vmatpush1.msra.mxu0 0.0
    %1902 = vmatprep.subr.mxu0 0.0
    %1903 = vmatpush1.msra.mxu0 0.0
    %1904 = vmatprep.subr.mxu0 0.0
    %1905 = vmatpush1.msra.mxu0 0.0
    %1906 = vmatprep.subr.mxu0 0.0
    %1907 = vmatpush1.msra.mxu0 0.0
    %1908 = vmatprep.subr.mxu0 0.0
    %1909 = vmatpush1.msra.mxu0 0.0
    %1910 = vmatprep.subr.mxu0 0.0
    %1911 = vmatpush1.msra.mxu0 0.0
    %1912 = vmatprep.subr.mxu0 0.0
    %1913 = vmatpush1.msra.mxu0 0.0
    %1914 = vmatprep.subr.mxu0 0.0
    %1915 = vmatpush1.msra.mxu0 0.0
    %1916 = vmatprep.subr.mxu0 0.0
    %1917 = vmatpush1.msra.mxu0 0.0
    %1918 = vmatprep.subr.mxu0 0.0
    %1919 = vmatpush1.msra.mxu0 0.0
    %1920 = vmatprep.subr.mxu0 0.0
    %1921 = vmatpush1.msra.mxu0 0.0
    %1922 = vmatprep.subr.mxu0 0.0
    %1923 = vmatpush1.msra.mxu0 0.0
    %1924 = vmatprep.subr.mxu0 0.0
    %1925 = vmatpush1.msra.mxu0 0.0
    %1926 = vmatprep.subr.mxu0 0.0
    %1927 = vmatpush1.msra.mxu0 0.0
    %1928 = vmatprep.subr.mxu0 0.0
    %1929 = vmatpush1.msra.mxu0 0.0
    %1930 = vmatprep.subr.mxu0 0.0
    %1931 = vmatpush1.msra.mxu0 0.0
    %1932 = vmatprep.subr.mxu0 0.0
    %1933 = vmatpush1.msra.mxu0 0.0
    %1934 = vmatprep.subr.mxu0 0.0
    %1935 = vmatpush1.msra.mxu0 0.0
    %1936 = vmatprep.mubr.f32.mxu0 0.0
    %v1937 = vand.u32 %v547, 4294901760
    %v1938 = vsub.f32 %v547, %v1937
    %1939 = vmatmul.mubr.f32.gmra.mrb[0].mxu0 %v1938
    %v1940 = vpop.f32.mrb[0].mxu0
    %v1941 = vadd.f32 %v1847, %v1940
    %v1942 = vpop.f32.mrb[0].mxu0
    %1943 = vmatprep.mubr.f32.mxu0 0.0
    %v1944 = vand.u32 %v550, 4294901760
    %v1945 = vsub.f32 %v550, %v1944
    %1946 = vmatmul.mubr.f32.gmra.mrb[0].mxu0 %v1945
    %v1947 = vpop.f32.mrb[0].mxu0
    %v1948 = vadd.f32 %v1853, %v1947
    %v1949 = vpop.f32.mrb[0].mxu0
    %1950 = vmatprep.mubr.f32.mxu0 0.0
    %v1951 = vand.u32 %v553, 4294901760
    %v1952 = vsub.f32 %v553, %v1951
    %1953 = vmatmul.mubr.f32.gmra.mrb[0].mxu0 %v1952
    %v1954 = vpop.f32.mrb[0].mxu0
    %v1955 = vadd.f32 %v1859, %v1954
    %v1956 = vpop.f32.mrb[0].mxu0
    %1957 = vmatprep.mubr.f32.mxu0 0.0
    %v1958 = vand.u32 %v556, 4294901760
    %v1959 = vsub.f32 %v556, %v1958
    %1960 = vmatmul.mubr.f32.gmra.mrb[0].mxu0 %v1959
    %v1961 = vpop.f32.mrb[0].mxu0
    %v1962 = vadd.f32 %v1865, %v1961
    %v1963 = vpop.f32.mrb[0].mxu0
    %1964 = vdwg.mxu0
    %1965 = vmatprep.subr.mxu0 0.0
    %v1966 = vand.u32 %v1653, 4294901760
    %1967 = vmatpush1.msra.mxu0 %v1966
    %1968 = vmatprep.subr.mxu0 0.0
    %v1969 = vand.u32 %v1659, 4294901760
    %1970 = vmatpush1.msra.mxu0 %v1969
    %1971 = vmatprep.subr.mxu0 0.0
    %1972 = vmatpush1.msra.mxu0 0.0
    %1973 = vmatprep.subr.mxu0 0.0
    %1974 = vmatpush1.msra.mxu0 0.0
    %1975 = vmatprep.subr.mxu0 0.0
    %1976 = vmatpush1.msra.mxu0 0.0
    %1977 = vmatprep.subr.mxu0 0.0
    %1978 = vmatpush1.msra.mxu0 0.0
    %1979 = vmatprep.subr.mxu0 0.0
    %1980 = vmatpush1.msra.mxu0 0.0
    %1981 = vmatprep.subr.mxu0 0.0
    %1982 = vmatpush1.msra.mxu0 0.0
    %1983 = vmatprep.subr.mxu0 0.0
    %1984 = vmatpush1.msra.mxu0 0.0
    %1985 = vmatprep.subr.mxu0 0.0
    %1986 = vmatpush1.msra.mxu0 0.0
    %1987 = vmatprep.subr.mxu0 0.0
    %1988 = vmatpush1.msra.mxu0 0.0
    %1989 = vmatprep.subr.mxu0 0.0
    %1990 = vmatpush1.msra.mxu0 0.0
    %1991 = vmatprep.subr.mxu0 0.0
    %1992 = vmatpush1.msra.mxu0 0.0
    %1993 = vmatprep.subr.mxu0 0.0
    %1994 = vmatpush1.msra.mxu0 0.0
    %1995 = vmatprep.subr.mxu0 0.0
    %1996 = vmatpush1.msra.mxu0 0.0
    %1997 = vmatprep.subr.mxu0 0.0
    %1998 = vmatpush1.msra.mxu0 0.0
    %1999 = vmatprep.subr.mxu0 0.0
    %2000 = vmatpush1.msra.mxu0 0.0
    %2001 = vmatprep.subr.mxu0 0.0
    %2002 = vmatpush1.msra.mxu0 0.0
    %2003 = vmatprep.subr.mxu0 0.0
    %2004 = vmatpush1.msra.mxu0 0.0
    %2005 = vmatprep.subr.mxu0 0.0
    %2006 = vmatpush1.msra.mxu0 0.0
    %2007 = vmatprep.subr.mxu0 0.0
    %2008 = vmatpush1.msra.mxu0 0.0
    %2009 = vmatprep.subr.mxu0 0.0
    %2010 = vmatpush1.msra.mxu0 0.0
    %2011 = vmatprep.subr.mxu0 0.0
    %2012 = vmatpush1.msra.mxu0 0.0
    %2013 = vmatprep.subr.mxu0 0.0
    %2014 = vmatpush1.msra.mxu0 0.0
    %2015 = vmatprep.subr.mxu0 0.0
    %2016 = vmatpush1.msra.mxu0 0.0
    %2017 = vmatprep.subr.mxu0 0.0
    %2018 = vmatpush1.msra.mxu0 0.0
    %2019 = vmatprep.subr.mxu0 0.0
    %2020 = vmatpush1.msra.mxu0 0.0
    %2021 = vmatprep.subr.mxu0 0.0
    %2022 = vmatpush1.msra.mxu0 0.0
    %2023 = vmatprep.subr.mxu0 0.0
    %2024 = vmatpush1.msra.mxu0 0.0
    %2025 = vmatprep.subr.mxu0 0.0
    %2026 = vmatpush1.msra.mxu0 0.0
    %2027 = vmatprep.subr.mxu0 0.0
    %2028 = vmatpush1.msra.mxu0 0.0
    %2029 = vmatprep.subr.mxu0 0.0
    %2030 = vmatpush1.msra.mxu0 0.0
    %2031 = vmatprep.mubr.f32.mxu0 0.0
    %v2032 = vand.u32 %v547, 4294901760
    %v2033 = vsub.f32 %v547, %v2032
    %v2034 = vand.u32 %v2033, 4294901760
    %2035 = vmatmul.mubr.f32.gmra.mrb[0].mxu0 %v2034
    %v2036 = vpop.f32.mrb[0].mxu0
    %v2037 = vadd.f32 %v1941, %v2036
    %v2038 = vpop.f32.mrb[0].mxu0
    %2039 = vmatprep.mubr.f32.mxu0 0.0
    %v2040 = vand.u32 %v550, 4294901760
    %v2041 = vsub.f32 %v550, %v2040
    %v2042 = vand.u32 %v2041, 4294901760
    %2043 = vmatmul.mubr.f32.gmra.mrb[0].mxu0 %v2042
    %v2044 = vpop.f32.mrb[0].mxu0
    %v2045 = vadd.f32 %v1948, %v2044
    %v2046 = vpop.f32.mrb[0].mxu0
    %2047 = vmatprep.mubr.f32.mxu0 0.0
    %v2048 = vand.u32 %v553, 4294901760
    %v2049 = vsub.f32 %v553, %v2048
    %v2050 = vand.u32 %v2049, 4294901760
    %2051 = vmatmul.mubr.f32.gmra.mrb[0].mxu0 %v2050
    %v2052 = vpop.f32.mrb[0].mxu0
    %v2053 = vadd.f32 %v1955, %v2052
    %v2054 = vpop.f32.mrb[0].mxu0
    %2055 = vmatprep.mubr.f32.mxu0 0.0
    %v2056 = vand.u32 %v556, 4294901760
    %v2057 = vsub.f32 %v556, %v2056
    %v2058 = vand.u32 %v2057, 4294901760
    %2059 = vmatmul.mubr.f32.gmra.mrb[0].mxu0 %v2058
    %v2060 = vpop.f32.mrb[0].mxu0
    %v2061 = vadd.f32 %v1962, %v2060
    %v2062 = vpop.f32.mrb[0].mxu0
    %2063 = vdwg.mxu0
    %2064 = vmatprep.subr.mxu0 0.0
    %v2065 = vand.u32 %v1653, 4294901760
    %v2066 = vsub.f32 %v1653, %v2065
    %v2067 = vand.u32 %v2066, 4294901760
    %2068 = vmatpush1.msra.mxu0 %v2067
    %2069 = vmatprep.subr.mxu0 0.0
    %v2070 = vand.u32 %v1659, 4294901760
    %v2071 = vsub.f32 %v1659, %v2070
    %v2072 = vand.u32 %v2071, 4294901760
    %2073 = vmatpush1.msra.mxu0 %v2072
    %2074 = vmatprep.subr.mxu0 0.0
    %2075 = vmatpush1.msra.mxu0 0.0
    %2076 = vmatprep.subr.mxu0 0.0
    %2077 = vmatpush1.msra.mxu0 0.0
    %2078 = vmatprep.subr.mxu0 0.0
    %2079 = vmatpush1.msra.mxu0 0.0
    %2080 = vmatprep.subr.mxu0 0.0
    %2081 = vmatpush1.msra.mxu0 0.0
    %2082 = vmatprep.subr.mxu0 0.0
    %2083 = vmatpush1.msra.mxu0 0.0
    %2084 = vmatprep.subr.mxu0 0.0
    %2085 = vmatpush1.msra.mxu0 0.0
    %2086 = vmatprep.subr.mxu0 0.0
    %2087 = vmatpush1.msra.mxu0 0.0
    %2088 = vmatprep.subr.mxu0 0.0
    %2089 = vmatpush1.msra.mxu0 0.0
    %2090 = vmatprep.subr.mxu0 0.0
    %2091 = vmatpush1.msra.mxu0 0.0
    %2092 = vmatprep.subr.mxu0 0.0
    %2093 = vmatpush1.msra.mxu0 0.0
    %2094 = vmatprep.subr.mxu0 0.0
    %2095 = vmatpush1.msra.mxu0 0.0
    %2096 = vmatprep.subr.mxu0 0.0
    %2097 = vmatpush1.msra.mxu0 0.0
    %2098 = vmatprep.subr.mxu0 0.0
    %2099 = vmatpush1.msra.mxu0 0.0
    %2100 = vmatprep.subr.mxu0 0.0
    %2101 = vmatpush1.msra.mxu0 0.0
    %2102 = vmatprep.subr.mxu0 0.0
    %2103 = vmatpush1.msra.mxu0 0.0
    %2104 = vmatprep.subr.mxu0 0.0
    %2105 = vmatpush1.msra.mxu0 0.0
    %2106 = vmatprep.subr.mxu0 0.0
    %2107 = vmatpush1.msra.mxu0 0.0
    %2108 = vmatprep.subr.mxu0 0.0
    %2109 = vmatpush1.msra.mxu0 0.0
    %2110 = vmatprep.subr.mxu0 0.0
    %2111 = vmatpush1.msra.mxu0 0.0
    %2112 = vmatprep.subr.mxu0 0.0
    %2113 = vmatpush1.msra.mxu0 0.0
    %2114 = vmatprep.subr.mxu0 0.0
    %2115 = vmatpush1.msra.mxu0 0.0
    %2116 = vmatprep.subr.mxu0 0.0
    %2117 = vmatpush1.msra.mxu0 0.0
    %2118 = vmatprep.subr.mxu0 0.0
    %2119 = vmatpush1.msra.mxu0 0.0
    %2120 = vmatprep.subr.mxu0 0.0
    %2121 = vmatpush1.msra.mxu0 0.0
    %2122 = vmatprep.subr.mxu0 0.0
    %2123 = vmatpush1.msra.mxu0 0.0
    %2124 = vmatprep.subr.mxu0 0.0
    %2125 = vmatpush1.msra.mxu0 0.0
    %2126 = vmatprep.subr.mxu0 0.0
    %2127 = vmatpush1.msra.mxu0 0.0
    %2128 = vmatprep.subr.mxu0 0.0
    %2129 = vmatpush1.msra.mxu0 0.0
    %2130 = vmatprep.subr.mxu0 0.0
    %2131 = vmatpush1.msra.mxu0 0.0
    %2132 = vmatprep.subr.mxu0 0.0
    %2133 = vmatpush1.msra.mxu0 0.0
    %2134 = vmatprep.mubr.f32.mxu0 0.0
    %v2135 = vand.u32 %v547, 4294901760
    %2136 = vmatmul.mubr.f32.gmra.mrb[0].mxu0 %v2135
    %v2137 = vpop.f32.mrb[0].mxu0
    %v2138 = vadd.f32 %v2037, %v2137
    %v2139 = vpop.f32.mrb[0].mxu0
    %2140 = vmatprep.mubr.f32.mxu0 0.0
    %v2141 = vand.u32 %v550, 4294901760
    %2142 = vmatmul.mubr.f32.gmra.mrb[0].mxu0 %v2141
    %v2143 = vpop.f32.mrb[0].mxu0
    %v2144 = vadd.f32 %v2045, %v2143
    %v2145 = vpop.f32.mrb[0].mxu0
    %2146 = vmatprep.mubr.f32.mxu0 0.0
    %v2147 = vand.u32 %v553, 4294901760
    %2148 = vmatmul.mubr.f32.gmra.mrb[0].mxu0 %v2147
    %v2149 = vpop.f32.mrb[0].mxu0
    %v2150 = vadd.f32 %v2053, %v2149
    %v2151 = vpop.f32.mrb[0].mxu0
    %2152 = vmatprep.mubr.f32.mxu0 0.0
    %v2153 = vand.u32 %v556, 4294901760
    %2154 = vmatmul.mubr.f32.gmra.mrb[0].mxu0 %v2153
    %v2155 = vpop.f32.mrb[0].mxu0
    %v2156 = vadd.f32 %v2061, %v2155
    %v2157 = vpop.f32.mrb[0].mxu0
    %2158 = vdwg.mxu0
    %2159 = vmatprep.subr.mxu0 0.0
    %v2160 = vand.u32 %v1653, 4294901760
    %2161 = vmatpush1.msra.mxu0 %v2160
    %2162 = vmatprep.subr.mxu0 0.0
    %v2163 = vand.u32 %v1659, 4294901760
    %2164 = vmatpush1.msra.mxu0 %v2163
    %2165 = vmatprep.subr.mxu0 0.0
    %2166 = vmatpush1.msra.mxu0 0.0
    %2167 = vmatprep.subr.mxu0 0.0
    %2168 = vmatpush1.msra.mxu0 0.0
    %2169 = vmatprep.subr.mxu0 0.0
    %2170 = vmatpush1.msra.mxu0 0.0
    %2171 = vmatprep.subr.mxu0 0.0
    %2172 = vmatpush1.msra.mxu0 0.0
    %2173 = vmatprep.subr.mxu0 0.0
    %2174 = vmatpush1.msra.mxu0 0.0
    %2175 = vmatprep.subr.mxu0 0.0
    %2176 = vmatpush1.msra.mxu0 0.0
    %2177 = vmatprep.subr.mxu0 0.0
    %2178 = vmatpush1.msra.mxu0 0.0
    %2179 = vmatprep.subr.mxu0 0.0
    %2180 = vmatpush1.msra.mxu0 0.0
    %2181 = vmatprep.subr.mxu0 0.0
    %2182 = vmatpush1.msra.mxu0 0.0
    %2183 = vmatprep.subr.mxu0 0.0
    %2184 = vmatpush1.msra.mxu0 0.0
    %2185 = vmatprep.subr.mxu0 0.0
    %2186 = vmatpush1.msra.mxu0 0.0
    %2187 = vmatprep.subr.mxu0 0.0
    %2188 = vmatpush1.msra.mxu0 0.0
    %2189 = vmatprep.subr.mxu0 0.0
    %2190 = vmatpush1.msra.mxu0 0.0
    %2191 = vmatprep.subr.mxu0 0.0
    %2192 = vmatpush1.msra.mxu0 0.0
    %2193 = vmatprep.subr.mxu0 0.0
    %2194 = vmatpush1.msra.mxu0 0.0
    %2195 = vmatprep.subr.mxu0 0.0
    %2196 = vmatpush1.msra.mxu0 0.0
    %2197 = vmatprep.subr.mxu0 0.0
    %2198 = vmatpush1.msra.mxu0 0.0
    %2199 = vmatprep.subr.mxu0 0.0
    %2200 = vmatpush1.msra.mxu0 0.0
    %2201 = vmatprep.subr.mxu0 0.0
    %2202 = vmatpush1.msra.mxu0 0.0
    %2203 = vmatprep.subr.mxu0 0.0
    %2204 = vmatpush1.msra.mxu0 0.0
    %2205 = vmatprep.subr.mxu0 0.0
    %2206 = vmatpush1.msra.mxu0 0.0
    %2207 = vmatprep.subr.mxu0 0.0
    %2208 = vmatpush1.msra.mxu0 0.0
    %2209 = vmatprep.subr.mxu0 0.0
    %2210 = vmatpush1.msra.mxu0 0.0
    %2211 = vmatprep.subr.mxu0 0.0
    %2212 = vmatpush1.msra.mxu0 0.0
    %2213 = vmatprep.subr.mxu0 0.0
    %2214 = vmatpush1.msra.mxu0 0.0
    %2215 = vmatprep.subr.mxu0 0.0
    %2216 = vmatpush1.msra.mxu0 0.0
    %2217 = vmatprep.subr.mxu0 0.0
    %2218 = vmatpush1.msra.mxu0 0.0
    %2219 = vmatprep.subr.mxu0 0.0
    %2220 = vmatpush1.msra.mxu0 0.0
    %2221 = vmatprep.subr.mxu0 0.0
    %2222 = vmatpush1.msra.mxu0 0.0
    %2223 = vmatprep.subr.mxu0 0.0
    %2224 = vmatpush1.msra.mxu0 0.0
    %2225 = vmatprep.mubr.f32.mxu0 0.0
    %v2226 = vand.u32 %v547, 4294901760
    %2227 = vmatmul.mubr.f32.gmra.mrb[0].mxu0 %v2226
    %v2228 = vpop.f32.mrb[0].mxu0
    %v2229 = vadd.f32 %v2138, %v2228
    %v2230 = vpop.f32.mrb[0].mxu0
    %2231 = vmatprep.mubr.f32.mxu0 0.0
    %v2232 = vand.u32 %v550, 4294901760
    %2233 = vmatmul.mubr.f32.gmra.mrb[0].mxu0 %v2232
    %v2234 = vpop.f32.mrb[0].mxu0
    %v2235 = vadd.f32 %v2144, %v2234
    %v2236 = vpop.f32.mrb[0].mxu0
    %2237 = vmatprep.mubr.f32.mxu0 0.0
    %v2238 = vand.u32 %v553, 4294901760
    %2239 = vmatmul.mubr.f32.gmra.mrb[0].mxu0 %v2238
    %v2240 = vpop.f32.mrb[0].mxu0
    %v2241 = vadd.f32 %v2150, %v2240
    %v2242 = vpop.f32.mrb[0].mxu0
    %2243 = vmatprep.mubr.f32.mxu0 0.0
    %v2244 = vand.u32 %v556, 4294901760
    %2245 = vmatmul.mubr.f32.gmra.mrb[0].mxu0 %v2244
    %v2246 = vpop.f32.mrb[0].mxu0
    %v2247 = vadd.f32 %v2156, %v2246
    %v2248 = vpop.f32.mrb[0].mxu0
    %2249 = vdwg.mxu0
    %s2250 = scalar_lea.vmem [#allocation5], 32
    %2251 = vst.msk [vmem:[%s2250] sm:$0xff] %vm1146, %v2229
    %2252 = vst.msk [vmem:[%s2250 + $0x8] sm:$0xff] %vm1146, %v2235
    %2253 = vst.msk [vmem:[%s2250 + $0x10] sm:$0xff] %vm1146, %v2241
    %2254 = vst.msk [vmem:[%s2250 + $0x18] sm:$0xff] %vm1146, %v2247
    %s2255 = scalar_lea.vmem [#allocation2], 32
    %v2256 = vld [vmem:[%s2255] sm:$0xff]
    %v2257 = vld [vmem:[%s2255 + $0x8] sm:$0xff]
    %v2259 = vsel %vm37, %v2256, 0
    %v2262 = vsel %vm37, %v2257, 0
    %2264 = vmatprep.subr.mxu0 0.0
    %v2265 = vand.u32 %v33, 4294901760
    %2266 = vmatpush1.msra.mxu0 %v2265
    %2267 = vmatprep.subr.mxu0 0.0
    %v2268 = vand.u32 %v34, 4294901760
    %2269 = vmatpush1.msra.mxu0 %v2268
    %2270 = vmatprep.subr.mxu0 0.0
    %2271 = vmatpush1.msra.mxu0 0.0
    %2272 = vmatprep.subr.mxu0 0.0
    %2273 = vmatpush1.msra.mxu0 0.0
    %2274 = vmatprep.subr.mxu0 0.0
    %2275 = vmatpush1.msra.mxu0 0.0
    %2276 = vmatprep.subr.mxu0 0.0
    %2277 = vmatpush1.msra.mxu0 0.0
    %2278 = vmatprep.subr.mxu0 0.0
    %2279 = vmatpush1.msra.mxu0 0.0
    %2280 = vmatprep.subr.mxu0 0.0
    %2281 = vmatpush1.msra.mxu0 0.0
    %2282 = vmatprep.subr.mxu0 0.0
    %2283 = vmatpush1.msra.mxu0 0.0
    %2284 = vmatprep.subr.mxu0 0.0
    %2285 = vmatpush1.msra.mxu0 0.0
    %2286 = vmatprep.subr.mxu0 0.0
    %2287 = vmatpush1.msra.mxu0 0.0
    %2288 = vmatprep.subr.mxu0 0.0
    %2289 = vmatpush1.msra.mxu0 0.0
    %2290 = vmatprep.subr.mxu0 0.0
    %2291 = vmatpush1.msra.mxu0 0.0
    %2292 = vmatprep.subr.mxu0 0.0
    %2293 = vmatpush1.msra.mxu0 0.0
    %2294 = vmatprep.subr.mxu0 0.0
    %2295 = vmatpush1.msra.mxu0 0.0
    %2296 = vmatprep.subr.mxu0 0.0
    %2297 = vmatpush1.msra.mxu0 0.0
    %2298 = vmatprep.subr.mxu0 0.0
    %2299 = vmatpush1.msra.mxu0 0.0
    %2300 = vmatprep.subr.mxu0 0.0
    %2301 = vmatpush1.msra.mxu0 0.0
    %2302 = vmatprep.subr.mxu0 0.0
    %2303 = vmatpush1.msra.mxu0 0.0
    %2304 = vmatprep.subr.mxu0 0.0
    %2305 = vmatpush1.msra.mxu0 0.0
    %2306 = vmatprep.subr.mxu0 0.0
    %2307 = vmatpush1.msra.mxu0 0.0
    %2308 = vmatprep.subr.mxu0 0.0
    %2309 = vmatpush1.msra.mxu0 0.0
    %2310 = vmatprep.subr.mxu0 0.0
    %2311 = vmatpush1.msra.mxu0 0.0
    %2312 = vmatprep.subr.mxu0 0.0
    %2313 = vmatpush1.msra.mxu0 0.0
    %2314 = vmatprep.subr.mxu0 0.0
    %2315 = vmatpush1.msra.mxu0 0.0
    %2316 = vmatprep.subr.mxu0 0.0
    %2317 = vmatpush1.msra.mxu0 0.0
    %2318 = vmatprep.subr.mxu0 0.0
    %2319 = vmatpush1.msra.mxu0 0.0
    %2320 = vmatprep.subr.mxu0 0.0
    %2321 = vmatpush1.msra.mxu0 0.0
    %2322 = vmatprep.subr.mxu0 0.0
    %2323 = vmatpush1.msra.mxu0 0.0
    %2324 = vmatprep.subr.mxu0 0.0
    %2325 = vmatpush1.msra.mxu0 0.0
    %2326 = vmatprep.subr.mxu0 0.0
    %2327 = vmatpush1.msra.mxu0 0.0
    %2328 = vmatprep.subr.mxu0 0.0
    %2329 = vmatpush1.msra.mxu0 0.0
    %2330 = vmatprep.mubr.f32.mxu0 0.0
    %v2331 = vand.u32 %v2259, 4294901760
    %v2332 = vsub.f32 %v2259, %v2331
    %v2333 = vand.u32 %v2332, 4294901760
    %v2334 = vsub.f32 %v2332, %v2333
    %v2335 = vand.u32 %v2334, 4294901760
    %2336 = vmatmul.mubr.f32.gmra.mrb[0].mxu0 %v2335
    %v2337 = vpop.f32.mrb[0].mxu0
    %v2338 = vadd.f32 0.0, %v2337
    %v2339 = vpop.f32.mrb[0].mxu0
    %2340 = vmatprep.mubr.f32.mxu0 0.0
    %v2341 = vand.u32 %v2262, 4294901760
    %v2342 = vsub.f32 %v2262, %v2341
    %v2343 = vand.u32 %v2342, 4294901760
    %v2344 = vsub.f32 %v2342, %v2343
    %v2345 = vand.u32 %v2344, 4294901760
    %2346 = vmatmul.mubr.f32.gmra.mrb[0].mxu0 %v2345
    %v2347 = vpop.f32.mrb[0].mxu0
    %v2348 = vadd.f32 0.0, %v2347
    %v2349 = vpop.f32.mrb[0].mxu0
    %2350 = vdwg.mxu0
    %2351 = vmatprep.subr.mxu0 0.0
    %v2352 = vand.u32 %v33, 4294901760
    %v2353 = vsub.f32 %v33, %v2352
    %v2354 = vand.u32 %v2353, 4294901760
    %v2355 = vsub.f32 %v2353, %v2354
    %v2356 = vand.u32 %v2355, 4294901760
    %2357 = vmatpush1.msra.mxu0 %v2356
    %2358 = vmatprep.subr.mxu0 0.0
    %v2359 = vand.u32 %v34, 4294901760
    %v2360 = vsub.f32 %v34, %v2359
    %v2361 = vand.u32 %v2360, 4294901760
    %v2362 = vsub.f32 %v2360, %v2361
    %v2363 = vand.u32 %v2362, 4294901760
    %2364 = vmatpush1.msra.mxu0 %v2363
    %2365 = vmatprep.subr.mxu0 0.0
    %2366 = vmatpush1.msra.mxu0 0.0
    %2367 = vmatprep.subr.mxu0 0.0
    %2368 = vmatpush1.msra.mxu0 0.0
    %2369 = vmatprep.subr.mxu0 0.0
    %2370 = vmatpush1.msra.mxu0 0.0
    %2371 = vmatprep.subr.mxu0 0.0
    %2372 = vmatpush1.msra.mxu0 0.0
    %2373 = vmatprep.subr.mxu0 0.0
    %2374 = vmatpush1.msra.mxu0 0.0
    %2375 = vmatprep.subr.mxu0 0.0
    %2376 = vmatpush1.msra.mxu0 0.0
    %2377 = vmatprep.subr.mxu0 0.0
    %2378 = vmatpush1.msra.mxu0 0.0
    %2379 = vmatprep.subr.mxu0 0.0
    %2380 = vmatpush1.msra.mxu0 0.0
    %2381 = vmatprep.subr.mxu0 0.0
    %2382 = vmatpush1.msra.mxu0 0.0
    %2383 = vmatprep.subr.mxu0 0.0
    %2384 = vmatpush1.msra.mxu0 0.0
    %2385 = vmatprep.subr.mxu0 0.0
    %2386 = vmatpush1.msra.mxu0 0.0
    %2387 = vmatprep.subr.mxu0 0.0
    %2388 = vmatpush1.msra.mxu0 0.0
    %2389 = vmatprep.subr.mxu0 0.0
    %2390 = vmatpush1.msra.mxu0 0.0
    %2391 = vmatprep.subr.mxu0 0.0
    %2392 = vmatpush1.msra.mxu0 0.0
    %2393 = vmatprep.subr.mxu0 0.0
    %2394 = vmatpush1.msra.mxu0 0.0
    %2395 = vmatprep.subr.mxu0 0.0
    %2396 = vmatpush1.msra.mxu0 0.0
    %2397 = vmatprep.subr.mxu0 0.0
    %2398 = vmatpush1.msra.mxu0 0.0
    %2399 = vmatprep.subr.mxu0 0.0
    %2400 = vmatpush1.msra.mxu0 0.0
    %2401 = vmatprep.subr.mxu0 0.0
    %2402 = vmatpush1.msra.mxu0 0.0
    %2403 = vmatprep.subr.mxu0 0.0
    %2404 = vmatpush1.msra.mxu0 0.0
    %2405 = vmatprep.subr.mxu0 0.0
    %2406 = vmatpush1.msra.mxu0 0.0
    %2407 = vmatprep.subr.mxu0 0.0
    %2408 = vmatpush1.msra.mxu0 0.0
    %2409 = vmatprep.subr.mxu0 0.0
    %2410 = vmatpush1.msra.mxu0 0.0
    %2411 = vmatprep.subr.mxu0 0.0
    %2412 = vmatpush1.msra.mxu0 0.0
    %2413 = vmatprep.subr.mxu0 0.0
    %2414 = vmatpush1.msra.mxu0 0.0
    %2415 = vmatprep.subr.mxu0 0.0
    %2416 = vmatpush1.msra.mxu0 0.0
    %2417 = vmatprep.subr.mxu0 0.0
    %2418 = vmatpush1.msra.mxu0 0.0
    %2419 = vmatprep.subr.mxu0 0.0
    %2420 = vmatpush1.msra.mxu0 0.0
    %2421 = vmatprep.subr.mxu0 0.0
    %2422 = vmatpush1.msra.mxu0 0.0
    %2423 = vmatprep.subr.mxu0 0.0
    %2424 = vmatpush1.msra.mxu0 0.0
    %2425 = vmatprep.mubr.f32.mxu0 0.0
    %v2426 = vand.u32 %v2259, 4294901760
    %2427 = vmatmul.mubr.f32.gmra.mrb[0].mxu0 %v2426
    %v2428 = vpop.f32.mrb[0].mxu0
    %v2429 = vadd.f32 %v2338, %v2428
    %v2430 = vpop.f32.mrb[0].mxu0
    %2431 = vmatprep.mubr.f32.mxu0 0.0
    %v2432 = vand.u32 %v2262, 4294901760
    %2433 = vmatmul.mubr.f32.gmra.mrb[0].mxu0 %v2432
    %v2434 = vpop.f32.mrb[0].mxu0
    %v2435 = vadd.f32 %v2348, %v2434
    %v2436 = vpop.f32.mrb[0].mxu0
    %2437 = vdwg.mxu0
    %2438 = vmatprep.subr.mxu0 0.0
    %v2439 = vand.u32 %v33, 4294901760
    %v2440 = vsub.f32 %v33, %v2439
    %2441 = vmatpush1.msra.mxu0 %v2440
    %2442 = vmatprep.subr.mxu0 0.0
    %v2443 = vand.u32 %v34, 4294901760
    %v2444 = vsub.f32 %v34, %v2443
    %2445 = vmatpush1.msra.mxu0 %v2444
    %2446 = vmatprep.subr.mxu0 0.0
    %2447 = vmatpush1.msra.mxu0 0.0
    %2448 = vmatprep.subr.mxu0 0.0
    %2449 = vmatpush1.msra.mxu0 0.0
    %2450 = vmatprep.subr.mxu0 0.0
    %2451 = vmatpush1.msra.mxu0 0.0
    %2452 = vmatprep.subr.mxu0 0.0
    %2453 = vmatpush1.msra.mxu0 0.0
    %2454 = vmatprep.subr.mxu0 0.0
    %2455 = vmatpush1.msra.mxu0 0.0
    %2456 = vmatprep.subr.mxu0 0.0
    %2457 = vmatpush1.msra.mxu0 0.0
    %2458 = vmatprep.subr.mxu0 0.0
    %2459 = vmatpush1.msra.mxu0 0.0
    %2460 = vmatprep.subr.mxu0 0.0
    %2461 = vmatpush1.msra.mxu0 0.0
    %2462 = vmatprep.subr.mxu0 0.0
    %2463 = vmatpush1.msra.mxu0 0.0
    %2464 = vmatprep.subr.mxu0 0.0
    %2465 = vmatpush1.msra.mxu0 0.0
    %2466 = vmatprep.subr.mxu0 0.0
    %2467 = vmatpush1.msra.mxu0 0.0
    %2468 = vmatprep.subr.mxu0 0.0
    %2469 = vmatpush1.msra.mxu0 0.0
    %2470 = vmatprep.subr.mxu0 0.0
    %2471 = vmatpush1.msra.mxu0 0.0
    %2472 = vmatprep.subr.mxu0 0.0
    %2473 = vmatpush1.msra.mxu0 0.0
    %2474 = vmatprep.subr.mxu0 0.0
    %2475 = vmatpush1.msra.mxu0 0.0
    %2476 = vmatprep.subr.mxu0 0.0
    %2477 = vmatpush1.msra.mxu0 0.0
    %2478 = vmatprep.subr.mxu0 0.0
    %2479 = vmatpush1.msra.mxu0 0.0
    %2480 = vmatprep.subr.mxu0 0.0
    %2481 = vmatpush1.msra.mxu0 0.0
    %2482 = vmatprep.subr.mxu0 0.0
    %2483 = vmatpush1.msra.mxu0 0.0
    %2484 = vmatprep.subr.mxu0 0.0
    %2485 = vmatpush1.msra.mxu0 0.0
    %2486 = vmatprep.subr.mxu0 0.0
    %2487 = vmatpush1.msra.mxu0 0.0
    %2488 = vmatprep.subr.mxu0 0.0
    %2489 = vmatpush1.msra.mxu0 0.0
    %2490 = vmatprep.subr.mxu0 0.0
    %2491 = vmatpush1.msra.mxu0 0.0
    %2492 = vmatprep.subr.mxu0 0.0
    %2493 = vmatpush1.msra.mxu0 0.0
    %2494 = vmatprep.subr.mxu0 0.0
    %2495 = vmatpush1.msra.mxu0 0.0
    %2496 = vmatprep.subr.mxu0 0.0
    %2497 = vmatpush1.msra.mxu0 0.0
    %2498 = vmatprep.subr.mxu0 0.0
    %2499 = vmatpush1.msra.mxu0 0.0
    %2500 = vmatprep.subr.mxu0 0.0
    %2501 = vmatpush1.msra.mxu0 0.0
    %2502 = vmatprep.subr.mxu0 0.0
    %2503 = vmatpush1.msra.mxu0 0.0
    %2504 = vmatprep.subr.mxu0 0.0
    %2505 = vmatpush1.msra.mxu0 0.0
    %2506 = vmatprep.mubr.f32.mxu0 0.0
    %v2507 = vand.u32 %v2259, 4294901760
    %v2508 = vsub.f32 %v2259, %v2507
    %2509 = vmatmul.mubr.f32.gmra.mrb[0].mxu0 %v2508
    %v2510 = vpop.f32.mrb[0].mxu0
    %v2511 = vadd.f32 %v2429, %v2510
    %v2512 = vpop.f32.mrb[0].mxu0
    %2513 = vmatprep.mubr.f32.mxu0 0.0
    %v2514 = vand.u32 %v2262, 4294901760
    %v2515 = vsub.f32 %v2262, %v2514
    %2516 = vmatmul.mubr.f32.gmra.mrb[0].mxu0 %v2515
    %v2517 = vpop.f32.mrb[0].mxu0
    %v2518 = vadd.f32 %v2435, %v2517
    %v2519 = vpop.f32.mrb[0].mxu0
    %2520 = vdwg.mxu0
    %2521 = vmatprep.subr.mxu0 0.0
    %v2522 = vand.u32 %v33, 4294901760
    %2523 = vmatpush1.msra.mxu0 %v2522
    %2524 = vmatprep.subr.mxu0 0.0
    %v2525 = vand.u32 %v34, 4294901760
    %2526 = vmatpush1.msra.mxu0 %v2525
    %2527 = vmatprep.subr.mxu0 0.0
    %2528 = vmatpush1.msra.mxu0 0.0
    %2529 = vmatprep.subr.mxu0 0.0
    %2530 = vmatpush1.msra.mxu0 0.0
    %2531 = vmatprep.subr.mxu0 0.0
    %2532 = vmatpush1.msra.mxu0 0.0
    %2533 = vmatprep.subr.mxu0 0.0
    %2534 = vmatpush1.msra.mxu0 0.0
    %2535 = vmatprep.subr.mxu0 0.0
    %2536 = vmatpush1.msra.mxu0 0.0
    %2537 = vmatprep.subr.mxu0 0.0
    %2538 = vmatpush1.msra.mxu0 0.0
    %2539 = vmatprep.subr.mxu0 0.0
    %2540 = vmatpush1.msra.mxu0 0.0
    %2541 = vmatprep.subr.mxu0 0.0
    %2542 = vmatpush1.msra.mxu0 0.0
    %2543 = vmatprep.subr.mxu0 0.0
    %2544 = vmatpush1.msra.mxu0 0.0
    %2545 = vmatprep.subr.mxu0 0.0
    %2546 = vmatpush1.msra.mxu0 0.0
    %2547 = vmatprep.subr.mxu0 0.0
    %2548 = vmatpush1.msra.mxu0 0.0
    %2549 = vmatprep.subr.mxu0 0.0
    %2550 = vmatpush1.msra.mxu0 0.0
    %2551 = vmatprep.subr.mxu0 0.0
    %2552 = vmatpush1.msra.mxu0 0.0
    %2553 = vmatprep.subr.mxu0 0.0
    %2554 = vmatpush1.msra.mxu0 0.0
    %2555 = vmatprep.subr.mxu0 0.0
    %2556 = vmatpush1.msra.mxu0 0.0
    %2557 = vmatprep.subr.mxu0 0.0
    %2558 = vmatpush1.msra.mxu0 0.0
    %2559 = vmatprep.subr.mxu0 0.0
    %2560 = vmatpush1.msra.mxu0 0.0
    %2561 = vmatprep.subr.mxu0 0.0
    %2562 = vmatpush1.msra.mxu0 0.0
    %2563 = vmatprep.subr.mxu0 0.0
    %2564 = vmatpush1.msra.mxu0 0.0
    %2565 = vmatprep.subr.mxu0 0.0
    %2566 = vmatpush1.msra.mxu0 0.0
    %2567 = vmatprep.subr.mxu0 0.0
    %2568 = vmatpush1.msra.mxu0 0.0
    %2569 = vmatprep.subr.mxu0 0.0
    %2570 = vmatpush1.msra.mxu0 0.0
    %2571 = vmatprep.subr.mxu0 0.0
    %2572 = vmatpush1.msra.mxu0 0.0
    %2573 = vmatprep.subr.mxu0 0.0
    %2574 = vmatpush1.msra.mxu0 0.0
    %2575 = vmatprep.subr.mxu0 0.0
    %2576 = vmatpush1.msra.mxu0 0.0
    %2577 = vmatprep.subr.mxu0 0.0
    %2578 = vmatpush1.msra.mxu0 0.0
    %2579 = vmatprep.subr.mxu0 0.0
    %2580 = vmatpush1.msra.mxu0 0.0
    %2581 = vmatprep.subr.mxu0 0.0
    %2582 = vmatpush1.msra.mxu0 0.0
    %2583 = vmatprep.subr.mxu0 0.0
    %2584 = vmatpush1.msra.mxu0 0.0
    %2585 = vmatprep.subr.mxu0 0.0
    %2586 = vmatpush1.msra.mxu0 0.0
    %2587 = vmatprep.mubr.f32.mxu0 0.0
    %v2588 = vand.u32 %v2259, 4294901760
    %v2589 = vsub.f32 %v2259, %v2588
    %v2590 = vand.u32 %v2589, 4294901760
    %2591 = vmatmul.mubr.f32.gmra.mrb[0].mxu0 %v2590
    %v2592 = vpop.f32.mrb[0].mxu0
    %v2593 = vadd.f32 %v2511, %v2592
    %v2594 = vpop.f32.mrb[0].mxu0
    %2595 = vmatprep.mubr.f32.mxu0 0.0
    %v2596 = vand.u32 %v2262, 4294901760
    %v2597 = vsub.f32 %v2262, %v2596
    %v2598 = vand.u32 %v2597, 4294901760
    %2599 = vmatmul.mubr.f32.gmra.mrb[0].mxu0 %v2598
    %v2600 = vpop.f32.mrb[0].mxu0
    %v2601 = vadd.f32 %v2518, %v2600
    %v2602 = vpop.f32.mrb[0].mxu0
    %2603 = vdwg.mxu0
    %2604 = vmatprep.subr.mxu0 0.0
    %v2605 = vand.u32 %v33, 4294901760
    %v2606 = vsub.f32 %v33, %v2605
    %v2607 = vand.u32 %v2606, 4294901760
    %2608 = vmatpush1.msra.mxu0 %v2607
    %2609 = vmatprep.subr.mxu0 0.0
    %v2610 = vand.u32 %v34, 4294901760
    %v2611 = vsub.f32 %v34, %v2610
    %v2612 = vand.u32 %v2611, 4294901760
    %2613 = vmatpush1.msra.mxu0 %v2612
    %2614 = vmatprep.subr.mxu0 0.0
    %2615 = vmatpush1.msra.mxu0 0.0
    %2616 = vmatprep.subr.mxu0 0.0
    %2617 = vmatpush1.msra.mxu0 0.0
    %2618 = vmatprep.subr.mxu0 0.0
    %2619 = vmatpush1.msra.mxu0 0.0
    %2620 = vmatprep.subr.mxu0 0.0
    %2621 = vmatpush1.msra.mxu0 0.0
    %2622 = vmatprep.subr.mxu0 0.0
    %2623 = vmatpush1.msra.mxu0 0.0
    %2624 = vmatprep.subr.mxu0 0.0
    %2625 = vmatpush1.msra.mxu0 0.0
    %2626 = vmatprep.subr.mxu0 0.0
    %2627 = vmatpush1.msra.mxu0 0.0
    %2628 = vmatprep.subr.mxu0 0.0
    %2629 = vmatpush1.msra.mxu0 0.0
    %2630 = vmatprep.subr.mxu0 0.0
    %2631 = vmatpush1.msra.mxu0 0.0
    %2632 = vmatprep.subr.mxu0 0.0
    %2633 = vmatpush1.msra.mxu0 0.0
    %2634 = vmatprep.subr.mxu0 0.0
    %2635 = vmatpush1.msra.mxu0 0.0
    %2636 = vmatprep.subr.mxu0 0.0
    %2637 = vmatpush1.msra.mxu0 0.0
    %2638 = vmatprep.subr.mxu0 0.0
    %2639 = vmatpush1.msra.mxu0 0.0
    %2640 = vmatprep.subr.mxu0 0.0
    %2641 = vmatpush1.msra.mxu0 0.0
    %2642 = vmatprep.subr.mxu0 0.0
    %2643 = vmatpush1.msra.mxu0 0.0
    %2644 = vmatprep.subr.mxu0 0.0
    %2645 = vmatpush1.msra.mxu0 0.0
    %2646 = vmatprep.subr.mxu0 0.0
    %2647 = vmatpush1.msra.mxu0 0.0
    %2648 = vmatprep.subr.mxu0 0.0
    %2649 = vmatpush1.msra.mxu0 0.0
    %2650 = vmatprep.subr.mxu0 0.0
    %2651 = vmatpush1.msra.mxu0 0.0
    %2652 = vmatprep.subr.mxu0 0.0
    %2653 = vmatpush1.msra.mxu0 0.0
    %2654 = vmatprep.subr.mxu0 0.0
    %2655 = vmatpush1.msra.mxu0 0.0
    %2656 = vmatprep.subr.mxu0 0.0
    %2657 = vmatpush1.msra.mxu0 0.0
    %2658 = vmatprep.subr.mxu0 0.0
    %2659 = vmatpush1.msra.mxu0 0.0
    %2660 = vmatprep.subr.mxu0 0.0
    %2661 = vmatpush1.msra.mxu0 0.0
    %2662 = vmatprep.subr.mxu0 0.0
    %2663 = vmatpush1.msra.mxu0 0.0
    %2664 = vmatprep.subr.mxu0 0.0
    %2665 = vmatpush1.msra.mxu0 0.0
    %2666 = vmatprep.subr.mxu0 0.0
    %2667 = vmatpush1.msra.mxu0 0.0
    %2668 = vmatprep.subr.mxu0 0.0
    %2669 = vmatpush1.msra.mxu0 0.0
    %2670 = vmatprep.subr.mxu0 0.0
    %2671 = vmatpush1.msra.mxu0 0.0
    %2672 = vmatprep.subr.mxu0 0.0
    %2673 = vmatpush1.msra.mxu0 0.0
    %2674 = vmatprep.mubr.f32.mxu0 0.0
    %v2675 = vand.u32 %v2259, 4294901760
    %2676 = vmatmul.mubr.f32.gmra.mrb[0].mxu0 %v2675
    %v2677 = vpop.f32.mrb[0].mxu0
    %v2678 = vadd.f32 %v2593, %v2677
    %v2679 = vpop.f32.mrb[0].mxu0
    %2680 = vmatprep.mubr.f32.mxu0 0.0
    %v2681 = vand.u32 %v2262, 4294901760
    %2682 = vmatmul.mubr.f32.gmra.mrb[0].mxu0 %v2681
    %v2683 = vpop.f32.mrb[0].mxu0
    %v2684 = vadd.f32 %v2601, %v2683
    %v2685 = vpop.f32.mrb[0].mxu0
    %2686 = vdwg.mxu0
    %2687 = vmatprep.subr.mxu0 0.0
    %v2688 = vand.u32 %v33, 4294901760
    %2689 = vmatpush1.msra.mxu0 %v2688
    %2690 = vmatprep.subr.mxu0 0.0
    %v2691 = vand.u32 %v34, 4294901760
    %2692 = vmatpush1.msra.mxu0 %v2691
    %2693 = vmatprep.subr.mxu0 0.0
    %2694 = vmatpush1.msra.mxu0 0.0
    %2695 = vmatprep.subr.mxu0 0.0
    %2696 = vmatpush1.msra.mxu0 0.0
    %2697 = vmatprep.subr.mxu0 0.0
    %2698 = vmatpush1.msra.mxu0 0.0
    %2699 = vmatprep.subr.mxu0 0.0
    %2700 = vmatpush1.msra.mxu0 0.0
    %2701 = vmatprep.subr.mxu0 0.0
    %2702 = vmatpush1.msra.mxu0 0.0
    %2703 = vmatprep.subr.mxu0 0.0
    %2704 = vmatpush1.msra.mxu0 0.0
    %2705 = vmatprep.subr.mxu0 0.0
    %2706 = vmatpush1.msra.mxu0 0.0
    %2707 = vmatprep.subr.mxu0 0.0
    %2708 = vmatpush1.msra.mxu0 0.0
    %2709 = vmatprep.subr.mxu0 0.0
    %2710 = vmatpush1.msra.mxu0 0.0
    %2711 = vmatprep.subr.mxu0 0.0
    %2712 = vmatpush1.msra.mxu0 0.0
    %2713 = vmatprep.subr.mxu0 0.0
    %2714 = vmatpush1.msra.mxu0 0.0
    %2715 = vmatprep.subr.mxu0 0.0
    %2716 = vmatpush1.msra.mxu0 0.0
    %2717 = vmatprep.subr.mxu0 0.0
    %2718 = vmatpush1.msra.mxu0 0.0
    %2719 = vmatprep.subr.mxu0 0.0
    %2720 = vmatpush1.msra.mxu0 0.0
    %2721 = vmatprep.subr.mxu0 0.0
    %2722 = vmatpush1.msra.mxu0 0.0
    %2723 = vmatprep.subr.mxu0 0.0
    %2724 = vmatpush1.msra.mxu0 0.0
    %2725 = vmatprep.subr.mxu0 0.0
    %2726 = vmatpush1.msra.mxu0 0.0
    %2727 = vmatprep.subr.mxu0 0.0
    %2728 = vmatpush1.msra.mxu0 0.0
    %2729 = vmatprep.subr.mxu0 0.0
    %2730 = vmatpush1.msra.mxu0 0.0
    %2731 = vmatprep.subr.mxu0 0.0
    %2732 = vmatpush1.msra.mxu0 0.0
    %2733 = vmatprep.subr.mxu0 0.0
    %2734 = vmatpush1.msra.mxu0 0.0
    %2735 = vmatprep.subr.mxu0 0.0
    %2736 = vmatpush1.msra.mxu0 0.0
    %2737 = vmatprep.subr.mxu0 0.0
    %2738 = vmatpush1.msra.mxu0 0.0
    %2739 = vmatprep.subr.mxu0 0.0
    %2740 = vmatpush1.msra.mxu0 0.0
    %2741 = vmatprep.subr.mxu0 0.0
    %2742 = vmatpush1.msra.mxu0 0.0
    %2743 = vmatprep.subr.mxu0 0.0
    %2744 = vmatpush1.msra.mxu0 0.0
    %2745 = vmatprep.subr.mxu0 0.0
    %2746 = vmatpush1.msra.mxu0 0.0
    %2747 = vmatprep.subr.mxu0 0.0
    %2748 = vmatpush1.msra.mxu0 0.0
    %2749 = vmatprep.subr.mxu0 0.0
    %2750 = vmatpush1.msra.mxu0 0.0
    %2751 = vmatprep.subr.mxu0 0.0
    %2752 = vmatpush1.msra.mxu0 0.0
    %2753 = vmatprep.mubr.f32.mxu0 0.0
    %v2754 = vand.u32 %v2259, 4294901760
    %2755 = vmatmul.mubr.f32.gmra.mrb[0].mxu0 %v2754
    %v2756 = vpop.f32.mrb[0].mxu0
    %v2757 = vadd.f32 %v2678, %v2756
    %v2758 = vpop.f32.mrb[0].mxu0
    %2759 = vmatprep.mubr.f32.mxu0 0.0
    %v2760 = vand.u32 %v2262, 4294901760
    %2761 = vmatmul.mubr.f32.gmra.mrb[0].mxu0 %v2760
    %v2762 = vpop.f32.mrb[0].mxu0
    %v2763 = vadd.f32 %v2684, %v2762
    %v2764 = vpop.f32.mrb[0].mxu0
    %2765 = vdwg.mxu0
    %2766 = vmatprep.subr.mxu0 0.0
    %v2767 = vand.u32 %v2757, 4294901760
    %2768 = vmatpush1.msra.mxu0 %v2767
    %2769 = vmatprep.subr.mxu0 0.0
    %v2770 = vand.u32 %v2763, 4294901760
    %2771 = vmatpush1.msra.mxu0 %v2770
    %2772 = vmatprep.subr.mxu0 0.0
    %2773 = vmatpush1.msra.mxu0 0.0
    %2774 = vmatprep.subr.mxu0 0.0
    %2775 = vmatpush1.msra.mxu0 0.0
    %2776 = vmatprep.subr.mxu0 0.0
    %2777 = vmatpush1.msra.mxu0 0.0
    %2778 = vmatprep.subr.mxu0 0.0
    %2779 = vmatpush1.msra.mxu0 0.0
    %2780 = vmatprep.subr.mxu0 0.0
    %2781 = vmatpush1.msra.mxu0 0.0
    %2782 = vmatprep.subr.mxu0 0.0
    %2783 = vmatpush1.msra.mxu0 0.0
    %2784 = vmatprep.subr.mxu0 0.0
    %2785 = vmatpush1.msra.mxu0 0.0
    %2786 = vmatprep.subr.mxu0 0.0
    %2787 = vmatpush1.msra.mxu0 0.0
    %2788 = vmatprep.subr.mxu0 0.0
    %2789 = vmatpush1.msra.mxu0 0.0
    %2790 = vmatprep.subr.mxu0 0.0
    %2791 = vmatpush1.msra.mxu0 0.0
    %2792 = vmatprep.subr.mxu0 0.0
    %2793 = vmatpush1.msra.mxu0 0.0
    %2794 = vmatprep.subr.mxu0 0.0
    %2795 = vmatpush1.msra.mxu0 0.0
    %2796 = vmatprep.subr.mxu0 0.0
    %2797 = vmatpush1.msra.mxu0 0.0
    %2798 = vmatprep.subr.mxu0 0.0
    %2799 = vmatpush1.msra.mxu0 0.0
    %2800 = vmatprep.subr.mxu0 0.0
    %2801 = vmatpush1.msra.mxu0 0.0
    %2802 = vmatprep.subr.mxu0 0.0
    %2803 = vmatpush1.msra.mxu0 0.0
    %2804 = vmatprep.subr.mxu0 0.0
    %2805 = vmatpush1.msra.mxu0 0.0
    %2806 = vmatprep.subr.mxu0 0.0
    %2807 = vmatpush1.msra.mxu0 0.0
    %2808 = vmatprep.subr.mxu0 0.0
    %2809 = vmatpush1.msra.mxu0 0.0
    %2810 = vmatprep.subr.mxu0 0.0
    %2811 = vmatpush1.msra.mxu0 0.0
    %2812 = vmatprep.subr.mxu0 0.0
    %2813 = vmatpush1.msra.mxu0 0.0
    %2814 = vmatprep.subr.mxu0 0.0
    %2815 = vmatpush1.msra.mxu0 0.0
    %2816 = vmatprep.subr.mxu0 0.0
    %2817 = vmatpush1.msra.mxu0 0.0
    %2818 = vmatprep.subr.mxu0 0.0
    %2819 = vmatpush1.msra.mxu0 0.0
    %2820 = vmatprep.subr.mxu0 0.0
    %2821 = vmatpush1.msra.mxu0 0.0
    %2822 = vmatprep.subr.mxu0 0.0
    %2823 = vmatpush1.msra.mxu0 0.0
    %2824 = vmatprep.subr.mxu0 0.0
    %2825 = vmatpush1.msra.mxu0 0.0
    %2826 = vmatprep.subr.mxu0 0.0
    %2827 = vmatpush1.msra.mxu0 0.0
    %2828 = vmatprep.subr.mxu0 0.0
    %2829 = vmatpush1.msra.mxu0 0.0
    %2830 = vmatprep.subr.mxu0 0.0
    %2831 = vmatpush1.msra.mxu0 0.0
    %2832 = vmatprep.mubr.f32.mxu0 0.0
    %v2833 = vand.u32 %v547, 4294901760
    %v2834 = vsub.f32 %v547, %v2833
    %v2835 = vand.u32 %v2834, 4294901760
    %v2836 = vsub.f32 %v2834, %v2835
    %v2837 = vand.u32 %v2836, 4294901760
    %2838 = vmatmul.mubr.f32.gmra.mrb[0].mxu0 %v2837
    %v2839 = vpop.f32.mrb[0].mxu0
    %v2840 = vadd.f32 0.0, %v2839
    %v2841 = vpop.f32.mrb[0].mxu0
    %2842 = vmatprep.mubr.f32.mxu0 0.0
    %v2843 = vand.u32 %v550, 4294901760
    %v2844 = vsub.f32 %v550, %v2843
    %v2845 = vand.u32 %v2844, 4294901760
    %v2846 = vsub.f32 %v2844, %v2845
    %v2847 = vand.u32 %v2846, 4294901760
    %2848 = vmatmul.mubr.f32.gmra.mrb[0].mxu0 %v2847
    %v2849 = vpop.f32.mrb[0].mxu0
    %v2850 = vadd.f32 0.0, %v2849
    %v2851 = vpop.f32.mrb[0].mxu0
    %2852 = vmatprep.mubr.f32.mxu0 0.0
    %v2853 = vand.u32 %v553, 4294901760
    %v2854 = vsub.f32 %v553, %v2853
    %v2855 = vand.u32 %v2854, 4294901760
    %v2856 = vsub.f32 %v2854, %v2855
    %v2857 = vand.u32 %v2856, 4294901760
    %2858 = vmatmul.mubr.f32.gmra.mrb[0].mxu0 %v2857
    %v2859 = vpop.f32.mrb[0].mxu0
    %v2860 = vadd.f32 0.0, %v2859
    %v2861 = vpop.f32.mrb[0].mxu0
    %2862 = vmatprep.mubr.f32.mxu0 0.0
    %v2863 = vand.u32 %v556, 4294901760
    %v2864 = vsub.f32 %v556, %v2863
    %v2865 = vand.u32 %v2864, 4294901760
    %v2866 = vsub.f32 %v2864, %v2865
    %v2867 = vand.u32 %v2866, 4294901760
    %2868 = vmatmul.mubr.f32.gmra.mrb[0].mxu0 %v2867
    %v2869 = vpop.f32.mrb[0].mxu0
    %v2870 = vadd.f32 0.0, %v2869
    %v2871 = vpop.f32.mrb[0].mxu0
    %2872 = vdwg.mxu0
    %2873 = vmatprep.subr.mxu0 0.0
    %v2874 = vand.u32 %v2757, 4294901760
    %v2875 = vsub.f32 %v2757, %v2874
    %v2876 = vand.u32 %v2875, 4294901760
    %v2877 = vsub.f32 %v2875, %v2876
    %v2878 = vand.u32 %v2877, 4294901760
    %2879 = vmatpush1.msra.mxu0 %v2878
    %2880 = vmatprep.subr.mxu0 0.0
    %v2881 = vand.u32 %v2763, 4294901760
    %v2882 = vsub.f32 %v2763, %v2881
    %v2883 = vand.u32 %v2882, 4294901760
    %v2884 = vsub.f32 %v2882, %v2883
    %v2885 = vand.u32 %v2884, 4294901760
    %2886 = vmatpush1.msra.mxu0 %v2885
    %2887 = vmatprep.subr.mxu0 0.0
    %2888 = vmatpush1.msra.mxu0 0.0
    %2889 = vmatprep.subr.mxu0 0.0
    %2890 = vmatpush1.msra.mxu0 0.0
    %2891 = vmatprep.subr.mxu0 0.0
    %2892 = vmatpush1.msra.mxu0 0.0
    %2893 = vmatprep.subr.mxu0 0.0
    %2894 = vmatpush1.msra.mxu0 0.0
    %2895 = vmatprep.subr.mxu0 0.0
    %2896 = vmatpush1.msra.mxu0 0.0
    %2897 = vmatprep.subr.mxu0 0.0
    %2898 = vmatpush1.msra.mxu0 0.0
    %2899 = vmatprep.subr.mxu0 0.0
    %2900 = vmatpush1.msra.mxu0 0.0
    %2901 = vmatprep.subr.mxu0 0.0
    %2902 = vmatpush1.msra.mxu0 0.0
    %2903 = vmatprep.subr.mxu0 0.0
    %2904 = vmatpush1.msra.mxu0 0.0
    %2905 = vmatprep.subr.mxu0 0.0
    %2906 = vmatpush1.msra.mxu0 0.0
    %2907 = vmatprep.subr.mxu0 0.0
    %2908 = vmatpush1.msra.mxu0 0.0
    %2909 = vmatprep.subr.mxu0 0.0
    %2910 = vmatpush1.msra.mxu0 0.0
    %2911 = vmatprep.subr.mxu0 0.0
    %2912 = vmatpush1.msra.mxu0 0.0
    %2913 = vmatprep.subr.mxu0 0.0
    %2914 = vmatpush1.msra.mxu0 0.0
    %2915 = vmatprep.subr.mxu0 0.0
    %2916 = vmatpush1.msra.mxu0 0.0
    %2917 = vmatprep.subr.mxu0 0.0
    %2918 = vmatpush1.msra.mxu0 0.0
    %2919 = vmatprep.subr.mxu0 0.0
    %2920 = vmatpush1.msra.mxu0 0.0
    %2921 = vmatprep.subr.mxu0 0.0
    %2922 = vmatpush1.msra.mxu0 0.0
    %2923 = vmatprep.subr.mxu0 0.0
    %2924 = vmatpush1.msra.mxu0 0.0
    %2925 = vmatprep.subr.mxu0 0.0
    %2926 = vmatpush1.msra.mxu0 0.0
    %2927 = vmatprep.subr.mxu0 0.0
    %2928 = vmatpush1.msra.mxu0 0.0
    %2929 = vmatprep.subr.mxu0 0.0
    %2930 = vmatpush1.msra.mxu0 0.0
    %2931 = vmatprep.subr.mxu0 0.0
    %2932 = vmatpush1.msra.mxu0 0.0
    %2933 = vmatprep.subr.mxu0 0.0
    %2934 = vmatpush1.msra.mxu0 0.0
    %2935 = vmatprep.subr.mxu0 0.0
    %2936 = vmatpush1.msra.mxu0 0.0
    %2937 = vmatprep.subr.mxu0 0.0
    %2938 = vmatpush1.msra.mxu0 0.0
    %2939 = vmatprep.subr.mxu0 0.0
    %2940 = vmatpush1.msra.mxu0 0.0
    %2941 = vmatprep.subr.mxu0 0.0
    %2942 = vmatpush1.msra.mxu0 0.0
    %2943 = vmatprep.subr.mxu0 0.0
    %2944 = vmatpush1.msra.mxu0 0.0
    %2945 = vmatprep.subr.mxu0 0.0
    %2946 = vmatpush1.msra.mxu0 0.0
    %2947 = vmatprep.mubr.f32.mxu0 0.0
    %v2948 = vand.u32 %v547, 4294901760
    %2949 = vmatmul.mubr.f32.gmra.mrb[0].mxu0 %v2948
    %v2950 = vpop.f32.mrb[0].mxu0
    %v2951 = vadd.f32 %v2840, %v2950
    %v2952 = vpop.f32.mrb[0].mxu0
    %2953 = vmatprep.mubr.f32.mxu0 0.0
    %v2954 = vand.u32 %v550, 4294901760
    %2955 = vmatmul.mubr.f32.gmra.mrb[0].mxu0 %v2954
    %v2956 = vpop.f32.mrb[0].mxu0
    %v2957 = vadd.f32 %v2850, %v2956
    %v2958 = vpop.f32.mrb[0].mxu0
    %2959 = vmatprep.mubr.f32.mxu0 0.0
    %v2960 = vand.u32 %v553, 4294901760
    %2961 = vmatmul.mubr.f32.gmra.mrb[0].mxu0 %v2960
    %v2962 = vpop.f32.mrb[0].mxu0
    %v2963 = vadd.f32 %v2860, %v2962
    %v2964 = vpop.f32.mrb[0].mxu0
    %2965 = vmatprep.mubr.f32.mxu0 0.0
    %v2966 = vand.u32 %v556, 4294901760
    %2967 = vmatmul.mubr.f32.gmra.mrb[0].mxu0 %v2966
    %v2968 = vpop.f32.mrb[0].mxu0
    %v2969 = vadd.f32 %v2870, %v2968
    %v2970 = vpop.f32.mrb[0].mxu0
    %2971 = vdwg.mxu0
    %2972 = vmatprep.subr.mxu0 0.0
    %v2973 = vand.u32 %v2757, 4294901760
    %v2974 = vsub.f32 %v2757, %v2973
    %2975 = vmatpush1.msra.mxu0 %v2974
    %2976 = vmatprep.subr.mxu0 0.0
    %v2977 = vand.u32 %v2763, 4294901760
    %v2978 = vsub.f32 %v2763, %v2977
    %2979 = vmatpush1.msra.mxu0 %v2978
    %2980 = vmatprep.subr.mxu0 0.0
    %2981 = vmatpush1.msra.mxu0 0.0
    %2982 = vmatprep.subr.mxu0 0.0
    %2983 = vmatpush1.msra.mxu0 0.0
    %2984 = vmatprep.subr.mxu0 0.0
    %2985 = vmatpush1.msra.mxu0 0.0
    %2986 = vmatprep.subr.mxu0 0.0
    %2987 = vmatpush1.msra.mxu0 0.0
    %2988 = vmatprep.subr.mxu0 0.0
    %2989 = vmatpush1.msra.mxu0 0.0
    %2990 = vmatprep.subr.mxu0 0.0
    %2991 = vmatpush1.msra.mxu0 0.0
    %2992 = vmatprep.subr.mxu0 0.0
    %2993 = vmatpush1.msra.mxu0 0.0
    %2994 = vmatprep.subr.mxu0 0.0
    %2995 = vmatpush1.msra.mxu0 0.0
    %2996 = vmatprep.subr.mxu0 0.0
    %2997 = vmatpush1.msra.mxu0 0.0
    %2998 = vmatprep.subr.mxu0 0.0
    %2999 = vmatpush1.msra.mxu0 0.0
    %3000 = vmatprep.subr.mxu0 0.0
    %3001 = vmatpush1.msra.mxu0 0.0
    %3002 = vmatprep.subr.mxu0 0.0
    %3003 = vmatpush1.msra.mxu0 0.0
    %3004 = vmatprep.subr.mxu0 0.0
    %3005 = vmatpush1.msra.mxu0 0.0
    %3006 = vmatprep.subr.mxu0 0.0
    %3007 = vmatpush1.msra.mxu0 0.0
    %3008 = vmatprep.subr.mxu0 0.0
    %3009 = vmatpush1.msra.mxu0 0.0
    %3010 = vmatprep.subr.mxu0 0.0
    %3011 = vmatpush1.msra.mxu0 0.0
    %3012 = vmatprep.subr.mxu0 0.0
    %3013 = vmatpush1.msra.mxu0 0.0
    %3014 = vmatprep.subr.mxu0 0.0
    %3015 = vmatpush1.msra.mxu0 0.0
    %3016 = vmatprep.subr.mxu0 0.0
    %3017 = vmatpush1.msra.mxu0 0.0
    %3018 = vmatprep.subr.mxu0 0.0
    %3019 = vmatpush1.msra.mxu0 0.0
    %3020 = vmatprep.subr.mxu0 0.0
    %3021 = vmatpush1.msra.mxu0 0.0
    %3022 = vmatprep.subr.mxu0 0.0
    %3023 = vmatpush1.msra.mxu0 0.0
    %3024 = vmatprep.subr.mxu0 0.0
    %3025 = vmatpush1.msra.mxu0 0.0
    %3026 = vmatprep.subr.mxu0 0.0
    %3027 = vmatpush1.msra.mxu0 0.0
    %3028 = vmatprep.subr.mxu0 0.0
    %3029 = vmatpush1.msra.mxu0 0.0
    %3030 = vmatprep.subr.mxu0 0.0
    %3031 = vmatpush1.msra.mxu0 0.0
    %3032 = vmatprep.subr.mxu0 0.0
    %3033 = vmatpush1.msra.mxu0 0.0
    %3034 = vmatprep.subr.mxu0 0.0
    %3035 = vmatpush1.msra.mxu0 0.0
    %3036 = vmatprep.subr.mxu0 0.0
    %3037 = vmatpush1.msra.mxu0 0.0
    %3038 = vmatprep.subr.mxu0 0.0
    %3039 = vmatpush1.msra.mxu0 0.0
    %3040 = vmatprep.mubr.f32.mxu0 0.0
    %v3041 = vand.u32 %v547, 4294901760
    %v3042 = vsub.f32 %v547, %v3041
    %3043 = vmatmul.mubr.f32.gmra.mrb[0].mxu0 %v3042
    %v3044 = vpop.f32.mrb[0].mxu0
    %v3045 = vadd.f32 %v2951, %v3044
    %v3046 = vpop.f32.mrb[0].mxu0
    %3047 = vmatprep.mubr.f32.mxu0 0.0
    %v3048 = vand.u32 %v550, 4294901760
    %v3049 = vsub.f32 %v550, %v3048
    %3050 = vmatmul.mubr.f32.gmra.mrb[0].mxu0 %v3049
    %v3051 = vpop.f32.mrb[0].mxu0
    %v3052 = vadd.f32 %v2957, %v3051
    %v3053 = vpop.f32.mrb[0].mxu0
    %3054 = vmatprep.mubr.f32.mxu0 0.0
    %v3055 = vand.u32 %v553, 4294901760
    %v3056 = vsub.f32 %v553, %v3055
    %3057 = vmatmul.mubr.f32.gmra.mrb[0].mxu0 %v3056
    %v3058 = vpop.f32.mrb[0].mxu0
    %v3059 = vadd.f32 %v2963, %v3058
    %v3060 = vpop.f32.mrb[0].mxu0
    %3061 = vmatprep.mubr.f32.mxu0 0.0
    %v3062 = vand.u32 %v556, 4294901760
    %v3063 = vsub.f32 %v556, %v3062
    %3064 = vmatmul.mubr.f32.gmra.mrb[0].mxu0 %v3063
    %v3065 = vpop.f32.mrb[0].mxu0
    %v3066 = vadd.f32 %v2969, %v3065
    %v3067 = vpop.f32.mrb[0].mxu0
    %3068 = vdwg.mxu0
    %3069 = vmatprep.subr.mxu0 0.0
    %v3070 = vand.u32 %v2757, 4294901760
    %3071 = vmatpush1.msra.mxu0 %v3070
    %3072 = vmatprep.subr.mxu0 0.0
    %v3073 = vand.u32 %v2763, 4294901760
    %3074 = vmatpush1.msra.mxu0 %v3073
    %3075 = vmatprep.subr.mxu0 0.0
    %3076 = vmatpush1.msra.mxu0 0.0
    %3077 = vmatprep.subr.mxu0 0.0
    %3078 = vmatpush1.msra.mxu0 0.0
    %3079 = vmatprep.subr.mxu0 0.0
    %3080 = vmatpush1.msra.mxu0 0.0
    %3081 = vmatprep.subr.mxu0 0.0
    %3082 = vmatpush1.msra.mxu0 0.0
    %3083 = vmatprep.subr.mxu0 0.0
    %3084 = vmatpush1.msra.mxu0 0.0
    %3085 = vmatprep.subr.mxu0 0.0
    %3086 = vmatpush1.msra.mxu0 0.0
    %3087 = vmatprep.subr.mxu0 0.0
    %3088 = vmatpush1.msra.mxu0 0.0
    %3089 = vmatprep.subr.mxu0 0.0
    %3090 = vmatpush1.msra.mxu0 0.0
    %3091 = vmatprep.subr.mxu0 0.0
    %3092 = vmatpush1.msra.mxu0 0.0
    %3093 = vmatprep.subr.mxu0 0.0
    %3094 = vmatpush1.msra.mxu0 0.0
    %3095 = vmatprep.subr.mxu0 0.0
    %3096 = vmatpush1.msra.mxu0 0.0
    %3097 = vmatprep.subr.mxu0 0.0
    %3098 = vmatpush1.msra.mxu0 0.0
    %3099 = vmatprep.subr.mxu0 0.0
    %3100 = vmatpush1.msra.mxu0 0.0
    %3101 = vmatprep.subr.mxu0 0.0
    %3102 = vmatpush1.msra.mxu0 0.0
    %3103 = vmatprep.subr.mxu0 0.0
    %3104 = vmatpush1.msra.mxu0 0.0
    %3105 = vmatprep.subr.mxu0 0.0
    %3106 = vmatpush1.msra.mxu0 0.0
    %3107 = vmatprep.subr.mxu0 0.0
    %3108 = vmatpush1.msra.mxu0 0.0
    %3109 = vmatprep.subr.mxu0 0.0
    %3110 = vmatpush1.msra.mxu0 0.0
    %3111 = vmatprep.subr.mxu0 0.0
    %3112 = vmatpush1.msra.mxu0 0.0
    %3113 = vmatprep.subr.mxu0 0.0
    %3114 = vmatpush1.msra.mxu0 0.0
    %3115 = vmatprep.subr.mxu0 0.0
    %3116 = vmatpush1.msra.mxu0 0.0
    %3117 = vmatprep.subr.mxu0 0.0
    %3118 = vmatpush1.msra.mxu0 0.0
    %3119 = vmatprep.subr.mxu0 0.0
    %3120 = vmatpush1.msra.mxu0 0.0
    %3121 = vmatprep.subr.mxu0 0.0
    %3122 = vmatpush1.msra.mxu0 0.0
    %3123 = vmatprep.subr.mxu0 0.0
    %3124 = vmatpush1.msra.mxu0 0.0
    %3125 = vmatprep.subr.mxu0 0.0
    %3126 = vmatpush1.msra.mxu0 0.0
    %3127 = vmatprep.subr.mxu0 0.0
    %3128 = vmatpush1.msra.mxu0 0.0
    %3129 = vmatprep.subr.mxu0 0.0
    %3130 = vmatpush1.msra.mxu0 0.0
    %3131 = vmatprep.subr.mxu0 0.0
    %3132 = vmatpush1.msra.mxu0 0.0
    %3133 = vmatprep.subr.mxu0 0.0
    %3134 = vmatpush1.msra.mxu0 0.0
    %3135 = vmatprep.mubr.f32.mxu0 0.0
    %v3136 = vand.u32 %v547, 4294901760
    %v3137 = vsub.f32 %v547, %v3136
    %v3138 = vand.u32 %v3137, 4294901760
    %3139 = vmatmul.mubr.f32.gmra.mrb[0].mxu0 %v3138
    %v3140 = vpop.f32.mrb[0].mxu0
    %v3141 = vadd.f32 %v3045, %v3140
    %v3142 = vpop.f32.mrb[0].mxu0
    %3143 = vmatprep.mubr.f32.mxu0 0.0
    %v3144 = vand.u32 %v550, 4294901760
    %v3145 = vsub.f32 %v550, %v3144
    %v3146 = vand.u32 %v3145, 4294901760
    %3147 = vmatmul.mubr.f32.gmra.mrb[0].mxu0 %v3146
    %v3148 = vpop.f32.mrb[0].mxu0
    %v3149 = vadd.f32 %v3052, %v3148
    %v3150 = vpop.f32.mrb[0].mxu0
    %3151 = vmatprep.mubr.f32.mxu0 0.0
    %v3152 = vand.u32 %v553, 4294901760
    %v3153 = vsub.f32 %v553, %v3152
    %v3154 = vand.u32 %v3153, 4294901760
    %3155 = vmatmul.mubr.f32.gmra.mrb[0].mxu0 %v3154
    %v3156 = vpop.f32.mrb[0].mxu0
    %v3157 = vadd.f32 %v3059, %v3156
    %v3158 = vpop.f32.mrb[0].mxu0
    %3159 = vmatprep.mubr.f32.mxu0 0.0
    %v3160 = vand.u32 %v556, 4294901760
    %v3161 = vsub.f32 %v556, %v3160
    %v3162 = vand.u32 %v3161, 4294901760
    %3163 = vmatmul.mubr.f32.gmra.mrb[0].mxu0 %v3162
    %v3164 = vpop.f32.mrb[0].mxu0
    %v3165 = vadd.f32 %v3066, %v3164
    %v3166 = vpop.f32.mrb[0].mxu0
    %3167 = vdwg.mxu0
    %3168 = vmatprep.subr.mxu0 0.0
    %v3169 = vand.u32 %v2757, 4294901760
    %v3170 = vsub.f32 %v2757, %v3169
    %v3171 = vand.u32 %v3170, 4294901760
    %3172 = vmatpush1.msra.mxu0 %v3171
    %3173 = vmatprep.subr.mxu0 0.0
    %v3174 = vand.u32 %v2763, 4294901760
    %v3175 = vsub.f32 %v2763, %v3174
    %v3176 = vand.u32 %v3175, 4294901760
    %3177 = vmatpush1.msra.mxu0 %v3176
    %3178 = vmatprep.subr.mxu0 0.0
    %3179 = vmatpush1.msra.mxu0 0.0
    %3180 = vmatprep.subr.mxu0 0.0
    %3181 = vmatpush1.msra.mxu0 0.0
    %3182 = vmatprep.subr.mxu0 0.0
    %3183 = vmatpush1.msra.mxu0 0.0
    %3184 = vmatprep.subr.mxu0 0.0
    %3185 = vmatpush1.msra.mxu0 0.0
    %3186 = vmatprep.subr.mxu0 0.0
    %3187 = vmatpush1.msra.mxu0 0.0
    %3188 = vmatprep.subr.mxu0 0.0
    %3189 = vmatpush1.msra.mxu0 0.0
    %3190 = vmatprep.subr.mxu0 0.0
    %3191 = vmatpush1.msra.mxu0 0.0
    %3192 = vmatprep.subr.mxu0 0.0
    %3193 = vmatpush1.msra.mxu0 0.0
    %3194 = vmatprep.subr.mxu0 0.0
    %3195 = vmatpush1.msra.mxu0 0.0
    %3196 = vmatprep.subr.mxu0 0.0
    %3197 = vmatpush1.msra.mxu0 0.0
    %3198 = vmatprep.subr.mxu0 0.0
    %3199 = vmatpush1.msra.mxu0 0.0
    %3200 = vmatprep.subr.mxu0 0.0
    %3201 = vmatpush1.msra.mxu0 0.0
    %3202 = vmatprep.subr.mxu0 0.0
    %3203 = vmatpush1.msra.mxu0 0.0
    %3204 = vmatprep.subr.mxu0 0.0
    %3205 = vmatpush1.msra.mxu0 0.0
    %3206 = vmatprep.subr.mxu0 0.0
    %3207 = vmatpush1.msra.mxu0 0.0
    %3208 = vmatprep.subr.mxu0 0.0
    %3209 = vmatpush1.msra.mxu0 0.0
    %3210 = vmatprep.subr.mxu0 0.0
    %3211 = vmatpush1.msra.mxu0 0.0
    %3212 = vmatprep.subr.mxu0 0.0
    %3213 = vmatpush1.msra.mxu0 0.0
    %3214 = vmatprep.subr.mxu0 0.0
    %3215 = vmatpush1.msra.mxu0 0.0
    %3216 = vmatprep.subr.mxu0 0.0
    %3217 = vmatpush1.msra.mxu0 0.0
    %3218 = vmatprep.subr.mxu0 0.0
    %3219 = vmatpush1.msra.mxu0 0.0
    %3220 = vmatprep.subr.mxu0 0.0
    %3221 = vmatpush1.msra.mxu0 0.0
    %3222 = vmatprep.subr.mxu0 0.0
    %3223 = vmatpush1.msra.mxu0 0.0
    %3224 = vmatprep.subr.mxu0 0.0
    %3225 = vmatpush1.msra.mxu0 0.0
    %3226 = vmatprep.subr.mxu0 0.0
    %3227 = vmatpush1.msra.mxu0 0.0
    %3228 = vmatprep.subr.mxu0 0.0
    %3229 = vmatpush1.msra.mxu0 0.0
    %3230 = vmatprep.subr.mxu0 0.0
    %3231 = vmatpush1.msra.mxu0 0.0
    %3232 = vmatprep.subr.mxu0 0.0
    %3233 = vmatpush1.msra.mxu0 0.0
    %3234 = vmatprep.subr.mxu0 0.0
    %3235 = vmatpush1.msra.mxu0 0.0
    %3236 = vmatprep.subr.mxu0 0.0
    %3237 = vmatpush1.msra.mxu0 0.0
    %3238 = vmatprep.mubr.f32.mxu0 0.0
    %v3239 = vand.u32 %v547, 4294901760
    %3240 = vmatmul.mubr.f32.gmra.mrb[0].mxu0 %v3239
    %v3241 = vpop.f32.mrb[0].mxu0
    %v3242 = vadd.f32 %v3141, %v3241
    %v3243 = vpop.f32.mrb[0].mxu0
    %3244 = vmatprep.mubr.f32.mxu0 0.0
    %v3245 = vand.u32 %v550, 4294901760
    %3246 = vmatmul.mubr.f32.gmra.mrb[0].mxu0 %v3245
    %v3247 = vpop.f32.mrb[0].mxu0
    %v3248 = vadd.f32 %v3149, %v3247
    %v3249 = vpop.f32.mrb[0].mxu0
    %3250 = vmatprep.mubr.f32.mxu0 0.0
    %v3251 = vand.u32 %v553, 4294901760
    %3252 = vmatmul.mubr.f32.gmra.mrb[0].mxu0 %v3251
    %v3253 = vpop.f32.mrb[0].mxu0
    %v3254 = vadd.f32 %v3157, %v3253
    %v3255 = vpop.f32.mrb[0].mxu0
    %3256 = vmatprep.mubr.f32.mxu0 0.0
    %v3257 = vand.u32 %v556, 4294901760
    %3258 = vmatmul.mubr.f32.gmra.mrb[0].mxu0 %v3257
    %v3259 = vpop.f32.mrb[0].mxu0
    %v3260 = vadd.f32 %v3165, %v3259
    %v3261 = vpop.f32.mrb[0].mxu0
    %3262 = vdwg.mxu0
    %3263 = vmatprep.subr.mxu0 0.0
    %v3264 = vand.u32 %v2757, 4294901760
    %3265 = vmatpush1.msra.mxu0 %v3264
    %3266 = vmatprep.subr.mxu0 0.0
    %v3267 = vand.u32 %v2763, 4294901760
    %3268 = vmatpush1.msra.mxu0 %v3267
    %3269 = vmatprep.subr.mxu0 0.0
    %3270 = vmatpush1.msra.mxu0 0.0
    %3271 = vmatprep.subr.mxu0 0.0
    %3272 = vmatpush1.msra.mxu0 0.0
    %3273 = vmatprep.subr.mxu0 0.0
    %3274 = vmatpush1.msra.mxu0 0.0
    %3275 = vmatprep.subr.mxu0 0.0
    %3276 = vmatpush1.msra.mxu0 0.0
    %3277 = vmatprep.subr.mxu0 0.0
    %3278 = vmatpush1.msra.mxu0 0.0
    %3279 = vmatprep.subr.mxu0 0.0
    %3280 = vmatpush1.msra.mxu0 0.0
    %3281 = vmatprep.subr.mxu0 0.0
    %3282 = vmatpush1.msra.mxu0 0.0
    %3283 = vmatprep.subr.mxu0 0.0
    %3284 = vmatpush1.msra.mxu0 0.0
    %3285 = vmatprep.subr.mxu0 0.0
    %3286 = vmatpush1.msra.mxu0 0.0
    %3287 = vmatprep.subr.mxu0 0.0
    %3288 = vmatpush1.msra.mxu0 0.0
    %3289 = vmatprep.subr.mxu0 0.0
    %3290 = vmatpush1.msra.mxu0 0.0
    %3291 = vmatprep.subr.mxu0 0.0
    %3292 = vmatpush1.msra.mxu0 0.0
    %3293 = vmatprep.subr.mxu0 0.0
    %3294 = vmatpush1.msra.mxu0 0.0
    %3295 = vmatprep.subr.mxu0 0.0
    %3296 = vmatpush1.msra.mxu0 0.0
    %3297 = vmatprep.subr.mxu0 0.0
    %3298 = vmatpush1.msra.mxu0 0.0
    %3299 = vmatprep.subr.mxu0 0.0
    %3300 = vmatpush1.msra.mxu0 0.0
    %3301 = vmatprep.subr.mxu0 0.0
    %3302 = vmatpush1.msra.mxu0 0.0
    %3303 = vmatprep.subr.mxu0 0.0
    %3304 = vmatpush1.msra.mxu0 0.0
    %3305 = vmatprep.subr.mxu0 0.0
    %3306 = vmatpush1.msra.mxu0 0.0
    %3307 = vmatprep.subr.mxu0 0.0
    %3308 = vmatpush1.msra.mxu0 0.0
    %3309 = vmatprep.subr.mxu0 0.0
    %3310 = vmatpush1.msra.mxu0 0.0
    %3311 = vmatprep.subr.mxu0 0.0
    %3312 = vmatpush1.msra.mxu0 0.0
    %3313 = vmatprep.subr.mxu0 0.0
    %3314 = vmatpush1.msra.mxu0 0.0
    %3315 = vmatprep.subr.mxu0 0.0
    %3316 = vmatpush1.msra.mxu0 0.0
    %3317 = vmatprep.subr.mxu0 0.0
    %3318 = vmatpush1.msra.mxu0 0.0
    %3319 = vmatprep.subr.mxu0 0.0
    %3320 = vmatpush1.msra.mxu0 0.0
    %3321 = vmatprep.subr.mxu0 0.0
    %3322 = vmatpush1.msra.mxu0 0.0
    %3323 = vmatprep.subr.mxu0 0.0
    %3324 = vmatpush1.msra.mxu0 0.0
    %3325 = vmatprep.subr.mxu0 0.0
    %3326 = vmatpush1.msra.mxu0 0.0
    %3327 = vmatprep.subr.mxu0 0.0
    %3328 = vmatpush1.msra.mxu0 0.0
    %3329 = vmatprep.mubr.f32.mxu0 0.0
    %v3330 = vand.u32 %v547, 4294901760
    %3331 = vmatmul.mubr.f32.gmra.mrb[0].mxu0 %v3330
    %v3332 = vpop.f32.mrb[0].mxu0
    %v3333 = vadd.f32 %v3242, %v3332
    %v3334 = vpop.f32.mrb[0].mxu0
    %3335 = vmatprep.mubr.f32.mxu0 0.0
    %v3336 = vand.u32 %v550, 4294901760
    %3337 = vmatmul.mubr.f32.gmra.mrb[0].mxu0 %v3336
    %v3338 = vpop.f32.mrb[0].mxu0
    %v3339 = vadd.f32 %v3248, %v3338
    %v3340 = vpop.f32.mrb[0].mxu0
    %3341 = vmatprep.mubr.f32.mxu0 0.0
    %v3342 = vand.u32 %v553, 4294901760
    %3343 = vmatmul.mubr.f32.gmra.mrb[0].mxu0 %v3342
    %v3344 = vpop.f32.mrb[0].mxu0
    %v3345 = vadd.f32 %v3254, %v3344
    %v3346 = vpop.f32.mrb[0].mxu0
    %3347 = vmatprep.mubr.f32.mxu0 0.0
    %v3348 = vand.u32 %v556, 4294901760
    %3349 = vmatmul.mubr.f32.gmra.mrb[0].mxu0 %v3348
    %v3350 = vpop.f32.mrb[0].mxu0
    %v3351 = vadd.f32 %v3260, %v3350
    %v3352 = vpop.f32.mrb[0].mxu0
    %3353 = vdwg.mxu0
    %s3354 = scalar_lea.vmem [#allocation5], 64
    %3355 = vst.msk [vmem:[%s3354] sm:$0xff] %vm1146, %v3333
    %3356 = vst.msk [vmem:[%s3354 + $0x8] sm:$0xff] %vm1146, %v3339
    %3357 = vst.msk [vmem:[%s3354 + $0x10] sm:$0xff] %vm1146, %v3345
    %3358 = vst.msk [vmem:[%s3354 + $0x18] sm:$0xff] %vm1146, %v3351
    %s3359 = scalar_lea.vmem [#allocation2], 48
    %v3360 = vld [vmem:[%s3359] sm:$0xff]
    %v3361 = vld [vmem:[%s3359 + $0x8] sm:$0xff]
    %v3363 = vsel %vm37, %v3360, 0
    %v3366 = vsel %vm37, %v3361, 0
    %3368 = vmatprep.subr.mxu0 0.0
    %v3369 = vand.u32 %v33, 4294901760
    %3370 = vmatpush1.msra.mxu0 %v3369
    %3371 = vmatprep.subr.mxu0 0.0
    %v3372 = vand.u32 %v34, 4294901760
    %3373 = vmatpush1.msra.mxu0 %v3372
    %3374 = vmatprep.subr.mxu0 0.0
    %3375 = vmatpush1.msra.mxu0 0.0
    %3376 = vmatprep.subr.mxu0 0.0
    %3377 = vmatpush1.msra.mxu0 0.0
    %3378 = vmatprep.subr.mxu0 0.0
    %3379 = vmatpush1.msra.mxu0 0.0
    %3380 = vmatprep.subr.mxu0 0.0
    %3381 = vmatpush1.msra.mxu0 0.0
    %3382 = vmatprep.subr.mxu0 0.0
    %3383 = vmatpush1.msra.mxu0 0.0
    %3384 = vmatprep.subr.mxu0 0.0
    %3385 = vmatpush1.msra.mxu0 0.0
    %3386 = vmatprep.subr.mxu0 0.0
    %3387 = vmatpush1.msra.mxu0 0.0
    %3388 = vmatprep.subr.mxu0 0.0
    %3389 = vmatpush1.msra.mxu0 0.0
    %3390 = vmatprep.subr.mxu0 0.0
    %3391 = vmatpush1.msra.mxu0 0.0
    %3392 = vmatprep.subr.mxu0 0.0
    %3393 = vmatpush1.msra.mxu0 0.0
    %3394 = vmatprep.subr.mxu0 0.0
    %3395 = vmatpush1.msra.mxu0 0.0
    %3396 = vmatprep.subr.mxu0 0.0
    %3397 = vmatpush1.msra.mxu0 0.0
    %3398 = vmatprep.subr.mxu0 0.0
    %3399 = vmatpush1.msra.mxu0 0.0
    %3400 = vmatprep.subr.mxu0 0.0
    %3401 = vmatpush1.msra.mxu0 0.0
    %3402 = vmatprep.subr.mxu0 0.0
    %3403 = vmatpush1.msra.mxu0 0.0
    %3404 = vmatprep.subr.mxu0 0.0
    %3405 = vmatpush1.msra.mxu0 0.0
    %3406 = vmatprep.subr.mxu0 0.0
    %3407 = vmatpush1.msra.mxu0 0.0
    %3408 = vmatprep.subr.mxu0 0.0
    %3409 = vmatpush1.msra.mxu0 0.0
    %3410 = vmatprep.subr.mxu0 0.0
    %3411 = vmatpush1.msra.mxu0 0.0
    %3412 = vmatprep.subr.mxu0 0.0
    %3413 = vmatpush1.msra.mxu0 0.0
    %3414 = vmatprep.subr.mxu0 0.0
    %3415 = vmatpush1.msra.mxu0 0.0
    %3416 = vmatprep.subr.mxu0 0.0
    %3417 = vmatpush1.msra.mxu0 0.0
    %3418 = vmatprep.subr.mxu0 0.0
    %3419 = vmatpush1.msra.mxu0 0.0
    %3420 = vmatprep.subr.mxu0 0.0
    %3421 = vmatpush1.msra.mxu0 0.0
    %3422 = vmatprep.subr.mxu0 0.0
    %3423 = vmatpush1.msra.mxu0 0.0
    %3424 = vmatprep.subr.mxu0 0.0
    %3425 = vmatpush1.msra.mxu0 0.0
    %3426 = vmatprep.subr.mxu0 0.0
    %3427 = vmatpush1.msra.mxu0 0.0
    %3428 = vmatprep.subr.mxu0 0.0
    %3429 = vmatpush1.msra.mxu0 0.0
    %3430 = vmatprep.subr.mxu0 0.0
    %3431 = vmatpush1.msra.mxu0 0.0
    %3432 = vmatprep.subr.mxu0 0.0
    %3433 = vmatpush1.msra.mxu0 0.0
    %3434 = vmatprep.mubr.f32.mxu0 0.0
    %v3435 = vand.u32 %v3363, 4294901760
    %v3436 = vsub.f32 %v3363, %v3435
    %v3437 = vand.u32 %v3436, 4294901760
    %v3438 = vsub.f32 %v3436, %v3437
    %v3439 = vand.u32 %v3438, 4294901760
    %3440 = vmatmul.mubr.f32.gmra.mrb[0].mxu0 %v3439
    %v3441 = vpop.f32.mrb[0].mxu0
    %v3442 = vadd.f32 0.0, %v3441
    %v3443 = vpop.f32.mrb[0].mxu0
    %3444 = vmatprep.mubr.f32.mxu0 0.0
    %v3445 = vand.u32 %v3366, 4294901760
    %v3446 = vsub.f32 %v3366, %v3445
    %v3447 = vand.u32 %v3446, 4294901760
    %v3448 = vsub.f32 %v3446, %v3447
    %v3449 = vand.u32 %v3448, 4294901760
    %3450 = vmatmul.mubr.f32.gmra.mrb[0].mxu0 %v3449
    %v3451 = vpop.f32.mrb[0].mxu0
    %v3452 = vadd.f32 0.0, %v3451
    %v3453 = vpop.f32.mrb[0].mxu0
    %3454 = vdwg.mxu0
    %3455 = vmatprep.subr.mxu0 0.0
    %v3456 = vand.u32 %v33, 4294901760
    %v3457 = vsub.f32 %v33, %v3456
    %v3458 = vand.u32 %v3457, 4294901760
    %v3459 = vsub.f32 %v3457, %v3458
    %v3460 = vand.u32 %v3459, 4294901760
    %3461 = vmatpush1.msra.mxu0 %v3460
    %3462 = vmatprep.subr.mxu0 0.0
    %v3463 = vand.u32 %v34, 4294901760
    %v3464 = vsub.f32 %v34, %v3463
    %v3465 = vand.u32 %v3464, 4294901760
    %v3466 = vsub.f32 %v3464, %v3465
    %v3467 = vand.u32 %v3466, 4294901760
    %3468 = vmatpush1.msra.mxu0 %v3467
    %3469 = vmatprep.subr.mxu0 0.0
    %3470 = vmatpush1.msra.mxu0 0.0
    %3471 = vmatprep.subr.mxu0 0.0
    %3472 = vmatpush1.msra.mxu0 0.0
    %3473 = vmatprep.subr.mxu0 0.0
    %3474 = vmatpush1.msra.mxu0 0.0
    %3475 = vmatprep.subr.mxu0 0.0
    %3476 = vmatpush1.msra.mxu0 0.0
    %3477 = vmatprep.subr.mxu0 0.0
    %3478 = vmatpush1.msra.mxu0 0.0
    %3479 = vmatprep.subr.mxu0 0.0
    %3480 = vmatpush1.msra.mxu0 0.0
    %3481 = vmatprep.subr.mxu0 0.0
    %3482 = vmatpush1.msra.mxu0 0.0
    %3483 = vmatprep.subr.mxu0 0.0
    %3484 = vmatpush1.msra.mxu0 0.0
    %3485 = vmatprep.subr.mxu0 0.0
    %3486 = vmatpush1.msra.mxu0 0.0
    %3487 = vmatprep.subr.mxu0 0.0
    %3488 = vmatpush1.msra.mxu0 0.0
    %3489 = vmatprep.subr.mxu0 0.0
    %3490 = vmatpush1.msra.mxu0 0.0
    %3491 = vmatprep.subr.mxu0 0.0
    %3492 = vmatpush1.msra.mxu0 0.0
    %3493 = vmatprep.subr.mxu0 0.0
    %3494 = vmatpush1.msra.mxu0 0.0
    %3495 = vmatprep.subr.mxu0 0.0
    %3496 = vmatpush1.msra.mxu0 0.0
    %3497 = vmatprep.subr.mxu0 0.0
    %3498 = vmatpush1.msra.mxu0 0.0
    %3499 = vmatprep.subr.mxu0 0.0
    %3500 = vmatpush1.msra.mxu0 0.0
    %3501 = vmatprep.subr.mxu0 0.0
    %3502 = vmatpush1.msra.mxu0 0.0
    %3503 = vmatprep.subr.mxu0 0.0
    %3504 = vmatpush1.msra.mxu0 0.0
    %3505 = vmatprep.subr.mxu0 0.0
    %3506 = vmatpush1.msra.mxu0 0.0
    %3507 = vmatprep.subr.mxu0 0.0
    %3508 = vmatpush1.msra.mxu0 0.0
    %3509 = vmatprep.subr.mxu0 0.0
    %3510 = vmatpush1.msra.mxu0 0.0
    %3511 = vmatprep.subr.mxu0 0.0
    %3512 = vmatpush1.msra.mxu0 0.0
    %3513 = vmatprep.subr.mxu0 0.0
    %3514 = vmatpush1.msra.mxu0 0.0
    %3515 = vmatprep.subr.mxu0 0.0
    %3516 = vmatpush1.msra.mxu0 0.0
    %3517 = vmatprep.subr.mxu0 0.0
    %3518 = vmatpush1.msra.mxu0 0.0
    %3519 = vmatprep.subr.mxu0 0.0
    %3520 = vmatpush1.msra.mxu0 0.0
    %3521 = vmatprep.subr.mxu0 0.0
    %3522 = vmatpush1.msra.mxu0 0.0
    %3523 = vmatprep.subr.mxu0 0.0
    %3524 = vmatpush1.msra.mxu0 0.0
    %3525 = vmatprep.subr.mxu0 0.0
    %3526 = vmatpush1.msra.mxu0 0.0
    %3527 = vmatprep.subr.mxu0 0.0
    %3528 = vmatpush1.msra.mxu0 0.0
    %3529 = vmatprep.mubr.f32.mxu0 0.0
    %v3530 = vand.u32 %v3363, 4294901760
    %3531 = vmatmul.mubr.f32.gmra.mrb[0].mxu0 %v3530
    %v3532 = vpop.f32.mrb[0].mxu0
    %v3533 = vadd.f32 %v3442, %v3532
    %v3534 = vpop.f32.mrb[0].mxu0
    %3535 = vmatprep.mubr.f32.mxu0 0.0
    %v3536 = vand.u32 %v3366, 4294901760
    %3537 = vmatmul.mubr.f32.gmra.mrb[0].mxu0 %v3536
    %v3538 = vpop.f32.mrb[0].mxu0
    %v3539 = vadd.f32 %v3452, %v3538
    %v3540 = vpop.f32.mrb[0].mxu0
    %3541 = vdwg.mxu0
    %3542 = vmatprep.subr.mxu0 0.0
    %v3543 = vand.u32 %v33, 4294901760
    %v3544 = vsub.f32 %v33, %v3543
    %3545 = vmatpush1.msra.mxu0 %v3544
    %3546 = vmatprep.subr.mxu0 0.0
    %v3547 = vand.u32 %v34, 4294901760
    %v3548 = vsub.f32 %v34, %v3547
    %3549 = vmatpush1.msra.mxu0 %v3548
    %3550 = vmatprep.subr.mxu0 0.0
    %3551 = vmatpush1.msra.mxu0 0.0
    %3552 = vmatprep.subr.mxu0 0.0
    %3553 = vmatpush1.msra.mxu0 0.0
    %3554 = vmatprep.subr.mxu0 0.0
    %3555 = vmatpush1.msra.mxu0 0.0
    %3556 = vmatprep.subr.mxu0 0.0
    %3557 = vmatpush1.msra.mxu0 0.0
    %3558 = vmatprep.subr.mxu0 0.0
    %3559 = vmatpush1.msra.mxu0 0.0
    %3560 = vmatprep.subr.mxu0 0.0
    %3561 = vmatpush1.msra.mxu0 0.0
    %3562 = vmatprep.subr.mxu0 0.0
    %3563 = vmatpush1.msra.mxu0 0.0
    %3564 = vmatprep.subr.mxu0 0.0
    %3565 = vmatpush1.msra.mxu0 0.0
    %3566 = vmatprep.subr.mxu0 0.0
    %3567 = vmatpush1.msra.mxu0 0.0
    %3568 = vmatprep.subr.mxu0 0.0
    %3569 = vmatpush1.msra.mxu0 0.0
    %3570 = vmatprep.subr.mxu0 0.0
    %3571 = vmatpush1.msra.mxu0 0.0
    %3572 = vmatprep.subr.mxu0 0.0
    %3573 = vmatpush1.msra.mxu0 0.0
    %3574 = vmatprep.subr.mxu0 0.0
    %3575 = vmatpush1.msra.mxu0 0.0
    %3576 = vmatprep.subr.mxu0 0.0
    %3577 = vmatpush1.msra.mxu0 0.0
    %3578 = vmatprep.subr.mxu0 0.0
    %3579 = vmatpush1.msra.mxu0 0.0
    %3580 = vmatprep.subr.mxu0 0.0
    %3581 = vmatpush1.msra.mxu0 0.0
    %3582 = vmatprep.subr.mxu0 0.0
    %3583 = vmatpush1.msra.mxu0 0.0
    %3584 = vmatprep.subr.mxu0 0.0
    %3585 = vmatpush1.msra.mxu0 0.0
    %3586 = vmatprep.subr.mxu0 0.0
    %3587 = vmatpush1.msra.mxu0 0.0
    %3588 = vmatprep.subr.mxu0 0.0
    %3589 = vmatpush1.msra.mxu0 0.0
    %3590 = vmatprep.subr.mxu0 0.0
    %3591 = vmatpush1.msra.mxu0 0.0
    %3592 = vmatprep.subr.mxu0 0.0
    %3593 = vmatpush1.msra.mxu0 0.0
    %3594 = vmatprep.subr.mxu0 0.0
    %3595 = vmatpush1.msra.mxu0 0.0
    %3596 = vmatprep.subr.mxu0 0.0
    %3597 = vmatpush1.msra.mxu0 0.0
    %3598 = vmatprep.subr.mxu0 0.0
    %3599 = vmatpush1.msra.mxu0 0.0
    %3600 = vmatprep.subr.mxu0 0.0
    %3601 = vmatpush1.msra.mxu0 0.0
    %3602 = vmatprep.subr.mxu0 0.0
    %3603 = vmatpush1.msra.mxu0 0.0
    %3604 = vmatprep.subr.mxu0 0.0
    %3605 = vmatpush1.msra.mxu0 0.0
    %3606 = vmatprep.subr.mxu0 0.0
    %3607 = vmatpush1.msra.mxu0 0.0
    %3608 = vmatprep.subr.mxu0 0.0
    %3609 = vmatpush1.msra.mxu0 0.0
    %3610 = vmatprep.mubr.f32.mxu0 0.0
    %v3611 = vand.u32 %v3363, 4294901760
    %v3612 = vsub.f32 %v3363, %v3611
    %3613 = vmatmul.mubr.f32.gmra.mrb[0].mxu0 %v3612
    %v3614 = vpop.f32.mrb[0].mxu0
    %v3615 = vadd.f32 %v3533, %v3614
    %v3616 = vpop.f32.mrb[0].mxu0
    %3617 = vmatprep.mubr.f32.mxu0 0.0
    %v3618 = vand.u32 %v3366, 4294901760
    %v3619 = vsub.f32 %v3366, %v3618
    %3620 = vmatmul.mubr.f32.gmra.mrb[0].mxu0 %v3619
    %v3621 = vpop.f32.mrb[0].mxu0
    %v3622 = vadd.f32 %v3539, %v3621
    %v3623 = vpop.f32.mrb[0].mxu0
    %3624 = vdwg.mxu0
    %3625 = vmatprep.subr.mxu0 0.0
    %v3626 = vand.u32 %v33, 4294901760
    %3627 = vmatpush1.msra.mxu0 %v3626
    %3628 = vmatprep.subr.mxu0 0.0
    %v3629 = vand.u32 %v34, 4294901760
    %3630 = vmatpush1.msra.mxu0 %v3629
    %3631 = vmatprep.subr.mxu0 0.0
    %3632 = vmatpush1.msra.mxu0 0.0
    %3633 = vmatprep.subr.mxu0 0.0
    %3634 = vmatpush1.msra.mxu0 0.0
    %3635 = vmatprep.subr.mxu0 0.0
    %3636 = vmatpush1.msra.mxu0 0.0
    %3637 = vmatprep.subr.mxu0 0.0
    %3638 = vmatpush1.msra.mxu0 0.0
    %3639 = vmatprep.subr.mxu0 0.0
    %3640 = vmatpush1.msra.mxu0 0.0
    %3641 = vmatprep.subr.mxu0 0.0
    %3642 = vmatpush1.msra.mxu0 0.0
    %3643 = vmatprep.subr.mxu0 0.0
    %3644 = vmatpush1.msra.mxu0 0.0
    %3645 = vmatprep.subr.mxu0 0.0
    %3646 = vmatpush1.msra.mxu0 0.0
    %3647 = vmatprep.subr.mxu0 0.0
    %3648 = vmatpush1.msra.mxu0 0.0
    %3649 = vmatprep.subr.mxu0 0.0
    %3650 = vmatpush1.msra.mxu0 0.0
    %3651 = vmatprep.subr.mxu0 0.0
    %3652 = vmatpush1.msra.mxu0 0.0
    %3653 = vmatprep.subr.mxu0 0.0
    %3654 = vmatpush1.msra.mxu0 0.0
    %3655 = vmatprep.subr.mxu0 0.0
    %3656 = vmatpush1.msra.mxu0 0.0
    %3657 = vmatprep.subr.mxu0 0.0
    %3658 = vmatpush1.msra.mxu0 0.0
    %3659 = vmatprep.subr.mxu0 0.0
    %3660 = vmatpush1.msra.mxu0 0.0
    %3661 = vmatprep.subr.mxu0 0.0
    %3662 = vmatpush1.msra.mxu0 0.0
    %3663 = vmatprep.subr.mxu0 0.0
    %3664 = vmatpush1.msra.mxu0 0.0
    %3665 = vmatprep.subr.mxu0 0.0
    %3666 = vmatpush1.msra.mxu0 0.0
    %3667 = vmatprep.subr.mxu0 0.0
    %3668 = vmatpush1.msra.mxu0 0.0
    %3669 = vmatprep.subr.mxu0 0.0
    %3670 = vmatpush1.msra.mxu0 0.0
    %3671 = vmatprep.subr.mxu0 0.0
    %3672 = vmatpush1.msra.mxu0 0.0
    %3673 = vmatprep.subr.mxu0 0.0
    %3674 = vmatpush1.msra.mxu0 0.0
    %3675 = vmatprep.subr.mxu0 0.0
    %3676 = vmatpush1.msra.mxu0 0.0
    %3677 = vmatprep.subr.mxu0 0.0
    %3678 = vmatpush1.msra.mxu0 0.0
    %3679 = vmatprep.subr.mxu0 0.0
    %3680 = vmatpush1.msra.mxu0 0.0
    %3681 = vmatprep.subr.mxu0 0.0
    %3682 = vmatpush1.msra.mxu0 0.0
    %3683 = vmatprep.subr.mxu0 0.0
    %3684 = vmatpush1.msra.mxu0 0.0
    %3685 = vmatprep.subr.mxu0 0.0
    %3686 = vmatpush1.msra.mxu0 0.0
    %3687 = vmatprep.subr.mxu0 0.0
    %3688 = vmatpush1.msra.mxu0 0.0
    %3689 = vmatprep.subr.mxu0 0.0
    %3690 = vmatpush1.msra.mxu0 0.0
    %3691 = vmatprep.mubr.f32.mxu0 0.0
    %v3692 = vand.u32 %v3363, 4294901760
    %v3693 = vsub.f32 %v3363, %v3692
    %v3694 = vand.u32 %v3693, 4294901760
    %3695 = vmatmul.mubr.f32.gmra.mrb[0].mxu0 %v3694
    %v3696 = vpop.f32.mrb[0].mxu0
    %v3697 = vadd.f32 %v3615, %v3696
    %v3698 = vpop.f32.mrb[0].mxu0
    %3699 = vmatprep.mubr.f32.mxu0 0.0
    %v3700 = vand.u32 %v3366, 4294901760
    %v3701 = vsub.f32 %v3366, %v3700
    %v3702 = vand.u32 %v3701, 4294901760
    %3703 = vmatmul.mubr.f32.gmra.mrb[0].mxu0 %v3702
    %v3704 = vpop.f32.mrb[0].mxu0
    %v3705 = vadd.f32 %v3622, %v3704
    %v3706 = vpop.f32.mrb[0].mxu0
    %3707 = vdwg.mxu0
    %3708 = vmatprep.subr.mxu0 0.0
    %v3709 = vand.u32 %v33, 4294901760
    %v3710 = vsub.f32 %v33, %v3709
    %v3711 = vand.u32 %v3710, 4294901760
    %3712 = vmatpush1.msra.mxu0 %v3711
    %3713 = vmatprep.subr.mxu0 0.0
    %v3714 = vand.u32 %v34, 4294901760
    %v3715 = vsub.f32 %v34, %v3714
    %v3716 = vand.u32 %v3715, 4294901760
    %3717 = vmatpush1.msra.mxu0 %v3716
    %3718 = vmatprep.subr.mxu0 0.0
    %3719 = vmatpush1.msra.mxu0 0.0
    %3720 = vmatprep.subr.mxu0 0.0
    %3721 = vmatpush1.msra.mxu0 0.0
    %3722 = vmatprep.subr.mxu0 0.0
    %3723 = vmatpush1.msra.mxu0 0.0
    %3724 = vmatprep.subr.mxu0 0.0
    %3725 = vmatpush1.msra.mxu0 0.0
    %3726 = vmatprep.subr.mxu0 0.0
    %3727 = vmatpush1.msra.mxu0 0.0
    %3728 = vmatprep.subr.mxu0 0.0
    %3729 = vmatpush1.msra.mxu0 0.0
    %3730 = vmatprep.subr.mxu0 0.0
    %3731 = vmatpush1.msra.mxu0 0.0
    %3732 = vmatprep.subr.mxu0 0.0
    %3733 = vmatpush1.msra.mxu0 0.0
    %3734 = vmatprep.subr.mxu0 0.0
    %3735 = vmatpush1.msra.mxu0 0.0
    %3736 = vmatprep.subr.mxu0 0.0
    %3737 = vmatpush1.msra.mxu0 0.0
    %3738 = vmatprep.subr.mxu0 0.0
    %3739 = vmatpush1.msra.mxu0 0.0
    %3740 = vmatprep.subr.mxu0 0.0
    %3741 = vmatpush1.msra.mxu0 0.0
    %3742 = vmatprep.subr.mxu0 0.0
    %3743 = vmatpush1.msra.mxu0 0.0
    %3744 = vmatprep.subr.mxu0 0.0
    %3745 = vmatpush1.msra.mxu0 0.0
    %3746 = vmatprep.subr.mxu0 0.0
    %3747 = vmatpush1.msra.mxu0 0.0
    %3748 = vmatprep.subr.mxu0 0.0
    %3749 = vmatpush1.msra.mxu0 0.0
    %3750 = vmatprep.subr.mxu0 0.0
    %3751 = vmatpush1.msra.mxu0 0.0
    %3752 = vmatprep.subr.mxu0 0.0
    %3753 = vmatpush1.msra.mxu0 0.0
    %3754 = vmatprep.subr.mxu0 0.0
    %3755 = vmatpush1.msra.mxu0 0.0
    %3756 = vmatprep.subr.mxu0 0.0
    %3757 = vmatpush1.msra.mxu0 0.0
    %3758 = vmatprep.subr.mxu0 0.0
    %3759 = vmatpush1.msra.mxu0 0.0
    %3760 = vmatprep.subr.mxu0 0.0
    %3761 = vmatpush1.msra.mxu0 0.0
    %3762 = vmatprep.subr.mxu0 0.0
    %3763 = vmatpush1.msra.mxu0 0.0
    %3764 = vmatprep.subr.mxu0 0.0
    %3765 = vmatpush1.msra.mxu0 0.0
    %3766 = vmatprep.subr.mxu0 0.0
    %3767 = vmatpush1.msra.mxu0 0.0
    %3768 = vmatprep.subr.mxu0 0.0
    %3769 = vmatpush1.msra.mxu0 0.0
    %3770 = vmatprep.subr.mxu0 0.0
    %3771 = vmatpush1.msra.mxu0 0.0
    %3772 = vmatprep.subr.mxu0 0.0
    %3773 = vmatpush1.msra.mxu0 0.0
    %3774 = vmatprep.subr.mxu0 0.0
    %3775 = vmatpush1.msra.mxu0 0.0
    %3776 = vmatprep.subr.mxu0 0.0
    %3777 = vmatpush1.msra.mxu0 0.0
    %3778 = vmatprep.mubr.f32.mxu0 0.0
    %v3779 = vand.u32 %v3363, 4294901760
    %3780 = vmatmul.mubr.f32.gmra.mrb[0].mxu0 %v3779
    %v3781 = vpop.f32.mrb[0].mxu0
    %v3782 = vadd.f32 %v3697, %v3781
    %v3783 = vpop.f32.mrb[0].mxu0
    %3784 = vmatprep.mubr.f32.mxu0 0.0
    %v3785 = vand.u32 %v3366, 4294901760
    %3786 = vmatmul.mubr.f32.gmra.mrb[0].mxu0 %v3785
    %v3787 = vpop.f32.mrb[0].mxu0
    %v3788 = vadd.f32 %v3705, %v3787
    %v3789 = vpop.f32.mrb[0].mxu0
    %3790 = vdwg.mxu0
    %3791 = vmatprep.subr.mxu0 0.0
    %v3792 = vand.u32 %v33, 4294901760
    %3793 = vmatpush1.msra.mxu0 %v3792
    %3794 = vmatprep.subr.mxu0 0.0
    %v3795 = vand.u32 %v34, 4294901760
    %3796 = vmatpush1.msra.mxu0 %v3795
    %3797 = vmatprep.subr.mxu0 0.0
    %3798 = vmatpush1.msra.mxu0 0.0
    %3799 = vmatprep.subr.mxu0 0.0
    %3800 = vmatpush1.msra.mxu0 0.0
    %3801 = vmatprep.subr.mxu0 0.0
    %3802 = vmatpush1.msra.mxu0 0.0
    %3803 = vmatprep.subr.mxu0 0.0
    %3804 = vmatpush1.msra.mxu0 0.0
    %3805 = vmatprep.subr.mxu0 0.0
    %3806 = vmatpush1.msra.mxu0 0.0
    %3807 = vmatprep.subr.mxu0 0.0
    %3808 = vmatpush1.msra.mxu0 0.0
    %3809 = vmatprep.subr.mxu0 0.0
    %3810 = vmatpush1.msra.mxu0 0.0
    %3811 = vmatprep.subr.mxu0 0.0
    %3812 = vmatpush1.msra.mxu0 0.0
    %3813 = vmatprep.subr.mxu0 0.0
    %3814 = vmatpush1.msra.mxu0 0.0
    %3815 = vmatprep.subr.mxu0 0.0
    %3816 = vmatpush1.msra.mxu0 0.0
    %3817 = vmatprep.subr.mxu0 0.0
    %3818 = vmatpush1.msra.mxu0 0.0
    %3819 = vmatprep.subr.mxu0 0.0
    %3820 = vmatpush1.msra.mxu0 0.0
    %3821 = vmatprep.subr.mxu0 0.0
    %3822 = vmatpush1.msra.mxu0 0.0
    %3823 = vmatprep.subr.mxu0 0.0
    %3824 = vmatpush1.msra.mxu0 0.0
    %3825 = vmatprep.subr.mxu0 0.0
    %3826 = vmatpush1.msra.mxu0 0.0
    %3827 = vmatprep.subr.mxu0 0.0
    %3828 = vmatpush1.msra.mxu0 0.0
    %3829 = vmatprep.subr.mxu0 0.0
    %3830 = vmatpush1.msra.mxu0 0.0
    %3831 = vmatprep.subr.mxu0 0.0
    %3832 = vmatpush1.msra.mxu0 0.0
    %3833 = vmatprep.subr.mxu0 0.0
    %3834 = vmatpush1.msra.mxu0 0.0
    %3835 = vmatprep.subr.mxu0 0.0
    %3836 = vmatpush1.msra.mxu0 0.0
    %3837 = vmatprep.subr.mxu0 0.0
    %3838 = vmatpush1.msra.mxu0 0.0
    %3839 = vmatprep.subr.mxu0 0.0
    %3840 = vmatpush1.msra.mxu0 0.0
    %3841 = vmatprep.subr.mxu0 0.0
    %3842 = vmatpush1.msra.mxu0 0.0
    %3843 = vmatprep.subr.mxu0 0.0
    %3844 = vmatpush1.msra.mxu0 0.0
    %3845 = vmatprep.subr.mxu0 0.0
    %3846 = vmatpush1.msra.mxu0 0.0
    %3847 = vmatprep.subr.mxu0 0.0
    %3848 = vmatpush1.msra.mxu0 0.0
    %3849 = vmatprep.subr.mxu0 0.0
    %3850 = vmatpush1.msra.mxu0 0.0
    %3851 = vmatprep.subr.mxu0 0.0
    %3852 = vmatpush1.msra.mxu0 0.0
    %3853 = vmatprep.subr.mxu0 0.0
    %3854 = vmatpush1.msra.mxu0 0.0
    %3855 = vmatprep.subr.mxu0 0.0
    %3856 = vmatpush1.msra.mxu0 0.0
    %3857 = vmatprep.mubr.f32.mxu0 0.0
    %v3858 = vand.u32 %v3363, 4294901760
    %3859 = vmatmul.mubr.f32.gmra.mrb[0].mxu0 %v3858
    %v3860 = vpop.f32.mrb[0].mxu0
    %v3861 = vadd.f32 %v3782, %v3860
    %v3862 = vpop.f32.mrb[0].mxu0
    %3863 = vmatprep.mubr.f32.mxu0 0.0
    %v3864 = vand.u32 %v3366, 4294901760
    %3865 = vmatmul.mubr.f32.gmra.mrb[0].mxu0 %v3864
    %v3866 = vpop.f32.mrb[0].mxu0
    %v3867 = vadd.f32 %v3788, %v3866
    %v3868 = vpop.f32.mrb[0].mxu0
    %3869 = vdwg.mxu0
    %3870 = vmatprep.subr.mxu0 0.0
    %v3871 = vand.u32 %v3861, 4294901760
    %3872 = vmatpush1.msra.mxu0 %v3871
    %3873 = vmatprep.subr.mxu0 0.0
    %v3874 = vand.u32 %v3867, 4294901760
    %3875 = vmatpush1.msra.mxu0 %v3874
    %3876 = vmatprep.subr.mxu0 0.0
    %3877 = vmatpush1.msra.mxu0 0.0
    %3878 = vmatprep.subr.mxu0 0.0
    %3879 = vmatpush1.msra.mxu0 0.0
    %3880 = vmatprep.subr.mxu0 0.0
    %3881 = vmatpush1.msra.mxu0 0.0
    %3882 = vmatprep.subr.mxu0 0.0
    %3883 = vmatpush1.msra.mxu0 0.0
    %3884 = vmatprep.subr.mxu0 0.0
    %3885 = vmatpush1.msra.mxu0 0.0
    %3886 = vmatprep.subr.mxu0 0.0
    %3887 = vmatpush1.msra.mxu0 0.0
    %3888 = vmatprep.subr.mxu0 0.0
    %3889 = vmatpush1.msra.mxu0 0.0
    %3890 = vmatprep.subr.mxu0 0.0
    %3891 = vmatpush1.msra.mxu0 0.0
    %3892 = vmatprep.subr.mxu0 0.0
    %3893 = vmatpush1.msra.mxu0 0.0
    %3894 = vmatprep.subr.mxu0 0.0
    %3895 = vmatpush1.msra.mxu0 0.0
    %3896 = vmatprep.subr.mxu0 0.0
    %3897 = vmatpush1.msra.mxu0 0.0
    %3898 = vmatprep.subr.mxu0 0.0
    %3899 = vmatpush1.msra.mxu0 0.0
    %3900 = vmatprep.subr.mxu0 0.0
    %3901 = vmatpush1.msra.mxu0 0.0
    %3902 = vmatprep.subr.mxu0 0.0
    %3903 = vmatpush1.msra.mxu0 0.0
    %3904 = vmatprep.subr.mxu0 0.0
    %3905 = vmatpush1.msra.mxu0 0.0
    %3906 = vmatprep.subr.mxu0 0.0
    %3907 = vmatpush1.msra.mxu0 0.0
    %3908 = vmatprep.subr.mxu0 0.0
    %3909 = vmatpush1.msra.mxu0 0.0
    %3910 = vmatprep.subr.mxu0 0.0
    %3911 = vmatpush1.msra.mxu0 0.0
    %3912 = vmatprep.subr.mxu0 0.0
    %3913 = vmatpush1.msra.mxu0 0.0
    %3914 = vmatprep.subr.mxu0 0.0
    %3915 = vmatpush1.msra.mxu0 0.0
    %3916 = vmatprep.subr.mxu0 0.0
    %3917 = vmatpush1.msra.mxu0 0.0
    %3918 = vmatprep.subr.mxu0 0.0
    %3919 = vmatpush1.msra.mxu0 0.0
    %3920 = vmatprep.subr.mxu0 0.0
    %3921 = vmatpush1.msra.mxu0 0.0
    %3922 = vmatprep.subr.mxu0 0.0
    %3923 = vmatpush1.msra.mxu0 0.0
    %3924 = vmatprep.subr.mxu0 0.0
    %3925 = vmatpush1.msra.mxu0 0.0
    %3926 = vmatprep.subr.mxu0 0.0
    %3927 = vmatpush1.msra.mxu0 0.0
    %3928 = vmatprep.subr.mxu0 0.0
    %3929 = vmatpush1.msra.mxu0 0.0
    %3930 = vmatprep.subr.mxu0 0.0
    %3931 = vmatpush1.msra.mxu0 0.0
    %3932 = vmatprep.subr.mxu0 0.0
    %3933 = vmatpush1.msra.mxu0 0.0
    %3934 = vmatprep.subr.mxu0 0.0
    %3935 = vmatpush1.msra.mxu0 0.0
    %3936 = vmatprep.mubr.f32.mxu0 0.0
    %v3937 = vand.u32 %v547, 4294901760
    %v3938 = vsub.f32 %v547, %v3937
    %v3939 = vand.u32 %v3938, 4294901760
    %v3940 = vsub.f32 %v3938, %v3939
    %v3941 = vand.u32 %v3940, 4294901760
    %3942 = vmatmul.mubr.f32.gmra.mrb[0].mxu0 %v3941
    %v3943 = vpop.f32.mrb[0].mxu0
    %v3944 = vadd.f32 0.0, %v3943
    %v3945 = vpop.f32.mrb[0].mxu0
    %3946 = vmatprep.mubr.f32.mxu0 0.0
    %v3947 = vand.u32 %v550, 4294901760
    %v3948 = vsub.f32 %v550, %v3947
    %v3949 = vand.u32 %v3948, 4294901760
    %v3950 = vsub.f32 %v3948, %v3949
    %v3951 = vand.u32 %v3950, 4294901760
    %3952 = vmatmul.mubr.f32.gmra.mrb[0].mxu0 %v3951
    %v3953 = vpop.f32.mrb[0].mxu0
    %v3954 = vadd.f32 0.0, %v3953
    %v3955 = vpop.f32.mrb[0].mxu0
    %3956 = vmatprep.mubr.f32.mxu0 0.0
    %v3957 = vand.u32 %v553, 4294901760
    %v3958 = vsub.f32 %v553, %v3957
    %v3959 = vand.u32 %v3958, 4294901760
    %v3960 = vsub.f32 %v3958, %v3959
    %v3961 = vand.u32 %v3960, 4294901760
    %3962 = vmatmul.mubr.f32.gmra.mrb[0].mxu0 %v3961
    %v3963 = vpop.f32.mrb[0].mxu0
    %v3964 = vadd.f32 0.0, %v3963
    %v3965 = vpop.f32.mrb[0].mxu0
    %3966 = vmatprep.mubr.f32.mxu0 0.0
    %v3967 = vand.u32 %v556, 4294901760
    %v3968 = vsub.f32 %v556, %v3967
    %v3969 = vand.u32 %v3968, 4294901760
    %v3970 = vsub.f32 %v3968, %v3969
    %v3971 = vand.u32 %v3970, 4294901760
    %3972 = vmatmul.mubr.f32.gmra.mrb[0].mxu0 %v3971
    %v3973 = vpop.f32.mrb[0].mxu0
    %v3974 = vadd.f32 0.0, %v3973
    %v3975 = vpop.f32.mrb[0].mxu0
    %3976 = vdwg.mxu0
    %3977 = vmatprep.subr.mxu0 0.0
    %v3978 = vand.u32 %v3861, 4294901760
    %v3979 = vsub.f32 %v3861, %v3978
    %v3980 = vand.u32 %v3979, 4294901760
    %v3981 = vsub.f32 %v3979, %v3980
    %v3982 = vand.u32 %v3981, 4294901760
    %3983 = vmatpush1.msra.mxu0 %v3982
    %3984 = vmatprep.subr.mxu0 0.0
    %v3985 = vand.u32 %v3867, 4294901760
    %v3986 = vsub.f32 %v3867, %v3985
    %v3987 = vand.u32 %v3986, 4294901760
    %v3988 = vsub.f32 %v3986, %v3987
    %v3989 = vand.u32 %v3988, 4294901760
    %3990 = vmatpush1.msra.mxu0 %v3989
    %3991 = vmatprep.subr.mxu0 0.0
    %3992 = vmatpush1.msra.mxu0 0.0
    %3993 = vmatprep.subr.mxu0 0.0
    %3994 = vmatpush1.msra.mxu0 0.0
    %3995 = vmatprep.subr.mxu0 0.0
    %3996 = vmatpush1.msra.mxu0 0.0
    %3997 = vmatprep.subr.mxu0 0.0
    %3998 = vmatpush1.msra.mxu0 0.0
    %3999 = vmatprep.subr.mxu0 0.0
    %4000 = vmatpush1.msra.mxu0 0.0
    %4001 = vmatprep.subr.mxu0 0.0
    %4002 = vmatpush1.msra.mxu0 0.0
    %4003 = vmatprep.subr.mxu0 0.0
    %4004 = vmatpush1.msra.mxu0 0.0
    %4005 = vmatprep.subr.mxu0 0.0
    %4006 = vmatpush1.msra.mxu0 0.0
    %4007 = vmatprep.subr.mxu0 0.0
    %4008 = vmatpush1.msra.mxu0 0.0
    %4009 = vmatprep.subr.mxu0 0.0
    %4010 = vmatpush1.msra.mxu0 0.0
    %4011 = vmatprep.subr.mxu0 0.0
    %4012 = vmatpush1.msra.mxu0 0.0
    %4013 = vmatprep.subr.mxu0 0.0
    %4014 = vmatpush1.msra.mxu0 0.0
    %4015 = vmatprep.subr.mxu0 0.0
    %4016 = vmatpush1.msra.mxu0 0.0
    %4017 = vmatprep.subr.mxu0 0.0
    %4018 = vmatpush1.msra.mxu0 0.0
    %4019 = vmatprep.subr.mxu0 0.0
    %4020 = vmatpush1.msra.mxu0 0.0
    %4021 = vmatprep.subr.mxu0 0.0
    %4022 = vmatpush1.msra.mxu0 0.0
    %4023 = vmatprep.subr.mxu0 0.0
    %4024 = vmatpush1.msra.mxu0 0.0
    %4025 = vmatprep.subr.mxu0 0.0
    %4026 = vmatpush1.msra.mxu0 0.0
    %4027 = vmatprep.subr.mxu0 0.0
    %4028 = vmatpush1.msra.mxu0 0.0
    %4029 = vmatprep.subr.mxu0 0.0
    %4030 = vmatpush1.msra.mxu0 0.0
    %4031 = vmatprep.subr.mxu0 0.0
    %4032 = vmatpush1.msra.mxu0 0.0
    %4033 = vmatprep.subr.mxu0 0.0
    %4034 = vmatpush1.msra.mxu0 0.0
    %4035 = vmatprep.subr.mxu0 0.0
    %4036 = vmatpush1.msra.mxu0 0.0
    %4037 = vmatprep.subr.mxu0 0.0
    %4038 = vmatpush1.msra.mxu0 0.0
    %4039 = vmatprep.subr.mxu0 0.0
    %4040 = vmatpush1.msra.mxu0 0.0
    %4041 = vmatprep.subr.mxu0 0.0
    %4042 = vmatpush1.msra.mxu0 0.0
    %4043 = vmatprep.subr.mxu0 0.0
    %4044 = vmatpush1.msra.mxu0 0.0
    %4045 = vmatprep.subr.mxu0 0.0
    %4046 = vmatpush1.msra.mxu0 0.0
    %4047 = vmatprep.subr.mxu0 0.0
    %4048 = vmatpush1.msra.mxu0 0.0
    %4049 = vmatprep.subr.mxu0 0.0
    %4050 = vmatpush1.msra.mxu0 0.0
    %4051 = vmatprep.mubr.f32.mxu0 0.0
    %v4052 = vand.u32 %v547, 4294901760
    %4053 = vmatmul.mubr.f32.gmra.mrb[0].mxu0 %v4052
    %v4054 = vpop.f32.mrb[0].mxu0
    %v4055 = vadd.f32 %v3944, %v4054
    %v4056 = vpop.f32.mrb[0].mxu0
    %4057 = vmatprep.mubr.f32.mxu0 0.0
    %v4058 = vand.u32 %v550, 4294901760
    %4059 = vmatmul.mubr.f32.gmra.mrb[0].mxu0 %v4058
    %v4060 = vpop.f32.mrb[0].mxu0
    %v4061 = vadd.f32 %v3954, %v4060
    %v4062 = vpop.f32.mrb[0].mxu0
    %4063 = vmatprep.mubr.f32.mxu0 0.0
    %v4064 = vand.u32 %v553, 4294901760
    %4065 = vmatmul.mubr.f32.gmra.mrb[0].mxu0 %v4064
    %v4066 = vpop.f32.mrb[0].mxu0
    %v4067 = vadd.f32 %v3964, %v4066
    %v4068 = vpop.f32.mrb[0].mxu0
    %4069 = vmatprep.mubr.f32.mxu0 0.0
    %v4070 = vand.u32 %v556, 4294901760
    %4071 = vmatmul.mubr.f32.gmra.mrb[0].mxu0 %v4070
    %v4072 = vpop.f32.mrb[0].mxu0
    %v4073 = vadd.f32 %v3974, %v4072
    %v4074 = vpop.f32.mrb[0].mxu0
    %4075 = vdwg.mxu0
    %4076 = vmatprep.subr.mxu0 0.0
    %v4077 = vand.u32 %v3861, 4294901760
    %v4078 = vsub.f32 %v3861, %v4077
    %4079 = vmatpush1.msra.mxu0 %v4078
    %4080 = vmatprep.subr.mxu0 0.0
    %v4081 = vand.u32 %v3867, 4294901760
    %v4082 = vsub.f32 %v3867, %v4081
    %4083 = vmatpush1.msra.mxu0 %v4082
    %4084 = vmatprep.subr.mxu0 0.0
    %4085 = vmatpush1.msra.mxu0 0.0
    %4086 = vmatprep.subr.mxu0 0.0
    %4087 = vmatpush1.msra.mxu0 0.0
    %4088 = vmatprep.subr.mxu0 0.0
    %4089 = vmatpush1.msra.mxu0 0.0
    %4090 = vmatprep.subr.mxu0 0.0
    %4091 = vmatpush1.msra.mxu0 0.0
    %4092 = vmatprep.subr.mxu0 0.0
    %4093 = vmatpush1.msra.mxu0 0.0
    %4094 = vmatprep.subr.mxu0 0.0
    %4095 = vmatpush1.msra.mxu0 0.0
    %4096 = vmatprep.subr.mxu0 0.0
    %4097 = vmatpush1.msra.mxu0 0.0
    %4098 = vmatprep.subr.mxu0 0.0
    %4099 = vmatpush1.msra.mxu0 0.0
    %4100 = vmatprep.subr.mxu0 0.0
    %4101 = vmatpush1.msra.mxu0 0.0
    %4102 = vmatprep.subr.mxu0 0.0
    %4103 = vmatpush1.msra.mxu0 0.0
    %4104 = vmatprep.subr.mxu0 0.0
    %4105 = vmatpush1.msra.mxu0 0.0
    %4106 = vmatprep.subr.mxu0 0.0
    %4107 = vmatpush1.msra.mxu0 0.0
    %4108 = vmatprep.subr.mxu0 0.0
    %4109 = vmatpush1.msra.mxu0 0.0
    %4110 = vmatprep.subr.mxu0 0.0
    %4111 = vmatpush1.msra.mxu0 0.0
    %4112 = vmatprep.subr.mxu0 0.0
    %4113 = vmatpush1.msra.mxu0 0.0
    %4114 = vmatprep.subr.mxu0 0.0
    %4115 = vmatpush1.msra.mxu0 0.0
    %4116 = vmatprep.subr.mxu0 0.0
    %4117 = vmatpush1.msra.mxu0 0.0
    %4118 = vmatprep.subr.mxu0 0.0
    %4119 = vmatpush1.msra.mxu0 0.0
    %4120 = vmatprep.subr.mxu0 0.0
    %4121 = vmatpush1.msra.mxu0 0.0
    %4122 = vmatprep.subr.mxu0 0.0
    %4123 = vmatpush1.msra.mxu0 0.0
    %4124 = vmatprep.subr.mxu0 0.0
    %4125 = vmatpush1.msra.mxu0 0.0
    %4126 = vmatprep.subr.mxu0 0.0
    %4127 = vmatpush1.msra.mxu0 0.0
    %4128 = vmatprep.subr.mxu0 0.0
    %4129 = vmatpush1.msra.mxu0 0.0
    %4130 = vmatprep.subr.mxu0 0.0
    %4131 = vmatpush1.msra.mxu0 0.0
    %4132 = vmatprep.subr.mxu0 0.0
    %4133 = vmatpush1.msra.mxu0 0.0
    %4134 = vmatprep.subr.mxu0 0.0
    %4135 = vmatpush1.msra.mxu0 0.0
    %4136 = vmatprep.subr.mxu0 0.0
    %4137 = vmatpush1.msra.mxu0 0.0
    %4138 = vmatprep.subr.mxu0 0.0
    %4139 = vmatpush1.msra.mxu0 0.0
    %4140 = vmatprep.subr.mxu0 0.0
    %4141 = vmatpush1.msra.mxu0 0.0
    %4142 = vmatprep.subr.mxu0 0.0
    %4143 = vmatpush1.msra.mxu0 0.0
    %4144 = vmatprep.mubr.f32.mxu0 0.0
    %v4145 = vand.u32 %v547, 4294901760
    %v4146 = vsub.f32 %v547, %v4145
    %4147 = vmatmul.mubr.f32.gmra.mrb[0].mxu0 %v4146
    %v4148 = vpop.f32.mrb[0].mxu0
    %v4149 = vadd.f32 %v4055, %v4148
    %v4150 = vpop.f32.mrb[0].mxu0
    %4151 = vmatprep.mubr.f32.mxu0 0.0
    %v4152 = vand.u32 %v550, 4294901760
    %v4153 = vsub.f32 %v550, %v4152
    %4154 = vmatmul.mubr.f32.gmra.mrb[0].mxu0 %v4153
    %v4155 = vpop.f32.mrb[0].mxu0
    %v4156 = vadd.f32 %v4061, %v4155
    %v4157 = vpop.f32.mrb[0].mxu0
    %4158 = vmatprep.mubr.f32.mxu0 0.0
    %v4159 = vand.u32 %v553, 4294901760
    %v4160 = vsub.f32 %v553, %v4159
    %4161 = vmatmul.mubr.f32.gmra.mrb[0].mxu0 %v4160
    %v4162 = vpop.f32.mrb[0].mxu0
    %v4163 = vadd.f32 %v4067, %v4162
    %v4164 = vpop.f32.mrb[0].mxu0
    %4165 = vmatprep.mubr.f32.mxu0 0.0
    %v4166 = vand.u32 %v556, 4294901760
    %v4167 = vsub.f32 %v556, %v4166
    %4168 = vmatmul.mubr.f32.gmra.mrb[0].mxu0 %v4167
    %v4169 = vpop.f32.mrb[0].mxu0
    %v4170 = vadd.f32 %v4073, %v4169
    %v4171 = vpop.f32.mrb[0].mxu0
    %4172 = vdwg.mxu0
    %4173 = vmatprep.subr.mxu0 0.0
    %v4174 = vand.u32 %v3861, 4294901760
    %4175 = vmatpush1.msra.mxu0 %v4174
    %4176 = vmatprep.subr.mxu0 0.0
    %v4177 = vand.u32 %v3867, 4294901760
    %4178 = vmatpush1.msra.mxu0 %v4177
    %4179 = vmatprep.subr.mxu0 0.0
    %4180 = vmatpush1.msra.mxu0 0.0
    %4181 = vmatprep.subr.mxu0 0.0
    %4182 = vmatpush1.msra.mxu0 0.0
    %4183 = vmatprep.subr.mxu0 0.0
    %4184 = vmatpush1.msra.mxu0 0.0
    %4185 = vmatprep.subr.mxu0 0.0
    %4186 = vmatpush1.msra.mxu0 0.0
    %4187 = vmatprep.subr.mxu0 0.0
    %4188 = vmatpush1.msra.mxu0 0.0
    %4189 = vmatprep.subr.mxu0 0.0
    %4190 = vmatpush1.msra.mxu0 0.0
    %4191 = vmatprep.subr.mxu0 0.0
    %4192 = vmatpush1.msra.mxu0 0.0
    %4193 = vmatprep.subr.mxu0 0.0
    %4194 = vmatpush1.msra.mxu0 0.0
    %4195 = vmatprep.subr.mxu0 0.0
    %4196 = vmatpush1.msra.mxu0 0.0
    %4197 = vmatprep.subr.mxu0 0.0
    %4198 = vmatpush1.msra.mxu0 0.0
    %4199 = vmatprep.subr.mxu0 0.0
    %4200 = vmatpush1.msra.mxu0 0.0
    %4201 = vmatprep.subr.mxu0 0.0
    %4202 = vmatpush1.msra.mxu0 0.0
    %4203 = vmatprep.subr.mxu0 0.0
    %4204 = vmatpush1.msra.mxu0 0.0
    %4205 = vmatprep.subr.mxu0 0.0
    %4206 = vmatpush1.msra.mxu0 0.0
    %4207 = vmatprep.subr.mxu0 0.0
    %4208 = vmatpush1.msra.mxu0 0.0
    %4209 = vmatprep.subr.mxu0 0.0
    %4210 = vmatpush1.msra.mxu0 0.0
    %4211 = vmatprep.subr.mxu0 0.0
    %4212 = vmatpush1.msra.mxu0 0.0
    %4213 = vmatprep.subr.mxu0 0.0
    %4214 = vmatpush1.msra.mxu0 0.0
    %4215 = vmatprep.subr.mxu0 0.0
    %4216 = vmatpush1.msra.mxu0 0.0
    %4217 = vmatprep.subr.mxu0 0.0
    %4218 = vmatpush1.msra.mxu0 0.0
    %4219 = vmatprep.subr.mxu0 0.0
    %4220 = vmatpush1.msra.mxu0 0.0
    %4221 = vmatprep.subr.mxu0 0.0
    %4222 = vmatpush1.msra.mxu0 0.0
    %4223 = vmatprep.subr.mxu0 0.0
    %4224 = vmatpush1.msra.mxu0 0.0
    %4225 = vmatprep.subr.mxu0 0.0
    %4226 = vmatpush1.msra.mxu0 0.0
    %4227 = vmatprep.subr.mxu0 0.0
    %4228 = vmatpush1.msra.mxu0 0.0
    %4229 = vmatprep.subr.mxu0 0.0
    %4230 = vmatpush1.msra.mxu0 0.0
    %4231 = vmatprep.subr.mxu0 0.0
    %4232 = vmatpush1.msra.mxu0 0.0
    %4233 = vmatprep.subr.mxu0 0.0
    %4234 = vmatpush1.msra.mxu0 0.0
    %4235 = vmatprep.subr.mxu0 0.0
    %4236 = vmatpush1.msra.mxu0 0.0
    %4237 = vmatprep.subr.mxu0 0.0
    %4238 = vmatpush1.msra.mxu0 0.0
    %4239 = vmatprep.mubr.f32.mxu0 0.0
    %v4240 = vand.u32 %v547, 4294901760
    %v4241 = vsub.f32 %v547, %v4240
    %v4242 = vand.u32 %v4241, 4294901760
    %4243 = vmatmul.mubr.f32.gmra.mrb[0].mxu0 %v4242
    %v4244 = vpop.f32.mrb[0].mxu0
    %v4245 = vadd.f32 %v4149, %v4244
    %v4246 = vpop.f32.mrb[0].mxu0
    %4247 = vmatprep.mubr.f32.mxu0 0.0
    %v4248 = vand.u32 %v550, 4294901760
    %v4249 = vsub.f32 %v550, %v4248
    %v4250 = vand.u32 %v4249, 4294901760
    %4251 = vmatmul.mubr.f32.gmra.mrb[0].mxu0 %v4250
    %v4252 = vpop.f32.mrb[0].mxu0
    %v4253 = vadd.f32 %v4156, %v4252
    %v4254 = vpop.f32.mrb[0].mxu0
    %4255 = vmatprep.mubr.f32.mxu0 0.0
    %v4256 = vand.u32 %v553, 4294901760
    %v4257 = vsub.f32 %v553, %v4256
    %v4258 = vand.u32 %v4257, 4294901760
    %4259 = vmatmul.mubr.f32.gmra.mrb[0].mxu0 %v4258
    %v4260 = vpop.f32.mrb[0].mxu0
    %v4261 = vadd.f32 %v4163, %v4260
    %v4262 = vpop.f32.mrb[0].mxu0
    %4263 = vmatprep.mubr.f32.mxu0 0.0
    %v4264 = vand.u32 %v556, 4294901760
    %v4265 = vsub.f32 %v556, %v4264
    %v4266 = vand.u32 %v4265, 4294901760
    %4267 = vmatmul.mubr.f32.gmra.mrb[0].mxu0 %v4266
    %v4268 = vpop.f32.mrb[0].mxu0
    %v4269 = vadd.f32 %v4170, %v4268
    %v4270 = vpop.f32.mrb[0].mxu0
    %4271 = vdwg.mxu0
    %4272 = vmatprep.subr.mxu0 0.0
    %v4273 = vand.u32 %v3861, 4294901760
    %v4274 = vsub.f32 %v3861, %v4273
    %v4275 = vand.u32 %v4274, 4294901760
    %4276 = vmatpush1.msra.mxu0 %v4275
    %4277 = vmatprep.subr.mxu0 0.0
    %v4278 = vand.u32 %v3867, 4294901760
    %v4279 = vsub.f32 %v3867, %v4278
    %v4280 = vand.u32 %v4279, 4294901760
    %4281 = vmatpush1.msra.mxu0 %v4280
    %4282 = vmatprep.subr.mxu0 0.0
    %4283 = vmatpush1.msra.mxu0 0.0
    %4284 = vmatprep.subr.mxu0 0.0
    %4285 = vmatpush1.msra.mxu0 0.0
    %4286 = vmatprep.subr.mxu0 0.0
    %4287 = vmatpush1.msra.mxu0 0.0
    %4288 = vmatprep.subr.mxu0 0.0
    %4289 = vmatpush1.msra.mxu0 0.0
    %4290 = vmatprep.subr.mxu0 0.0
    %4291 = vmatpush1.msra.mxu0 0.0
    %4292 = vmatprep.subr.mxu0 0.0
    %4293 = vmatpush1.msra.mxu0 0.0
    %4294 = vmatprep.subr.mxu0 0.0
    %4295 = vmatpush1.msra.mxu0 0.0
    %4296 = vmatprep.subr.mxu0 0.0
    %4297 = vmatpush1.msra.mxu0 0.0
    %4298 = vmatprep.subr.mxu0 0.0
    %4299 = vmatpush1.msra.mxu0 0.0
    %4300 = vmatprep.subr.mxu0 0.0
    %4301 = vmatpush1.msra.mxu0 0.0
    %4302 = vmatprep.subr.mxu0 0.0
    %4303 = vmatpush1.msra.mxu0 0.0
    %4304 = vmatprep.subr.mxu0 0.0
    %4305 = vmatpush1.msra.mxu0 0.0
    %4306 = vmatprep.subr.mxu0 0.0
    %4307 = vmatpush1.msra.mxu0 0.0
    %4308 = vmatprep.subr.mxu0 0.0
    %4309 = vmatpush1.msra.mxu0 0.0
    %4310 = vmatprep.subr.mxu0 0.0
    %4311 = vmatpush1.msra.mxu0 0.0
    %4312 = vmatprep.subr.mxu0 0.0
    %4313 = vmatpush1.msra.mxu0 0.0
    %4314 = vmatprep.subr.mxu0 0.0
    %4315 = vmatpush1.msra.mxu0 0.0
    %4316 = vmatprep.subr.mxu0 0.0
    %4317 = vmatpush1.msra.mxu0 0.0
    %4318 = vmatprep.subr.mxu0 0.0
    %4319 = vmatpush1.msra.mxu0 0.0
    %4320 = vmatprep.subr.mxu0 0.0
    %4321 = vmatpush1.msra.mxu0 0.0
    %4322 = vmatprep.subr.mxu0 0.0
    %4323 = vmatpush1.msra.mxu0 0.0
    %4324 = vmatprep.subr.mxu0 0.0
    %4325 = vmatpush1.msra.mxu0 0.0
    %4326 = vmatprep.subr.mxu0 0.0
    %4327 = vmatpush1.msra.mxu0 0.0
    %4328 = vmatprep.subr.mxu0 0.0
    %4329 = vmatpush1.msra.mxu0 0.0
    %4330 = vmatprep.subr.mxu0 0.0
    %4331 = vmatpush1.msra.mxu0 0.0
    %4332 = vmatprep.subr.mxu0 0.0
    %4333 = vmatpush1.msra.mxu0 0.0
    %4334 = vmatprep.subr.mxu0 0.0
    %4335 = vmatpush1.msra.mxu0 0.0
    %4336 = vmatprep.subr.mxu0 0.0
    %4337 = vmatpush1.msra.mxu0 0.0
    %4338 = vmatprep.subr.mxu0 0.0
    %4339 = vmatpush1.msra.mxu0 0.0
    %4340 = vmatprep.subr.mxu0 0.0
    %4341 = vmatpush1.msra.mxu0 0.0
    %4342 = vmatprep.mubr.f32.mxu0 0.0
    %v4343 = vand.u32 %v547, 4294901760
    %4344 = vmatmul.mubr.f32.gmra.mrb[0].mxu0 %v4343
    %v4345 = vpop.f32.mrb[0].mxu0
    %v4346 = vadd.f32 %v4245, %v4345
    %v4347 = vpop.f32.mrb[0].mxu0
    %4348 = vmatprep.mubr.f32.mxu0 0.0
    %v4349 = vand.u32 %v550, 4294901760
    %4350 = vmatmul.mubr.f32.gmra.mrb[0].mxu0 %v4349
    %v4351 = vpop.f32.mrb[0].mxu0
    %v4352 = vadd.f32 %v4253, %v4351
    %v4353 = vpop.f32.mrb[0].mxu0
    %4354 = vmatprep.mubr.f32.mxu0 0.0
    %v4355 = vand.u32 %v553, 4294901760
    %4356 = vmatmul.mubr.f32.gmra.mrb[0].mxu0 %v4355
    %v4357 = vpop.f32.mrb[0].mxu0
    %v4358 = vadd.f32 %v4261, %v4357
    %v4359 = vpop.f32.mrb[0].mxu0
    %4360 = vmatprep.mubr.f32.mxu0 0.0
    %v4361 = vand.u32 %v556, 4294901760
    %4362 = vmatmul.mubr.f32.gmra.mrb[0].mxu0 %v4361
    %v4363 = vpop.f32.mrb[0].mxu0
    %v4364 = vadd.f32 %v4269, %v4363
    %v4365 = vpop.f32.mrb[0].mxu0
    %4366 = vdwg.mxu0
    %4367 = vmatprep.subr.mxu0 0.0
    %v4368 = vand.u32 %v3861, 4294901760
    %4369 = vmatpush1.msra.mxu0 %v4368
    %4370 = vmatprep.subr.mxu0 0.0
    %v4371 = vand.u32 %v3867, 4294901760
    %4372 = vmatpush1.msra.mxu0 %v4371
    %4373 = vmatprep.subr.mxu0 0.0
    %4374 = vmatpush1.msra.mxu0 0.0
    %4375 = vmatprep.subr.mxu0 0.0
    %4376 = vmatpush1.msra.mxu0 0.0
    %4377 = vmatprep.subr.mxu0 0.0
    %4378 = vmatpush1.msra.mxu0 0.0
    %4379 = vmatprep.subr.mxu0 0.0
    %4380 = vmatpush1.msra.mxu0 0.0
    %4381 = vmatprep.subr.mxu0 0.0
    %4382 = vmatpush1.msra.mxu0 0.0
    %4383 = vmatprep.subr.mxu0 0.0
    %4384 = vmatpush1.msra.mxu0 0.0
    %4385 = vmatprep.subr.mxu0 0.0
    %4386 = vmatpush1.msra.mxu0 0.0
    %4387 = vmatprep.subr.mxu0 0.0
    %4388 = vmatpush1.msra.mxu0 0.0
    %4389 = vmatprep.subr.mxu0 0.0
    %4390 = vmatpush1.msra.mxu0 0.0
    %4391 = vmatprep.subr.mxu0 0.0
    %4392 = vmatpush1.msra.mxu0 0.0
    %4393 = vmatprep.subr.mxu0 0.0
    %4394 = vmatpush1.msra.mxu0 0.0
    %4395 = vmatprep.subr.mxu0 0.0
    %4396 = vmatpush1.msra.mxu0 0.0
    %4397 = vmatprep.subr.mxu0 0.0
    %4398 = vmatpush1.msra.mxu0 0.0
    %4399 = vmatprep.subr.mxu0 0.0
    %4400 = vmatpush1.msra.mxu0 0.0
    %4401 = vmatprep.subr.mxu0 0.0
    %4402 = vmatpush1.msra.mxu0 0.0
    %4403 = vmatprep.subr.mxu0 0.0
    %4404 = vmatpush1.msra.mxu0 0.0
    %4405 = vmatprep.subr.mxu0 0.0
    %4406 = vmatpush1.msra.mxu0 0.0
    %4407 = vmatprep.subr.mxu0 0.0
    %4408 = vmatpush1.msra.mxu0 0.0
    %4409 = vmatprep.subr.mxu0 0.0
    %4410 = vmatpush1.msra.mxu0 0.0
    %4411 = vmatprep.subr.mxu0 0.0
    %4412 = vmatpush1.msra.mxu0 0.0
    %4413 = vmatprep.subr.mxu0 0.0
    %4414 = vmatpush1.msra.mxu0 0.0
    %4415 = vmatprep.subr.mxu0 0.0
    %4416 = vmatpush1.msra.mxu0 0.0
    %4417 = vmatprep.subr.mxu0 0.0
    %4418 = vmatpush1.msra.mxu0 0.0
    %4419 = vmatprep.subr.mxu0 0.0
    %4420 = vmatpush1.msra.mxu0 0.0
    %4421 = vmatprep.subr.mxu0 0.0
    %4422 = vmatpush1.msra.mxu0 0.0
    %4423 = vmatprep.subr.mxu0 0.0
    %4424 = vmatpush1.msra.mxu0 0.0
    %4425 = vmatprep.subr.mxu0 0.0
    %4426 = vmatpush1.msra.mxu0 0.0
    %4427 = vmatprep.subr.mxu0 0.0
    %4428 = vmatpush1.msra.mxu0 0.0
    %4429 = vmatprep.subr.mxu0 0.0
    %4430 = vmatpush1.msra.mxu0 0.0
    %4431 = vmatprep.subr.mxu0 0.0
    %4432 = vmatpush1.msra.mxu0 0.0
    %4433 = vmatprep.mubr.f32.mxu0 0.0
    %v4434 = vand.u32 %v547, 4294901760
    %4435 = vmatmul.mubr.f32.gmra.mrb[0].mxu0 %v4434
    %v4436 = vpop.f32.mrb[0].mxu0
    %v4437 = vadd.f32 %v4346, %v4436
    %v4438 = vpop.f32.mrb[0].mxu0
    %4439 = vmatprep.mubr.f32.mxu0 0.0
    %v4440 = vand.u32 %v550, 4294901760
    %4441 = vmatmul.mubr.f32.gmra.mrb[0].mxu0 %v4440
    %v4442 = vpop.f32.mrb[0].mxu0
    %v4443 = vadd.f32 %v4352, %v4442
    %v4444 = vpop.f32.mrb[0].mxu0
    %4445 = vmatprep.mubr.f32.mxu0 0.0
    %v4446 = vand.u32 %v553, 4294901760
    %4447 = vmatmul.mubr.f32.gmra.mrb[0].mxu0 %v4446
    %v4448 = vpop.f32.mrb[0].mxu0
    %v4449 = vadd.f32 %v4358, %v4448
    %v4450 = vpop.f32.mrb[0].mxu0
    %4451 = vmatprep.mubr.f32.mxu0 0.0
    %v4452 = vand.u32 %v556, 4294901760
    %4453 = vmatmul.mubr.f32.gmra.mrb[0].mxu0 %v4452
    %v4454 = vpop.f32.mrb[0].mxu0
    %v4455 = vadd.f32 %v4364, %v4454
    %v4456 = vpop.f32.mrb[0].mxu0
    %4457 = vdwg.mxu0
    %s4458 = scalar_lea.vmem [#allocation5], 96
    %4459 = vst.msk [vmem:[%s4458] sm:$0xff] %vm1146, %v4437
    %4460 = vst.msk [vmem:[%s4458 + $0x8] sm:$0xff] %vm1146, %v4443
    %4461 = vst.msk [vmem:[%s4458 + $0x10] sm:$0xff] %vm1146, %v4449
    %4462 = vst.msk [vmem:[%s4458 + $0x18] sm:$0xff] %vm1146, %v4455
    %s4463 = scalar_lea.vmem [#allocation2], 64
    %v4464 = vld [vmem:[%s4463] sm:$0xff]
    %v4465 = vld [vmem:[%s4463 + $0x8] sm:$0xff]
    %v4467 = vsel %vm37, %v4464, 0
    %v4470 = vsel %vm37, %v4465, 0
    %4472 = vmatprep.subr.mxu0 0.0
    %v4473 = vand.u32 %v33, 4294901760
    %4474 = vmatpush1.msra.mxu0 %v4473
    %4475 = vmatprep.subr.mxu0 0.0
    %v4476 = vand.u32 %v34, 4294901760
    %4477 = vmatpush1.msra.mxu0 %v4476
    %4478 = vmatprep.subr.mxu0 0.0
    %4479 = vmatpush1.msra.mxu0 0.0
    %4480 = vmatprep.subr.mxu0 0.0
    %4481 = vmatpush1.msra.mxu0 0.0
    %4482 = vmatprep.subr.mxu0 0.0
    %4483 = vmatpush1.msra.mxu0 0.0
    %4484 = vmatprep.subr.mxu0 0.0
    %4485 = vmatpush1.msra.mxu0 0.0
    %4486 = vmatprep.subr.mxu0 0.0
    %4487 = vmatpush1.msra.mxu0 0.0
    %4488 = vmatprep.subr.mxu0 0.0
    %4489 = vmatpush1.msra.mxu0 0.0
    %4490 = vmatprep.subr.mxu0 0.0
    %4491 = vmatpush1.msra.mxu0 0.0
    %4492 = vmatprep.subr.mxu0 0.0
    %4493 = vmatpush1.msra.mxu0 0.0
    %4494 = vmatprep.subr.mxu0 0.0
    %4495 = vmatpush1.msra.mxu0 0.0
    %4496 = vmatprep.subr.mxu0 0.0
    %4497 = vmatpush1.msra.mxu0 0.0
    %4498 = vmatprep.subr.mxu0 0.0
    %4499 = vmatpush1.msra.mxu0 0.0
    %4500 = vmatprep.subr.mxu0 0.0
    %4501 = vmatpush1.msra.mxu0 0.0
    %4502 = vmatprep.subr.mxu0 0.0
    %4503 = vmatpush1.msra.mxu0 0.0
    %4504 = vmatprep.subr.mxu0 0.0
    %4505 = vmatpush1.msra.mxu0 0.0
    %4506 = vmatprep.subr.mxu0 0.0
    %4507 = vmatpush1.msra.mxu0 0.0
    %4508 = vmatprep.subr.mxu0 0.0
    %4509 = vmatpush1.msra.mxu0 0.0
    %4510 = vmatprep.subr.mxu0 0.0
    %4511 = vmatpush1.msra.mxu0 0.0
    %4512 = vmatprep.subr.mxu0 0.0
    %4513 = vmatpush1.msra.mxu0 0.0
    %4514 = vmatprep.subr.mxu0 0.0
    %4515 = vmatpush1.msra.mxu0 0.0
    %4516 = vmatprep.subr.mxu0 0.0
    %4517 = vmatpush1.msra.mxu0 0.0
    %4518 = vmatprep.subr.mxu0 0.0
    %4519 = vmatpush1.msra.mxu0 0.0
    %4520 = vmatprep.subr.mxu0 0.0
    %4521 = vmatpush1.msra.mxu0 0.0
    %4522 = vmatprep.subr.mxu0 0.0
    %4523 = vmatpush1.msra.mxu0 0.0
    %4524 = vmatprep.subr.mxu0 0.0
    %4525 = vmatpush1.msra.mxu0 0.0
    %4526 = vmatprep.subr.mxu0 0.0
    %4527 = vmatpush1.msra.mxu0 0.0
    %4528 = vmatprep.subr.mxu0 0.0
    %4529 = vmatpush1.msra.mxu0 0.0
    %4530 = vmatprep.subr.mxu0 0.0
    %4531 = vmatpush1.msra.mxu0 0.0
    %4532 = vmatprep.subr.mxu0 0.0
    %4533 = vmatpush1.msra.mxu0 0.0
    %4534 = vmatprep.subr.mxu0 0.0
    %4535 = vmatpush1.msra.mxu0 0.0
    %4536 = vmatprep.subr.mxu0 0.0
    %4537 = vmatpush1.msra.mxu0 0.0
    %4538 = vmatprep.mubr.f32.mxu0 0.0
    %v4539 = vand.u32 %v4467, 4294901760
    %v4540 = vsub.f32 %v4467, %v4539
    %v4541 = vand.u32 %v4540, 4294901760
    %v4542 = vsub.f32 %v4540, %v4541
    %v4543 = vand.u32 %v4542, 4294901760
    %4544 = vmatmul.mubr.f32.gmra.mrb[0].mxu0 %v4543
    %v4545 = vpop.f32.mrb[0].mxu0
    %v4546 = vadd.f32 0.0, %v4545
    %v4547 = vpop.f32.mrb[0].mxu0
    %4548 = vmatprep.mubr.f32.mxu0 0.0
    %v4549 = vand.u32 %v4470, 4294901760
    %v4550 = vsub.f32 %v4470, %v4549
    %v4551 = vand.u32 %v4550, 4294901760
    %v4552 = vsub.f32 %v4550, %v4551
    %v4553 = vand.u32 %v4552, 4294901760
    %4554 = vmatmul.mubr.f32.gmra.mrb[0].mxu0 %v4553
    %v4555 = vpop.f32.mrb[0].mxu0
    %v4556 = vadd.f32 0.0, %v4555
    %v4557 = vpop.f32.mrb[0].mxu0
    %4558 = vdwg.mxu0
    %4559 = vmatprep.subr.mxu0 0.0
    %v4560 = vand.u32 %v33, 4294901760
    %v4561 = vsub.f32 %v33, %v4560
    %v4562 = vand.u32 %v4561, 4294901760
    %v4563 = vsub.f32 %v4561, %v4562
    %v4564 = vand.u32 %v4563, 4294901760
    %4565 = vmatpush1.msra.mxu0 %v4564
    %4566 = vmatprep.subr.mxu0 0.0
    %v4567 = vand.u32 %v34, 4294901760
    %v4568 = vsub.f32 %v34, %v4567
    %v4569 = vand.u32 %v4568, 4294901760
    %v4570 = vsub.f32 %v4568, %v4569
    %v4571 = vand.u32 %v4570, 4294901760
    %4572 = vmatpush1.msra.mxu0 %v4571
    %4573 = vmatprep.subr.mxu0 0.0
    %4574 = vmatpush1.msra.mxu0 0.0
    %4575 = vmatprep.subr.mxu0 0.0
    %4576 = vmatpush1.msra.mxu0 0.0
    %4577 = vmatprep.subr.mxu0 0.0
    %4578 = vmatpush1.msra.mxu0 0.0
    %4579 = vmatprep.subr.mxu0 0.0
    %4580 = vmatpush1.msra.mxu0 0.0
    %4581 = vmatprep.subr.mxu0 0.0
    %4582 = vmatpush1.msra.mxu0 0.0
    %4583 = vmatprep.subr.mxu0 0.0
    %4584 = vmatpush1.msra.mxu0 0.0
    %4585 = vmatprep.subr.mxu0 0.0
    %4586 = vmatpush1.msra.mxu0 0.0
    %4587 = vmatprep.subr.mxu0 0.0
    %4588 = vmatpush1.msra.mxu0 0.0
    %4589 = vmatprep.subr.mxu0 0.0
    %4590 = vmatpush1.msra.mxu0 0.0
    %4591 = vmatprep.subr.mxu0 0.0
    %4592 = vmatpush1.msra.mxu0 0.0
    %4593 = vmatprep.subr.mxu0 0.0
    %4594 = vmatpush1.msra.mxu0 0.0
    %4595 = vmatprep.subr.mxu0 0.0
    %4596 = vmatpush1.msra.mxu0 0.0
    %4597 = vmatprep.subr.mxu0 0.0
    %4598 = vmatpush1.msra.mxu0 0.0
    %4599 = vmatprep.subr.mxu0 0.0
    %4600 = vmatpush1.msra.mxu0 0.0
    %4601 = vmatprep.subr.mxu0 0.0
    %4602 = vmatpush1.msra.mxu0 0.0
    %4603 = vmatprep.subr.mxu0 0.0
    %4604 = vmatpush1.msra.mxu0 0.0
    %4605 = vmatprep.subr.mxu0 0.0
    %4606 = vmatpush1.msra.mxu0 0.0
    %4607 = vmatprep.subr.mxu0 0.0
    %4608 = vmatpush1.msra.mxu0 0.0
    %4609 = vmatprep.subr.mxu0 0.0
    %4610 = vmatpush1.msra.mxu0 0.0
    %4611 = vmatprep.subr.mxu0 0.0
    %4612 = vmatpush1.msra.mxu0 0.0
    %4613 = vmatprep.subr.mxu0 0.0
    %4614 = vmatpush1.msra.mxu0 0.0
    %4615 = vmatprep.subr.mxu0 0.0
    %4616 = vmatpush1.msra.mxu0 0.0
    %4617 = vmatprep.subr.mxu0 0.0
    %4618 = vmatpush1.msra.mxu0 0.0
    %4619 = vmatprep.subr.mxu0 0.0
    %4620 = vmatpush1.msra.mxu0 0.0
    %4621 = vmatprep.subr.mxu0 0.0
    %4622 = vmatpush1.msra.mxu0 0.0
    %4623 = vmatprep.subr.mxu0 0.0
    %4624 = vmatpush1.msra.mxu0 0.0
    %4625 = vmatprep.subr.mxu0 0.0
    %4626 = vmatpush1.msra.mxu0 0.0
    %4627 = vmatprep.subr.mxu0 0.0
    %4628 = vmatpush1.msra.mxu0 0.0
    %4629 = vmatprep.subr.mxu0 0.0
    %4630 = vmatpush1.msra.mxu0 0.0
    %4631 = vmatprep.subr.mxu0 0.0
    %4632 = vmatpush1.msra.mxu0 0.0
    %4633 = vmatprep.mubr.f32.mxu0 0.0
    %v4634 = vand.u32 %v4467, 4294901760
    %4635 = vmatmul.mubr.f32.gmra.mrb[0].mxu0 %v4634
    %v4636 = vpop.f32.mrb[0].mxu0
    %v4637 = vadd.f32 %v4546, %v4636
    %v4638 = vpop.f32.mrb[0].mxu0
    %4639 = vmatprep.mubr.f32.mxu0 0.0
    %v4640 = vand.u32 %v4470, 4294901760
    %4641 = vmatmul.mubr.f32.gmra.mrb[0].mxu0 %v4640
    %v4642 = vpop.f32.mrb[0].mxu0
    %v4643 = vadd.f32 %v4556, %v4642
    %v4644 = vpop.f32.mrb[0].mxu0
    %4645 = vdwg.mxu0
    %4646 = vmatprep.subr.mxu0 0.0
    %v4647 = vand.u32 %v33, 4294901760
    %v4648 = vsub.f32 %v33, %v4647
    %4649 = vmatpush1.msra.mxu0 %v4648
    %4650 = vmatprep.subr.mxu0 0.0
    %v4651 = vand.u32 %v34, 4294901760
    %v4652 = vsub.f32 %v34, %v4651
    %4653 = vmatpush1.msra.mxu0 %v4652
    %4654 = vmatprep.subr.mxu0 0.0
    %4655 = vmatpush1.msra.mxu0 0.0
    %4656 = vmatprep.subr.mxu0 0.0
    %4657 = vmatpush1.msra.mxu0 0.0
    %4658 = vmatprep.subr.mxu0 0.0
    %4659 = vmatpush1.msra.mxu0 0.0
    %4660 = vmatprep.subr.mxu0 0.0
    %4661 = vmatpush1.msra.mxu0 0.0
    %4662 = vmatprep.subr.mxu0 0.0
    %4663 = vmatpush1.msra.mxu0 0.0
    %4664 = vmatprep.subr.mxu0 0.0
    %4665 = vmatpush1.msra.mxu0 0.0
    %4666 = vmatprep.subr.mxu0 0.0
    %4667 = vmatpush1.msra.mxu0 0.0
    %4668 = vmatprep.subr.mxu0 0.0
    %4669 = vmatpush1.msra.mxu0 0.0
    %4670 = vmatprep.subr.mxu0 0.0
    %4671 = vmatpush1.msra.mxu0 0.0
    %4672 = vmatprep.subr.mxu0 0.0
    %4673 = vmatpush1.msra.mxu0 0.0
    %4674 = vmatprep.subr.mxu0 0.0
    %4675 = vmatpush1.msra.mxu0 0.0
    %4676 = vmatprep.subr.mxu0 0.0
    %4677 = vmatpush1.msra.mxu0 0.0
    %4678 = vmatprep.subr.mxu0 0.0
    %4679 = vmatpush1.msra.mxu0 0.0
    %4680 = vmatprep.subr.mxu0 0.0
    %4681 = vmatpush1.msra.mxu0 0.0
    %4682 = vmatprep.subr.mxu0 0.0
    %4683 = vmatpush1.msra.mxu0 0.0
    %4684 = vmatprep.subr.mxu0 0.0
    %4685 = vmatpush1.msra.mxu0 0.0
    %4686 = vmatprep.subr.mxu0 0.0
    %4687 = vmatpush1.msra.mxu0 0.0
    %4688 = vmatprep.subr.mxu0 0.0
    %4689 = vmatpush1.msra.mxu0 0.0
    %4690 = vmatprep.subr.mxu0 0.0
    %4691 = vmatpush1.msra.mxu0 0.0
    %4692 = vmatprep.subr.mxu0 0.0
    %4693 = vmatpush1.msra.mxu0 0.0
    %4694 = vmatprep.subr.mxu0 0.0
    %4695 = vmatpush1.msra.mxu0 0.0
    %4696 = vmatprep.subr.mxu0 0.0
    %4697 = vmatpush1.msra.mxu0 0.0
    %4698 = vmatprep.subr.mxu0 0.0
    %4699 = vmatpush1.msra.mxu0 0.0
    %4700 = vmatprep.subr.mxu0 0.0
    %4701 = vmatpush1.msra.mxu0 0.0
    %4702 = vmatprep.subr.mxu0 0.0
    %4703 = vmatpush1.msra.mxu0 0.0
    %4704 = vmatprep.subr.mxu0 0.0
    %4705 = vmatpush1.msra.mxu0 0.0
    %4706 = vmatprep.subr.mxu0 0.0
    %4707 = vmatpush1.msra.mxu0 0.0
    %4708 = vmatprep.subr.mxu0 0.0
    %4709 = vmatpush1.msra.mxu0 0.0
    %4710 = vmatprep.subr.mxu0 0.0
    %4711 = vmatpush1.msra.mxu0 0.0
    %4712 = vmatprep.subr.mxu0 0.0
    %4713 = vmatpush1.msra.mxu0 0.0
    %4714 = vmatprep.mubr.f32.mxu0 0.0
    %v4715 = vand.u32 %v4467, 4294901760
    %v4716 = vsub.f32 %v4467, %v4715
    %4717 = vmatmul.mubr.f32.gmra.mrb[0].mxu0 %v4716
    %v4718 = vpop.f32.mrb[0].mxu0
    %v4719 = vadd.f32 %v4637, %v4718
    %v4720 = vpop.f32.mrb[0].mxu0
    %4721 = vmatprep.mubr.f32.mxu0 0.0
    %v4722 = vand.u32 %v4470, 4294901760
    %v4723 = vsub.f32 %v4470, %v4722
    %4724 = vmatmul.mubr.f32.gmra.mrb[0].mxu0 %v4723
    %v4725 = vpop.f32.mrb[0].mxu0
    %v4726 = vadd.f32 %v4643, %v4725
    %v4727 = vpop.f32.mrb[0].mxu0
    %4728 = vdwg.mxu0
    %4729 = vmatprep.subr.mxu0 0.0
    %v4730 = vand.u32 %v33, 4294901760
    %4731 = vmatpush1.msra.mxu0 %v4730
    %4732 = vmatprep.subr.mxu0 0.0
    %v4733 = vand.u32 %v34, 4294901760
    %4734 = vmatpush1.msra.mxu0 %v4733
    %4735 = vmatprep.subr.mxu0 0.0
    %4736 = vmatpush1.msra.mxu0 0.0
    %4737 = vmatprep.subr.mxu0 0.0
    %4738 = vmatpush1.msra.mxu0 0.0
    %4739 = vmatprep.subr.mxu0 0.0
    %4740 = vmatpush1.msra.mxu0 0.0
    %4741 = vmatprep.subr.mxu0 0.0
    %4742 = vmatpush1.msra.mxu0 0.0
    %4743 = vmatprep.subr.mxu0 0.0
    %4744 = vmatpush1.msra.mxu0 0.0
    %4745 = vmatprep.subr.mxu0 0.0
    %4746 = vmatpush1.msra.mxu0 0.0
    %4747 = vmatprep.subr.mxu0 0.0
    %4748 = vmatpush1.msra.mxu0 0.0
    %4749 = vmatprep.subr.mxu0 0.0
    %4750 = vmatpush1.msra.mxu0 0.0
    %4751 = vmatprep.subr.mxu0 0.0
    %4752 = vmatpush1.msra.mxu0 0.0
    %4753 = vmatprep.subr.mxu0 0.0
    %4754 = vmatpush1.msra.mxu0 0.0
    %4755 = vmatprep.subr.mxu0 0.0
    %4756 = vmatpush1.msra.mxu0 0.0
    %4757 = vmatprep.subr.mxu0 0.0
    %4758 = vmatpush1.msra.mxu0 0.0
    %4759 = vmatprep.subr.mxu0 0.0
    %4760 = vmatpush1.msra.mxu0 0.0
    %4761 = vmatprep.subr.mxu0 0.0
    %4762 = vmatpush1.msra.mxu0 0.0
    %4763 = vmatprep.subr.mxu0 0.0
    %4764 = vmatpush1.msra.mxu0 0.0
    %4765 = vmatprep.subr.mxu0 0.0
    %4766 = vmatpush1.msra.mxu0 0.0
    %4767 = vmatprep.subr.mxu0 0.0
    %4768 = vmatpush1.msra.mxu0 0.0
    %4769 = vmatprep.subr.mxu0 0.0
    %4770 = vmatpush1.msra.mxu0 0.0
    %4771 = vmatprep.subr.mxu0 0.0
    %4772 = vmatpush1.msra.mxu0 0.0
    %4773 = vmatprep.subr.mxu0 0.0
    %4774 = vmatpush1.msra.mxu0 0.0
    %4775 = vmatprep.subr.mxu0 0.0
    %4776 = vmatpush1.msra.mxu0 0.0
    %4777 = vmatprep.subr.mxu0 0.0
    %4778 = vmatpush1.msra.mxu0 0.0
    %4779 = vmatprep.subr.mxu0 0.0
    %4780 = vmatpush1.msra.mxu0 0.0
    %4781 = vmatprep.subr.mxu0 0.0
    %4782 = vmatpush1.msra.mxu0 0.0
    %4783 = vmatprep.subr.mxu0 0.0
    %4784 = vmatpush1.msra.mxu0 0.0
    %4785 = vmatprep.subr.mxu0 0.0
    %4786 = vmatpush1.msra.mxu0 0.0
    %4787 = vmatprep.subr.mxu0 0.0
    %4788 = vmatpush1.msra.mxu0 0.0
    %4789 = vmatprep.subr.mxu0 0.0
    %4790 = vmatpush1.msra.mxu0 0.0
    %4791 = vmatprep.subr.mxu0 0.0
    %4792 = vmatpush1.msra.mxu0 0.0
    %4793 = vmatprep.subr.mxu0 0.0
    %4794 = vmatpush1.msra.mxu0 0.0
    %4795 = vmatprep.mubr.f32.mxu0 0.0
    %v4796 = vand.u32 %v4467, 4294901760
    %v4797 = vsub.f32 %v4467, %v4796
    %v4798 = vand.u32 %v4797, 4294901760
    %4799 = vmatmul.mubr.f32.gmra.mrb[0].mxu0 %v4798
    %v4800 = vpop.f32.mrb[0].mxu0
    %v4801 = vadd.f32 %v4719, %v4800
    %v4802 = vpop.f32.mrb[0].mxu0
    %4803 = vmatprep.mubr.f32.mxu0 0.0
    %v4804 = vand.u32 %v4470, 4294901760
    %v4805 = vsub.f32 %v4470, %v4804
    %v4806 = vand.u32 %v4805, 4294901760
    %4807 = vmatmul.mubr.f32.gmra.mrb[0].mxu0 %v4806
    %v4808 = vpop.f32.mrb[0].mxu0
    %v4809 = vadd.f32 %v4726, %v4808
    %v4810 = vpop.f32.mrb[0].mxu0
    %4811 = vdwg.mxu0
    %4812 = vmatprep.subr.mxu0 0.0
    %v4813 = vand.u32 %v33, 4294901760
    %v4814 = vsub.f32 %v33, %v4813
    %v4815 = vand.u32 %v4814, 4294901760
    %4816 = vmatpush1.msra.mxu0 %v4815
    %4817 = vmatprep.subr.mxu0 0.0
    %v4818 = vand.u32 %v34, 4294901760
    %v4819 = vsub.f32 %v34, %v4818
    %v4820 = vand.u32 %v4819, 4294901760
    %4821 = vmatpush1.msra.mxu0 %v4820
    %4822 = vmatprep.subr.mxu0 0.0
    %4823 = vmatpush1.msra.mxu0 0.0
    %4824 = vmatprep.subr.mxu0 0.0
    %4825 = vmatpush1.msra.mxu0 0.0
    %4826 = vmatprep.subr.mxu0 0.0
    %4827 = vmatpush1.msra.mxu0 0.0
    %4828 = vmatprep.subr.mxu0 0.0
    %4829 = vmatpush1.msra.mxu0 0.0
    %4830 = vmatprep.subr.mxu0 0.0
    %4831 = vmatpush1.msra.mxu0 0.0
    %4832 = vmatprep.subr.mxu0 0.0
    %4833 = vmatpush1.msra.mxu0 0.0
    %4834 = vmatprep.subr.mxu0 0.0
    %4835 = vmatpush1.msra.mxu0 0.0
    %4836 = vmatprep.subr.mxu0 0.0
    %4837 = vmatpush1.msra.mxu0 0.0
    %4838 = vmatprep.subr.mxu0 0.0
    %4839 = vmatpush1.msra.mxu0 0.0
    %4840 = vmatprep.subr.mxu0 0.0
    %4841 = vmatpush1.msra.mxu0 0.0
    %4842 = vmatprep.subr.mxu0 0.0
    %4843 = vmatpush1.msra.mxu0 0.0
    %4844 = vmatprep.subr.mxu0 0.0
    %4845 = vmatpush1.msra.mxu0 0.0
    %4846 = vmatprep.subr.mxu0 0.0
    %4847 = vmatpush1.msra.mxu0 0.0
    %4848 = vmatprep.subr.mxu0 0.0
    %4849 = vmatpush1.msra.mxu0 0.0
    %4850 = vmatprep.subr.mxu0 0.0
    %4851 = vmatpush1.msra.mxu0 0.0
    %4852 = vmatprep.subr.mxu0 0.0
    %4853 = vmatpush1.msra.mxu0 0.0
    %4854 = vmatprep.subr.mxu0 0.0
    %4855 = vmatpush1.msra.mxu0 0.0
    %4856 = vmatprep.subr.mxu0 0.0
    %4857 = vmatpush1.msra.mxu0 0.0
    %4858 = vmatprep.subr.mxu0 0.0
    %4859 = vmatpush1.msra.mxu0 0.0
    %4860 = vmatprep.subr.mxu0 0.0
    %4861 = vmatpush1.msra.mxu0 0.0
    %4862 = vmatprep.subr.mxu0 0.0
    %4863 = vmatpush1.msra.mxu0 0.0
    %4864 = vmatprep.subr.mxu0 0.0
    %4865 = vmatpush1.msra.mxu0 0.0
    %4866 = vmatprep.subr.mxu0 0.0
    %4867 = vmatpush1.msra.mxu0 0.0
    %4868 = vmatprep.subr.mxu0 0.0
    %4869 = vmatpush1.msra.mxu0 0.0
    %4870 = vmatprep.subr.mxu0 0.0
    %4871 = vmatpush1.msra.mxu0 0.0
    %4872 = vmatprep.subr.mxu0 0.0
    %4873 = vmatpush1.msra.mxu0 0.0
    %4874 = vmatprep.subr.mxu0 0.0
    %4875 = vmatpush1.msra.mxu0 0.0
    %4876 = vmatprep.subr.mxu0 0.0
    %4877 = vmatpush1.msra.mxu0 0.0
    %4878 = vmatprep.subr.mxu0 0.0
    %4879 = vmatpush1.msra.mxu0 0.0
    %4880 = vmatprep.subr.mxu0 0.0
    %4881 = vmatpush1.msra.mxu0 0.0
    %4882 = vmatprep.mubr.f32.mxu0 0.0
    %v4883 = vand.u32 %v4467, 4294901760
    %4884 = vmatmul.mubr.f32.gmra.mrb[0].mxu0 %v4883
    %v4885 = vpop.f32.mrb[0].mxu0
    %v4886 = vadd.f32 %v4801, %v4885
    %v4887 = vpop.f32.mrb[0].mxu0
    %4888 = vmatprep.mubr.f32.mxu0 0.0
    %v4889 = vand.u32 %v4470, 4294901760
    %4890 = vmatmul.mubr.f32.gmra.mrb[0].mxu0 %v4889
    %v4891 = vpop.f32.mrb[0].mxu0
    %v4892 = vadd.f32 %v4809, %v4891
    %v4893 = vpop.f32.mrb[0].mxu0
    %4894 = vdwg.mxu0
    %4895 = vmatprep.subr.mxu0 0.0
    %v4896 = vand.u32 %v33, 4294901760
    %4897 = vmatpush1.msra.mxu0 %v4896
    %4898 = vmatprep.subr.mxu0 0.0
    %v4899 = vand.u32 %v34, 4294901760
    %4900 = vmatpush1.msra.mxu0 %v4899
    %4901 = vmatprep.subr.mxu0 0.0
    %4902 = vmatpush1.msra.mxu0 0.0
    %4903 = vmatprep.subr.mxu0 0.0
    %4904 = vmatpush1.msra.mxu0 0.0
    %4905 = vmatprep.subr.mxu0 0.0
    %4906 = vmatpush1.msra.mxu0 0.0
    %4907 = vmatprep.subr.mxu0 0.0
    %4908 = vmatpush1.msra.mxu0 0.0
    %4909 = vmatprep.subr.mxu0 0.0
    %4910 = vmatpush1.msra.mxu0 0.0
    %4911 = vmatprep.subr.mxu0 0.0
    %4912 = vmatpush1.msra.mxu0 0.0
    %4913 = vmatprep.subr.mxu0 0.0
    %4914 = vmatpush1.msra.mxu0 0.0
    %4915 = vmatprep.subr.mxu0 0.0
    %4916 = vmatpush1.msra.mxu0 0.0
    %4917 = vmatprep.subr.mxu0 0.0
    %4918 = vmatpush1.msra.mxu0 0.0
    %4919 = vmatprep.subr.mxu0 0.0
    %4920 = vmatpush1.msra.mxu0 0.0
    %4921 = vmatprep.subr.mxu0 0.0
    %4922 = vmatpush1.msra.mxu0 0.0
    %4923 = vmatprep.subr.mxu0 0.0
    %4924 = vmatpush1.msra.mxu0 0.0
    %4925 = vmatprep.subr.mxu0 0.0
    %4926 = vmatpush1.msra.mxu0 0.0
    %4927 = vmatprep.subr.mxu0 0.0
    %4928 = vmatpush1.msra.mxu0 0.0
    %4929 = vmatprep.subr.mxu0 0.0
    %4930 = vmatpush1.msra.mxu0 0.0
    %4931 = vmatprep.subr.mxu0 0.0
    %4932 = vmatpush1.msra.mxu0 0.0
    %4933 = vmatprep.subr.mxu0 0.0
    %4934 = vmatpush1.msra.mxu0 0.0
    %4935 = vmatprep.subr.mxu0 0.0
    %4936 = vmatpush1.msra.mxu0 0.0
    %4937 = vmatprep.subr.mxu0 0.0
    %4938 = vmatpush1.msra.mxu0 0.0
    %4939 = vmatprep.subr.mxu0 0.0
    %4940 = vmatpush1.msra.mxu0 0.0
    %4941 = vmatprep.subr.mxu0 0.0
    %4942 = vmatpush1.msra.mxu0 0.0
    %4943 = vmatprep.subr.mxu0 0.0
    %4944 = vmatpush1.msra.mxu0 0.0
    %4945 = vmatprep.subr.mxu0 0.0
    %4946 = vmatpush1.msra.mxu0 0.0
    %4947 = vmatprep.subr.mxu0 0.0
    %4948 = vmatpush1.msra.mxu0 0.0
    %4949 = vmatprep.subr.mxu0 0.0
    %4950 = vmatpush1.msra.mxu0 0.0
    %4951 = vmatprep.subr.mxu0 0.0
    %4952 = vmatpush1.msra.mxu0 0.0
    %4953 = vmatprep.subr.mxu0 0.0
    %4954 = vmatpush1.msra.mxu0 0.0
    %4955 = vmatprep.subr.mxu0 0.0
    %4956 = vmatpush1.msra.mxu0 0.0
    %4957 = vmatprep.subr.mxu0 0.0
    %4958 = vmatpush1.msra.mxu0 0.0
    %4959 = vmatprep.subr.mxu0 0.0
    %4960 = vmatpush1.msra.mxu0 0.0
    %4961 = vmatprep.mubr.f32.mxu0 0.0
    %v4962 = vand.u32 %v4467, 4294901760
    %4963 = vmatmul.mubr.f32.gmra.mrb[0].mxu0 %v4962
    %v4964 = vpop.f32.mrb[0].mxu0
    %v4965 = vadd.f32 %v4886, %v4964
    %v4966 = vpop.f32.mrb[0].mxu0
    %4967 = vmatprep.mubr.f32.mxu0 0.0
    %v4968 = vand.u32 %v4470, 4294901760
    %4969 = vmatmul.mubr.f32.gmra.mrb[0].mxu0 %v4968
    %v4970 = vpop.f32.mrb[0].mxu0
    %v4971 = vadd.f32 %v4892, %v4970
    %v4972 = vpop.f32.mrb[0].mxu0
    %4973 = vdwg.mxu0
    %4974 = vmatprep.subr.mxu0 0.0
    %v4975 = vand.u32 %v4965, 4294901760
    %4976 = vmatpush1.msra.mxu0 %v4975
    %4977 = vmatprep.subr.mxu0 0.0
    %v4978 = vand.u32 %v4971, 4294901760
    %4979 = vmatpush1.msra.mxu0 %v4978
    %4980 = vmatprep.subr.mxu0 0.0
    %4981 = vmatpush1.msra.mxu0 0.0
    %4982 = vmatprep.subr.mxu0 0.0
    %4983 = vmatpush1.msra.mxu0 0.0
    %4984 = vmatprep.subr.mxu0 0.0
    %4985 = vmatpush1.msra.mxu0 0.0
    %4986 = vmatprep.subr.mxu0 0.0
    %4987 = vmatpush1.msra.mxu0 0.0
    %4988 = vmatprep.subr.mxu0 0.0
    %4989 = vmatpush1.msra.mxu0 0.0
    %4990 = vmatprep.subr.mxu0 0.0
    %4991 = vmatpush1.msra.mxu0 0.0
    %4992 = vmatprep.subr.mxu0 0.0
    %4993 = vmatpush1.msra.mxu0 0.0
    %4994 = vmatprep.subr.mxu0 0.0
    %4995 = vmatpush1.msra.mxu0 0.0
    %4996 = vmatprep.subr.mxu0 0.0
    %4997 = vmatpush1.msra.mxu0 0.0
    %4998 = vmatprep.subr.mxu0 0.0
    %4999 = vmatpush1.msra.mxu0 0.0
    %5000 = vmatprep.subr.mxu0 0.0
    %5001 = vmatpush1.msra.mxu0 0.0
    %5002 = vmatprep.subr.mxu0 0.0
    %5003 = vmatpush1.msra.mxu0 0.0
    %5004 = vmatprep.subr.mxu0 0.0
    %5005 = vmatpush1.msra.mxu0 0.0
    %5006 = vmatprep.subr.mxu0 0.0
    %5007 = vmatpush1.msra.mxu0 0.0
    %5008 = vmatprep.subr.mxu0 0.0
    %5009 = vmatpush1.msra.mxu0 0.0
    %5010 = vmatprep.subr.mxu0 0.0
    %5011 = vmatpush1.msra.mxu0 0.0
    %5012 = vmatprep.subr.mxu0 0.0
    %5013 = vmatpush1.msra.mxu0 0.0
    %5014 = vmatprep.subr.mxu0 0.0
    %5015 = vmatpush1.msra.mxu0 0.0
    %5016 = vmatprep.subr.mxu0 0.0
    %5017 = vmatpush1.msra.mxu0 0.0
    %5018 = vmatprep.subr.mxu0 0.0
    %5019 = vmatpush1.msra.mxu0 0.0
    %5020 = vmatprep.subr.mxu0 0.0
    %5021 = vmatpush1.msra.mxu0 0.0
    %5022 = vmatprep.subr.mxu0 0.0
    %5023 = vmatpush1.msra.mxu0 0.0
    %5024 = vmatprep.subr.mxu0 0.0
    %5025 = vmatpush1.msra.mxu0 0.0
    %5026 = vmatprep.subr.mxu0 0.0
    %5027 = vmatpush1.msra.mxu0 0.0
    %5028 = vmatprep.subr.mxu0 0.0
    %5029 = vmatpush1.msra.mxu0 0.0
    %5030 = vmatprep.subr.mxu0 0.0
    %5031 = vmatpush1.msra.mxu0 0.0
    %5032 = vmatprep.subr.mxu0 0.0
    %5033 = vmatpush1.msra.mxu0 0.0
    %5034 = vmatprep.subr.mxu0 0.0
    %5035 = vmatpush1.msra.mxu0 0.0
    %5036 = vmatprep.subr.mxu0 0.0
    %5037 = vmatpush1.msra.mxu0 0.0
    %5038 = vmatprep.subr.mxu0 0.0
    %5039 = vmatpush1.msra.mxu0 0.0
    %5040 = vmatprep.mubr.f32.mxu0 0.0
    %v5041 = vand.u32 %v547, 4294901760
    %v5042 = vsub.f32 %v547, %v5041
    %v5043 = vand.u32 %v5042, 4294901760
    %v5044 = vsub.f32 %v5042, %v5043
    %v5045 = vand.u32 %v5044, 4294901760
    %5046 = vmatmul.mubr.f32.gmra.mrb[0].mxu0 %v5045
    %v5047 = vpop.f32.mrb[0].mxu0
    %v5048 = vadd.f32 0.0, %v5047
    %v5049 = vpop.f32.mrb[0].mxu0
    %5050 = vmatprep.mubr.f32.mxu0 0.0
    %v5051 = vand.u32 %v550, 4294901760
    %v5052 = vsub.f32 %v550, %v5051
    %v5053 = vand.u32 %v5052, 4294901760
    %v5054 = vsub.f32 %v5052, %v5053
    %v5055 = vand.u32 %v5054, 4294901760
    %5056 = vmatmul.mubr.f32.gmra.mrb[0].mxu0 %v5055
    %v5057 = vpop.f32.mrb[0].mxu0
    %v5058 = vadd.f32 0.0, %v5057
    %v5059 = vpop.f32.mrb[0].mxu0
    %5060 = vmatprep.mubr.f32.mxu0 0.0
    %v5061 = vand.u32 %v553, 4294901760
    %v5062 = vsub.f32 %v553, %v5061
    %v5063 = vand.u32 %v5062, 4294901760
    %v5064 = vsub.f32 %v5062, %v5063
    %v5065 = vand.u32 %v5064, 4294901760
    %5066 = vmatmul.mubr.f32.gmra.mrb[0].mxu0 %v5065
    %v5067 = vpop.f32.mrb[0].mxu0
    %v5068 = vadd.f32 0.0, %v5067
    %v5069 = vpop.f32.mrb[0].mxu0
    %5070 = vmatprep.mubr.f32.mxu0 0.0
    %v5071 = vand.u32 %v556, 4294901760
    %v5072 = vsub.f32 %v556, %v5071
    %v5073 = vand.u32 %v5072, 4294901760
    %v5074 = vsub.f32 %v5072, %v5073
    %v5075 = vand.u32 %v5074, 4294901760
    %5076 = vmatmul.mubr.f32.gmra.mrb[0].mxu0 %v5075
    %v5077 = vpop.f32.mrb[0].mxu0
    %v5078 = vadd.f32 0.0, %v5077
    %v5079 = vpop.f32.mrb[0].mxu0
    %5080 = vdwg.mxu0
    %5081 = vmatprep.subr.mxu0 0.0
    %v5082 = vand.u32 %v4965, 4294901760
    %v5083 = vsub.f32 %v4965, %v5082
    %v5084 = vand.u32 %v5083, 4294901760
    %v5085 = vsub.f32 %v5083, %v5084
    %v5086 = vand.u32 %v5085, 4294901760
    %5087 = vmatpush1.msra.mxu0 %v5086
    %5088 = vmatprep.subr.mxu0 0.0
    %v5089 = vand.u32 %v4971, 4294901760
    %v5090 = vsub.f32 %v4971, %v5089
    %v5091 = vand.u32 %v5090, 4294901760
    %v5092 = vsub.f32 %v5090, %v5091
    %v5093 = vand.u32 %v5092, 4294901760
    %5094 = vmatpush1.msra.mxu0 %v5093
    %5095 = vmatprep.subr.mxu0 0.0
    %5096 = vmatpush1.msra.mxu0 0.0
    %5097 = vmatprep.subr.mxu0 0.0
    %5098 = vmatpush1.msra.mxu0 0.0
    %5099 = vmatprep.subr.mxu0 0.0
    %5100 = vmatpush1.msra.mxu0 0.0
    %5101 = vmatprep.subr.mxu0 0.0
    %5102 = vmatpush1.msra.mxu0 0.0
    %5103 = vmatprep.subr.mxu0 0.0
    %5104 = vmatpush1.msra.mxu0 0.0
    %5105 = vmatprep.subr.mxu0 0.0
    %5106 = vmatpush1.msra.mxu0 0.0
    %5107 = vmatprep.subr.mxu0 0.0
    %5108 = vmatpush1.msra.mxu0 0.0
    %5109 = vmatprep.subr.mxu0 0.0
    %5110 = vmatpush1.msra.mxu0 0.0
    %5111 = vmatprep.subr.mxu0 0.0
    %5112 = vmatpush1.msra.mxu0 0.0
    %5113 = vmatprep.subr.mxu0 0.0
    %5114 = vmatpush1.msra.mxu0 0.0
    %5115 = vmatprep.subr.mxu0 0.0
    %5116 = vmatpush1.msra.mxu0 0.0
    %5117 = vmatprep.subr.mxu0 0.0
    %5118 = vmatpush1.msra.mxu0 0.0
    %5119 = vmatprep.subr.mxu0 0.0
    %5120 = vmatpush1.msra.mxu0 0.0
    %5121 = vmatprep.subr.mxu0 0.0
    %5122 = vmatpush1.msra.mxu0 0.0
    %5123 = vmatprep.subr.mxu0 0.0
    %5124 = vmatpush1.msra.mxu0 0.0
    %5125 = vmatprep.subr.mxu0 0.0
    %5126 = vmatpush1.msra.mxu0 0.0
    %5127 = vmatprep.subr.mxu0 0.0
    %5128 = vmatpush1.msra.mxu0 0.0
    %5129 = vmatprep.subr.mxu0 0.0
    %5130 = vmatpush1.msra.mxu0 0.0
    %5131 = vmatprep.subr.mxu0 0.0
    %5132 = vmatpush1.msra.mxu0 0.0
    %5133 = vmatprep.subr.mxu0 0.0
    %5134 = vmatpush1.msra.mxu0 0.0
    %5135 = vmatprep.subr.mxu0 0.0
    %5136 = vmatpush1.msra.mxu0 0.0
    %5137 = vmatprep.subr.mxu0 0.0
    %5138 = vmatpush1.msra.mxu0 0.0
    %5139 = vmatprep.subr.mxu0 0.0
    %5140 = vmatpush1.msra.mxu0 0.0
    %5141 = vmatprep.subr.mxu0 0.0
    %5142 = vmatpush1.msra.mxu0 0.0
    %5143 = vmatprep.subr.mxu0 0.0
    %5144 = vmatpush1.msra.mxu0 0.0
    %5145 = vmatprep.subr.mxu0 0.0
    %5146 = vmatpush1.msra.mxu0 0.0
    %5147 = vmatprep.subr.mxu0 0.0
    %5148 = vmatpush1.msra.mxu0 0.0
    %5149 = vmatprep.subr.mxu0 0.0
    %5150 = vmatpush1.msra.mxu0 0.0
    %5151 = vmatprep.subr.mxu0 0.0
    %5152 = vmatpush1.msra.mxu0 0.0
    %5153 = vmatprep.subr.mxu0 0.0
    %5154 = vmatpush1.msra.mxu0 0.0
    %5155 = vmatprep.mubr.f32.mxu0 0.0
    %v5156 = vand.u32 %v547, 4294901760
    %5157 = vmatmul.mubr.f32.gmra.mrb[0].mxu0 %v5156
    %v5158 = vpop.f32.mrb[0].mxu0
    %v5159 = vadd.f32 %v5048, %v5158
    %v5160 = vpop.f32.mrb[0].mxu0
    %5161 = vmatprep.mubr.f32.mxu0 0.0
    %v5162 = vand.u32 %v550, 4294901760
    %5163 = vmatmul.mubr.f32.gmra.mrb[0].mxu0 %v5162
    %v5164 = vpop.f32.mrb[0].mxu0
    %v5165 = vadd.f32 %v5058, %v5164
    %v5166 = vpop.f32.mrb[0].mxu0
    %5167 = vmatprep.mubr.f32.mxu0 0.0
    %v5168 = vand.u32 %v553, 4294901760
    %5169 = vmatmul.mubr.f32.gmra.mrb[0].mxu0 %v5168
    %v5170 = vpop.f32.mrb[0].mxu0
    %v5171 = vadd.f32 %v5068, %v5170
    %v5172 = vpop.f32.mrb[0].mxu0
    %5173 = vmatprep.mubr.f32.mxu0 0.0
    %v5174 = vand.u32 %v556, 4294901760
    %5175 = vmatmul.mubr.f32.gmra.mrb[0].mxu0 %v5174
    %v5176 = vpop.f32.mrb[0].mxu0
    %v5177 = vadd.f32 %v5078, %v5176
    %v5178 = vpop.f32.mrb[0].mxu0
    %5179 = vdwg.mxu0
    %5180 = vmatprep.subr.mxu0 0.0
    %v5181 = vand.u32 %v4965, 4294901760
    %v5182 = vsub.f32 %v4965, %v5181
    %5183 = vmatpush1.msra.mxu0 %v5182
    %5184 = vmatprep.subr.mxu0 0.0
    %v5185 = vand.u32 %v4971, 4294901760
    %v5186 = vsub.f32 %v4971, %v5185
    %5187 = vmatpush1.msra.mxu0 %v5186
    %5188 = vmatprep.subr.mxu0 0.0
    %5189 = vmatpush1.msra.mxu0 0.0
    %5190 = vmatprep.subr.mxu0 0.0
    %5191 = vmatpush1.msra.mxu0 0.0
    %5192 = vmatprep.subr.mxu0 0.0
    %5193 = vmatpush1.msra.mxu0 0.0
    %5194 = vmatprep.subr.mxu0 0.0
    %5195 = vmatpush1.msra.mxu0 0.0
    %5196 = vmatprep.subr.mxu0 0.0
    %5197 = vmatpush1.msra.mxu0 0.0
    %5198 = vmatprep.subr.mxu0 0.0
    %5199 = vmatpush1.msra.mxu0 0.0
    %5200 = vmatprep.subr.mxu0 0.0
    %5201 = vmatpush1.msra.mxu0 0.0
    %5202 = vmatprep.subr.mxu0 0.0
    %5203 = vmatpush1.msra.mxu0 0.0
    %5204 = vmatprep.subr.mxu0 0.0
    %5205 = vmatpush1.msra.mxu0 0.0
    %5206 = vmatprep.subr.mxu0 0.0
    %5207 = vmatpush1.msra.mxu0 0.0
    %5208 = vmatprep.subr.mxu0 0.0
    %5209 = vmatpush1.msra.mxu0 0.0
    %5210 = vmatprep.subr.mxu0 0.0
    %5211 = vmatpush1.msra.mxu0 0.0
    %5212 = vmatprep.subr.mxu0 0.0
    %5213 = vmatpush1.msra.mxu0 0.0
    %5214 = vmatprep.subr.mxu0 0.0
    %5215 = vmatpush1.msra.mxu0 0.0
    %5216 = vmatprep.subr.mxu0 0.0
    %5217 = vmatpush1.msra.mxu0 0.0
    %5218 = vmatprep.subr.mxu0 0.0
    %5219 = vmatpush1.msra.mxu0 0.0
    %5220 = vmatprep.subr.mxu0 0.0
    %5221 = vmatpush1.msra.mxu0 0.0
    %5222 = vmatprep.subr.mxu0 0.0
    %5223 = vmatpush1.msra.mxu0 0.0
    %5224 = vmatprep.subr.mxu0 0.0
    %5225 = vmatpush1.msra.mxu0 0.0
    %5226 = vmatprep.subr.mxu0 0.0
    %5227 = vmatpush1.msra.mxu0 0.0
    %5228 = vmatprep.subr.mxu0 0.0
    %5229 = vmatpush1.msra.mxu0 0.0
    %5230 = vmatprep.subr.mxu0 0.0
    %5231 = vmatpush1.msra.mxu0 0.0
    %5232 = vmatprep.subr.mxu0 0.0
    %5233 = vmatpush1.msra.mxu0 0.0
    %5234 = vmatprep.subr.mxu0 0.0
    %5235 = vmatpush1.msra.mxu0 0.0
    %5236 = vmatprep.subr.mxu0 0.0
    %5237 = vmatpush1.msra.mxu0 0.0
    %5238 = vmatprep.subr.mxu0 0.0
    %5239 = vmatpush1.msra.mxu0 0.0
    %5240 = vmatprep.subr.mxu0 0.0
    %5241 = vmatpush1.msra.mxu0 0.0
    %5242 = vmatprep.subr.mxu0 0.0
    %5243 = vmatpush1.msra.mxu0 0.0
    %5244 = vmatprep.subr.mxu0 0.0
    %5245 = vmatpush1.msra.mxu0 0.0
    %5246 = vmatprep.subr.mxu0 0.0
    %5247 = vmatpush1.msra.mxu0 0.0
    %5248 = vmatprep.mubr.f32.mxu0 0.0
    %v5249 = vand.u32 %v547, 4294901760
    %v5250 = vsub.f32 %v547, %v5249
    %5251 = vmatmul.mubr.f32.gmra.mrb[0].mxu0 %v5250
    %v5252 = vpop.f32.mrb[0].mxu0
    %v5253 = vadd.f32 %v5159, %v5252
    %v5254 = vpop.f32.mrb[0].mxu0
    %5255 = vmatprep.mubr.f32.mxu0 0.0
    %v5256 = vand.u32 %v550, 4294901760
    %v5257 = vsub.f32 %v550, %v5256
    %5258 = vmatmul.mubr.f32.gmra.mrb[0].mxu0 %v5257
    %v5259 = vpop.f32.mrb[0].mxu0
    %v5260 = vadd.f32 %v5165, %v5259
    %v5261 = vpop.f32.mrb[0].mxu0
    %5262 = vmatprep.mubr.f32.mxu0 0.0
    %v5263 = vand.u32 %v553, 4294901760
    %v5264 = vsub.f32 %v553, %v5263
    %5265 = vmatmul.mubr.f32.gmra.mrb[0].mxu0 %v5264
    %v5266 = vpop.f32.mrb[0].mxu0
    %v5267 = vadd.f32 %v5171, %v5266
    %v5268 = vpop.f32.mrb[0].mxu0
    %5269 = vmatprep.mubr.f32.mxu0 0.0
    %v5270 = vand.u32 %v556, 4294901760
    %v5271 = vsub.f32 %v556, %v5270
    %5272 = vmatmul.mubr.f32.gmra.mrb[0].mxu0 %v5271
    %v5273 = vpop.f32.mrb[0].mxu0
    %v5274 = vadd.f32 %v5177, %v5273
    %v5275 = vpop.f32.mrb[0].mxu0
    %5276 = vdwg.mxu0
    %5277 = vmatprep.subr.mxu0 0.0
    %v5278 = vand.u32 %v4965, 4294901760
    %5279 = vmatpush1.msra.mxu0 %v5278
    %5280 = vmatprep.subr.mxu0 0.0
    %v5281 = vand.u32 %v4971, 4294901760
    %5282 = vmatpush1.msra.mxu0 %v5281
    %5283 = vmatprep.subr.mxu0 0.0
    %5284 = vmatpush1.msra.mxu0 0.0
    %5285 = vmatprep.subr.mxu0 0.0
    %5286 = vmatpush1.msra.mxu0 0.0
    %5287 = vmatprep.subr.mxu0 0.0
    %5288 = vmatpush1.msra.mxu0 0.0
    %5289 = vmatprep.subr.mxu0 0.0
    %5290 = vmatpush1.msra.mxu0 0.0
    %5291 = vmatprep.subr.mxu0 0.0
    %5292 = vmatpush1.msra.mxu0 0.0
    %5293 = vmatprep.subr.mxu0 0.0
    %5294 = vmatpush1.msra.mxu0 0.0
    %5295 = vmatprep.subr.mxu0 0.0
    %5296 = vmatpush1.msra.mxu0 0.0
    %5297 = vmatprep.subr.mxu0 0.0
    %5298 = vmatpush1.msra.mxu0 0.0
    %5299 = vmatprep.subr.mxu0 0.0
    %5300 = vmatpush1.msra.mxu0 0.0
    %5301 = vmatprep.subr.mxu0 0.0
    %5302 = vmatpush1.msra.mxu0 0.0
    %5303 = vmatprep.subr.mxu0 0.0
    %5304 = vmatpush1.msra.mxu0 0.0
    %5305 = vmatprep.subr.mxu0 0.0
    %5306 = vmatpush1.msra.mxu0 0.0
    %5307 = vmatprep.subr.mxu0 0.0
    %5308 = vmatpush1.msra.mxu0 0.0
    %5309 = vmatprep.subr.mxu0 0.0
    %5310 = vmatpush1.msra.mxu0 0.0
    %5311 = vmatprep.subr.mxu0 0.0
    %5312 = vmatpush1.msra.mxu0 0.0
    %5313 = vmatprep.subr.mxu0 0.0
    %5314 = vmatpush1.msra.mxu0 0.0
    %5315 = vmatprep.subr.mxu0 0.0
    %5316 = vmatpush1.msra.mxu0 0.0
    %5317 = vmatprep.subr.mxu0 0.0
    %5318 = vmatpush1.msra.mxu0 0.0
    %5319 = vmatprep.subr.mxu0 0.0
    %5320 = vmatpush1.msra.mxu0 0.0
    %5321 = vmatprep.subr.mxu0 0.0
    %5322 = vmatpush1.msra.mxu0 0.0
    %5323 = vmatprep.subr.mxu0 0.0
    %5324 = vmatpush1.msra.mxu0 0.0
    %5325 = vmatprep.subr.mxu0 0.0
    %5326 = vmatpush1.msra.mxu0 0.0
    %5327 = vmatprep.subr.mxu0 0.0
    %5328 = vmatpush1.msra.mxu0 0.0
    %5329 = vmatprep.subr.mxu0 0.0
    %5330 = vmatpush1.msra.mxu0 0.0
    %5331 = vmatprep.subr.mxu0 0.0
    %5332 = vmatpush1.msra.mxu0 0.0
    %5333 = vmatprep.subr.mxu0 0.0
    %5334 = vmatpush1.msra.mxu0 0.0
    %5335 = vmatprep.subr.mxu0 0.0
    %5336 = vmatpush1.msra.mxu0 0.0
    %5337 = vmatprep.subr.mxu0 0.0
    %5338 = vmatpush1.msra.mxu0 0.0
    %5339 = vmatprep.subr.mxu0 0.0
    %5340 = vmatpush1.msra.mxu0 0.0
    %5341 = vmatprep.subr.mxu0 0.0
    %5342 = vmatpush1.msra.mxu0 0.0
    %5343 = vmatprep.mubr.f32.mxu0 0.0
    %v5344 = vand.u32 %v547, 4294901760
    %v5345 = vsub.f32 %v547, %v5344
    %v5346 = vand.u32 %v5345, 4294901760
    %5347 = vmatmul.mubr.f32.gmra.mrb[0].mxu0 %v5346
    %v5348 = vpop.f32.mrb[0].mxu0
    %v5349 = vadd.f32 %v5253, %v5348
    %v5350 = vpop.f32.mrb[0].mxu0
    %5351 = vmatprep.mubr.f32.mxu0 0.0
    %v5352 = vand.u32 %v550, 4294901760
    %v5353 = vsub.f32 %v550, %v5352
    %v5354 = vand.u32 %v5353, 4294901760
    %5355 = vmatmul.mubr.f32.gmra.mrb[0].mxu0 %v5354
    %v5356 = vpop.f32.mrb[0].mxu0
    %v5357 = vadd.f32 %v5260, %v5356
    %v5358 = vpop.f32.mrb[0].mxu0
    %5359 = vmatprep.mubr.f32.mxu0 0.0
    %v5360 = vand.u32 %v553, 4294901760
    %v5361 = vsub.f32 %v553, %v5360
    %v5362 = vand.u32 %v5361, 4294901760
    %5363 = vmatmul.mubr.f32.gmra.mrb[0].mxu0 %v5362
    %v5364 = vpop.f32.mrb[0].mxu0
    %v5365 = vadd.f32 %v5267, %v5364
    %v5366 = vpop.f32.mrb[0].mxu0
    %5367 = vmatprep.mubr.f32.mxu0 0.0
    %v5368 = vand.u32 %v556, 4294901760
    %v5369 = vsub.f32 %v556, %v5368
    %v5370 = vand.u32 %v5369, 4294901760
    %5371 = vmatmul.mubr.f32.gmra.mrb[0].mxu0 %v5370
    %v5372 = vpop.f32.mrb[0].mxu0
    %v5373 = vadd.f32 %v5274, %v5372
    %v5374 = vpop.f32.mrb[0].mxu0
    %5375 = vdwg.mxu0
    %5376 = vmatprep.subr.mxu0 0.0
    %v5377 = vand.u32 %v4965, 4294901760
    %v5378 = vsub.f32 %v4965, %v5377
    %v5379 = vand.u32 %v5378, 4294901760
    %5380 = vmatpush1.msra.mxu0 %v5379
    %5381 = vmatprep.subr.mxu0 0.0
    %v5382 = vand.u32 %v4971, 4294901760
    %v5383 = vsub.f32 %v4971, %v5382
    %v5384 = vand.u32 %v5383, 4294901760
    %5385 = vmatpush1.msra.mxu0 %v5384
    %5386 = vmatprep.subr.mxu0 0.0
    %5387 = vmatpush1.msra.mxu0 0.0
    %5388 = vmatprep.subr.mxu0 0.0
    %5389 = vmatpush1.msra.mxu0 0.0
    %5390 = vmatprep.subr.mxu0 0.0
    %5391 = vmatpush1.msra.mxu0 0.0
    %5392 = vmatprep.subr.mxu0 0.0
    %5393 = vmatpush1.msra.mxu0 0.0
    %5394 = vmatprep.subr.mxu0 0.0
    %5395 = vmatpush1.msra.mxu0 0.0
    %5396 = vmatprep.subr.mxu0 0.0
    %5397 = vmatpush1.msra.mxu0 0.0
    %5398 = vmatprep.subr.mxu0 0.0
    %5399 = vmatpush1.msra.mxu0 0.0
    %5400 = vmatprep.subr.mxu0 0.0
    %5401 = vmatpush1.msra.mxu0 0.0
    %5402 = vmatprep.subr.mxu0 0.0
    %5403 = vmatpush1.msra.mxu0 0.0
    %5404 = vmatprep.subr.mxu0 0.0
    %5405 = vmatpush1.msra.mxu0 0.0
    %5406 = vmatprep.subr.mxu0 0.0
    %5407 = vmatpush1.msra.mxu0 0.0
    %5408 = vmatprep.subr.mxu0 0.0
    %5409 = vmatpush1.msra.mxu0 0.0
    %5410 = vmatprep.subr.mxu0 0.0
    %5411 = vmatpush1.msra.mxu0 0.0
    %5412 = vmatprep.subr.mxu0 0.0
    %5413 = vmatpush1.msra.mxu0 0.0
    %5414 = vmatprep.subr.mxu0 0.0
    %5415 = vmatpush1.msra.mxu0 0.0
    %5416 = vmatprep.subr.mxu0 0.0
    %5417 = vmatpush1.msra.mxu0 0.0
    %5418 = vmatprep.subr.mxu0 0.0
    %5419 = vmatpush1.msra.mxu0 0.0
    %5420 = vmatprep.subr.mxu0 0.0
    %5421 = vmatpush1.msra.mxu0 0.0
    %5422 = vmatprep.subr.mxu0 0.0
    %5423 = vmatpush1.msra.mxu0 0.0
    %5424 = vmatprep.subr.mxu0 0.0
    %5425 = vmatpush1.msra.mxu0 0.0
    %5426 = vmatprep.subr.mxu0 0.0
    %5427 = vmatpush1.msra.mxu0 0.0
    %5428 = vmatprep.subr.mxu0 0.0
    %5429 = vmatpush1.msra.mxu0 0.0
    %5430 = vmatprep.subr.mxu0 0.0
    %5431 = vmatpush1.msra.mxu0 0.0
    %5432 = vmatprep.subr.mxu0 0.0
    %5433 = vmatpush1.msra.mxu0 0.0
    %5434 = vmatprep.subr.mxu0 0.0
    %5435 = vmatpush1.msra.mxu0 0.0
    %5436 = vmatprep.subr.mxu0 0.0
    %5437 = vmatpush1.msra.mxu0 0.0
    %5438 = vmatprep.subr.mxu0 0.0
    %5439 = vmatpush1.msra.mxu0 0.0
    %5440 = vmatprep.subr.mxu0 0.0
    %5441 = vmatpush1.msra.mxu0 0.0
    %5442 = vmatprep.subr.mxu0 0.0
    %5443 = vmatpush1.msra.mxu0 0.0
    %5444 = vmatprep.subr.mxu0 0.0
    %5445 = vmatpush1.msra.mxu0 0.0
    %5446 = vmatprep.mubr.f32.mxu0 0.0
    %v5447 = vand.u32 %v547, 4294901760
    %5448 = vmatmul.mubr.f32.gmra.mrb[0].mxu0 %v5447
    %v5449 = vpop.f32.mrb[0].mxu0
    %v5450 = vadd.f32 %v5349, %v5449
    %v5451 = vpop.f32.mrb[0].mxu0
    %5452 = vmatprep.mubr.f32.mxu0 0.0
    %v5453 = vand.u32 %v550, 4294901760
    %5454 = vmatmul.mubr.f32.gmra.mrb[0].mxu0 %v5453
    %v5455 = vpop.f32.mrb[0].mxu0
    %v5456 = vadd.f32 %v5357, %v5455
    %v5457 = vpop.f32.mrb[0].mxu0
    %5458 = vmatprep.mubr.f32.mxu0 0.0
    %v5459 = vand.u32 %v553, 4294901760
    %5460 = vmatmul.mubr.f32.gmra.mrb[0].mxu0 %v5459
    %v5461 = vpop.f32.mrb[0].mxu0
    %v5462 = vadd.f32 %v5365, %v5461
    %v5463 = vpop.f32.mrb[0].mxu0
    %5464 = vmatprep.mubr.f32.mxu0 0.0
    %v5465 = vand.u32 %v556, 4294901760
    %5466 = vmatmul.mubr.f32.gmra.mrb[0].mxu0 %v5465
    %v5467 = vpop.f32.mrb[0].mxu0
    %v5468 = vadd.f32 %v5373, %v5467
    %v5469 = vpop.f32.mrb[0].mxu0
    %5470 = vdwg.mxu0
    %5471 = vmatprep.subr.mxu0 0.0
    %v5472 = vand.u32 %v4965, 4294901760
    %5473 = vmatpush1.msra.mxu0 %v5472
    %5474 = vmatprep.subr.mxu0 0.0
    %v5475 = vand.u32 %v4971, 4294901760
    %5476 = vmatpush1.msra.mxu0 %v5475
    %5477 = vmatprep.subr.mxu0 0.0
    %5478 = vmatpush1.msra.mxu0 0.0
    %5479 = vmatprep.subr.mxu0 0.0
    %5480 = vmatpush1.msra.mxu0 0.0
    %5481 = vmatprep.subr.mxu0 0.0
    %5482 = vmatpush1.msra.mxu0 0.0
    %5483 = vmatprep.subr.mxu0 0.0
    %5484 = vmatpush1.msra.mxu0 0.0
    %5485 = vmatprep.subr.mxu0 0.0
    %5486 = vmatpush1.msra.mxu0 0.0
    %5487 = vmatprep.subr.mxu0 0.0
    %5488 = vmatpush1.msra.mxu0 0.0
    %5489 = vmatprep.subr.mxu0 0.0
    %5490 = vmatpush1.msra.mxu0 0.0
    %5491 = vmatprep.subr.mxu0 0.0
    %5492 = vmatpush1.msra.mxu0 0.0
    %5493 = vmatprep.subr.mxu0 0.0
    %5494 = vmatpush1.msra.mxu0 0.0
    %5495 = vmatprep.subr.mxu0 0.0
    %5496 = vmatpush1.msra.mxu0 0.0
    %5497 = vmatprep.subr.mxu0 0.0
    %5498 = vmatpush1.msra.mxu0 0.0
    %5499 = vmatprep.subr.mxu0 0.0
    %5500 = vmatpush1.msra.mxu0 0.0
    %5501 = vmatprep.subr.mxu0 0.0
    %5502 = vmatpush1.msra.mxu0 0.0
    %5503 = vmatprep.subr.mxu0 0.0
    %5504 = vmatpush1.msra.mxu0 0.0
    %5505 = vmatprep.subr.mxu0 0.0
    %5506 = vmatpush1.msra.mxu0 0.0
    %5507 = vmatprep.subr.mxu0 0.0
    %5508 = vmatpush1.msra.mxu0 0.0
    %5509 = vmatprep.subr.mxu0 0.0
    %5510 = vmatpush1.msra.mxu0 0.0
    %5511 = vmatprep.subr.mxu0 0.0
    %5512 = vmatpush1.msra.mxu0 0.0
    %5513 = vmatprep.subr.mxu0 0.0
    %5514 = vmatpush1.msra.mxu0 0.0
    %5515 = vmatprep.subr.mxu0 0.0
    %5516 = vmatpush1.msra.mxu0 0.0
    %5517 = vmatprep.subr.mxu0 0.0
    %5518 = vmatpush1.msra.mxu0 0.0
    %5519 = vmatprep.subr.mxu0 0.0
    %5520 = vmatpush1.msra.mxu0 0.0
    %5521 = vmatprep.subr.mxu0 0.0
    %5522 = vmatpush1.msra.mxu0 0.0
    %5523 = vmatprep.subr.mxu0 0.0
    %5524 = vmatpush1.msra.mxu0 0.0
    %5525 = vmatprep.subr.mxu0 0.0
    %5526 = vmatpush1.msra.mxu0 0.0
    %5527 = vmatprep.subr.mxu0 0.0
    %5528 = vmatpush1.msra.mxu0 0.0
    %5529 = vmatprep.subr.mxu0 0.0
    %5530 = vmatpush1.msra.mxu0 0.0
    %5531 = vmatprep.subr.mxu0 0.0
    %5532 = vmatpush1.msra.mxu0 0.0
    %5533 = vmatprep.subr.mxu0 0.0
    %5534 = vmatpush1.msra.mxu0 0.0
    %5535 = vmatprep.subr.mxu0 0.0
    %5536 = vmatpush1.msra.mxu0 0.0
    %5537 = vmatprep.mubr.f32.mxu0 0.0
    %v5538 = vand.u32 %v547, 4294901760
    %5539 = vmatmul.mubr.f32.gmra.mrb[0].mxu0 %v5538
    %v5540 = vpop.f32.mrb[0].mxu0
    %v5541 = vadd.f32 %v5450, %v5540
    %v5542 = vpop.f32.mrb[0].mxu0
    %5543 = vmatprep.mubr.f32.mxu0 0.0
    %v5544 = vand.u32 %v550, 4294901760
    %5545 = vmatmul.mubr.f32.gmra.mrb[0].mxu0 %v5544
    %v5546 = vpop.f32.mrb[0].mxu0
    %v5547 = vadd.f32 %v5456, %v5546
    %v5548 = vpop.f32.mrb[0].mxu0
    %5549 = vmatprep.mubr.f32.mxu0 0.0
    %v5550 = vand.u32 %v553, 4294901760
    %5551 = vmatmul.mubr.f32.gmra.mrb[0].mxu0 %v5550
    %v5552 = vpop.f32.mrb[0].mxu0
    %v5553 = vadd.f32 %v5462, %v5552
    %v5554 = vpop.f32.mrb[0].mxu0
    %5555 = vmatprep.mubr.f32.mxu0 0.0
    %v5556 = vand.u32 %v556, 4294901760
    %5557 = vmatmul.mubr.f32.gmra.mrb[0].mxu0 %v5556
    %v5558 = vpop.f32.mrb[0].mxu0
    %v5559 = vadd.f32 %v5468, %v5558
    %v5560 = vpop.f32.mrb[0].mxu0
    %5561 = vdwg.mxu0
    %s5562 = scalar_lea.vmem [#allocation5], 128
    %5563 = vst.msk [vmem:[%s5562] sm:$0xff] %vm1146, %v5541
    %5564 = vst.msk [vmem:[%s5562 + $0x8] sm:$0xff] %vm1146, %v5547
    %5565 = vst.msk [vmem:[%s5562 + $0x10] sm:$0xff] %vm1146, %v5553
    %5566 = vst.msk [vmem:[%s5562 + $0x18] sm:$0xff] %vm1146, %v5559
    %s5567 = scalar_lea.vmem [#allocation2], 80
    %v5568 = vld [vmem:[%s5567] sm:$0xff]
    %v5569 = vld [vmem:[%s5567 + $0x8] sm:$0xff]
    %v5571 = vsel %vm37, %v5568, 0
    %v5574 = vsel %vm37, %v5569, 0
    %5576 = vmatprep.subr.mxu0 0.0
    %v5577 = vand.u32 %v33, 4294901760
    %5578 = vmatpush1.msra.mxu0 %v5577
    %5579 = vmatprep.subr.mxu0 0.0
    %v5580 = vand.u32 %v34, 4294901760
    %5581 = vmatpush1.msra.mxu0 %v5580
    %5582 = vmatprep.subr.mxu0 0.0
    %5583 = vmatpush1.msra.mxu0 0.0
    %5584 = vmatprep.subr.mxu0 0.0
    %5585 = vmatpush1.msra.mxu0 0.0
    %5586 = vmatprep.subr.mxu0 0.0
    %5587 = vmatpush1.msra.mxu0 0.0
    %5588 = vmatprep.subr.mxu0 0.0
    %5589 = vmatpush1.msra.mxu0 0.0
    %5590 = vmatprep.subr.mxu0 0.0
    %5591 = vmatpush1.msra.mxu0 0.0
    %5592 = vmatprep.subr.mxu0 0.0
    %5593 = vmatpush1.msra.mxu0 0.0
    %5594 = vmatprep.subr.mxu0 0.0
    %5595 = vmatpush1.msra.mxu0 0.0
    %5596 = vmatprep.subr.mxu0 0.0
    %5597 = vmatpush1.msra.mxu0 0.0
    %5598 = vmatprep.subr.mxu0 0.0
    %5599 = vmatpush1.msra.mxu0 0.0
    %5600 = vmatprep.subr.mxu0 0.0
    %5601 = vmatpush1.msra.mxu0 0.0
    %5602 = vmatprep.subr.mxu0 0.0
    %5603 = vmatpush1.msra.mxu0 0.0
    %5604 = vmatprep.subr.mxu0 0.0
    %5605 = vmatpush1.msra.mxu0 0.0
    %5606 = vmatprep.subr.mxu0 0.0
    %5607 = vmatpush1.msra.mxu0 0.0
    %5608 = vmatprep.subr.mxu0 0.0
    %5609 = vmatpush1.msra.mxu0 0.0
    %5610 = vmatprep.subr.mxu0 0.0
    %5611 = vmatpush1.msra.mxu0 0.0
    %5612 = vmatprep.subr.mxu0 0.0
    %5613 = vmatpush1.msra.mxu0 0.0
    %5614 = vmatprep.subr.mxu0 0.0
    %5615 = vmatpush1.msra.mxu0 0.0
    %5616 = vmatprep.subr.mxu0 0.0
    %5617 = vmatpush1.msra.mxu0 0.0
    %5618 = vmatprep.subr.mxu0 0.0
    %5619 = vmatpush1.msra.mxu0 0.0
    %5620 = vmatprep.subr.mxu0 0.0
    %5621 = vmatpush1.msra.mxu0 0.0
    %5622 = vmatprep.subr.mxu0 0.0
    %5623 = vmatpush1.msra.mxu0 0.0
    %5624 = vmatprep.subr.mxu0 0.0
    %5625 = vmatpush1.msra.mxu0 0.0
    %5626 = vmatprep.subr.mxu0 0.0
    %5627 = vmatpush1.msra.mxu0 0.0
    %5628 = vmatprep.subr.mxu0 0.0
    %5629 = vmatpush1.msra.mxu0 0.0
    %5630 = vmatprep.subr.mxu0 0.0
    %5631 = vmatpush1.msra.mxu0 0.0
    %5632 = vmatprep.subr.mxu0 0.0
    %5633 = vmatpush1.msra.mxu0 0.0
    %5634 = vmatprep.subr.mxu0 0.0
    %5635 = vmatpush1.msra.mxu0 0.0
    %5636 = vmatprep.subr.mxu0 0.0
    %5637 = vmatpush1.msra.mxu0 0.0
    %5638 = vmatprep.subr.mxu0 0.0
    %5639 = vmatpush1.msra.mxu0 0.0
    %5640 = vmatprep.subr.mxu0 0.0
    %5641 = vmatpush1.msra.mxu0 0.0
    %5642 = vmatprep.mubr.f32.mxu0 0.0
    %v5643 = vand.u32 %v5571, 4294901760
    %v5644 = vsub.f32 %v5571, %v5643
    %v5645 = vand.u32 %v5644, 4294901760
    %v5646 = vsub.f32 %v5644, %v5645
    %v5647 = vand.u32 %v5646, 4294901760
    %5648 = vmatmul.mubr.f32.gmra.mrb[0].mxu0 %v5647
    %v5649 = vpop.f32.mrb[0].mxu0
    %v5650 = vadd.f32 0.0, %v5649
    %v5651 = vpop.f32.mrb[0].mxu0
    %5652 = vmatprep.mubr.f32.mxu0 0.0
    %v5653 = vand.u32 %v5574, 4294901760
    %v5654 = vsub.f32 %v5574, %v5653
    %v5655 = vand.u32 %v5654, 4294901760
    %v5656 = vsub.f32 %v5654, %v5655
    %v5657 = vand.u32 %v5656, 4294901760
    %5658 = vmatmul.mubr.f32.gmra.mrb[0].mxu0 %v5657
    %v5659 = vpop.f32.mrb[0].mxu0
    %v5660 = vadd.f32 0.0, %v5659
    %v5661 = vpop.f32.mrb[0].mxu0
    %5662 = vdwg.mxu0
    %5663 = vmatprep.subr.mxu0 0.0
    %v5664 = vand.u32 %v33, 4294901760
    %v5665 = vsub.f32 %v33, %v5664
    %v5666 = vand.u32 %v5665, 4294901760
    %v5667 = vsub.f32 %v5665, %v5666
    %v5668 = vand.u32 %v5667, 4294901760
    %5669 = vmatpush1.msra.mxu0 %v5668
    %5670 = vmatprep.subr.mxu0 0.0
    %v5671 = vand.u32 %v34, 4294901760
    %v5672 = vsub.f32 %v34, %v5671
    %v5673 = vand.u32 %v5672, 4294901760
    %v5674 = vsub.f32 %v5672, %v5673
    %v5675 = vand.u32 %v5674, 4294901760
    %5676 = vmatpush1.msra.mxu0 %v5675
    %5677 = vmatprep.subr.mxu0 0.0
    %5678 = vmatpush1.msra.mxu0 0.0
    %5679 = vmatprep.subr.mxu0 0.0
    %5680 = vmatpush1.msra.mxu0 0.0
    %5681 = vmatprep.subr.mxu0 0.0
    %5682 = vmatpush1.msra.mxu0 0.0
    %5683 = vmatprep.subr.mxu0 0.0
    %5684 = vmatpush1.msra.mxu0 0.0
    %5685 = vmatprep.subr.mxu0 0.0
    %5686 = vmatpush1.msra.mxu0 0.0
    %5687 = vmatprep.subr.mxu0 0.0
    %5688 = vmatpush1.msra.mxu0 0.0
    %5689 = vmatprep.subr.mxu0 0.0
    %5690 = vmatpush1.msra.mxu0 0.0
    %5691 = vmatprep.subr.mxu0 0.0
    %5692 = vmatpush1.msra.mxu0 0.0
    %5693 = vmatprep.subr.mxu0 0.0
    %5694 = vmatpush1.msra.mxu0 0.0
    %5695 = vmatprep.subr.mxu0 0.0
    %5696 = vmatpush1.msra.mxu0 0.0
    %5697 = vmatprep.subr.mxu0 0.0
    %5698 = vmatpush1.msra.mxu0 0.0
    %5699 = vmatprep.subr.mxu0 0.0
    %5700 = vmatpush1.msra.mxu0 0.0
    %5701 = vmatprep.subr.mxu0 0.0
    %5702 = vmatpush1.msra.mxu0 0.0
    %5703 = vmatprep.subr.mxu0 0.0
    %5704 = vmatpush1.msra.mxu0 0.0
    %5705 = vmatprep.subr.mxu0 0.0
    %5706 = vmatpush1.msra.mxu0 0.0
    %5707 = vmatprep.subr.mxu0 0.0
    %5708 = vmatpush1.msra.mxu0 0.0
    %5709 = vmatprep.subr.mxu0 0.0
    %5710 = vmatpush1.msra.mxu0 0.0
    %5711 = vmatprep.subr.mxu0 0.0
    %5712 = vmatpush1.msra.mxu0 0.0
    %5713 = vmatprep.subr.mxu0 0.0
    %5714 = vmatpush1.msra.mxu0 0.0
    %5715 = vmatprep.subr.mxu0 0.0
    %5716 = vmatpush1.msra.mxu0 0.0
    %5717 = vmatprep.subr.mxu0 0.0
    %5718 = vmatpush1.msra.mxu0 0.0
    %5719 = vmatprep.subr.mxu0 0.0
    %5720 = vmatpush1.msra.mxu0 0.0
    %5721 = vmatprep.subr.mxu0 0.0
    %5722 = vmatpush1.msra.mxu0 0.0
    %5723 = vmatprep.subr.mxu0 0.0
    %5724 = vmatpush1.msra.mxu0 0.0
    %5725 = vmatprep.subr.mxu0 0.0
    %5726 = vmatpush1.msra.mxu0 0.0
    %5727 = vmatprep.subr.mxu0 0.0
    %5728 = vmatpush1.msra.mxu0 0.0
    %5729 = vmatprep.subr.mxu0 0.0
    %5730 = vmatpush1.msra.mxu0 0.0
    %5731 = vmatprep.subr.mxu0 0.0
    %5732 = vmatpush1.msra.mxu0 0.0
    %5733 = vmatprep.subr.mxu0 0.0
    %5734 = vmatpush1.msra.mxu0 0.0
    %5735 = vmatprep.subr.mxu0 0.0
    %5736 = vmatpush1.msra.mxu0 0.0
    %5737 = vmatprep.mubr.f32.mxu0 0.0
    %v5738 = vand.u32 %v5571, 4294901760
    %5739 = vmatmul.mubr.f32.gmra.mrb[0].mxu0 %v5738
    %v5740 = vpop.f32.mrb[0].mxu0
    %v5741 = vadd.f32 %v5650, %v5740
    %v5742 = vpop.f32.mrb[0].mxu0
    %5743 = vmatprep.mubr.f32.mxu0 0.0
    %v5744 = vand.u32 %v5574, 4294901760
    %5745 = vmatmul.mubr.f32.gmra.mrb[0].mxu0 %v5744
    %v5746 = vpop.f32.mrb[0].mxu0
    %v5747 = vadd.f32 %v5660, %v5746
    %v5748 = vpop.f32.mrb[0].mxu0
    %5749 = vdwg.mxu0
    %5750 = vmatprep.subr.mxu0 0.0
    %v5751 = vand.u32 %v33, 4294901760
    %v5752 = vsub.f32 %v33, %v5751
    %5753 = vmatpush1.msra.mxu0 %v5752
    %5754 = vmatprep.subr.mxu0 0.0
    %v5755 = vand.u32 %v34, 4294901760
    %v5756 = vsub.f32 %v34, %v5755
    %5757 = vmatpush1.msra.mxu0 %v5756
    %5758 = vmatprep.subr.mxu0 0.0
    %5759 = vmatpush1.msra.mxu0 0.0
    %5760 = vmatprep.subr.mxu0 0.0
    %5761 = vmatpush1.msra.mxu0 0.0
    %5762 = vmatprep.subr.mxu0 0.0
    %5763 = vmatpush1.msra.mxu0 0.0
    %5764 = vmatprep.subr.mxu0 0.0
    %5765 = vmatpush1.msra.mxu0 0.0
    %5766 = vmatprep.subr.mxu0 0.0
    %5767 = vmatpush1.msra.mxu0 0.0
    %5768 = vmatprep.subr.mxu0 0.0
    %5769 = vmatpush1.msra.mxu0 0.0
    %5770 = vmatprep.subr.mxu0 0.0
    %5771 = vmatpush1.msra.mxu0 0.0
    %5772 = vmatprep.subr.mxu0 0.0
    %5773 = vmatpush1.msra.mxu0 0.0
    %5774 = vmatprep.subr.mxu0 0.0
    %5775 = vmatpush1.msra.mxu0 0.0
    %5776 = vmatprep.subr.mxu0 0.0
    %5777 = vmatpush1.msra.mxu0 0.0
    %5778 = vmatprep.subr.mxu0 0.0
    %5779 = vmatpush1.msra.mxu0 0.0
    %5780 = vmatprep.subr.mxu0 0.0
    %5781 = vmatpush1.msra.mxu0 0.0
    %5782 = vmatprep.subr.mxu0 0.0
    %5783 = vmatpush1.msra.mxu0 0.0
    %5784 = vmatprep.subr.mxu0 0.0
    %5785 = vmatpush1.msra.mxu0 0.0
    %5786 = vmatprep.subr.mxu0 0.0
    %5787 = vmatpush1.msra.mxu0 0.0
    %5788 = vmatprep.subr.mxu0 0.0
    %5789 = vmatpush1.msra.mxu0 0.0
    %5790 = vmatprep.subr.mxu0 0.0
    %5791 = vmatpush1.msra.mxu0 0.0
    %5792 = vmatprep.subr.mxu0 0.0
    %5793 = vmatpush1.msra.mxu0 0.0
    %5794 = vmatprep.subr.mxu0 0.0
    %5795 = vmatpush1.msra.mxu0 0.0
    %5796 = vmatprep.subr.mxu0 0.0
    %5797 = vmatpush1.msra.mxu0 0.0
    %5798 = vmatprep.subr.mxu0 0.0
    %5799 = vmatpush1.msra.mxu0 0.0
    %5800 = vmatprep.subr.mxu0 0.0
    %5801 = vmatpush1.msra.mxu0 0.0
    %5802 = vmatprep.subr.mxu0 0.0
    %5803 = vmatpush1.msra.mxu0 0.0
    %5804 = vmatprep.subr.mxu0 0.0
    %5805 = vmatpush1.msra.mxu0 0.0
    %5806 = vmatprep.subr.mxu0 0.0
    %5807 = vmatpush1.msra.mxu0 0.0
    %5808 = vmatprep.subr.mxu0 0.0
    %5809 = vmatpush1.msra.mxu0 0.0
    %5810 = vmatprep.subr.mxu0 0.0
    %5811 = vmatpush1.msra.mxu0 0.0
    %5812 = vmatprep.subr.mxu0 0.0
    %5813 = vmatpush1.msra.mxu0 0.0
    %5814 = vmatprep.subr.mxu0 0.0
    %5815 = vmatpush1.msra.mxu0 0.0
    %5816 = vmatprep.subr.mxu0 0.0
    %5817 = vmatpush1.msra.mxu0 0.0
    %5818 = vmatprep.mubr.f32.mxu0 0.0
    %v5819 = vand.u32 %v5571, 4294901760
    %v5820 = vsub.f32 %v5571, %v5819
    %5821 = vmatmul.mubr.f32.gmra.mrb[0].mxu0 %v5820
    %v5822 = vpop.f32.mrb[0].mxu0
    %v5823 = vadd.f32 %v5741, %v5822
    %v5824 = vpop.f32.mrb[0].mxu0
    %5825 = vmatprep.mubr.f32.mxu0 0.0
    %v5826 = vand.u32 %v5574, 4294901760
    %v5827 = vsub.f32 %v5574, %v5826
    %5828 = vmatmul.mubr.f32.gmra.mrb[0].mxu0 %v5827
    %v5829 = vpop.f32.mrb[0].mxu0
    %v5830 = vadd.f32 %v5747, %v5829
    %v5831 = vpop.f32.mrb[0].mxu0
    %5832 = vdwg.mxu0
    %5833 = vmatprep.subr.mxu0 0.0
    %v5834 = vand.u32 %v33, 4294901760
    %5835 = vmatpush1.msra.mxu0 %v5834
    %5836 = vmatprep.subr.mxu0 0.0
    %v5837 = vand.u32 %v34, 4294901760
    %5838 = vmatpush1.msra.mxu0 %v5837
    %5839 = vmatprep.subr.mxu0 0.0
    %5840 = vmatpush1.msra.mxu0 0.0
    %5841 = vmatprep.subr.mxu0 0.0
    %5842 = vmatpush1.msra.mxu0 0.0
    %5843 = vmatprep.subr.mxu0 0.0
    %5844 = vmatpush1.msra.mxu0 0.0
    %5845 = vmatprep.subr.mxu0 0.0
    %5846 = vmatpush1.msra.mxu0 0.0
    %5847 = vmatprep.subr.mxu0 0.0
    %5848 = vmatpush1.msra.mxu0 0.0
    %5849 = vmatprep.subr.mxu0 0.0
    %5850 = vmatpush1.msra.mxu0 0.0
    %5851 = vmatprep.subr.mxu0 0.0
    %5852 = vmatpush1.msra.mxu0 0.0
    %5853 = vmatprep.subr.mxu0 0.0
    %5854 = vmatpush1.msra.mxu0 0.0
    %5855 = vmatprep.subr.mxu0 0.0
    %5856 = vmatpush1.msra.mxu0 0.0
    %5857 = vmatprep.subr.mxu0 0.0
    %5858 = vmatpush1.msra.mxu0 0.0
    %5859 = vmatprep.subr.mxu0 0.0
    %5860 = vmatpush1.msra.mxu0 0.0
    %5861 = vmatprep.subr.mxu0 0.0
    %5862 = vmatpush1.msra.mxu0 0.0
    %5863 = vmatprep.subr.mxu0 0.0
    %5864 = vmatpush1.msra.mxu0 0.0
    %5865 = vmatprep.subr.mxu0 0.0
    %5866 = vmatpush1.msra.mxu0 0.0
    %5867 = vmatprep.subr.mxu0 0.0
    %5868 = vmatpush1.msra.mxu0 0.0
    %5869 = vmatprep.subr.mxu0 0.0
    %5870 = vmatpush1.msra.mxu0 0.0
    %5871 = vmatprep.subr.mxu0 0.0
    %5872 = vmatpush1.msra.mxu0 0.0
    %5873 = vmatprep.subr.mxu0 0.0
    %5874 = vmatpush1.msra.mxu0 0.0
    %5875 = vmatprep.subr.mxu0 0.0
    %5876 = vmatpush1.msra.mxu0 0.0
    %5877 = vmatprep.subr.mxu0 0.0
    %5878 = vmatpush1.msra.mxu0 0.0
    %5879 = vmatprep.subr.mxu0 0.0
    %5880 = vmatpush1.msra.mxu0 0.0
    %5881 = vmatprep.subr.mxu0 0.0
    %5882 = vmatpush1.msra.mxu0 0.0
    %5883 = vmatprep.subr.mxu0 0.0
    %5884 = vmatpush1.msra.mxu0 0.0
    %5885 = vmatprep.subr.mxu0 0.0
    %5886 = vmatpush1.msra.mxu0 0.0
    %5887 = vmatprep.subr.mxu0 0.0
    %5888 = vmatpush1.msra.mxu0 0.0
    %5889 = vmatprep.subr.mxu0 0.0
    %5890 = vmatpush1.msra.mxu0 0.0
    %5891 = vmatprep.subr.mxu0 0.0
    %5892 = vmatpush1.msra.mxu0 0.0
    %5893 = vmatprep.subr.mxu0 0.0
    %5894 = vmatpush1.msra.mxu0 0.0
    %5895 = vmatprep.subr.mxu0 0.0
    %5896 = vmatpush1.msra.mxu0 0.0
    %5897 = vmatprep.subr.mxu0 0.0
    %5898 = vmatpush1.msra.mxu0 0.0
    %5899 = vmatprep.mubr.f32.mxu0 0.0
    %v5900 = vand.u32 %v5571, 4294901760
    %v5901 = vsub.f32 %v5571, %v5900
    %v5902 = vand.u32 %v5901, 4294901760
    %5903 = vmatmul.mubr.f32.gmra.mrb[0].mxu0 %v5902
    %v5904 = vpop.f32.mrb[0].mxu0
    %v5905 = vadd.f32 %v5823, %v5904
    %v5906 = vpop.f32.mrb[0].mxu0
    %5907 = vmatprep.mubr.f32.mxu0 0.0
    %v5908 = vand.u32 %v5574, 4294901760
    %v5909 = vsub.f32 %v5574, %v5908
    %v5910 = vand.u32 %v5909, 4294901760
    %5911 = vmatmul.mubr.f32.gmra.mrb[0].mxu0 %v5910
    %v5912 = vpop.f32.mrb[0].mxu0
    %v5913 = vadd.f32 %v5830, %v5912
    %v5914 = vpop.f32.mrb[0].mxu0
    %5915 = vdwg.mxu0
    %5916 = vmatprep.subr.mxu0 0.0
    %v5917 = vand.u32 %v33, 4294901760
    %v5918 = vsub.f32 %v33, %v5917
    %v5919 = vand.u32 %v5918, 4294901760
    %5920 = vmatpush1.msra.mxu0 %v5919
    %5921 = vmatprep.subr.mxu0 0.0
    %v5922 = vand.u32 %v34, 4294901760
    %v5923 = vsub.f32 %v34, %v5922
    %v5924 = vand.u32 %v5923, 4294901760
    %5925 = vmatpush1.msra.mxu0 %v5924
    %5926 = vmatprep.subr.mxu0 0.0
    %5927 = vmatpush1.msra.mxu0 0.0
    %5928 = vmatprep.subr.mxu0 0.0
    %5929 = vmatpush1.msra.mxu0 0.0
    %5930 = vmatprep.subr.mxu0 0.0
    %5931 = vmatpush1.msra.mxu0 0.0
    %5932 = vmatprep.subr.mxu0 0.0
    %5933 = vmatpush1.msra.mxu0 0.0
    %5934 = vmatprep.subr.mxu0 0.0
    %5935 = vmatpush1.msra.mxu0 0.0
    %5936 = vmatprep.subr.mxu0 0.0
    %5937 = vmatpush1.msra.mxu0 0.0
    %5938 = vmatprep.subr.mxu0 0.0
    %5939 = vmatpush1.msra.mxu0 0.0
    %5940 = vmatprep.subr.mxu0 0.0
    %5941 = vmatpush1.msra.mxu0 0.0
    %5942 = vmatprep.subr.mxu0 0.0
    %5943 = vmatpush1.msra.mxu0 0.0
    %5944 = vmatprep.subr.mxu0 0.0
    %5945 = vmatpush1.msra.mxu0 0.0
    %5946 = vmatprep.subr.mxu0 0.0
    %5947 = vmatpush1.msra.mxu0 0.0
    %5948 = vmatprep.subr.mxu0 0.0
    %5949 = vmatpush1.msra.mxu0 0.0
    %5950 = vmatprep.subr.mxu0 0.0
    %5951 = vmatpush1.msra.mxu0 0.0
    %5952 = vmatprep.subr.mxu0 0.0
    %5953 = vmatpush1.msra.mxu0 0.0
    %5954 = vmatprep.subr.mxu0 0.0
    %5955 = vmatpush1.msra.mxu0 0.0
    %5956 = vmatprep.subr.mxu0 0.0
    %5957 = vmatpush1.msra.mxu0 0.0
    %5958 = vmatprep.subr.mxu0 0.0
    %5959 = vmatpush1.msra.mxu0 0.0
    %5960 = vmatprep.subr.mxu0 0.0
    %5961 = vmatpush1.msra.mxu0 0.0
    %5962 = vmatprep.subr.mxu0 0.0
    %5963 = vmatpush1.msra.mxu0 0.0
    %5964 = vmatprep.subr.mxu0 0.0
    %5965 = vmatpush1.msra.mxu0 0.0
    %5966 = vmatprep.subr.mxu0 0.0
    %5967 = vmatpush1.msra.mxu0 0.0
    %5968 = vmatprep.subr.mxu0 0.0
    %5969 = vmatpush1.msra.mxu0 0.0
    %5970 = vmatprep.subr.mxu0 0.0
    %5971 = vmatpush1.msra.mxu0 0.0
    %5972 = vmatprep.subr.mxu0 0.0
    %5973 = vmatpush1.msra.mxu0 0.0
    %5974 = vmatprep.subr.mxu0 0.0
    %5975 = vmatpush1.msra.mxu0 0.0
    %5976 = vmatprep.subr.mxu0 0.0
    %5977 = vmatpush1.msra.mxu0 0.0
    %5978 = vmatprep.subr.mxu0 0.0
    %5979 = vmatpush1.msra.mxu0 0.0
    %5980 = vmatprep.subr.mxu0 0.0
    %5981 = vmatpush1.msra.mxu0 0.0
    %5982 = vmatprep.subr.mxu0 0.0
    %5983 = vmatpush1.msra.mxu0 0.0
    %5984 = vmatprep.subr.mxu0 0.0
    %5985 = vmatpush1.msra.mxu0 0.0
    %5986 = vmatprep.mubr.f32.mxu0 0.0
    %v5987 = vand.u32 %v5571, 4294901760
    %5988 = vmatmul.mubr.f32.gmra.mrb[0].mxu0 %v5987
    %v5989 = vpop.f32.mrb[0].mxu0
    %v5990 = vadd.f32 %v5905, %v5989
    %v5991 = vpop.f32.mrb[0].mxu0
    %5992 = vmatprep.mubr.f32.mxu0 0.0
    %v5993 = vand.u32 %v5574, 4294901760
    %5994 = vmatmul.mubr.f32.gmra.mrb[0].mxu0 %v5993
    %v5995 = vpop.f32.mrb[0].mxu0
    %v5996 = vadd.f32 %v5913, %v5995
    %v5997 = vpop.f32.mrb[0].mxu0
    %5998 = vdwg.mxu0
    %5999 = vmatprep.subr.mxu0 0.0
    %v6000 = vand.u32 %v33, 4294901760
    %6001 = vmatpush1.msra.mxu0 %v6000
    %6002 = vmatprep.subr.mxu0 0.0
    %v6003 = vand.u32 %v34, 4294901760
    %6004 = vmatpush1.msra.mxu0 %v6003
    %6005 = vmatprep.subr.mxu0 0.0
    %6006 = vmatpush1.msra.mxu0 0.0
    %6007 = vmatprep.subr.mxu0 0.0
    %6008 = vmatpush1.msra.mxu0 0.0
    %6009 = vmatprep.subr.mxu0 0.0
    %6010 = vmatpush1.msra.mxu0 0.0
    %6011 = vmatprep.subr.mxu0 0.0
    %6012 = vmatpush1.msra.mxu0 0.0
    %6013 = vmatprep.subr.mxu0 0.0
    %6014 = vmatpush1.msra.mxu0 0.0
    %6015 = vmatprep.subr.mxu0 0.0
    %6016 = vmatpush1.msra.mxu0 0.0
    %6017 = vmatprep.subr.mxu0 0.0
    %6018 = vmatpush1.msra.mxu0 0.0
    %6019 = vmatprep.subr.mxu0 0.0
    %6020 = vmatpush1.msra.mxu0 0.0
    %6021 = vmatprep.subr.mxu0 0.0
    %6022 = vmatpush1.msra.mxu0 0.0
    %6023 = vmatprep.subr.mxu0 0.0
    %6024 = vmatpush1.msra.mxu0 0.0
    %6025 = vmatprep.subr.mxu0 0.0
    %6026 = vmatpush1.msra.mxu0 0.0
    %6027 = vmatprep.subr.mxu0 0.0
    %6028 = vmatpush1.msra.mxu0 0.0
    %6029 = vmatprep.subr.mxu0 0.0
    %6030 = vmatpush1.msra.mxu0 0.0
    %6031 = vmatprep.subr.mxu0 0.0
    %6032 = vmatpush1.msra.mxu0 0.0
    %6033 = vmatprep.subr.mxu0 0.0
    %6034 = vmatpush1.msra.mxu0 0.0
    %6035 = vmatprep.subr.mxu0 0.0
    %6036 = vmatpush1.msra.mxu0 0.0
    %6037 = vmatprep.subr.mxu0 0.0
    %6038 = vmatpush1.msra.mxu0 0.0
    %6039 = vmatprep.subr.mxu0 0.0
    %6040 = vmatpush1.msra.mxu0 0.0
    %6041 = vmatprep.subr.mxu0 0.0
    %6042 = vmatpush1.msra.mxu0 0.0
    %6043 = vmatprep.subr.mxu0 0.0
    %6044 = vmatpush1.msra.mxu0 0.0
    %6045 = vmatprep.subr.mxu0 0.0
    %6046 = vmatpush1.msra.mxu0 0.0
    %6047 = vmatprep.subr.mxu0 0.0
    %6048 = vmatpush1.msra.mxu0 0.0
    %6049 = vmatprep.subr.mxu0 0.0
    %6050 = vmatpush1.msra.mxu0 0.0
    %6051 = vmatprep.subr.mxu0 0.0
    %6052 = vmatpush1.msra.mxu0 0.0
    %6053 = vmatprep.subr.mxu0 0.0
    %6054 = vmatpush1.msra.mxu0 0.0
    %6055 = vmatprep.subr.mxu0 0.0
    %6056 = vmatpush1.msra.mxu0 0.0
    %6057 = vmatprep.subr.mxu0 0.0
    %6058 = vmatpush1.msra.mxu0 0.0
    %6059 = vmatprep.subr.mxu0 0.0
    %6060 = vmatpush1.msra.mxu0 0.0
    %6061 = vmatprep.subr.mxu0 0.0
    %6062 = vmatpush1.msra.mxu0 0.0
    %6063 = vmatprep.subr.mxu0 0.0
    %6064 = vmatpush1.msra.mxu0 0.0
    %6065 = vmatprep.mubr.f32.mxu0 0.0
    %v6066 = vand.u32 %v5571, 4294901760
    %6067 = vmatmul.mubr.f32.gmra.mrb[0].mxu0 %v6066
    %v6068 = vpop.f32.mrb[0].mxu0
    %v6069 = vadd.f32 %v5990, %v6068
    %v6070 = vpop.f32.mrb[0].mxu0
    %6071 = vmatprep.mubr.f32.mxu0 0.0
    %v6072 = vand.u32 %v5574, 4294901760
    %6073 = vmatmul.mubr.f32.gmra.mrb[0].mxu0 %v6072
    %v6074 = vpop.f32.mrb[0].mxu0
    %v6075 = vadd.f32 %v5996, %v6074
    %v6076 = vpop.f32.mrb[0].mxu0
    %6077 = vdwg.mxu0
    %6078 = vmatprep.subr.mxu0 0.0
    %v6079 = vand.u32 %v6069, 4294901760
    %6080 = vmatpush1.msra.mxu0 %v6079
    %6081 = vmatprep.subr.mxu0 0.0
    %v6082 = vand.u32 %v6075, 4294901760
    %6083 = vmatpush1.msra.mxu0 %v6082
    %6084 = vmatprep.subr.mxu0 0.0
    %6085 = vmatpush1.msra.mxu0 0.0
    %6086 = vmatprep.subr.mxu0 0.0
    %6087 = vmatpush1.msra.mxu0 0.0
    %6088 = vmatprep.subr.mxu0 0.0
    %6089 = vmatpush1.msra.mxu0 0.0
    %6090 = vmatprep.subr.mxu0 0.0
    %6091 = vmatpush1.msra.mxu0 0.0
    %6092 = vmatprep.subr.mxu0 0.0
    %6093 = vmatpush1.msra.mxu0 0.0
    %6094 = vmatprep.subr.mxu0 0.0
    %6095 = vmatpush1.msra.mxu0 0.0
    %6096 = vmatprep.subr.mxu0 0.0
    %6097 = vmatpush1.msra.mxu0 0.0
    %6098 = vmatprep.subr.mxu0 0.0
    %6099 = vmatpush1.msra.mxu0 0.0
    %6100 = vmatprep.subr.mxu0 0.0
    %6101 = vmatpush1.msra.mxu0 0.0
    %6102 = vmatprep.subr.mxu0 0.0
    %6103 = vmatpush1.msra.mxu0 0.0
    %6104 = vmatprep.subr.mxu0 0.0
    %6105 = vmatpush1.msra.mxu0 0.0
    %6106 = vmatprep.subr.mxu0 0.0
    %6107 = vmatpush1.msra.mxu0 0.0
    %6108 = vmatprep.subr.mxu0 0.0
    %6109 = vmatpush1.msra.mxu0 0.0
    %6110 = vmatprep.subr.mxu0 0.0
    %6111 = vmatpush1.msra.mxu0 0.0
    %6112 = vmatprep.subr.mxu0 0.0
    %6113 = vmatpush1.msra.mxu0 0.0
    %6114 = vmatprep.subr.mxu0 0.0
    %6115 = vmatpush1.msra.mxu0 0.0
    %6116 = vmatprep.subr.mxu0 0.0
    %6117 = vmatpush1.msra.mxu0 0.0
    %6118 = vmatprep.subr.mxu0 0.0
    %6119 = vmatpush1.msra.mxu0 0.0
    %6120 = vmatprep.subr.mxu0 0.0
    %6121 = vmatpush1.msra.mxu0 0.0
    %6122 = vmatprep.subr.mxu0 0.0
    %6123 = vmatpush1.msra.mxu0 0.0
    %6124 = vmatprep.subr.mxu0 0.0
    %6125 = vmatpush1.msra.mxu0 0.0
    %6126 = vmatprep.subr.mxu0 0.0
    %6127 = vmatpush1.msra.mxu0 0.0
    %6128 = vmatprep.subr.mxu0 0.0
    %6129 = vmatpush1.msra.mxu0 0.0
    %6130 = vmatprep.subr.mxu0 0.0
    %6131 = vmatpush1.msra.mxu0 0.0
    %6132 = vmatprep.subr.mxu0 0.0
    %6133 = vmatpush1.msra.mxu0 0.0
    %6134 = vmatprep.subr.mxu0 0.0
    %6135 = vmatpush1.msra.mxu0 0.0
    %6136 = vmatprep.subr.mxu0 0.0
    %6137 = vmatpush1.msra.mxu0 0.0
    %6138 = vmatprep.subr.mxu0 0.0
    %6139 = vmatpush1.msra.mxu0 0.0
    %6140 = vmatprep.subr.mxu0 0.0
    %6141 = vmatpush1.msra.mxu0 0.0
    %6142 = vmatprep.subr.mxu0 0.0
    %6143 = vmatpush1.msra.mxu0 0.0
    %6144 = vmatprep.mubr.f32.mxu0 0.0
    %v6145 = vand.u32 %v547, 4294901760
    %v6146 = vsub.f32 %v547, %v6145
    %v6147 = vand.u32 %v6146, 4294901760
    %v6148 = vsub.f32 %v6146, %v6147
    %v6149 = vand.u32 %v6148, 4294901760
    %6150 = vmatmul.mubr.f32.gmra.mrb[0].mxu0 %v6149
    %v6151 = vpop.f32.mrb[0].mxu0
    %v6152 = vadd.f32 0.0, %v6151
    %v6153 = vpop.f32.mrb[0].mxu0
    %6154 = vmatprep.mubr.f32.mxu0 0.0
    %v6155 = vand.u32 %v550, 4294901760
    %v6156 = vsub.f32 %v550, %v6155
    %v6157 = vand.u32 %v6156, 4294901760
    %v6158 = vsub.f32 %v6156, %v6157
    %v6159 = vand.u32 %v6158, 4294901760
    %6160 = vmatmul.mubr.f32.gmra.mrb[0].mxu0 %v6159
    %v6161 = vpop.f32.mrb[0].mxu0
    %v6162 = vadd.f32 0.0, %v6161
    %v6163 = vpop.f32.mrb[0].mxu0
    %6164 = vmatprep.mubr.f32.mxu0 0.0
    %v6165 = vand.u32 %v553, 4294901760
    %v6166 = vsub.f32 %v553, %v6165
    %v6167 = vand.u32 %v6166, 4294901760
    %v6168 = vsub.f32 %v6166, %v6167
    %v6169 = vand.u32 %v6168, 4294901760
    %6170 = vmatmul.mubr.f32.gmra.mrb[0].mxu0 %v6169
    %v6171 = vpop.f32.mrb[0].mxu0
    %v6172 = vadd.f32 0.0, %v6171
    %v6173 = vpop.f32.mrb[0].mxu0
    %6174 = vmatprep.mubr.f32.mxu0 0.0
    %v6175 = vand.u32 %v556, 4294901760
    %v6176 = vsub.f32 %v556, %v6175
    %v6177 = vand.u32 %v6176, 4294901760
    %v6178 = vsub.f32 %v6176, %v6177
    %v6179 = vand.u32 %v6178, 4294901760
    %6180 = vmatmul.mubr.f32.gmra.mrb[0].mxu0 %v6179
    %v6181 = vpop.f32.mrb[0].mxu0
    %v6182 = vadd.f32 0.0, %v6181
    %v6183 = vpop.f32.mrb[0].mxu0
    %6184 = vdwg.mxu0
    %6185 = vmatprep.subr.mxu0 0.0
    %v6186 = vand.u32 %v6069, 4294901760
    %v6187 = vsub.f32 %v6069, %v6186
    %v6188 = vand.u32 %v6187, 4294901760
    %v6189 = vsub.f32 %v6187, %v6188
    %v6190 = vand.u32 %v6189, 4294901760
    %6191 = vmatpush1.msra.mxu0 %v6190
    %6192 = vmatprep.subr.mxu0 0.0
    %v6193 = vand.u32 %v6075, 4294901760
    %v6194 = vsub.f32 %v6075, %v6193
    %v6195 = vand.u32 %v6194, 4294901760
    %v6196 = vsub.f32 %v6194, %v6195
    %v6197 = vand.u32 %v6196, 4294901760
    %6198 = vmatpush1.msra.mxu0 %v6197
    %6199 = vmatprep.subr.mxu0 0.0
    %6200 = vmatpush1.msra.mxu0 0.0
    %6201 = vmatprep.subr.mxu0 0.0
    %6202 = vmatpush1.msra.mxu0 0.0
    %6203 = vmatprep.subr.mxu0 0.0
    %6204 = vmatpush1.msra.mxu0 0.0
    %6205 = vmatprep.subr.mxu0 0.0
    %6206 = vmatpush1.msra.mxu0 0.0
    %6207 = vmatprep.subr.mxu0 0.0
    %6208 = vmatpush1.msra.mxu0 0.0
    %6209 = vmatprep.subr.mxu0 0.0
    %6210 = vmatpush1.msra.mxu0 0.0
    %6211 = vmatprep.subr.mxu0 0.0
    %6212 = vmatpush1.msra.mxu0 0.0
    %6213 = vmatprep.subr.mxu0 0.0
    %6214 = vmatpush1.msra.mxu0 0.0
    %6215 = vmatprep.subr.mxu0 0.0
    %6216 = vmatpush1.msra.mxu0 0.0
    %6217 = vmatprep.subr.mxu0 0.0
    %6218 = vmatpush1.msra.mxu0 0.0
    %6219 = vmatprep.subr.mxu0 0.0
    %6220 = vmatpush1.msra.mxu0 0.0
    %6221 = vmatprep.subr.mxu0 0.0
    %6222 = vmatpush1.msra.mxu0 0.0
    %6223 = vmatprep.subr.mxu0 0.0
    %6224 = vmatpush1.msra.mxu0 0.0
    %6225 = vmatprep.subr.mxu0 0.0
    %6226 = vmatpush1.msra.mxu0 0.0
    %6227 = vmatprep.subr.mxu0 0.0
    %6228 = vmatpush1.msra.mxu0 0.0
    %6229 = vmatprep.subr.mxu0 0.0
    %6230 = vmatpush1.msra.mxu0 0.0
    %6231 = vmatprep.subr.mxu0 0.0
    %6232 = vmatpush1.msra.mxu0 0.0
    %6233 = vmatprep.subr.mxu0 0.0
    %6234 = vmatpush1.msra.mxu0 0.0
    %6235 = vmatprep.subr.mxu0 0.0
    %6236 = vmatpush1.msra.mxu0 0.0
    %6237 = vmatprep.subr.mxu0 0.0
    %6238 = vmatpush1.msra.mxu0 0.0
    %6239 = vmatprep.subr.mxu0 0.0
    %6240 = vmatpush1.msra.mxu0 0.0
    %6241 = vmatprep.subr.mxu0 0.0
    %6242 = vmatpush1.msra.mxu0 0.0
    %6243 = vmatprep.subr.mxu0 0.0
    %6244 = vmatpush1.msra.mxu0 0.0
    %6245 = vmatprep.subr.mxu0 0.0
    %6246 = vmatpush1.msra.mxu0 0.0
    %6247 = vmatprep.subr.mxu0 0.0
    %6248 = vmatpush1.msra.mxu0 0.0
    %6249 = vmatprep.subr.mxu0 0.0
    %6250 = vmatpush1.msra.mxu0 0.0
    %6251 = vmatprep.subr.mxu0 0.0
    %6252 = vmatpush1.msra.mxu0 0.0
    %6253 = vmatprep.subr.mxu0 0.0
    %6254 = vmatpush1.msra.mxu0 0.0
    %6255 = vmatprep.subr.mxu0 0.0
    %6256 = vmatpush1.msra.mxu0 0.0
    %6257 = vmatprep.subr.mxu0 0.0
    %6258 = vmatpush1.msra.mxu0 0.0
    %6259 = vmatprep.mubr.f32.mxu0 0.0
    %v6260 = vand.u32 %v547, 4294901760
    %6261 = vmatmul.mubr.f32.gmra.mrb[0].mxu0 %v6260
    %v6262 = vpop.f32.mrb[0].mxu0
    %v6263 = vadd.f32 %v6152, %v6262
    %v6264 = vpop.f32.mrb[0].mxu0
    %6265 = vmatprep.mubr.f32.mxu0 0.0
    %v6266 = vand.u32 %v550, 4294901760
    %6267 = vmatmul.mubr.f32.gmra.mrb[0].mxu0 %v6266
    %v6268 = vpop.f32.mrb[0].mxu0
    %v6269 = vadd.f32 %v6162, %v6268
    %v6270 = vpop.f32.mrb[0].mxu0
    %6271 = vmatprep.mubr.f32.mxu0 0.0
    %v6272 = vand.u32 %v553, 4294901760
    %6273 = vmatmul.mubr.f32.gmra.mrb[0].mxu0 %v6272
    %v6274 = vpop.f32.mrb[0].mxu0
    %v6275 = vadd.f32 %v6172, %v6274
    %v6276 = vpop.f32.mrb[0].mxu0
    %6277 = vmatprep.mubr.f32.mxu0 0.0
    %v6278 = vand.u32 %v556, 4294901760
    %6279 = vmatmul.mubr.f32.gmra.mrb[0].mxu0 %v6278
    %v6280 = vpop.f32.mrb[0].mxu0
    %v6281 = vadd.f32 %v6182, %v6280
    %v6282 = vpop.f32.mrb[0].mxu0
    %6283 = vdwg.mxu0
    %6284 = vmatprep.subr.mxu0 0.0
    %v6285 = vand.u32 %v6069, 4294901760
    %v6286 = vsub.f32 %v6069, %v6285
    %6287 = vmatpush1.msra.mxu0 %v6286
    %6288 = vmatprep.subr.mxu0 0.0
    %v6289 = vand.u32 %v6075, 4294901760
    %v6290 = vsub.f32 %v6075, %v6289
    %6291 = vmatpush1.msra.mxu0 %v6290
    %6292 = vmatprep.subr.mxu0 0.0
    %6293 = vmatpush1.msra.mxu0 0.0
    %6294 = vmatprep.subr.mxu0 0.0
    %6295 = vmatpush1.msra.mxu0 0.0
    %6296 = vmatprep.subr.mxu0 0.0
    %6297 = vmatpush1.msra.mxu0 0.0
    %6298 = vmatprep.subr.mxu0 0.0
    %6299 = vmatpush1.msra.mxu0 0.0
    %6300 = vmatprep.subr.mxu0 0.0
    %6301 = vmatpush1.msra.mxu0 0.0
    %6302 = vmatprep.subr.mxu0 0.0
    %6303 = vmatpush1.msra.mxu0 0.0
    %6304 = vmatprep.subr.mxu0 0.0
    %6305 = vmatpush1.msra.mxu0 0.0
    %6306 = vmatprep.subr.mxu0 0.0
    %6307 = vmatpush1.msra.mxu0 0.0
    %6308 = vmatprep.subr.mxu0 0.0
    %6309 = vmatpush1.msra.mxu0 0.0
    %6310 = vmatprep.subr.mxu0 0.0
    %6311 = vmatpush1.msra.mxu0 0.0
    %6312 = vmatprep.subr.mxu0 0.0
    %6313 = vmatpush1.msra.mxu0 0.0
    %6314 = vmatprep.subr.mxu0 0.0
    %6315 = vmatpush1.msra.mxu0 0.0
    %6316 = vmatprep.subr.mxu0 0.0
    %6317 = vmatpush1.msra.mxu0 0.0
    %6318 = vmatprep.subr.mxu0 0.0
    %6319 = vmatpush1.msra.mxu0 0.0
    %6320 = vmatprep.subr.mxu0 0.0
    %6321 = vmatpush1.msra.mxu0 0.0
    %6322 = vmatprep.subr.mxu0 0.0
    %6323 = vmatpush1.msra.mxu0 0.0
    %6324 = vmatprep.subr.mxu0 0.0
    %6325 = vmatpush1.msra.mxu0 0.0
    %6326 = vmatprep.subr.mxu0 0.0
    %6327 = vmatpush1.msra.mxu0 0.0
    %6328 = vmatprep.subr.mxu0 0.0
    %6329 = vmatpush1.msra.mxu0 0.0
    %6330 = vmatprep.subr.mxu0 0.0
    %6331 = vmatpush1.msra.mxu0 0.0
    %6332 = vmatprep.subr.mxu0 0.0
    %6333 = vmatpush1.msra.mxu0 0.0
    %6334 = vmatprep.subr.mxu0 0.0
    %6335 = vmatpush1.msra.mxu0 0.0
    %6336 = vmatprep.subr.mxu0 0.0
    %6337 = vmatpush1.msra.mxu0 0.0
    %6338 = vmatprep.subr.mxu0 0.0
    %6339 = vmatpush1.msra.mxu0 0.0
    %6340 = vmatprep.subr.mxu0 0.0
    %6341 = vmatpush1.msra.mxu0 0.0
    %6342 = vmatprep.subr.mxu0 0.0
    %6343 = vmatpush1.msra.mxu0 0.0
    %6344 = vmatprep.subr.mxu0 0.0
    %6345 = vmatpush1.msra.mxu0 0.0
    %6346 = vmatprep.subr.mxu0 0.0
    %6347 = vmatpush1.msra.mxu0 0.0
    %6348 = vmatprep.subr.mxu0 0.0
    %6349 = vmatpush1.msra.mxu0 0.0
    %6350 = vmatprep.subr.mxu0 0.0
    %6351 = vmatpush1.msra.mxu0 0.0
    %6352 = vmatprep.mubr.f32.mxu0 0.0
    %v6353 = vand.u32 %v547, 4294901760
    %v6354 = vsub.f32 %v547, %v6353
    %6355 = vmatmul.mubr.f32.gmra.mrb[0].mxu0 %v6354
    %v6356 = vpop.f32.mrb[0].mxu0
    %v6357 = vadd.f32 %v6263, %v6356
    %v6358 = vpop.f32.mrb[0].mxu0
    %6359 = vmatprep.mubr.f32.mxu0 0.0
    %v6360 = vand.u32 %v550, 4294901760
    %v6361 = vsub.f32 %v550, %v6360
    %6362 = vmatmul.mubr.f32.gmra.mrb[0].mxu0 %v6361
    %v6363 = vpop.f32.mrb[0].mxu0
    %v6364 = vadd.f32 %v6269, %v6363
    %v6365 = vpop.f32.mrb[0].mxu0
    %6366 = vmatprep.mubr.f32.mxu0 0.0
    %v6367 = vand.u32 %v553, 4294901760
    %v6368 = vsub.f32 %v553, %v6367
    %6369 = vmatmul.mubr.f32.gmra.mrb[0].mxu0 %v6368
    %v6370 = vpop.f32.mrb[0].mxu0
    %v6371 = vadd.f32 %v6275, %v6370
    %v6372 = vpop.f32.mrb[0].mxu0
    %6373 = vmatprep.mubr.f32.mxu0 0.0
    %v6374 = vand.u32 %v556, 4294901760
    %v6375 = vsub.f32 %v556, %v6374
    %6376 = vmatmul.mubr.f32.gmra.mrb[0].mxu0 %v6375
    %v6377 = vpop.f32.mrb[0].mxu0
    %v6378 = vadd.f32 %v6281, %v6377
    %v6379 = vpop.f32.mrb[0].mxu0
    %6380 = vdwg.mxu0
    %6381 = vmatprep.subr.mxu0 0.0
    %v6382 = vand.u32 %v6069, 4294901760
    %6383 = vmatpush1.msra.mxu0 %v6382
    %6384 = vmatprep.subr.mxu0 0.0
    %v6385 = vand.u32 %v6075, 4294901760
    %6386 = vmatpush1.msra.mxu0 %v6385
    %6387 = vmatprep.subr.mxu0 0.0
    %6388 = vmatpush1.msra.mxu0 0.0
    %6389 = vmatprep.subr.mxu0 0.0
    %6390 = vmatpush1.msra.mxu0 0.0
    %6391 = vmatprep.subr.mxu0 0.0
    %6392 = vmatpush1.msra.mxu0 0.0
    %6393 = vmatprep.subr.mxu0 0.0
    %6394 = vmatpush1.msra.mxu0 0.0
    %6395 = vmatprep.subr.mxu0 0.0
    %6396 = vmatpush1.msra.mxu0 0.0
    %6397 = vmatprep.subr.mxu0 0.0
    %6398 = vmatpush1.msra.mxu0 0.0
    %6399 = vmatprep.subr.mxu0 0.0
    %6400 = vmatpush1.msra.mxu0 0.0
    %6401 = vmatprep.subr.mxu0 0.0
    %6402 = vmatpush1.msra.mxu0 0.0
    %6403 = vmatprep.subr.mxu0 0.0
    %6404 = vmatpush1.msra.mxu0 0.0
    %6405 = vmatprep.subr.mxu0 0.0
    %6406 = vmatpush1.msra.mxu0 0.0
    %6407 = vmatprep.subr.mxu0 0.0
    %6408 = vmatpush1.msra.mxu0 0.0
    %6409 = vmatprep.subr.mxu0 0.0
    %6410 = vmatpush1.msra.mxu0 0.0
    %6411 = vmatprep.subr.mxu0 0.0
    %6412 = vmatpush1.msra.mxu0 0.0
    %6413 = vmatprep.subr.mxu0 0.0
    %6414 = vmatpush1.msra.mxu0 0.0
    %6415 = vmatprep.subr.mxu0 0.0
    %6416 = vmatpush1.msra.mxu0 0.0
    %6417 = vmatprep.subr.mxu0 0.0
    %6418 = vmatpush1.msra.mxu0 0.0
    %6419 = vmatprep.subr.mxu0 0.0
    %6420 = vmatpush1.msra.mxu0 0.0
    %6421 = vmatprep.subr.mxu0 0.0
    %6422 = vmatpush1.msra.mxu0 0.0
    %6423 = vmatprep.subr.mxu0 0.0
    %6424 = vmatpush1.msra.mxu0 0.0
    %6425 = vmatprep.subr.mxu0 0.0
    %6426 = vmatpush1.msra.mxu0 0.0
    %6427 = vmatprep.subr.mxu0 0.0
    %6428 = vmatpush1.msra.mxu0 0.0
    %6429 = vmatprep.subr.mxu0 0.0
    %6430 = vmatpush1.msra.mxu0 0.0
    %6431 = vmatprep.subr.mxu0 0.0
    %6432 = vmatpush1.msra.mxu0 0.0
    %6433 = vmatprep.subr.mxu0 0.0
    %6434 = vmatpush1.msra.mxu0 0.0
    %6435 = vmatprep.subr.mxu0 0.0
    %6436 = vmatpush1.msra.mxu0 0.0
    %6437 = vmatprep.subr.mxu0 0.0
    %6438 = vmatpush1.msra.mxu0 0.0
    %6439 = vmatprep.subr.mxu0 0.0
    %6440 = vmatpush1.msra.mxu0 0.0
    %6441 = vmatprep.subr.mxu0 0.0
    %6442 = vmatpush1.msra.mxu0 0.0
    %6443 = vmatprep.subr.mxu0 0.0
    %6444 = vmatpush1.msra.mxu0 0.0
    %6445 = vmatprep.subr.mxu0 0.0
    %6446 = vmatpush1.msra.mxu0 0.0
    %6447 = vmatprep.mubr.f32.mxu0 0.0
    %v6448 = vand.u32 %v547, 4294901760
    %v6449 = vsub.f32 %v547, %v6448
    %v6450 = vand.u32 %v6449, 4294901760
    %6451 = vmatmul.mubr.f32.gmra.mrb[0].mxu0 %v6450
    %v6452 = vpop.f32.mrb[0].mxu0
    %v6453 = vadd.f32 %v6357, %v6452
    %v6454 = vpop.f32.mrb[0].mxu0
    %6455 = vmatprep.mubr.f32.mxu0 0.0
    %v6456 = vand.u32 %v550, 4294901760
    %v6457 = vsub.f32 %v550, %v6456
    %v6458 = vand.u32 %v6457, 4294901760
    %6459 = vmatmul.mubr.f32.gmra.mrb[0].mxu0 %v6458
    %v6460 = vpop.f32.mrb[0].mxu0
    %v6461 = vadd.f32 %v6364, %v6460
    %v6462 = vpop.f32.mrb[0].mxu0
    %6463 = vmatprep.mubr.f32.mxu0 0.0
    %v6464 = vand.u32 %v553, 4294901760
    %v6465 = vsub.f32 %v553, %v6464
    %v6466 = vand.u32 %v6465, 4294901760
    %6467 = vmatmul.mubr.f32.gmra.mrb[0].mxu0 %v6466
    %v6468 = vpop.f32.mrb[0].mxu0
    %v6469 = vadd.f32 %v6371, %v6468
    %v6470 = vpop.f32.mrb[0].mxu0
    %6471 = vmatprep.mubr.f32.mxu0 0.0
    %v6472 = vand.u32 %v556, 4294901760
    %v6473 = vsub.f32 %v556, %v6472
    %v6474 = vand.u32 %v6473, 4294901760
    %6475 = vmatmul.mubr.f32.gmra.mrb[0].mxu0 %v6474
    %v6476 = vpop.f32.mrb[0].mxu0
    %v6477 = vadd.f32 %v6378, %v6476
    %v6478 = vpop.f32.mrb[0].mxu0
    %6479 = vdwg.mxu0
    %6480 = vmatprep.subr.mxu0 0.0
    %v6481 = vand.u32 %v6069, 4294901760
    %v6482 = vsub.f32 %v6069, %v6481
    %v6483 = vand.u32 %v6482, 4294901760
    %6484 = vmatpush1.msra.mxu0 %v6483
    %6485 = vmatprep.subr.mxu0 0.0
    %v6486 = vand.u32 %v6075, 4294901760
    %v6487 = vsub.f32 %v6075, %v6486
    %v6488 = vand.u32 %v6487, 4294901760
    %6489 = vmatpush1.msra.mxu0 %v6488
    %6490 = vmatprep.subr.mxu0 0.0
    %6491 = vmatpush1.msra.mxu0 0.0
    %6492 = vmatprep.subr.mxu0 0.0
    %6493 = vmatpush1.msra.mxu0 0.0
    %6494 = vmatprep.subr.mxu0 0.0
    %6495 = vmatpush1.msra.mxu0 0.0
    %6496 = vmatprep.subr.mxu0 0.0
    %6497 = vmatpush1.msra.mxu0 0.0
    %6498 = vmatprep.subr.mxu0 0.0
    %6499 = vmatpush1.msra.mxu0 0.0
    %6500 = vmatprep.subr.mxu0 0.0
    %6501 = vmatpush1.msra.mxu0 0.0
    %6502 = vmatprep.subr.mxu0 0.0
    %6503 = vmatpush1.msra.mxu0 0.0
    %6504 = vmatprep.subr.mxu0 0.0
    %6505 = vmatpush1.msra.mxu0 0.0
    %6506 = vmatprep.subr.mxu0 0.0
    %6507 = vmatpush1.msra.mxu0 0.0
    %6508 = vmatprep.subr.mxu0 0.0
    %6509 = vmatpush1.msra.mxu0 0.0
    %6510 = vmatprep.subr.mxu0 0.0
    %6511 = vmatpush1.msra.mxu0 0.0
    %6512 = vmatprep.subr.mxu0 0.0
    %6513 = vmatpush1.msra.mxu0 0.0
    %6514 = vmatprep.subr.mxu0 0.0
    %6515 = vmatpush1.msra.mxu0 0.0
    %6516 = vmatprep.subr.mxu0 0.0
    %6517 = vmatpush1.msra.mxu0 0.0
    %6518 = vmatprep.subr.mxu0 0.0
    %6519 = vmatpush1.msra.mxu0 0.0
    %6520 = vmatprep.subr.mxu0 0.0
    %6521 = vmatpush1.msra.mxu0 0.0
    %6522 = vmatprep.subr.mxu0 0.0
    %6523 = vmatpush1.msra.mxu0 0.0
    %6524 = vmatprep.subr.mxu0 0.0
    %6525 = vmatpush1.msra.mxu0 0.0
    %6526 = vmatprep.subr.mxu0 0.0
    %6527 = vmatpush1.msra.mxu0 0.0
    %6528 = vmatprep.subr.mxu0 0.0
    %6529 = vmatpush1.msra.mxu0 0.0
    %6530 = vmatprep.subr.mxu0 0.0
    %6531 = vmatpush1.msra.mxu0 0.0
    %6532 = vmatprep.subr.mxu0 0.0
    %6533 = vmatpush1.msra.mxu0 0.0
    %6534 = vmatprep.subr.mxu0 0.0
    %6535 = vmatpush1.msra.mxu0 0.0
    %6536 = vmatprep.subr.mxu0 0.0
    %6537 = vmatpush1.msra.mxu0 0.0
    %6538 = vmatprep.subr.mxu0 0.0
    %6539 = vmatpush1.msra.mxu0 0.0
    %6540 = vmatprep.subr.mxu0 0.0
    %6541 = vmatpush1.msra.mxu0 0.0
    %6542 = vmatprep.subr.mxu0 0.0
    %6543 = vmatpush1.msra.mxu0 0.0
    %6544 = vmatprep.subr.mxu0 0.0
    %6545 = vmatpush1.msra.mxu0 0.0
    %6546 = vmatprep.subr.mxu0 0.0
    %6547 = vmatpush1.msra.mxu0 0.0
    %6548 = vmatprep.subr.mxu0 0.0
    %6549 = vmatpush1.msra.mxu0 0.0
    %6550 = vmatprep.mubr.f32.mxu0 0.0
    %v6551 = vand.u32 %v547, 4294901760
    %6552 = vmatmul.mubr.f32.gmra.mrb[0].mxu0 %v6551
    %v6553 = vpop.f32.mrb[0].mxu0
    %v6554 = vadd.f32 %v6453, %v6553
    %v6555 = vpop.f32.mrb[0].mxu0
    %6556 = vmatprep.mubr.f32.mxu0 0.0
    %v6557 = vand.u32 %v550, 4294901760
    %6558 = vmatmul.mubr.f32.gmra.mrb[0].mxu0 %v6557
    %v6559 = vpop.f32.mrb[0].mxu0
    %v6560 = vadd.f32 %v6461, %v6559
    %v6561 = vpop.f32.mrb[0].mxu0
    %6562 = vmatprep.mubr.f32.mxu0 0.0
    %v6563 = vand.u32 %v553, 4294901760
    %6564 = vmatmul.mubr.f32.gmra.mrb[0].mxu0 %v6563
    %v6565 = vpop.f32.mrb[0].mxu0
    %v6566 = vadd.f32 %v6469, %v6565
    %v6567 = vpop.f32.mrb[0].mxu0
    %6568 = vmatprep.mubr.f32.mxu0 0.0
    %v6569 = vand.u32 %v556, 4294901760
    %6570 = vmatmul.mubr.f32.gmra.mrb[0].mxu0 %v6569
    %v6571 = vpop.f32.mrb[0].mxu0
    %v6572 = vadd.f32 %v6477, %v6571
    %v6573 = vpop.f32.mrb[0].mxu0
    %6574 = vdwg.mxu0
    %6575 = vmatprep.subr.mxu0 0.0
    %v6576 = vand.u32 %v6069, 4294901760
    %6577 = vmatpush1.msra.mxu0 %v6576
    %6578 = vmatprep.subr.mxu0 0.0
    %v6579 = vand.u32 %v6075, 4294901760
    %6580 = vmatpush1.msra.mxu0 %v6579
    %6581 = vmatprep.subr.mxu0 0.0
    %6582 = vmatpush1.msra.mxu0 0.0
    %6583 = vmatprep.subr.mxu0 0.0
    %6584 = vmatpush1.msra.mxu0 0.0
    %6585 = vmatprep.subr.mxu0 0.0
    %6586 = vmatpush1.msra.mxu0 0.0
    %6587 = vmatprep.subr.mxu0 0.0
    %6588 = vmatpush1.msra.mxu0 0.0
    %6589 = vmatprep.subr.mxu0 0.0
    %6590 = vmatpush1.msra.mxu0 0.0
    %6591 = vmatprep.subr.mxu0 0.0
    %6592 = vmatpush1.msra.mxu0 0.0
    %6593 = vmatprep.subr.mxu0 0.0
    %6594 = vmatpush1.msra.mxu0 0.0
    %6595 = vmatprep.subr.mxu0 0.0
    %6596 = vmatpush1.msra.mxu0 0.0
    %6597 = vmatprep.subr.mxu0 0.0
    %6598 = vmatpush1.msra.mxu0 0.0
    %6599 = vmatprep.subr.mxu0 0.0
    %6600 = vmatpush1.msra.mxu0 0.0
    %6601 = vmatprep.subr.mxu0 0.0
    %6602 = vmatpush1.msra.mxu0 0.0
    %6603 = vmatprep.subr.mxu0 0.0
    %6604 = vmatpush1.msra.mxu0 0.0
    %6605 = vmatprep.subr.mxu0 0.0
    %6606 = vmatpush1.msra.mxu0 0.0
    %6607 = vmatprep.subr.mxu0 0.0
    %6608 = vmatpush1.msra.mxu0 0.0
    %6609 = vmatprep.subr.mxu0 0.0
    %6610 = vmatpush1.msra.mxu0 0.0
    %6611 = vmatprep.subr.mxu0 0.0
    %6612 = vmatpush1.msra.mxu0 0.0
    %6613 = vmatprep.subr.mxu0 0.0
    %6614 = vmatpush1.msra.mxu0 0.0
    %6615 = vmatprep.subr.mxu0 0.0
    %6616 = vmatpush1.msra.mxu0 0.0
    %6617 = vmatprep.subr.mxu0 0.0
    %6618 = vmatpush1.msra.mxu0 0.0
    %6619 = vmatprep.subr.mxu0 0.0
    %6620 = vmatpush1.msra.mxu0 0.0
    %6621 = vmatprep.subr.mxu0 0.0
    %6622 = vmatpush1.msra.mxu0 0.0
    %6623 = vmatprep.subr.mxu0 0.0
    %6624 = vmatpush1.msra.mxu0 0.0
    %6625 = vmatprep.subr.mxu0 0.0
    %6626 = vmatpush1.msra.mxu0 0.0
    %6627 = vmatprep.subr.mxu0 0.0
    %6628 = vmatpush1.msra.mxu0 0.0
    %6629 = vmatprep.subr.mxu0 0.0
    %6630 = vmatpush1.msra.mxu0 0.0
    %6631 = vmatprep.subr.mxu0 0.0
    %6632 = vmatpush1.msra.mxu0 0.0
    %6633 = vmatprep.subr.mxu0 0.0
    %6634 = vmatpush1.msra.mxu0 0.0
    %6635 = vmatprep.subr.mxu0 0.0
    %6636 = vmatpush1.msra.mxu0 0.0
    %6637 = vmatprep.subr.mxu0 0.0
    %6638 = vmatpush1.msra.mxu0 0.0
    %6639 = vmatprep.subr.mxu0 0.0
    %6640 = vmatpush1.msra.mxu0 0.0
    %6641 = vmatprep.mubr.f32.mxu0 0.0
    %v6642 = vand.u32 %v547, 4294901760
    %6643 = vmatmul.mubr.f32.gmra.mrb[0].mxu0 %v6642
    %v6644 = vpop.f32.mrb[0].mxu0
    %v6645 = vadd.f32 %v6554, %v6644
    %v6646 = vpop.f32.mrb[0].mxu0
    %6647 = vmatprep.mubr.f32.mxu0 0.0
    %v6648 = vand.u32 %v550, 4294901760
    %6649 = vmatmul.mubr.f32.gmra.mrb[0].mxu0 %v6648
    %v6650 = vpop.f32.mrb[0].mxu0
    %v6651 = vadd.f32 %v6560, %v6650
    %v6652 = vpop.f32.mrb[0].mxu0
    %6653 = vmatprep.mubr.f32.mxu0 0.0
    %v6654 = vand.u32 %v553, 4294901760
    %6655 = vmatmul.mubr.f32.gmra.mrb[0].mxu0 %v6654
    %v6656 = vpop.f32.mrb[0].mxu0
    %v6657 = vadd.f32 %v6566, %v6656
    %v6658 = vpop.f32.mrb[0].mxu0
    %6659 = vmatprep.mubr.f32.mxu0 0.0
    %v6660 = vand.u32 %v556, 4294901760
    %6661 = vmatmul.mubr.f32.gmra.mrb[0].mxu0 %v6660
    %v6662 = vpop.f32.mrb[0].mxu0
    %v6663 = vadd.f32 %v6572, %v6662
    %v6664 = vpop.f32.mrb[0].mxu0
    %6665 = vdwg.mxu0
    %s6666 = scalar_lea.vmem [#allocation5], 160
    %6667 = vst.msk [vmem:[%s6666] sm:$0xff] %vm1146, %v6645
    %6668 = vst.msk [vmem:[%s6666 + $0x8] sm:$0xff] %vm1146, %v6651
    %6669 = vst.msk [vmem:[%s6666 + $0x10] sm:$0xff] %vm1146, %v6657
    %6670 = vst.msk [vmem:[%s6666 + $0x18] sm:$0xff] %vm1146, %v6663
    %s6671 = scalar_lea.vmem [#allocation2], 96
    %v6672 = vld [vmem:[%s6671] sm:$0xff]
    %v6673 = vld [vmem:[%s6671 + $0x8] sm:$0xff]
    %v6675 = vsel %vm37, %v6672, 0
    %v6678 = vsel %vm37, %v6673, 0
    %6680 = vmatprep.subr.mxu0 0.0
    %v6681 = vand.u32 %v33, 4294901760
    %6682 = vmatpush1.msra.mxu0 %v6681
    %6683 = vmatprep.subr.mxu0 0.0
    %v6684 = vand.u32 %v34, 4294901760
    %6685 = vmatpush1.msra.mxu0 %v6684
    %6686 = vmatprep.subr.mxu0 0.0
    %6687 = vmatpush1.msra.mxu0 0.0
    %6688 = vmatprep.subr.mxu0 0.0
    %6689 = vmatpush1.msra.mxu0 0.0
    %6690 = vmatprep.subr.mxu0 0.0
    %6691 = vmatpush1.msra.mxu0 0.0
    %6692 = vmatprep.subr.mxu0 0.0
    %6693 = vmatpush1.msra.mxu0 0.0
    %6694 = vmatprep.subr.mxu0 0.0
    %6695 = vmatpush1.msra.mxu0 0.0
    %6696 = vmatprep.subr.mxu0 0.0
    %6697 = vmatpush1.msra.mxu0 0.0
    %6698 = vmatprep.subr.mxu0 0.0
    %6699 = vmatpush1.msra.mxu0 0.0
    %6700 = vmatprep.subr.mxu0 0.0
    %6701 = vmatpush1.msra.mxu0 0.0
    %6702 = vmatprep.subr.mxu0 0.0
    %6703 = vmatpush1.msra.mxu0 0.0
    %6704 = vmatprep.subr.mxu0 0.0
    %6705 = vmatpush1.msra.mxu0 0.0
    %6706 = vmatprep.subr.mxu0 0.0
    %6707 = vmatpush1.msra.mxu0 0.0
    %6708 = vmatprep.subr.mxu0 0.0
    %6709 = vmatpush1.msra.mxu0 0.0
    %6710 = vmatprep.subr.mxu0 0.0
    %6711 = vmatpush1.msra.mxu0 0.0
    %6712 = vmatprep.subr.mxu0 0.0
    %6713 = vmatpush1.msra.mxu0 0.0
    %6714 = vmatprep.subr.mxu0 0.0
    %6715 = vmatpush1.msra.mxu0 0.0
    %6716 = vmatprep.subr.mxu0 0.0
    %6717 = vmatpush1.msra.mxu0 0.0
    %6718 = vmatprep.subr.mxu0 0.0
    %6719 = vmatpush1.msra.mxu0 0.0
    %6720 = vmatprep.subr.mxu0 0.0
    %6721 = vmatpush1.msra.mxu0 0.0
    %6722 = vmatprep.subr.mxu0 0.0
    %6723 = vmatpush1.msra.mxu0 0.0
    %6724 = vmatprep.subr.mxu0 0.0
    %6725 = vmatpush1.msra.mxu0 0.0
    %6726 = vmatprep.subr.mxu0 0.0
    %6727 = vmatpush1.msra.mxu0 0.0
    %6728 = vmatprep.subr.mxu0 0.0
    %6729 = vmatpush1.msra.mxu0 0.0
    %6730 = vmatprep.subr.mxu0 0.0
    %6731 = vmatpush1.msra.mxu0 0.0
    %6732 = vmatprep.subr.mxu0 0.0
    %6733 = vmatpush1.msra.mxu0 0.0
    %6734 = vmatprep.subr.mxu0 0.0
    %6735 = vmatpush1.msra.mxu0 0.0
    %6736 = vmatprep.subr.mxu0 0.0
    %6737 = vmatpush1.msra.mxu0 0.0
    %6738 = vmatprep.subr.mxu0 0.0
    %6739 = vmatpush1.msra.mxu0 0.0
    %6740 = vmatprep.subr.mxu0 0.0
    %6741 = vmatpush1.msra.mxu0 0.0
    %6742 = vmatprep.subr.mxu0 0.0
    %6743 = vmatpush1.msra.mxu0 0.0
    %6744 = vmatprep.subr.mxu0 0.0
    %6745 = vmatpush1.msra.mxu0 0.0
    %6746 = vmatprep.mubr.f32.mxu0 0.0
    %v6747 = vand.u32 %v6675, 4294901760
    %v6748 = vsub.f32 %v6675, %v6747
    %v6749 = vand.u32 %v6748, 4294901760
    %v6750 = vsub.f32 %v6748, %v6749
    %v6751 = vand.u32 %v6750, 4294901760
    %6752 = vmatmul.mubr.f32.gmra.mrb[0].mxu0 %v6751
    %v6753 = vpop.f32.mrb[0].mxu0
    %v6754 = vadd.f32 0.0, %v6753
    %v6755 = vpop.f32.mrb[0].mxu0
    %6756 = vmatprep.mubr.f32.mxu0 0.0
    %v6757 = vand.u32 %v6678, 4294901760
    %v6758 = vsub.f32 %v6678, %v6757
    %v6759 = vand.u32 %v6758, 4294901760
    %v6760 = vsub.f32 %v6758, %v6759
    %v6761 = vand.u32 %v6760, 4294901760
    %6762 = vmatmul.mubr.f32.gmra.mrb[0].mxu0 %v6761
    %v6763 = vpop.f32.mrb[0].mxu0
    %v6764 = vadd.f32 0.0, %v6763
    %v6765 = vpop.f32.mrb[0].mxu0
    %6766 = vdwg.mxu0
    %6767 = vmatprep.subr.mxu0 0.0
    %v6768 = vand.u32 %v33, 4294901760
    %v6769 = vsub.f32 %v33, %v6768
    %v6770 = vand.u32 %v6769, 4294901760
    %v6771 = vsub.f32 %v6769, %v6770
    %v6772 = vand.u32 %v6771, 4294901760
    %6773 = vmatpush1.msra.mxu0 %v6772
    %6774 = vmatprep.subr.mxu0 0.0
    %v6775 = vand.u32 %v34, 4294901760
    %v6776 = vsub.f32 %v34, %v6775
    %v6777 = vand.u32 %v6776, 4294901760
    %v6778 = vsub.f32 %v6776, %v6777
    %v6779 = vand.u32 %v6778, 4294901760
    %6780 = vmatpush1.msra.mxu0 %v6779
    %6781 = vmatprep.subr.mxu0 0.0
    %6782 = vmatpush1.msra.mxu0 0.0
    %6783 = vmatprep.subr.mxu0 0.0
    %6784 = vmatpush1.msra.mxu0 0.0
    %6785 = vmatprep.subr.mxu0 0.0
    %6786 = vmatpush1.msra.mxu0 0.0
    %6787 = vmatprep.subr.mxu0 0.0
    %6788 = vmatpush1.msra.mxu0 0.0
    %6789 = vmatprep.subr.mxu0 0.0
    %6790 = vmatpush1.msra.mxu0 0.0
    %6791 = vmatprep.subr.mxu0 0.0
    %6792 = vmatpush1.msra.mxu0 0.0
    %6793 = vmatprep.subr.mxu0 0.0
    %6794 = vmatpush1.msra.mxu0 0.0
    %6795 = vmatprep.subr.mxu0 0.0
    %6796 = vmatpush1.msra.mxu0 0.0
    %6797 = vmatprep.subr.mxu0 0.0
    %6798 = vmatpush1.msra.mxu0 0.0
    %6799 = vmatprep.subr.mxu0 0.0
    %6800 = vmatpush1.msra.mxu0 0.0
    %6801 = vmatprep.subr.mxu0 0.0
    %6802 = vmatpush1.msra.mxu0 0.0
    %6803 = vmatprep.subr.mxu0 0.0
    %6804 = vmatpush1.msra.mxu0 0.0
    %6805 = vmatprep.subr.mxu0 0.0
    %6806 = vmatpush1.msra.mxu0 0.0
    %6807 = vmatprep.subr.mxu0 0.0
    %6808 = vmatpush1.msra.mxu0 0.0
    %6809 = vmatprep.subr.mxu0 0.0
    %6810 = vmatpush1.msra.mxu0 0.0
    %6811 = vmatprep.subr.mxu0 0.0
    %6812 = vmatpush1.msra.mxu0 0.0
    %6813 = vmatprep.subr.mxu0 0.0
    %6814 = vmatpush1.msra.mxu0 0.0
    %6815 = vmatprep.subr.mxu0 0.0
    %6816 = vmatpush1.msra.mxu0 0.0
    %6817 = vmatprep.subr.mxu0 0.0
    %6818 = vmatpush1.msra.mxu0 0.0
    %6819 = vmatprep.subr.mxu0 0.0
    %6820 = vmatpush1.msra.mxu0 0.0
    %6821 = vmatprep.subr.mxu0 0.0
    %6822 = vmatpush1.msra.mxu0 0.0
    %6823 = vmatprep.subr.mxu0 0.0
    %6824 = vmatpush1.msra.mxu0 0.0
    %6825 = vmatprep.subr.mxu0 0.0
    %6826 = vmatpush1.msra.mxu0 0.0
    %6827 = vmatprep.subr.mxu0 0.0
    %6828 = vmatpush1.msra.mxu0 0.0
    %6829 = vmatprep.subr.mxu0 0.0
    %6830 = vmatpush1.msra.mxu0 0.0
    %6831 = vmatprep.subr.mxu0 0.0
    %6832 = vmatpush1.msra.mxu0 0.0
    %6833 = vmatprep.subr.mxu0 0.0
    %6834 = vmatpush1.msra.mxu0 0.0
    %6835 = vmatprep.subr.mxu0 0.0
    %6836 = vmatpush1.msra.mxu0 0.0
    %6837 = vmatprep.subr.mxu0 0.0
    %6838 = vmatpush1.msra.mxu0 0.0
    %6839 = vmatprep.subr.mxu0 0.0
    %6840 = vmatpush1.msra.mxu0 0.0
    %6841 = vmatprep.mubr.f32.mxu0 0.0
    %v6842 = vand.u32 %v6675, 4294901760
    %6843 = vmatmul.mubr.f32.gmra.mrb[0].mxu0 %v6842
    %v6844 = vpop.f32.mrb[0].mxu0
    %v6845 = vadd.f32 %v6754, %v6844
    %v6846 = vpop.f32.mrb[0].mxu0
    %6847 = vmatprep.mubr.f32.mxu0 0.0
    %v6848 = vand.u32 %v6678, 4294901760
    %6849 = vmatmul.mubr.f32.gmra.mrb[0].mxu0 %v6848
    %v6850 = vpop.f32.mrb[0].mxu0
    %v6851 = vadd.f32 %v6764, %v6850
    %v6852 = vpop.f32.mrb[0].mxu0
    %6853 = vdwg.mxu0
    %6854 = vmatprep.subr.mxu0 0.0
    %v6855 = vand.u32 %v33, 4294901760
    %v6856 = vsub.f32 %v33, %v6855
    %6857 = vmatpush1.msra.mxu0 %v6856
    %6858 = vmatprep.subr.mxu0 0.0
    %v6859 = vand.u32 %v34, 4294901760
    %v6860 = vsub.f32 %v34, %v6859
    %6861 = vmatpush1.msra.mxu0 %v6860
    %6862 = vmatprep.subr.mxu0 0.0
    %6863 = vmatpush1.msra.mxu0 0.0
    %6864 = vmatprep.subr.mxu0 0.0
    %6865 = vmatpush1.msra.mxu0 0.0
    %6866 = vmatprep.subr.mxu0 0.0
    %6867 = vmatpush1.msra.mxu0 0.0
    %6868 = vmatprep.subr.mxu0 0.0
    %6869 = vmatpush1.msra.mxu0 0.0
    %6870 = vmatprep.subr.mxu0 0.0
    %6871 = vmatpush1.msra.mxu0 0.0
    %6872 = vmatprep.subr.mxu0 0.0
    %6873 = vmatpush1.msra.mxu0 0.0
    %6874 = vmatprep.subr.mxu0 0.0
    %6875 = vmatpush1.msra.mxu0 0.0
    %6876 = vmatprep.subr.mxu0 0.0
    %6877 = vmatpush1.msra.mxu0 0.0
    %6878 = vmatprep.subr.mxu0 0.0
    %6879 = vmatpush1.msra.mxu0 0.0
    %6880 = vmatprep.subr.mxu0 0.0
    %6881 = vmatpush1.msra.mxu0 0.0
    %6882 = vmatprep.subr.mxu0 0.0
    %6883 = vmatpush1.msra.mxu0 0.0
    %6884 = vmatprep.subr.mxu0 0.0
    %6885 = vmatpush1.msra.mxu0 0.0
    %6886 = vmatprep.subr.mxu0 0.0
    %6887 = vmatpush1.msra.mxu0 0.0
    %6888 = vmatprep.subr.mxu0 0.0
    %6889 = vmatpush1.msra.mxu0 0.0
    %6890 = vmatprep.subr.mxu0 0.0
    %6891 = vmatpush1.msra.mxu0 0.0
    %6892 = vmatprep.subr.mxu0 0.0
    %6893 = vmatpush1.msra.mxu0 0.0
    %6894 = vmatprep.subr.mxu0 0.0
    %6895 = vmatpush1.msra.mxu0 0.0
    %6896 = vmatprep.subr.mxu0 0.0
    %6897 = vmatpush1.msra.mxu0 0.0
    %6898 = vmatprep.subr.mxu0 0.0
    %6899 = vmatpush1.msra.mxu0 0.0
    %6900 = vmatprep.subr.mxu0 0.0
    %6901 = vmatpush1.msra.mxu0 0.0
    %6902 = vmatprep.subr.mxu0 0.0
    %6903 = vmatpush1.msra.mxu0 0.0
    %6904 = vmatprep.subr.mxu0 0.0
    %6905 = vmatpush1.msra.mxu0 0.0
    %6906 = vmatprep.subr.mxu0 0.0
    %6907 = vmatpush1.msra.mxu0 0.0
    %6908 = vmatprep.subr.mxu0 0.0
    %6909 = vmatpush1.msra.mxu0 0.0
    %6910 = vmatprep.subr.mxu0 0.0
    %6911 = vmatpush1.msra.mxu0 0.0
    %6912 = vmatprep.subr.mxu0 0.0
    %6913 = vmatpush1.msra.mxu0 0.0
    %6914 = vmatprep.subr.mxu0 0.0
    %6915 = vmatpush1.msra.mxu0 0.0
    %6916 = vmatprep.subr.mxu0 0.0
    %6917 = vmatpush1.msra.mxu0 0.0
    %6918 = vmatprep.subr.mxu0 0.0
    %6919 = vmatpush1.msra.mxu0 0.0
    %6920 = vmatprep.subr.mxu0 0.0
    %6921 = vmatpush1.msra.mxu0 0.0
    %6922 = vmatprep.mubr.f32.mxu0 0.0
    %v6923 = vand.u32 %v6675, 4294901760
    %v6924 = vsub.f32 %v6675, %v6923
    %6925 = vmatmul.mubr.f32.gmra.mrb[0].mxu0 %v6924
    %v6926 = vpop.f32.mrb[0].mxu0
    %v6927 = vadd.f32 %v6845, %v6926
    %v6928 = vpop.f32.mrb[0].mxu0
    %6929 = vmatprep.mubr.f32.mxu0 0.0
    %v6930 = vand.u32 %v6678, 4294901760
    %v6931 = vsub.f32 %v6678, %v6930
    %6932 = vmatmul.mubr.f32.gmra.mrb[0].mxu0 %v6931
    %v6933 = vpop.f32.mrb[0].mxu0
    %v6934 = vadd.f32 %v6851, %v6933
    %v6935 = vpop.f32.mrb[0].mxu0
    %6936 = vdwg.mxu0
    %6937 = vmatprep.subr.mxu0 0.0
    %v6938 = vand.u32 %v33, 4294901760
    %6939 = vmatpush1.msra.mxu0 %v6938
    %6940 = vmatprep.subr.mxu0 0.0
    %v6941 = vand.u32 %v34, 4294901760
    %6942 = vmatpush1.msra.mxu0 %v6941
    %6943 = vmatprep.subr.mxu0 0.0
    %6944 = vmatpush1.msra.mxu0 0.0
    %6945 = vmatprep.subr.mxu0 0.0
    %6946 = vmatpush1.msra.mxu0 0.0
    %6947 = vmatprep.subr.mxu0 0.0
    %6948 = vmatpush1.msra.mxu0 0.0
    %6949 = vmatprep.subr.mxu0 0.0
    %6950 = vmatpush1.msra.mxu0 0.0
    %6951 = vmatprep.subr.mxu0 0.0
    %6952 = vmatpush1.msra.mxu0 0.0
    %6953 = vmatprep.subr.mxu0 0.0
    %6954 = vmatpush1.msra.mxu0 0.0
    %6955 = vmatprep.subr.mxu0 0.0
    %6956 = vmatpush1.msra.mxu0 0.0
    %6957 = vmatprep.subr.mxu0 0.0
    %6958 = vmatpush1.msra.mxu0 0.0
    %6959 = vmatprep.subr.mxu0 0.0
    %6960 = vmatpush1.msra.mxu0 0.0
    %6961 = vmatprep.subr.mxu0 0.0
    %6962 = vmatpush1.msra.mxu0 0.0
    %6963 = vmatprep.subr.mxu0 0.0
    %6964 = vmatpush1.msra.mxu0 0.0
    %6965 = vmatprep.subr.mxu0 0.0
    %6966 = vmatpush1.msra.mxu0 0.0
    %6967 = vmatprep.subr.mxu0 0.0
    %6968 = vmatpush1.msra.mxu0 0.0
    %6969 = vmatprep.subr.mxu0 0.0
    %6970 = vmatpush1.msra.mxu0 0.0
    %6971 = vmatprep.subr.mxu0 0.0
    %6972 = vmatpush1.msra.mxu0 0.0
    %6973 = vmatprep.subr.mxu0 0.0
    %6974 = vmatpush1.msra.mxu0 0.0
    %6975 = vmatprep.subr.mxu0 0.0
    %6976 = vmatpush1.msra.mxu0 0.0
    %6977 = vmatprep.subr.mxu0 0.0
    %6978 = vmatpush1.msra.mxu0 0.0
    %6979 = vmatprep.subr.mxu0 0.0
    %6980 = vmatpush1.msra.mxu0 0.0
    %6981 = vmatprep.subr.mxu0 0.0
    %6982 = vmatpush1.msra.mxu0 0.0
    %6983 = vmatprep.subr.mxu0 0.0
    %6984 = vmatpush1.msra.mxu0 0.0
    %6985 = vmatprep.subr.mxu0 0.0
    %6986 = vmatpush1.msra.mxu0 0.0
    %6987 = vmatprep.subr.mxu0 0.0
    %6988 = vmatpush1.msra.mxu0 0.0
    %6989 = vmatprep.subr.mxu0 0.0
    %6990 = vmatpush1.msra.mxu0 0.0
    %6991 = vmatprep.subr.mxu0 0.0
    %6992 = vmatpush1.msra.mxu0 0.0
    %6993 = vmatprep.subr.mxu0 0.0
    %6994 = vmatpush1.msra.mxu0 0.0
    %6995 = vmatprep.subr.mxu0 0.0
    %6996 = vmatpush1.msra.mxu0 0.0
    %6997 = vmatprep.subr.mxu0 0.0
    %6998 = vmatpush1.msra.mxu0 0.0
    %6999 = vmatprep.subr.mxu0 0.0
    %7000 = vmatpush1.msra.mxu0 0.0
    %7001 = vmatprep.subr.mxu0 0.0
    %7002 = vmatpush1.msra.mxu0 0.0
    %7003 = vmatprep.mubr.f32.mxu0 0.0
    %v7004 = vand.u32 %v6675, 4294901760
    %v7005 = vsub.f32 %v6675, %v7004
    %v7006 = vand.u32 %v7005, 4294901760
    %7007 = vmatmul.mubr.f32.gmra.mrb[0].mxu0 %v7006
    %v7008 = vpop.f32.mrb[0].mxu0
    %v7009 = vadd.f32 %v6927, %v7008
    %v7010 = vpop.f32.mrb[0].mxu0
    %7011 = vmatprep.mubr.f32.mxu0 0.0
    %v7012 = vand.u32 %v6678, 4294901760
    %v7013 = vsub.f32 %v6678, %v7012
    %v7014 = vand.u32 %v7013, 4294901760
    %7015 = vmatmul.mubr.f32.gmra.mrb[0].mxu0 %v7014
    %v7016 = vpop.f32.mrb[0].mxu0
    %v7017 = vadd.f32 %v6934, %v7016
    %v7018 = vpop.f32.mrb[0].mxu0
    %7019 = vdwg.mxu0
    %7020 = vmatprep.subr.mxu0 0.0
    %v7021 = vand.u32 %v33, 4294901760
    %v7022 = vsub.f32 %v33, %v7021
    %v7023 = vand.u32 %v7022, 4294901760
    %7024 = vmatpush1.msra.mxu0 %v7023
    %7025 = vmatprep.subr.mxu0 0.0
    %v7026 = vand.u32 %v34, 4294901760
    %v7027 = vsub.f32 %v34, %v7026
    %v7028 = vand.u32 %v7027, 4294901760
    %7029 = vmatpush1.msra.mxu0 %v7028
    %7030 = vmatprep.subr.mxu0 0.0
    %7031 = vmatpush1.msra.mxu0 0.0
    %7032 = vmatprep.subr.mxu0 0.0
    %7033 = vmatpush1.msra.mxu0 0.0
    %7034 = vmatprep.subr.mxu0 0.0
    %7035 = vmatpush1.msra.mxu0 0.0
    %7036 = vmatprep.subr.mxu0 0.0
    %7037 = vmatpush1.msra.mxu0 0.0
    %7038 = vmatprep.subr.mxu0 0.0
    %7039 = vmatpush1.msra.mxu0 0.0
    %7040 = vmatprep.subr.mxu0 0.0
    %7041 = vmatpush1.msra.mxu0 0.0
    %7042 = vmatprep.subr.mxu0 0.0
    %7043 = vmatpush1.msra.mxu0 0.0
    %7044 = vmatprep.subr.mxu0 0.0
    %7045 = vmatpush1.msra.mxu0 0.0
    %7046 = vmatprep.subr.mxu0 0.0
    %7047 = vmatpush1.msra.mxu0 0.0
    %7048 = vmatprep.subr.mxu0 0.0
    %7049 = vmatpush1.msra.mxu0 0.0
    %7050 = vmatprep.subr.mxu0 0.0
    %7051 = vmatpush1.msra.mxu0 0.0
    %7052 = vmatprep.subr.mxu0 0.0
    %7053 = vmatpush1.msra.mxu0 0.0
    %7054 = vmatprep.subr.mxu0 0.0
    %7055 = vmatpush1.msra.mxu0 0.0
    %7056 = vmatprep.subr.mxu0 0.0
    %7057 = vmatpush1.msra.mxu0 0.0
    %7058 = vmatprep.subr.mxu0 0.0
    %7059 = vmatpush1.msra.mxu0 0.0
    %7060 = vmatprep.subr.mxu0 0.0
    %7061 = vmatpush1.msra.mxu0 0.0
    %7062 = vmatprep.subr.mxu0 0.0
    %7063 = vmatpush1.msra.mxu0 0.0
    %7064 = vmatprep.subr.mxu0 0.0
    %7065 = vmatpush1.msra.mxu0 0.0
    %7066 = vmatprep.subr.mxu0 0.0
    %7067 = vmatpush1.msra.mxu0 0.0
    %7068 = vmatprep.subr.mxu0 0.0
    %7069 = vmatpush1.msra.mxu0 0.0
    %7070 = vmatprep.subr.mxu0 0.0
    %7071 = vmatpush1.msra.mxu0 0.0
    %7072 = vmatprep.subr.mxu0 0.0
    %7073 = vmatpush1.msra.mxu0 0.0
    %7074 = vmatprep.subr.mxu0 0.0
    %7075 = vmatpush1.msra.mxu0 0.0
    %7076 = vmatprep.subr.mxu0 0.0
    %7077 = vmatpush1.msra.mxu0 0.0
    %7078 = vmatprep.subr.mxu0 0.0
    %7079 = vmatpush1.msra.mxu0 0.0
    %7080 = vmatprep.subr.mxu0 0.0
    %7081 = vmatpush1.msra.mxu0 0.0
    %7082 = vmatprep.subr.mxu0 0.0
    %7083 = vmatpush1.msra.mxu0 0.0
    %7084 = vmatprep.subr.mxu0 0.0
    %7085 = vmatpush1.msra.mxu0 0.0
    %7086 = vmatprep.subr.mxu0 0.0
    %7087 = vmatpush1.msra.mxu0 0.0
    %7088 = vmatprep.subr.mxu0 0.0
    %7089 = vmatpush1.msra.mxu0 0.0
    %7090 = vmatprep.mubr.f32.mxu0 0.0
    %v7091 = vand.u32 %v6675, 4294901760
    %7092 = vmatmul.mubr.f32.gmra.mrb[0].mxu0 %v7091
    %v7093 = vpop.f32.mrb[0].mxu0
    %v7094 = vadd.f32 %v7009, %v7093
    %v7095 = vpop.f32.mrb[0].mxu0
    %7096 = vmatprep.mubr.f32.mxu0 0.0
    %v7097 = vand.u32 %v6678, 4294901760
    %7098 = vmatmul.mubr.f32.gmra.mrb[0].mxu0 %v7097
    %v7099 = vpop.f32.mrb[0].mxu0
    %v7100 = vadd.f32 %v7017, %v7099
    %v7101 = vpop.f32.mrb[0].mxu0
    %7102 = vdwg.mxu0
    %7103 = vmatprep.subr.mxu0 0.0
    %v7104 = vand.u32 %v33, 4294901760
    %7105 = vmatpush1.msra.mxu0 %v7104
    %7106 = vmatprep.subr.mxu0 0.0
    %v7107 = vand.u32 %v34, 4294901760
    %7108 = vmatpush1.msra.mxu0 %v7107
    %7109 = vmatprep.subr.mxu0 0.0
    %7110 = vmatpush1.msra.mxu0 0.0
    %7111 = vmatprep.subr.mxu0 0.0
    %7112 = vmatpush1.msra.mxu0 0.0
    %7113 = vmatprep.subr.mxu0 0.0
    %7114 = vmatpush1.msra.mxu0 0.0
    %7115 = vmatprep.subr.mxu0 0.0
    %7116 = vmatpush1.msra.mxu0 0.0
    %7117 = vmatprep.subr.mxu0 0.0
    %7118 = vmatpush1.msra.mxu0 0.0
    %7119 = vmatprep.subr.mxu0 0.0
    %7120 = vmatpush1.msra.mxu0 0.0
    %7121 = vmatprep.subr.mxu0 0.0
    %7122 = vmatpush1.msra.mxu0 0.0
    %7123 = vmatprep.subr.mxu0 0.0
    %7124 = vmatpush1.msra.mxu0 0.0
    %7125 = vmatprep.subr.mxu0 0.0
    %7126 = vmatpush1.msra.mxu0 0.0
    %7127 = vmatprep.subr.mxu0 0.0
    %7128 = vmatpush1.msra.mxu0 0.0
    %7129 = vmatprep.subr.mxu0 0.0
    %7130 = vmatpush1.msra.mxu0 0.0
    %7131 = vmatprep.subr.mxu0 0.0
    %7132 = vmatpush1.msra.mxu0 0.0
    %7133 = vmatprep.subr.mxu0 0.0
    %7134 = vmatpush1.msra.mxu0 0.0
    %7135 = vmatprep.subr.mxu0 0.0
    %7136 = vmatpush1.msra.mxu0 0.0
    %7137 = vmatprep.subr.mxu0 0.0
    %7138 = vmatpush1.msra.mxu0 0.0
    %7139 = vmatprep.subr.mxu0 0.0
    %7140 = vmatpush1.msra.mxu0 0.0
    %7141 = vmatprep.subr.mxu0 0.0
    %7142 = vmatpush1.msra.mxu0 0.0
    %7143 = vmatprep.subr.mxu0 0.0
    %7144 = vmatpush1.msra.mxu0 0.0
    %7145 = vmatprep.subr.mxu0 0.0
    %7146 = vmatpush1.msra.mxu0 0.0
    %7147 = vmatprep.subr.mxu0 0.0
    %7148 = vmatpush1.msra.mxu0 0.0
    %7149 = vmatprep.subr.mxu0 0.0
    %7150 = vmatpush1.msra.mxu0 0.0
    %7151 = vmatprep.subr.mxu0 0.0
    %7152 = vmatpush1.msra.mxu0 0.0
    %7153 = vmatprep.subr.mxu0 0.0
    %7154 = vmatpush1.msra.mxu0 0.0
    %7155 = vmatprep.subr.mxu0 0.0
    %7156 = vmatpush1.msra.mxu0 0.0
    %7157 = vmatprep.subr.mxu0 0.0
    %7158 = vmatpush1.msra.mxu0 0.0
    %7159 = vmatprep.subr.mxu0 0.0
    %7160 = vmatpush1.msra.mxu0 0.0
    %7161 = vmatprep.subr.mxu0 0.0
    %7162 = vmatpush1.msra.mxu0 0.0
    %7163 = vmatprep.subr.mxu0 0.0
    %7164 = vmatpush1.msra.mxu0 0.0
    %7165 = vmatprep.subr.mxu0 0.0
    %7166 = vmatpush1.msra.mxu0 0.0
    %7167 = vmatprep.subr.mxu0 0.0
    %7168 = vmatpush1.msra.mxu0 0.0
    %7169 = vmatprep.mubr.f32.mxu0 0.0
    %v7170 = vand.u32 %v6675, 4294901760
    %7171 = vmatmul.mubr.f32.gmra.mrb[0].mxu0 %v7170
    %v7172 = vpop.f32.mrb[0].mxu0
    %v7173 = vadd.f32 %v7094, %v7172
    %v7174 = vpop.f32.mrb[0].mxu0
    %7175 = vmatprep.mubr.f32.mxu0 0.0
    %v7176 = vand.u32 %v6678, 4294901760
    %7177 = vmatmul.mubr.f32.gmra.mrb[0].mxu0 %v7176
    %v7178 = vpop.f32.mrb[0].mxu0
    %v7179 = vadd.f32 %v7100, %v7178
    %v7180 = vpop.f32.mrb[0].mxu0
    %7181 = vdwg.mxu0
    %7182 = vmatprep.subr.mxu0 0.0
    %v7183 = vand.u32 %v7173, 4294901760
    %7184 = vmatpush1.msra.mxu0 %v7183
    %7185 = vmatprep.subr.mxu0 0.0
    %v7186 = vand.u32 %v7179, 4294901760
    %7187 = vmatpush1.msra.mxu0 %v7186
    %7188 = vmatprep.subr.mxu0 0.0
    %7189 = vmatpush1.msra.mxu0 0.0
    %7190 = vmatprep.subr.mxu0 0.0
    %7191 = vmatpush1.msra.mxu0 0.0
    %7192 = vmatprep.subr.mxu0 0.0
    %7193 = vmatpush1.msra.mxu0 0.0
    %7194 = vmatprep.subr.mxu0 0.0
    %7195 = vmatpush1.msra.mxu0 0.0
    %7196 = vmatprep.subr.mxu0 0.0
    %7197 = vmatpush1.msra.mxu0 0.0
    %7198 = vmatprep.subr.mxu0 0.0
    %7199 = vmatpush1.msra.mxu0 0.0
    %7200 = vmatprep.subr.mxu0 0.0
    %7201 = vmatpush1.msra.mxu0 0.0
    %7202 = vmatprep.subr.mxu0 0.0
    %7203 = vmatpush1.msra.mxu0 0.0
    %7204 = vmatprep.subr.mxu0 0.0
    %7205 = vmatpush1.msra.mxu0 0.0
    %7206 = vmatprep.subr.mxu0 0.0
    %7207 = vmatpush1.msra.mxu0 0.0
    %7208 = vmatprep.subr.mxu0 0.0
    %7209 = vmatpush1.msra.mxu0 0.0
    %7210 = vmatprep.subr.mxu0 0.0
    %7211 = vmatpush1.msra.mxu0 0.0
    %7212 = vmatprep.subr.mxu0 0.0
    %7213 = vmatpush1.msra.mxu0 0.0
    %7214 = vmatprep.subr.mxu0 0.0
    %7215 = vmatpush1.msra.mxu0 0.0
    %7216 = vmatprep.subr.mxu0 0.0
    %7217 = vmatpush1.msra.mxu0 0.0
    %7218 = vmatprep.subr.mxu0 0.0
    %7219 = vmatpush1.msra.mxu0 0.0
    %7220 = vmatprep.subr.mxu0 0.0
    %7221 = vmatpush1.msra.mxu0 0.0
    %7222 = vmatprep.subr.mxu0 0.0
    %7223 = vmatpush1.msra.mxu0 0.0
    %7224 = vmatprep.subr.mxu0 0.0
    %7225 = vmatpush1.msra.mxu0 0.0
    %7226 = vmatprep.subr.mxu0 0.0
    %7227 = vmatpush1.msra.mxu0 0.0
    %7228 = vmatprep.subr.mxu0 0.0
    %7229 = vmatpush1.msra.mxu0 0.0
    %7230 = vmatprep.subr.mxu0 0.0
    %7231 = vmatpush1.msra.mxu0 0.0
    %7232 = vmatprep.subr.mxu0 0.0
    %7233 = vmatpush1.msra.mxu0 0.0
    %7234 = vmatprep.subr.mxu0 0.0
    %7235 = vmatpush1.msra.mxu0 0.0
    %7236 = vmatprep.subr.mxu0 0.0
    %7237 = vmatpush1.msra.mxu0 0.0
    %7238 = vmatprep.subr.mxu0 0.0
    %7239 = vmatpush1.msra.mxu0 0.0
    %7240 = vmatprep.subr.mxu0 0.0
    %7241 = vmatpush1.msra.mxu0 0.0
    %7242 = vmatprep.subr.mxu0 0.0
    %7243 = vmatpush1.msra.mxu0 0.0
    %7244 = vmatprep.subr.mxu0 0.0
    %7245 = vmatpush1.msra.mxu0 0.0
    %7246 = vmatprep.subr.mxu0 0.0
    %7247 = vmatpush1.msra.mxu0 0.0
    %7248 = vmatprep.mubr.f32.mxu0 0.0
    %v7249 = vand.u32 %v547, 4294901760
    %v7250 = vsub.f32 %v547, %v7249
    %v7251 = vand.u32 %v7250, 4294901760
    %v7252 = vsub.f32 %v7250, %v7251
    %v7253 = vand.u32 %v7252, 4294901760
    %7254 = vmatmul.mubr.f32.gmra.mrb[0].mxu0 %v7253
    %v7255 = vpop.f32.mrb[0].mxu0
    %v7256 = vadd.f32 0.0, %v7255
    %v7257 = vpop.f32.mrb[0].mxu0
    %7258 = vmatprep.mubr.f32.mxu0 0.0
    %v7259 = vand.u32 %v550, 4294901760
    %v7260 = vsub.f32 %v550, %v7259
    %v7261 = vand.u32 %v7260, 4294901760
    %v7262 = vsub.f32 %v7260, %v7261
    %v7263 = vand.u32 %v7262, 4294901760
    %7264 = vmatmul.mubr.f32.gmra.mrb[0].mxu0 %v7263
    %v7265 = vpop.f32.mrb[0].mxu0
    %v7266 = vadd.f32 0.0, %v7265
    %v7267 = vpop.f32.mrb[0].mxu0
    %7268 = vmatprep.mubr.f32.mxu0 0.0
    %v7269 = vand.u32 %v553, 4294901760
    %v7270 = vsub.f32 %v553, %v7269
    %v7271 = vand.u32 %v7270, 4294901760
    %v7272 = vsub.f32 %v7270, %v7271
    %v7273 = vand.u32 %v7272, 4294901760
    %7274 = vmatmul.mubr.f32.gmra.mrb[0].mxu0 %v7273
    %v7275 = vpop.f32.mrb[0].mxu0
    %v7276 = vadd.f32 0.0, %v7275
    %v7277 = vpop.f32.mrb[0].mxu0
    %7278 = vmatprep.mubr.f32.mxu0 0.0
    %v7279 = vand.u32 %v556, 4294901760
    %v7280 = vsub.f32 %v556, %v7279
    %v7281 = vand.u32 %v7280, 4294901760
    %v7282 = vsub.f32 %v7280, %v7281
    %v7283 = vand.u32 %v7282, 4294901760
    %7284 = vmatmul.mubr.f32.gmra.mrb[0].mxu0 %v7283
    %v7285 = vpop.f32.mrb[0].mxu0
    %v7286 = vadd.f32 0.0, %v7285
    %v7287 = vpop.f32.mrb[0].mxu0
    %7288 = vdwg.mxu0
    %7289 = vmatprep.subr.mxu0 0.0
    %v7290 = vand.u32 %v7173, 4294901760
    %v7291 = vsub.f32 %v7173, %v7290
    %v7292 = vand.u32 %v7291, 4294901760
    %v7293 = vsub.f32 %v7291, %v7292
    %v7294 = vand.u32 %v7293, 4294901760
    %7295 = vmatpush1.msra.mxu0 %v7294
    %7296 = vmatprep.subr.mxu0 0.0
    %v7297 = vand.u32 %v7179, 4294901760
    %v7298 = vsub.f32 %v7179, %v7297
    %v7299 = vand.u32 %v7298, 4294901760
    %v7300 = vsub.f32 %v7298, %v7299
    %v7301 = vand.u32 %v7300, 4294901760
    %7302 = vmatpush1.msra.mxu0 %v7301
    %7303 = vmatprep.subr.mxu0 0.0
    %7304 = vmatpush1.msra.mxu0 0.0
    %7305 = vmatprep.subr.mxu0 0.0
    %7306 = vmatpush1.msra.mxu0 0.0
    %7307 = vmatprep.subr.mxu0 0.0
    %7308 = vmatpush1.msra.mxu0 0.0
    %7309 = vmatprep.subr.mxu0 0.0
    %7310 = vmatpush1.msra.mxu0 0.0
    %7311 = vmatprep.subr.mxu0 0.0
    %7312 = vmatpush1.msra.mxu0 0.0
    %7313 = vmatprep.subr.mxu0 0.0
    %7314 = vmatpush1.msra.mxu0 0.0
    %7315 = vmatprep.subr.mxu0 0.0
    %7316 = vmatpush1.msra.mxu0 0.0
    %7317 = vmatprep.subr.mxu0 0.0
    %7318 = vmatpush1.msra.mxu0 0.0
    %7319 = vmatprep.subr.mxu0 0.0
    %7320 = vmatpush1.msra.mxu0 0.0
    %7321 = vmatprep.subr.mxu0 0.0
    %7322 = vmatpush1.msra.mxu0 0.0
    %7323 = vmatprep.subr.mxu0 0.0
    %7324 = vmatpush1.msra.mxu0 0.0
    %7325 = vmatprep.subr.mxu0 0.0
    %7326 = vmatpush1.msra.mxu0 0.0
    %7327 = vmatprep.subr.mxu0 0.0
    %7328 = vmatpush1.msra.mxu0 0.0
    %7329 = vmatprep.subr.mxu0 0.0
    %7330 = vmatpush1.msra.mxu0 0.0
    %7331 = vmatprep.subr.mxu0 0.0
    %7332 = vmatpush1.msra.mxu0 0.0
    %7333 = vmatprep.subr.mxu0 0.0
    %7334 = vmatpush1.msra.mxu0 0.0
    %7335 = vmatprep.subr.mxu0 0.0
    %7336 = vmatpush1.msra.mxu0 0.0
    %7337 = vmatprep.subr.mxu0 0.0
    %7338 = vmatpush1.msra.mxu0 0.0
    %7339 = vmatprep.subr.mxu0 0.0
    %7340 = vmatpush1.msra.mxu0 0.0
    %7341 = vmatprep.subr.mxu0 0.0
    %7342 = vmatpush1.msra.mxu0 0.0
    %7343 = vmatprep.subr.mxu0 0.0
    %7344 = vmatpush1.msra.mxu0 0.0
    %7345 = vmatprep.subr.mxu0 0.0
    %7346 = vmatpush1.msra.mxu0 0.0
    %7347 = vmatprep.subr.mxu0 0.0
    %7348 = vmatpush1.msra.mxu0 0.0
    %7349 = vmatprep.subr.mxu0 0.0
    %7350 = vmatpush1.msra.mxu0 0.0
    %7351 = vmatprep.subr.mxu0 0.0
    %7352 = vmatpush1.msra.mxu0 0.0
    %7353 = vmatprep.subr.mxu0 0.0
    %7354 = vmatpush1.msra.mxu0 0.0
    %7355 = vmatprep.subr.mxu0 0.0
    %7356 = vmatpush1.msra.mxu0 0.0
    %7357 = vmatprep.subr.mxu0 0.0
    %7358 = vmatpush1.msra.mxu0 0.0
    %7359 = vmatprep.subr.mxu0 0.0
    %7360 = vmatpush1.msra.mxu0 0.0
    %7361 = vmatprep.subr.mxu0 0.0
    %7362 = vmatpush1.msra.mxu0 0.0
    %7363 = vmatprep.mubr.f32.mxu0 0.0
    %v7364 = vand.u32 %v547, 4294901760
    %7365 = vmatmul.mubr.f32.gmra.mrb[0].mxu0 %v7364
    %v7366 = vpop.f32.mrb[0].mxu0
    %v7367 = vadd.f32 %v7256, %v7366
    %v7368 = vpop.f32.mrb[0].mxu0
    %7369 = vmatprep.mubr.f32.mxu0 0.0
    %v7370 = vand.u32 %v550, 4294901760
    %7371 = vmatmul.mubr.f32.gmra.mrb[0].mxu0 %v7370
    %v7372 = vpop.f32.mrb[0].mxu0
    %v7373 = vadd.f32 %v7266, %v7372
    %v7374 = vpop.f32.mrb[0].mxu0
    %7375 = vmatprep.mubr.f32.mxu0 0.0
    %v7376 = vand.u32 %v553, 4294901760
    %7377 = vmatmul.mubr.f32.gmra.mrb[0].mxu0 %v7376
    %v7378 = vpop.f32.mrb[0].mxu0
    %v7379 = vadd.f32 %v7276, %v7378
    %v7380 = vpop.f32.mrb[0].mxu0
    %7381 = vmatprep.mubr.f32.mxu0 0.0
    %v7382 = vand.u32 %v556, 4294901760
    %7383 = vmatmul.mubr.f32.gmra.mrb[0].mxu0 %v7382
    %v7384 = vpop.f32.mrb[0].mxu0
    %v7385 = vadd.f32 %v7286, %v7384
    %v7386 = vpop.f32.mrb[0].mxu0
    %7387 = vdwg.mxu0
    %7388 = vmatprep.subr.mxu0 0.0
    %v7389 = vand.u32 %v7173, 4294901760
    %v7390 = vsub.f32 %v7173, %v7389
    %7391 = vmatpush1.msra.mxu0 %v7390
    %7392 = vmatprep.subr.mxu0 0.0
    %v7393 = vand.u32 %v7179, 4294901760
    %v7394 = vsub.f32 %v7179, %v7393
    %7395 = vmatpush1.msra.mxu0 %v7394
    %7396 = vmatprep.subr.mxu0 0.0
    %7397 = vmatpush1.msra.mxu0 0.0
    %7398 = vmatprep.subr.mxu0 0.0
    %7399 = vmatpush1.msra.mxu0 0.0
    %7400 = vmatprep.subr.mxu0 0.0
    %7401 = vmatpush1.msra.mxu0 0.0
    %7402 = vmatprep.subr.mxu0 0.0
    %7403 = vmatpush1.msra.mxu0 0.0
    %7404 = vmatprep.subr.mxu0 0.0
    %7405 = vmatpush1.msra.mxu0 0.0
    %7406 = vmatprep.subr.mxu0 0.0
    %7407 = vmatpush1.msra.mxu0 0.0
    %7408 = vmatprep.subr.mxu0 0.0
    %7409 = vmatpush1.msra.mxu0 0.0
    %7410 = vmatprep.subr.mxu0 0.0
    %7411 = vmatpush1.msra.mxu0 0.0
    %7412 = vmatprep.subr.mxu0 0.0
    %7413 = vmatpush1.msra.mxu0 0.0
    %7414 = vmatprep.subr.mxu0 0.0
    %7415 = vmatpush1.msra.mxu0 0.0
    %7416 = vmatprep.subr.mxu0 0.0
    %7417 = vmatpush1.msra.mxu0 0.0
    %7418 = vmatprep.subr.mxu0 0.0
    %7419 = vmatpush1.msra.mxu0 0.0
    %7420 = vmatprep.subr.mxu0 0.0
    %7421 = vmatpush1.msra.mxu0 0.0
    %7422 = vmatprep.subr.mxu0 0.0
    %7423 = vmatpush1.msra.mxu0 0.0
    %7424 = vmatprep.subr.mxu0 0.0
    %7425 = vmatpush1.msra.mxu0 0.0
    %7426 = vmatprep.subr.mxu0 0.0
    %7427 = vmatpush1.msra.mxu0 0.0
    %7428 = vmatprep.subr.mxu0 0.0
    %7429 = vmatpush1.msra.mxu0 0.0
    %7430 = vmatprep.subr.mxu0 0.0
    %7431 = vmatpush1.msra.mxu0 0.0
    %7432 = vmatprep.subr.mxu0 0.0
    %7433 = vmatpush1.msra.mxu0 0.0
    %7434 = vmatprep.subr.mxu0 0.0
    %7435 = vmatpush1.msra.mxu0 0.0
    %7436 = vmatprep.subr.mxu0 0.0
    %7437 = vmatpush1.msra.mxu0 0.0
    %7438 = vmatprep.subr.mxu0 0.0
    %7439 = vmatpush1.msra.mxu0 0.0
    %7440 = vmatprep.subr.mxu0 0.0
    %7441 = vmatpush1.msra.mxu0 0.0
    %7442 = vmatprep.subr.mxu0 0.0
    %7443 = vmatpush1.msra.mxu0 0.0
    %7444 = vmatprep.subr.mxu0 0.0
    %7445 = vmatpush1.msra.mxu0 0.0
    %7446 = vmatprep.subr.mxu0 0.0
    %7447 = vmatpush1.msra.mxu0 0.0
    %7448 = vmatprep.subr.mxu0 0.0
    %7449 = vmatpush1.msra.mxu0 0.0
    %7450 = vmatprep.subr.mxu0 0.0
    %7451 = vmatpush1.msra.mxu0 0.0
    %7452 = vmatprep.subr.mxu0 0.0
    %7453 = vmatpush1.msra.mxu0 0.0
    %7454 = vmatprep.subr.mxu0 0.0
    %7455 = vmatpush1.msra.mxu0 0.0
    %7456 = vmatprep.mubr.f32.mxu0 0.0
    %v7457 = vand.u32 %v547, 4294901760
    %v7458 = vsub.f32 %v547, %v7457
    %7459 = vmatmul.mubr.f32.gmra.mrb[0].mxu0 %v7458
    %v7460 = vpop.f32.mrb[0].mxu0
    %v7461 = vadd.f32 %v7367, %v7460
    %v7462 = vpop.f32.mrb[0].mxu0
    %7463 = vmatprep.mubr.f32.mxu0 0.0
    %v7464 = vand.u32 %v550, 4294901760
    %v7465 = vsub.f32 %v550, %v7464
    %7466 = vmatmul.mubr.f32.gmra.mrb[0].mxu0 %v7465
    %v7467 = vpop.f32.mrb[0].mxu0
    %v7468 = vadd.f32 %v7373, %v7467
    %v7469 = vpop.f32.mrb[0].mxu0
    %7470 = vmatprep.mubr.f32.mxu0 0.0
    %v7471 = vand.u32 %v553, 4294901760
    %v7472 = vsub.f32 %v553, %v7471
    %7473 = vmatmul.mubr.f32.gmra.mrb[0].mxu0 %v7472
    %v7474 = vpop.f32.mrb[0].mxu0
    %v7475 = vadd.f32 %v7379, %v7474
    %v7476 = vpop.f32.mrb[0].mxu0
    %7477 = vmatprep.mubr.f32.mxu0 0.0
    %v7478 = vand.u32 %v556, 4294901760
    %v7479 = vsub.f32 %v556, %v7478
    %7480 = vmatmul.mubr.f32.gmra.mrb[0].mxu0 %v7479
    %v7481 = vpop.f32.mrb[0].mxu0
    %v7482 = vadd.f32 %v7385, %v7481
    %v7483 = vpop.f32.mrb[0].mxu0
    %7484 = vdwg.mxu0
    %7485 = vmatprep.subr.mxu0 0.0
    %v7486 = vand.u32 %v7173, 4294901760
    %7487 = vmatpush1.msra.mxu0 %v7486
    %7488 = vmatprep.subr.mxu0 0.0
    %v7489 = vand.u32 %v7179, 4294901760
    %7490 = vmatpush1.msra.mxu0 %v7489
    %7491 = vmatprep.subr.mxu0 0.0
    %7492 = vmatpush1.msra.mxu0 0.0
    %7493 = vmatprep.subr.mxu0 0.0
    %7494 = vmatpush1.msra.mxu0 0.0
    %7495 = vmatprep.subr.mxu0 0.0
    %7496 = vmatpush1.msra.mxu0 0.0
    %7497 = vmatprep.subr.mxu0 0.0
    %7498 = vmatpush1.msra.mxu0 0.0
    %7499 = vmatprep.subr.mxu0 0.0
    %7500 = vmatpush1.msra.mxu0 0.0
    %7501 = vmatprep.subr.mxu0 0.0
    %7502 = vmatpush1.msra.mxu0 0.0
    %7503 = vmatprep.subr.mxu0 0.0
    %7504 = vmatpush1.msra.mxu0 0.0
    %7505 = vmatprep.subr.mxu0 0.0
    %7506 = vmatpush1.msra.mxu0 0.0
    %7507 = vmatprep.subr.mxu0 0.0
    %7508 = vmatpush1.msra.mxu0 0.0
    %7509 = vmatprep.subr.mxu0 0.0
    %7510 = vmatpush1.msra.mxu0 0.0
    %7511 = vmatprep.subr.mxu0 0.0
    %7512 = vmatpush1.msra.mxu0 0.0
    %7513 = vmatprep.subr.mxu0 0.0
    %7514 = vmatpush1.msra.mxu0 0.0
    %7515 = vmatprep.subr.mxu0 0.0
    %7516 = vmatpush1.msra.mxu0 0.0
    %7517 = vmatprep.subr.mxu0 0.0
    %7518 = vmatpush1.msra.mxu0 0.0
    %7519 = vmatprep.subr.mxu0 0.0
    %7520 = vmatpush1.msra.mxu0 0.0
    %7521 = vmatprep.subr.mxu0 0.0
    %7522 = vmatpush1.msra.mxu0 0.0
    %7523 = vmatprep.subr.mxu0 0.0
    %7524 = vmatpush1.msra.mxu0 0.0
    %7525 = vmatprep.subr.mxu0 0.0
    %7526 = vmatpush1.msra.mxu0 0.0
    %7527 = vmatprep.subr.mxu0 0.0
    %7528 = vmatpush1.msra.mxu0 0.0
    %7529 = vmatprep.subr.mxu0 0.0
    %7530 = vmatpush1.msra.mxu0 0.0
    %7531 = vmatprep.subr.mxu0 0.0
    %7532 = vmatpush1.msra.mxu0 0.0
    %7533 = vmatprep.subr.mxu0 0.0
    %7534 = vmatpush1.msra.mxu0 0.0
    %7535 = vmatprep.subr.mxu0 0.0
    %7536 = vmatpush1.msra.mxu0 0.0
    %7537 = vmatprep.subr.mxu0 0.0
    %7538 = vmatpush1.msra.mxu0 0.0
    %7539 = vmatprep.subr.mxu0 0.0
    %7540 = vmatpush1.msra.mxu0 0.0
    %7541 = vmatprep.subr.mxu0 0.0
    %7542 = vmatpush1.msra.mxu0 0.0
    %7543 = vmatprep.subr.mxu0 0.0
    %7544 = vmatpush1.msra.mxu0 0.0
    %7545 = vmatprep.subr.mxu0 0.0
    %7546 = vmatpush1.msra.mxu0 0.0
    %7547 = vmatprep.subr.mxu0 0.0
    %7548 = vmatpush1.msra.mxu0 0.0
    %7549 = vmatprep.subr.mxu0 0.0
    %7550 = vmatpush1.msra.mxu0 0.0
    %7551 = vmatprep.mubr.f32.mxu0 0.0
    %v7552 = vand.u32 %v547, 4294901760
    %v7553 = vsub.f32 %v547, %v7552
    %v7554 = vand.u32 %v7553, 4294901760
    %7555 = vmatmul.mubr.f32.gmra.mrb[0].mxu0 %v7554
    %v7556 = vpop.f32.mrb[0].mxu0
    %v7557 = vadd.f32 %v7461, %v7556
    %v7558 = vpop.f32.mrb[0].mxu0
    %7559 = vmatprep.mubr.f32.mxu0 0.0
    %v7560 = vand.u32 %v550, 4294901760
    %v7561 = vsub.f32 %v550, %v7560
    %v7562 = vand.u32 %v7561, 4294901760
    %7563 = vmatmul.mubr.f32.gmra.mrb[0].mxu0 %v7562
    %v7564 = vpop.f32.mrb[0].mxu0
    %v7565 = vadd.f32 %v7468, %v7564
    %v7566 = vpop.f32.mrb[0].mxu0
    %7567 = vmatprep.mubr.f32.mxu0 0.0
    %v7568 = vand.u32 %v553, 4294901760
    %v7569 = vsub.f32 %v553, %v7568
    %v7570 = vand.u32 %v7569, 4294901760
    %7571 = vmatmul.mubr.f32.gmra.mrb[0].mxu0 %v7570
    %v7572 = vpop.f32.mrb[0].mxu0
    %v7573 = vadd.f32 %v7475, %v7572
    %v7574 = vpop.f32.mrb[0].mxu0
    %7575 = vmatprep.mubr.f32.mxu0 0.0
    %v7576 = vand.u32 %v556, 4294901760
    %v7577 = vsub.f32 %v556, %v7576
    %v7578 = vand.u32 %v7577, 4294901760
    %7579 = vmatmul.mubr.f32.gmra.mrb[0].mxu0 %v7578
    %v7580 = vpop.f32.mrb[0].mxu0
    %v7581 = vadd.f32 %v7482, %v7580
    %v7582 = vpop.f32.mrb[0].mxu0
    %7583 = vdwg.mxu0
    %7584 = vmatprep.subr.mxu0 0.0
    %v7585 = vand.u32 %v7173, 4294901760
    %v7586 = vsub.f32 %v7173, %v7585
    %v7587 = vand.u32 %v7586, 4294901760
    %7588 = vmatpush1.msra.mxu0 %v7587
    %7589 = vmatprep.subr.mxu0 0.0
    %v7590 = vand.u32 %v7179, 4294901760
    %v7591 = vsub.f32 %v7179, %v7590
    %v7592 = vand.u32 %v7591, 4294901760
    %7593 = vmatpush1.msra.mxu0 %v7592
    %7594 = vmatprep.subr.mxu0 0.0
    %7595 = vmatpush1.msra.mxu0 0.0
    %7596 = vmatprep.subr.mxu0 0.0
    %7597 = vmatpush1.msra.mxu0 0.0
    %7598 = vmatprep.subr.mxu0 0.0
    %7599 = vmatpush1.msra.mxu0 0.0
    %7600 = vmatprep.subr.mxu0 0.0
    %7601 = vmatpush1.msra.mxu0 0.0
    %7602 = vmatprep.subr.mxu0 0.0
    %7603 = vmatpush1.msra.mxu0 0.0
    %7604 = vmatprep.subr.mxu0 0.0
    %7605 = vmatpush1.msra.mxu0 0.0
    %7606 = vmatprep.subr.mxu0 0.0
    %7607 = vmatpush1.msra.mxu0 0.0
    %7608 = vmatprep.subr.mxu0 0.0
    %7609 = vmatpush1.msra.mxu0 0.0
    %7610 = vmatprep.subr.mxu0 0.0
    %7611 = vmatpush1.msra.mxu0 0.0
    %7612 = vmatprep.subr.mxu0 0.0
    %7613 = vmatpush1.msra.mxu0 0.0
    %7614 = vmatprep.subr.mxu0 0.0
    %7615 = vmatpush1.msra.mxu0 0.0
    %7616 = vmatprep.subr.mxu0 0.0
    %7617 = vmatpush1.msra.mxu0 0.0
    %7618 = vmatprep.subr.mxu0 0.0
    %7619 = vmatpush1.msra.mxu0 0.0
    %7620 = vmatprep.subr.mxu0 0.0
    %7621 = vmatpush1.msra.mxu0 0.0
    %7622 = vmatprep.subr.mxu0 0.0
    %7623 = vmatpush1.msra.mxu0 0.0
    %7624 = vmatprep.subr.mxu0 0.0
    %7625 = vmatpush1.msra.mxu0 0.0
    %7626 = vmatprep.subr.mxu0 0.0
    %7627 = vmatpush1.msra.mxu0 0.0
    %7628 = vmatprep.subr.mxu0 0.0
    %7629 = vmatpush1.msra.mxu0 0.0
    %7630 = vmatprep.subr.mxu0 0.0
    %7631 = vmatpush1.msra.mxu0 0.0
    %7632 = vmatprep.subr.mxu0 0.0
    %7633 = vmatpush1.msra.mxu0 0.0
    %7634 = vmatprep.subr.mxu0 0.0
    %7635 = vmatpush1.msra.mxu0 0.0
    %7636 = vmatprep.subr.mxu0 0.0
    %7637 = vmatpush1.msra.mxu0 0.0
    %7638 = vmatprep.subr.mxu0 0.0
    %7639 = vmatpush1.msra.mxu0 0.0
    %7640 = vmatprep.subr.mxu0 0.0
    %7641 = vmatpush1.msra.mxu0 0.0
    %7642 = vmatprep.subr.mxu0 0.0
    %7643 = vmatpush1.msra.mxu0 0.0
    %7644 = vmatprep.subr.mxu0 0.0
    %7645 = vmatpush1.msra.mxu0 0.0
    %7646 = vmatprep.subr.mxu0 0.0
    %7647 = vmatpush1.msra.mxu0 0.0
    %7648 = vmatprep.subr.mxu0 0.0
    %7649 = vmatpush1.msra.mxu0 0.0
    %7650 = vmatprep.subr.mxu0 0.0
    %7651 = vmatpush1.msra.mxu0 0.0
    %7652 = vmatprep.subr.mxu0 0.0
    %7653 = vmatpush1.msra.mxu0 0.0
    %7654 = vmatprep.mubr.f32.mxu0 0.0
    %v7655 = vand.u32 %v547, 4294901760
    %7656 = vmatmul.mubr.f32.gmra.mrb[0].mxu0 %v7655
    %v7657 = vpop.f32.mrb[0].mxu0
    %v7658 = vadd.f32 %v7557, %v7657
    %v7659 = vpop.f32.mrb[0].mxu0
    %7660 = vmatprep.mubr.f32.mxu0 0.0
    %v7661 = vand.u32 %v550, 4294901760
    %7662 = vmatmul.mubr.f32.gmra.mrb[0].mxu0 %v7661
    %v7663 = vpop.f32.mrb[0].mxu0
    %v7664 = vadd.f32 %v7565, %v7663
    %v7665 = vpop.f32.mrb[0].mxu0
    %7666 = vmatprep.mubr.f32.mxu0 0.0
    %v7667 = vand.u32 %v553, 4294901760
    %7668 = vmatmul.mubr.f32.gmra.mrb[0].mxu0 %v7667
    %v7669 = vpop.f32.mrb[0].mxu0
    %v7670 = vadd.f32 %v7573, %v7669
    %v7671 = vpop.f32.mrb[0].mxu0
    %7672 = vmatprep.mubr.f32.mxu0 0.0
    %v7673 = vand.u32 %v556, 4294901760
    %7674 = vmatmul.mubr.f32.gmra.mrb[0].mxu0 %v7673
    %v7675 = vpop.f32.mrb[0].mxu0
    %v7676 = vadd.f32 %v7581, %v7675
    %v7677 = vpop.f32.mrb[0].mxu0
    %7678 = vdwg.mxu0
    %7679 = vmatprep.subr.mxu0 0.0
    %v7680 = vand.u32 %v7173, 4294901760
    %7681 = vmatpush1.msra.mxu0 %v7680
    %7682 = vmatprep.subr.mxu0 0.0
    %v7683 = vand.u32 %v7179, 4294901760
    %7684 = vmatpush1.msra.mxu0 %v7683
    %7685 = vmatprep.subr.mxu0 0.0
    %7686 = vmatpush1.msra.mxu0 0.0
    %7687 = vmatprep.subr.mxu0 0.0
    %7688 = vmatpush1.msra.mxu0 0.0
    %7689 = vmatprep.subr.mxu0 0.0
    %7690 = vmatpush1.msra.mxu0 0.0
    %7691 = vmatprep.subr.mxu0 0.0
    %7692 = vmatpush1.msra.mxu0 0.0
    %7693 = vmatprep.subr.mxu0 0.0
    %7694 = vmatpush1.msra.mxu0 0.0
    %7695 = vmatprep.subr.mxu0 0.0
    %7696 = vmatpush1.msra.mxu0 0.0
    %7697 = vmatprep.subr.mxu0 0.0
    %7698 = vmatpush1.msra.mxu0 0.0
    %7699 = vmatprep.subr.mxu0 0.0
    %7700 = vmatpush1.msra.mxu0 0.0
    %7701 = vmatprep.subr.mxu0 0.0
    %7702 = vmatpush1.msra.mxu0 0.0
    %7703 = vmatprep.subr.mxu0 0.0
    %7704 = vmatpush1.msra.mxu0 0.0
    %7705 = vmatprep.subr.mxu0 0.0
    %7706 = vmatpush1.msra.mxu0 0.0
    %7707 = vmatprep.subr.mxu0 0.0
    %7708 = vmatpush1.msra.mxu0 0.0
    %7709 = vmatprep.subr.mxu0 0.0
    %7710 = vmatpush1.msra.mxu0 0.0
    %7711 = vmatprep.subr.mxu0 0.0
    %7712 = vmatpush1.msra.mxu0 0.0
    %7713 = vmatprep.subr.mxu0 0.0
    %7714 = vmatpush1.msra.mxu0 0.0
    %7715 = vmatprep.subr.mxu0 0.0
    %7716 = vmatpush1.msra.mxu0 0.0
    %7717 = vmatprep.subr.mxu0 0.0
    %7718 = vmatpush1.msra.mxu0 0.0
    %7719 = vmatprep.subr.mxu0 0.0
    %7720 = vmatpush1.msra.mxu0 0.0
    %7721 = vmatprep.subr.mxu0 0.0
    %7722 = vmatpush1.msra.mxu0 0.0
    %7723 = vmatprep.subr.mxu0 0.0
    %7724 = vmatpush1.msra.mxu0 0.0
    %7725 = vmatprep.subr.mxu0 0.0
    %7726 = vmatpush1.msra.mxu0 0.0
    %7727 = vmatprep.subr.mxu0 0.0
    %7728 = vmatpush1.msra.mxu0 0.0
    %7729 = vmatprep.subr.mxu0 0.0
    %7730 = vmatpush1.msra.mxu0 0.0
    %7731 = vmatprep.subr.mxu0 0.0
    %7732 = vmatpush1.msra.mxu0 0.0
    %7733 = vmatprep.subr.mxu0 0.0
    %7734 = vmatpush1.msra.mxu0 0.0
    %7735 = vmatprep.subr.mxu0 0.0
    %7736 = vmatpush1.msra.mxu0 0.0
    %7737 = vmatprep.subr.mxu0 0.0
    %7738 = vmatpush1.msra.mxu0 0.0
    %7739 = vmatprep.subr.mxu0 0.0
    %7740 = vmatpush1.msra.mxu0 0.0
    %7741 = vmatprep.subr.mxu0 0.0
    %7742 = vmatpush1.msra.mxu0 0.0
    %7743 = vmatprep.subr.mxu0 0.0
    %7744 = vmatpush1.msra.mxu0 0.0
    %7745 = vmatprep.mubr.f32.mxu0 0.0
    %v7746 = vand.u32 %v547, 4294901760
    %7747 = vmatmul.mubr.f32.gmra.mrb[0].mxu0 %v7746
    %v7748 = vpop.f32.mrb[0].mxu0
    %v7749 = vadd.f32 %v7658, %v7748
    %v7750 = vpop.f32.mrb[0].mxu0
    %7751 = vmatprep.mubr.f32.mxu0 0.0
    %v7752 = vand.u32 %v550, 4294901760
    %7753 = vmatmul.mubr.f32.gmra.mrb[0].mxu0 %v7752
    %v7754 = vpop.f32.mrb[0].mxu0
    %v7755 = vadd.f32 %v7664, %v7754
    %v7756 = vpop.f32.mrb[0].mxu0
    %7757 = vmatprep.mubr.f32.mxu0 0.0
    %v7758 = vand.u32 %v553, 4294901760
    %7759 = vmatmul.mubr.f32.gmra.mrb[0].mxu0 %v7758
    %v7760 = vpop.f32.mrb[0].mxu0
    %v7761 = vadd.f32 %v7670, %v7760
    %v7762 = vpop.f32.mrb[0].mxu0
    %7763 = vmatprep.mubr.f32.mxu0 0.0
    %v7764 = vand.u32 %v556, 4294901760
    %7765 = vmatmul.mubr.f32.gmra.mrb[0].mxu0 %v7764
    %v7766 = vpop.f32.mrb[0].mxu0
    %v7767 = vadd.f32 %v7676, %v7766
    %v7768 = vpop.f32.mrb[0].mxu0
    %7769 = vdwg.mxu0
    %s7770 = scalar_lea.vmem [#allocation5], 192
    %7771 = vst.msk [vmem:[%s7770] sm:$0xff] %vm1146, %v7749
    %7772 = vst.msk [vmem:[%s7770 + $0x8] sm:$0xff] %vm1146, %v7755
    %7773 = vst.msk [vmem:[%s7770 + $0x10] sm:$0xff] %vm1146, %v7761
    %7774 = vst.msk [vmem:[%s7770 + $0x18] sm:$0xff] %vm1146, %v7767
    %s7775 = scalar_lea.vmem [#allocation2], 112
    %v7776 = vld [vmem:[%s7775] sm:$0xff]
    %v7777 = vld [vmem:[%s7775 + $0x8] sm:$0xff]
    %v7779 = vsel %vm37, %v7776, 0
    %v7782 = vsel %vm37, %v7777, 0
    %7784 = vmatprep.subr.mxu0 0.0
    %v7785 = vand.u32 %v33, 4294901760
    %7786 = vmatpush1.msra.mxu0 %v7785
    %7787 = vmatprep.subr.mxu0 0.0
    %v7788 = vand.u32 %v34, 4294901760
    %7789 = vmatpush1.msra.mxu0 %v7788
    %7790 = vmatprep.subr.mxu0 0.0
    %7791 = vmatpush1.msra.mxu0 0.0
    %7792 = vmatprep.subr.mxu0 0.0
    %7793 = vmatpush1.msra.mxu0 0.0
    %7794 = vmatprep.subr.mxu0 0.0
    %7795 = vmatpush1.msra.mxu0 0.0
    %7796 = vmatprep.subr.mxu0 0.0
    %7797 = vmatpush1.msra.mxu0 0.0
    %7798 = vmatprep.subr.mxu0 0.0
    %7799 = vmatpush1.msra.mxu0 0.0
    %7800 = vmatprep.subr.mxu0 0.0
    %7801 = vmatpush1.msra.mxu0 0.0
    %7802 = vmatprep.subr.mxu0 0.0
    %7803 = vmatpush1.msra.mxu0 0.0
    %7804 = vmatprep.subr.mxu0 0.0
    %7805 = vmatpush1.msra.mxu0 0.0
    %7806 = vmatprep.subr.mxu0 0.0
    %7807 = vmatpush1.msra.mxu0 0.0
    %7808 = vmatprep.subr.mxu0 0.0
    %7809 = vmatpush1.msra.mxu0 0.0
    %7810 = vmatprep.subr.mxu0 0.0
    %7811 = vmatpush1.msra.mxu0 0.0
    %7812 = vmatprep.subr.mxu0 0.0
    %7813 = vmatpush1.msra.mxu0 0.0
    %7814 = vmatprep.subr.mxu0 0.0
    %7815 = vmatpush1.msra.mxu0 0.0
    %7816 = vmatprep.subr.mxu0 0.0
    %7817 = vmatpush1.msra.mxu0 0.0
    %7818 = vmatprep.subr.mxu0 0.0
    %7819 = vmatpush1.msra.mxu0 0.0
    %7820 = vmatprep.subr.mxu0 0.0
    %7821 = vmatpush1.msra.mxu0 0.0
    %7822 = vmatprep.subr.mxu0 0.0
    %7823 = vmatpush1.msra.mxu0 0.0
    %7824 = vmatprep.subr.mxu0 0.0
    %7825 = vmatpush1.msra.mxu0 0.0
    %7826 = vmatprep.subr.mxu0 0.0
    %7827 = vmatpush1.msra.mxu0 0.0
    %7828 = vmatprep.subr.mxu0 0.0
    %7829 = vmatpush1.msra.mxu0 0.0
    %7830 = vmatprep.subr.mxu0 0.0
    %7831 = vmatpush1.msra.mxu0 0.0
    %7832 = vmatprep.subr.mxu0 0.0
    %7833 = vmatpush1.msra.mxu0 0.0
    %7834 = vmatprep.subr.mxu0 0.0
    %7835 = vmatpush1.msra.mxu0 0.0
    %7836 = vmatprep.subr.mxu0 0.0
    %7837 = vmatpush1.msra.mxu0 0.0
    %7838 = vmatprep.subr.mxu0 0.0
    %7839 = vmatpush1.msra.mxu0 0.0
    %7840 = vmatprep.subr.mxu0 0.0
    %7841 = vmatpush1.msra.mxu0 0.0
    %7842 = vmatprep.subr.mxu0 0.0
    %7843 = vmatpush1.msra.mxu0 0.0
    %7844 = vmatprep.subr.mxu0 0.0
    %7845 = vmatpush1.msra.mxu0 0.0
    %7846 = vmatprep.subr.mxu0 0.0
    %7847 = vmatpush1.msra.mxu0 0.0
    %7848 = vmatprep.subr.mxu0 0.0
    %7849 = vmatpush1.msra.mxu0 0.0
    %7850 = vmatprep.mubr.f32.mxu0 0.0
    %v7851 = vand.u32 %v7779, 4294901760
    %v7852 = vsub.f32 %v7779, %v7851
    %v7853 = vand.u32 %v7852, 4294901760
    %v7854 = vsub.f32 %v7852, %v7853
    %v7855 = vand.u32 %v7854, 4294901760
    %7856 = vmatmul.mubr.f32.gmra.mrb[0].mxu0 %v7855
    %v7857 = vpop.f32.mrb[0].mxu0
    %v7858 = vadd.f32 0.0, %v7857
    %v7859 = vpop.f32.mrb[0].mxu0
    %7860 = vmatprep.mubr.f32.mxu0 0.0
    %v7861 = vand.u32 %v7782, 4294901760
    %v7862 = vsub.f32 %v7782, %v7861
    %v7863 = vand.u32 %v7862, 4294901760
    %v7864 = vsub.f32 %v7862, %v7863
    %v7865 = vand.u32 %v7864, 4294901760
    %7866 = vmatmul.mubr.f32.gmra.mrb[0].mxu0 %v7865
    %v7867 = vpop.f32.mrb[0].mxu0
    %v7868 = vadd.f32 0.0, %v7867
    %v7869 = vpop.f32.mrb[0].mxu0
    %7870 = vdwg.mxu0
    %7871 = vmatprep.subr.mxu0 0.0
    %v7872 = vand.u32 %v33, 4294901760
    %v7873 = vsub.f32 %v33, %v7872
    %v7874 = vand.u32 %v7873, 4294901760
    %v7875 = vsub.f32 %v7873, %v7874
    %v7876 = vand.u32 %v7875, 4294901760
    %7877 = vmatpush1.msra.mxu0 %v7876
    %7878 = vmatprep.subr.mxu0 0.0
    %v7879 = vand.u32 %v34, 4294901760
    %v7880 = vsub.f32 %v34, %v7879
    %v7881 = vand.u32 %v7880, 4294901760
    %v7882 = vsub.f32 %v7880, %v7881
    %v7883 = vand.u32 %v7882, 4294901760
    %7884 = vmatpush1.msra.mxu0 %v7883
    %7885 = vmatprep.subr.mxu0 0.0
    %7886 = vmatpush1.msra.mxu0 0.0
    %7887 = vmatprep.subr.mxu0 0.0
    %7888 = vmatpush1.msra.mxu0 0.0
    %7889 = vmatprep.subr.mxu0 0.0
    %7890 = vmatpush1.msra.mxu0 0.0
    %7891 = vmatprep.subr.mxu0 0.0
    %7892 = vmatpush1.msra.mxu0 0.0
    %7893 = vmatprep.subr.mxu0 0.0
    %7894 = vmatpush1.msra.mxu0 0.0
    %7895 = vmatprep.subr.mxu0 0.0
    %7896 = vmatpush1.msra.mxu0 0.0
    %7897 = vmatprep.subr.mxu0 0.0
    %7898 = vmatpush1.msra.mxu0 0.0
    %7899 = vmatprep.subr.mxu0 0.0
    %7900 = vmatpush1.msra.mxu0 0.0
    %7901 = vmatprep.subr.mxu0 0.0
    %7902 = vmatpush1.msra.mxu0 0.0
    %7903 = vmatprep.subr.mxu0 0.0
    %7904 = vmatpush1.msra.mxu0 0.0
    %7905 = vmatprep.subr.mxu0 0.0
    %7906 = vmatpush1.msra.mxu0 0.0
    %7907 = vmatprep.subr.mxu0 0.0
    %7908 = vmatpush1.msra.mxu0 0.0
    %7909 = vmatprep.subr.mxu0 0.0
    %7910 = vmatpush1.msra.mxu0 0.0
    %7911 = vmatprep.subr.mxu0 0.0
    %7912 = vmatpush1.msra.mxu0 0.0
    %7913 = vmatprep.subr.mxu0 0.0
    %7914 = vmatpush1.msra.mxu0 0.0
    %7915 = vmatprep.subr.mxu0 0.0
    %7916 = vmatpush1.msra.mxu0 0.0
    %7917 = vmatprep.subr.mxu0 0.0
    %7918 = vmatpush1.msra.mxu0 0.0
    %7919 = vmatprep.subr.mxu0 0.0
    %7920 = vmatpush1.msra.mxu0 0.0
    %7921 = vmatprep.subr.mxu0 0.0
    %7922 = vmatpush1.msra.mxu0 0.0
    %7923 = vmatprep.subr.mxu0 0.0
    %7924 = vmatpush1.msra.mxu0 0.0
    %7925 = vmatprep.subr.mxu0 0.0
    %7926 = vmatpush1.msra.mxu0 0.0
    %7927 = vmatprep.subr.mxu0 0.0
    %7928 = vmatpush1.msra.mxu0 0.0
    %7929 = vmatprep.subr.mxu0 0.0
    %7930 = vmatpush1.msra.mxu0 0.0
    %7931 = vmatprep.subr.mxu0 0.0
    %7932 = vmatpush1.msra.mxu0 0.0
    %7933 = vmatprep.subr.mxu0 0.0
    %7934 = vmatpush1.msra.mxu0 0.0
    %7935 = vmatprep.subr.mxu0 0.0
    %7936 = vmatpush1.msra.mxu0 0.0
    %7937 = vmatprep.subr.mxu0 0.0
    %7938 = vmatpush1.msra.mxu0 0.0
    %7939 = vmatprep.subr.mxu0 0.0
    %7940 = vmatpush1.msra.mxu0 0.0
    %7941 = vmatprep.subr.mxu0 0.0
    %7942 = vmatpush1.msra.mxu0 0.0
    %7943 = vmatprep.subr.mxu0 0.0
    %7944 = vmatpush1.msra.mxu0 0.0
    %7945 = vmatprep.mubr.f32.mxu0 0.0
    %v7946 = vand.u32 %v7779, 4294901760
    %7947 = vmatmul.mubr.f32.gmra.mrb[0].mxu0 %v7946
    %v7948 = vpop.f32.mrb[0].mxu0
    %v7949 = vadd.f32 %v7858, %v7948
    %v7950 = vpop.f32.mrb[0].mxu0
    %7951 = vmatprep.mubr.f32.mxu0 0.0
    %v7952 = vand.u32 %v7782, 4294901760
    %7953 = vmatmul.mubr.f32.gmra.mrb[0].mxu0 %v7952
    %v7954 = vpop.f32.mrb[0].mxu0
    %v7955 = vadd.f32 %v7868, %v7954
    %v7956 = vpop.f32.mrb[0].mxu0
    %7957 = vdwg.mxu0
    %7958 = vmatprep.subr.mxu0 0.0
    %v7959 = vand.u32 %v33, 4294901760
    %v7960 = vsub.f32 %v33, %v7959
    %7961 = vmatpush1.msra.mxu0 %v7960
    %7962 = vmatprep.subr.mxu0 0.0
    %v7963 = vand.u32 %v34, 4294901760
    %v7964 = vsub.f32 %v34, %v7963
    %7965 = vmatpush1.msra.mxu0 %v7964
    %7966 = vmatprep.subr.mxu0 0.0
    %7967 = vmatpush1.msra.mxu0 0.0
    %7968 = vmatprep.subr.mxu0 0.0
    %7969 = vmatpush1.msra.mxu0 0.0
    %7970 = vmatprep.subr.mxu0 0.0
    %7971 = vmatpush1.msra.mxu0 0.0
    %7972 = vmatprep.subr.mxu0 0.0
    %7973 = vmatpush1.msra.mxu0 0.0
    %7974 = vmatprep.subr.mxu0 0.0
    %7975 = vmatpush1.msra.mxu0 0.0
    %7976 = vmatprep.subr.mxu0 0.0
    %7977 = vmatpush1.msra.mxu0 0.0
    %7978 = vmatprep.subr.mxu0 0.0
    %7979 = vmatpush1.msra.mxu0 0.0
    %7980 = vmatprep.subr.mxu0 0.0
    %7981 = vmatpush1.msra.mxu0 0.0
    %7982 = vmatprep.subr.mxu0 0.0
    %7983 = vmatpush1.msra.mxu0 0.0
    %7984 = vmatprep.subr.mxu0 0.0
    %7985 = vmatpush1.msra.mxu0 0.0
    %7986 = vmatprep.subr.mxu0 0.0
    %7987 = vmatpush1.msra.mxu0 0.0
    %7988 = vmatprep.subr.mxu0 0.0
    %7989 = vmatpush1.msra.mxu0 0.0
    %7990 = vmatprep.subr.mxu0 0.0
    %7991 = vmatpush1.msra.mxu0 0.0
    %7992 = vmatprep.subr.mxu0 0.0
    %7993 = vmatpush1.msra.mxu0 0.0
    %7994 = vmatprep.subr.mxu0 0.0
    %7995 = vmatpush1.msra.mxu0 0.0
    %7996 = vmatprep.subr.mxu0 0.0
    %7997 = vmatpush1.msra.mxu0 0.0
    %7998 = vmatprep.subr.mxu0 0.0
    %7999 = vmatpush1.msra.mxu0 0.0
    %8000 = vmatprep.subr.mxu0 0.0
    %8001 = vmatpush1.msra.mxu0 0.0
    %8002 = vmatprep.subr.mxu0 0.0
    %8003 = vmatpush1.msra.mxu0 0.0
    %8004 = vmatprep.subr.mxu0 0.0
    %8005 = vmatpush1.msra.mxu0 0.0
    %8006 = vmatprep.subr.mxu0 0.0
    %8007 = vmatpush1.msra.mxu0 0.0
    %8008 = vmatprep.subr.mxu0 0.0
    %8009 = vmatpush1.msra.mxu0 0.0
    %8010 = vmatprep.subr.mxu0 0.0
    %8011 = vmatpush1.msra.mxu0 0.0
    %8012 = vmatprep.subr.mxu0 0.0
    %8013 = vmatpush1.msra.mxu0 0.0
    %8014 = vmatprep.subr.mxu0 0.0
    %8015 = vmatpush1.msra.mxu0 0.0
    %8016 = vmatprep.subr.mxu0 0.0
    %8017 = vmatpush1.msra.mxu0 0.0
    %8018 = vmatprep.subr.mxu0 0.0
    %8019 = vmatpush1.msra.mxu0 0.0
    %8020 = vmatprep.subr.mxu0 0.0
    %8021 = vmatpush1.msra.mxu0 0.0
    %8022 = vmatprep.subr.mxu0 0.0
    %8023 = vmatpush1.msra.mxu0 0.0
    %8024 = vmatprep.subr.mxu0 0.0
    %8025 = vmatpush1.msra.mxu0 0.0
    %8026 = vmatprep.mubr.f32.mxu0 0.0
    %v8027 = vand.u32 %v7779, 4294901760
    %v8028 = vsub.f32 %v7779, %v8027
    %8029 = vmatmul.mubr.f32.gmra.mrb[0].mxu0 %v8028
    %v8030 = vpop.f32.mrb[0].mxu0
    %v8031 = vadd.f32 %v7949, %v8030
    %v8032 = vpop.f32.mrb[0].mxu0
    %8033 = vmatprep.mubr.f32.mxu0 0.0
    %v8034 = vand.u32 %v7782, 4294901760
    %v8035 = vsub.f32 %v7782, %v8034
    %8036 = vmatmul.mubr.f32.gmra.mrb[0].mxu0 %v8035
    %v8037 = vpop.f32.mrb[0].mxu0
    %v8038 = vadd.f32 %v7955, %v8037
    %v8039 = vpop.f32.mrb[0].mxu0
    %8040 = vdwg.mxu0
    %8041 = vmatprep.subr.mxu0 0.0
    %v8042 = vand.u32 %v33, 4294901760
    %8043 = vmatpush1.msra.mxu0 %v8042
    %8044 = vmatprep.subr.mxu0 0.0
    %v8045 = vand.u32 %v34, 4294901760
    %8046 = vmatpush1.msra.mxu0 %v8045
    %8047 = vmatprep.subr.mxu0 0.0
    %8048 = vmatpush1.msra.mxu0 0.0
    %8049 = vmatprep.subr.mxu0 0.0
    %8050 = vmatpush1.msra.mxu0 0.0
    %8051 = vmatprep.subr.mxu0 0.0
    %8052 = vmatpush1.msra.mxu0 0.0
    %8053 = vmatprep.subr.mxu0 0.0
    %8054 = vmatpush1.msra.mxu0 0.0
    %8055 = vmatprep.subr.mxu0 0.0
    %8056 = vmatpush1.msra.mxu0 0.0
    %8057 = vmatprep.subr.mxu0 0.0
    %8058 = vmatpush1.msra.mxu0 0.0
    %8059 = vmatprep.subr.mxu0 0.0
    %8060 = vmatpush1.msra.mxu0 0.0
    %8061 = vmatprep.subr.mxu0 0.0
    %8062 = vmatpush1.msra.mxu0 0.0
    %8063 = vmatprep.subr.mxu0 0.0
    %8064 = vmatpush1.msra.mxu0 0.0
    %8065 = vmatprep.subr.mxu0 0.0
    %8066 = vmatpush1.msra.mxu0 0.0
    %8067 = vmatprep.subr.mxu0 0.0
    %8068 = vmatpush1.msra.mxu0 0.0
    %8069 = vmatprep.subr.mxu0 0.0
    %8070 = vmatpush1.msra.mxu0 0.0
    %8071 = vmatprep.subr.mxu0 0.0
    %8072 = vmatpush1.msra.mxu0 0.0
    %8073 = vmatprep.subr.mxu0 0.0
    %8074 = vmatpush1.msra.mxu0 0.0
    %8075 = vmatprep.subr.mxu0 0.0
    %8076 = vmatpush1.msra.mxu0 0.0
    %8077 = vmatprep.subr.mxu0 0.0
    %8078 = vmatpush1.msra.mxu0 0.0
    %8079 = vmatprep.subr.mxu0 0.0
    %8080 = vmatpush1.msra.mxu0 0.0
    %8081 = vmatprep.subr.mxu0 0.0
    %8082 = vmatpush1.msra.mxu0 0.0
    %8083 = vmatprep.subr.mxu0 0.0
    %8084 = vmatpush1.msra.mxu0 0.0
    %8085 = vmatprep.subr.mxu0 0.0
    %8086 = vmatpush1.msra.mxu0 0.0
    %8087 = vmatprep.subr.mxu0 0.0
    %8088 = vmatpush1.msra.mxu0 0.0
    %8089 = vmatprep.subr.mxu0 0.0
    %8090 = vmatpush1.msra.mxu0 0.0
    %8091 = vmatprep.subr.mxu0 0.0
    %8092 = vmatpush1.msra.mxu0 0.0
    %8093 = vmatprep.subr.mxu0 0.0
    %8094 = vmatpush1.msra.mxu0 0.0
    %8095 = vmatprep.subr.mxu0 0.0
    %8096 = vmatpush1.msra.mxu0 0.0
    %8097 = vmatprep.subr.mxu0 0.0
    %8098 = vmatpush1.msra.mxu0 0.0
    %8099 = vmatprep.subr.mxu0 0.0
    %8100 = vmatpush1.msra.mxu0 0.0
    %8101 = vmatprep.subr.mxu0 0.0
    %8102 = vmatpush1.msra.mxu0 0.0
    %8103 = vmatprep.subr.mxu0 0.0
    %8104 = vmatpush1.msra.mxu0 0.0
    %8105 = vmatprep.subr.mxu0 0.0
    %8106 = vmatpush1.msra.mxu0 0.0
    %8107 = vmatprep.mubr.f32.mxu0 0.0
    %v8108 = vand.u32 %v7779, 4294901760
    %v8109 = vsub.f32 %v7779, %v8108
    %v8110 = vand.u32 %v8109, 4294901760
    %8111 = vmatmul.mubr.f32.gmra.mrb[0].mxu0 %v8110
    %v8112 = vpop.f32.mrb[0].mxu0
    %v8113 = vadd.f32 %v8031, %v8112
    %v8114 = vpop.f32.mrb[0].mxu0
    %8115 = vmatprep.mubr.f32.mxu0 0.0
    %v8116 = vand.u32 %v7782, 4294901760
    %v8117 = vsub.f32 %v7782, %v8116
    %v8118 = vand.u32 %v8117, 4294901760
    %8119 = vmatmul.mubr.f32.gmra.mrb[0].mxu0 %v8118
    %v8120 = vpop.f32.mrb[0].mxu0
    %v8121 = vadd.f32 %v8038, %v8120
    %v8122 = vpop.f32.mrb[0].mxu0
    %8123 = vdwg.mxu0
    %8124 = vmatprep.subr.mxu0 0.0
    %v8125 = vand.u32 %v33, 4294901760
    %v8126 = vsub.f32 %v33, %v8125
    %v8127 = vand.u32 %v8126, 4294901760
    %8128 = vmatpush1.msra.mxu0 %v8127
    %8129 = vmatprep.subr.mxu0 0.0
    %v8130 = vand.u32 %v34, 4294901760
    %v8131 = vsub.f32 %v34, %v8130
    %v8132 = vand.u32 %v8131, 4294901760
    %8133 = vmatpush1.msra.mxu0 %v8132
    %8134 = vmatprep.subr.mxu0 0.0
    %8135 = vmatpush1.msra.mxu0 0.0
    %8136 = vmatprep.subr.mxu0 0.0
    %8137 = vmatpush1.msra.mxu0 0.0
    %8138 = vmatprep.subr.mxu0 0.0
    %8139 = vmatpush1.msra.mxu0 0.0
    %8140 = vmatprep.subr.mxu0 0.0
    %8141 = vmatpush1.msra.mxu0 0.0
    %8142 = vmatprep.subr.mxu0 0.0
    %8143 = vmatpush1.msra.mxu0 0.0
    %8144 = vmatprep.subr.mxu0 0.0
    %8145 = vmatpush1.msra.mxu0 0.0
    %8146 = vmatprep.subr.mxu0 0.0
    %8147 = vmatpush1.msra.mxu0 0.0
    %8148 = vmatprep.subr.mxu0 0.0
    %8149 = vmatpush1.msra.mxu0 0.0
    %8150 = vmatprep.subr.mxu0 0.0
    %8151 = vmatpush1.msra.mxu0 0.0
    %8152 = vmatprep.subr.mxu0 0.0
    %8153 = vmatpush1.msra.mxu0 0.0
    %8154 = vmatprep.subr.mxu0 0.0
    %8155 = vmatpush1.msra.mxu0 0.0
    %8156 = vmatprep.subr.mxu0 0.0
    %8157 = vmatpush1.msra.mxu0 0.0
    %8158 = vmatprep.subr.mxu0 0.0
    %8159 = vmatpush1.msra.mxu0 0.0
    %8160 = vmatprep.subr.mxu0 0.0
    %8161 = vmatpush1.msra.mxu0 0.0
    %8162 = vmatprep.subr.mxu0 0.0
    %8163 = vmatpush1.msra.mxu0 0.0
    %8164 = vmatprep.subr.mxu0 0.0
    %8165 = vmatpush1.msra.mxu0 0.0
    %8166 = vmatprep.subr.mxu0 0.0
    %8167 = vmatpush1.msra.mxu0 0.0
    %8168 = vmatprep.subr.mxu0 0.0
    %8169 = vmatpush1.msra.mxu0 0.0
    %8170 = vmatprep.subr.mxu0 0.0
    %8171 = vmatpush1.msra.mxu0 0.0
    %8172 = vmatprep.subr.mxu0 0.0
    %8173 = vmatpush1.msra.mxu0 0.0
    %8174 = vmatprep.subr.mxu0 0.0
    %8175 = vmatpush1.msra.mxu0 0.0
    %8176 = vmatprep.subr.mxu0 0.0
    %8177 = vmatpush1.msra.mxu0 0.0
    %8178 = vmatprep.subr.mxu0 0.0
    %8179 = vmatpush1.msra.mxu0 0.0
    %8180 = vmatprep.subr.mxu0 0.0
    %8181 = vmatpush1.msra.mxu0 0.0
    %8182 = vmatprep.subr.mxu0 0.0
    %8183 = vmatpush1.msra.mxu0 0.0
    %8184 = vmatprep.subr.mxu0 0.0
    %8185 = vmatpush1.msra.mxu0 0.0
    %8186 = vmatprep.subr.mxu0 0.0
    %8187 = vmatpush1.msra.mxu0 0.0
    %8188 = vmatprep.subr.mxu0 0.0
    %8189 = vmatpush1.msra.mxu0 0.0
    %8190 = vmatprep.subr.mxu0 0.0
    %8191 = vmatpush1.msra.mxu0 0.0
    %8192 = vmatprep.subr.mxu0 0.0
    %8193 = vmatpush1.msra.mxu0 0.0
    %8194 = vmatprep.mubr.f32.mxu0 0.0
    %v8195 = vand.u32 %v7779, 4294901760
    %8196 = vmatmul.mubr.f32.gmra.mrb[0].mxu0 %v8195
    %v8197 = vpop.f32.mrb[0].mxu0
    %v8198 = vadd.f32 %v8113, %v8197
    %v8199 = vpop.f32.mrb[0].mxu0
    %8200 = vmatprep.mubr.f32.mxu0 0.0
    %v8201 = vand.u32 %v7782, 4294901760
    %8202 = vmatmul.mubr.f32.gmra.mrb[0].mxu0 %v8201
    %v8203 = vpop.f32.mrb[0].mxu0
    %v8204 = vadd.f32 %v8121, %v8203
    %v8205 = vpop.f32.mrb[0].mxu0
    %8206 = vdwg.mxu0
    %8207 = vmatprep.subr.mxu0 0.0
    %v8208 = vand.u32 %v33, 4294901760
    %8209 = vmatpush1.msra.mxu0 %v8208
    %8210 = vmatprep.subr.mxu0 0.0
    %v8211 = vand.u32 %v34, 4294901760
    %8212 = vmatpush1.msra.mxu0 %v8211
    %8213 = vmatprep.subr.mxu0 0.0
    %8214 = vmatpush1.msra.mxu0 0.0
    %8215 = vmatprep.subr.mxu0 0.0
    %8216 = vmatpush1.msra.mxu0 0.0
    %8217 = vmatprep.subr.mxu0 0.0
    %8218 = vmatpush1.msra.mxu0 0.0
    %8219 = vmatprep.subr.mxu0 0.0
    %8220 = vmatpush1.msra.mxu0 0.0
    %8221 = vmatprep.subr.mxu0 0.0
    %8222 = vmatpush1.msra.mxu0 0.0
    %8223 = vmatprep.subr.mxu0 0.0
    %8224 = vmatpush1.msra.mxu0 0.0
    %8225 = vmatprep.subr.mxu0 0.0
    %8226 = vmatpush1.msra.mxu0 0.0
    %8227 = vmatprep.subr.mxu0 0.0
    %8228 = vmatpush1.msra.mxu0 0.0
    %8229 = vmatprep.subr.mxu0 0.0
    %8230 = vmatpush1.msra.mxu0 0.0
    %8231 = vmatprep.subr.mxu0 0.0
    %8232 = vmatpush1.msra.mxu0 0.0
    %8233 = vmatprep.subr.mxu0 0.0
    %8234 = vmatpush1.msra.mxu0 0.0
    %8235 = vmatprep.subr.mxu0 0.0
    %8236 = vmatpush1.msra.mxu0 0.0
    %8237 = vmatprep.subr.mxu0 0.0
    %8238 = vmatpush1.msra.mxu0 0.0
    %8239 = vmatprep.subr.mxu0 0.0
    %8240 = vmatpush1.msra.mxu0 0.0
    %8241 = vmatprep.subr.mxu0 0.0
    %8242 = vmatpush1.msra.mxu0 0.0
    %8243 = vmatprep.subr.mxu0 0.0
    %8244 = vmatpush1.msra.mxu0 0.0
    %8245 = vmatprep.subr.mxu0 0.0
    %8246 = vmatpush1.msra.mxu0 0.0
    %8247 = vmatprep.subr.mxu0 0.0
    %8248 = vmatpush1.msra.mxu0 0.0
    %8249 = vmatprep.subr.mxu0 0.0
    %8250 = vmatpush1.msra.mxu0 0.0
    %8251 = vmatprep.subr.mxu0 0.0
    %8252 = vmatpush1.msra.mxu0 0.0
    %8253 = vmatprep.subr.mxu0 0.0
    %8254 = vmatpush1.msra.mxu0 0.0
    %8255 = vmatprep.subr.mxu0 0.0
    %8256 = vmatpush1.msra.mxu0 0.0
    %8257 = vmatprep.subr.mxu0 0.0
    %8258 = vmatpush1.msra.mxu0 0.0
    %8259 = vmatprep.subr.mxu0 0.0
    %8260 = vmatpush1.msra.mxu0 0.0
    %8261 = vmatprep.subr.mxu0 0.0
    %8262 = vmatpush1.msra.mxu0 0.0
    %8263 = vmatprep.subr.mxu0 0.0
    %8264 = vmatpush1.msra.mxu0 0.0
    %8265 = vmatprep.subr.mxu0 0.0
    %8266 = vmatpush1.msra.mxu0 0.0
    %8267 = vmatprep.subr.mxu0 0.0
    %8268 = vmatpush1.msra.mxu0 0.0
    %8269 = vmatprep.subr.mxu0 0.0
    %8270 = vmatpush1.msra.mxu0 0.0
    %8271 = vmatprep.subr.mxu0 0.0
    %8272 = vmatpush1.msra.mxu0 0.0
    %8273 = vmatprep.mubr.f32.mxu0 0.0
    %v8274 = vand.u32 %v7779, 4294901760
    %8275 = vmatmul.mubr.f32.gmra.mrb[0].mxu0 %v8274
    %v8276 = vpop.f32.mrb[0].mxu0
    %v8277 = vadd.f32 %v8198, %v8276
    %v8278 = vpop.f32.mrb[0].mxu0
    %8279 = vmatprep.mubr.f32.mxu0 0.0
    %v8280 = vand.u32 %v7782, 4294901760
    %8281 = vmatmul.mubr.f32.gmra.mrb[0].mxu0 %v8280
    %v8282 = vpop.f32.mrb[0].mxu0
    %v8283 = vadd.f32 %v8204, %v8282
    %v8284 = vpop.f32.mrb[0].mxu0
    %8285 = vdwg.mxu0
    %8286 = vmatprep.subr.mxu0 0.0
    %v8287 = vand.u32 %v8277, 4294901760
    %8288 = vmatpush1.msra.mxu0 %v8287
    %8289 = vmatprep.subr.mxu0 0.0
    %v8290 = vand.u32 %v8283, 4294901760
    %8291 = vmatpush1.msra.mxu0 %v8290
    %8292 = vmatprep.subr.mxu0 0.0
    %8293 = vmatpush1.msra.mxu0 0.0
    %8294 = vmatprep.subr.mxu0 0.0
    %8295 = vmatpush1.msra.mxu0 0.0
    %8296 = vmatprep.subr.mxu0 0.0
    %8297 = vmatpush1.msra.mxu0 0.0
    %8298 = vmatprep.subr.mxu0 0.0
    %8299 = vmatpush1.msra.mxu0 0.0
    %8300 = vmatprep.subr.mxu0 0.0
    %8301 = vmatpush1.msra.mxu0 0.0
    %8302 = vmatprep.subr.mxu0 0.0
    %8303 = vmatpush1.msra.mxu0 0.0
    %8304 = vmatprep.subr.mxu0 0.0
    %8305 = vmatpush1.msra.mxu0 0.0
    %8306 = vmatprep.subr.mxu0 0.0
    %8307 = vmatpush1.msra.mxu0 0.0
    %8308 = vmatprep.subr.mxu0 0.0
    %8309 = vmatpush1.msra.mxu0 0.0
    %8310 = vmatprep.subr.mxu0 0.0
    %8311 = vmatpush1.msra.mxu0 0.0
    %8312 = vmatprep.subr.mxu0 0.0
    %8313 = vmatpush1.msra.mxu0 0.0
    %8314 = vmatprep.subr.mxu0 0.0
    %8315 = vmatpush1.msra.mxu0 0.0
    %8316 = vmatprep.subr.mxu0 0.0
    %8317 = vmatpush1.msra.mxu0 0.0
    %8318 = vmatprep.subr.mxu0 0.0
    %8319 = vmatpush1.msra.mxu0 0.0
    %8320 = vmatprep.subr.mxu0 0.0
    %8321 = vmatpush1.msra.mxu0 0.0
    %8322 = vmatprep.subr.mxu0 0.0
    %8323 = vmatpush1.msra.mxu0 0.0
    %8324 = vmatprep.subr.mxu0 0.0
    %8325 = vmatpush1.msra.mxu0 0.0
    %8326 = vmatprep.subr.mxu0 0.0
    %8327 = vmatpush1.msra.mxu0 0.0
    %8328 = vmatprep.subr.mxu0 0.0
    %8329 = vmatpush1.msra.mxu0 0.0
    %8330 = vmatprep.subr.mxu0 0.0
    %8331 = vmatpush1.msra.mxu0 0.0
    %8332 = vmatprep.subr.mxu0 0.0
    %8333 = vmatpush1.msra.mxu0 0.0
    %8334 = vmatprep.subr.mxu0 0.0
    %8335 = vmatpush1.msra.mxu0 0.0
    %8336 = vmatprep.subr.mxu0 0.0
    %8337 = vmatpush1.msra.mxu0 0.0
    %8338 = vmatprep.subr.mxu0 0.0
    %8339 = vmatpush1.msra.mxu0 0.0
    %8340 = vmatprep.subr.mxu0 0.0
    %8341 = vmatpush1.msra.mxu0 0.0
    %8342 = vmatprep.subr.mxu0 0.0
    %8343 = vmatpush1.msra.mxu0 0.0
    %8344 = vmatprep.subr.mxu0 0.0
    %8345 = vmatpush1.msra.mxu0 0.0
    %8346 = vmatprep.subr.mxu0 0.0
    %8347 = vmatpush1.msra.mxu0 0.0
    %8348 = vmatprep.subr.mxu0 0.0
    %8349 = vmatpush1.msra.mxu0 0.0
    %8350 = vmatprep.subr.mxu0 0.0
    %8351 = vmatpush1.msra.mxu0 0.0
    %8352 = vmatprep.mubr.f32.mxu0 0.0
    %v8353 = vand.u32 %v547, 4294901760
    %v8354 = vsub.f32 %v547, %v8353
    %v8355 = vand.u32 %v8354, 4294901760
    %v8356 = vsub.f32 %v8354, %v8355
    %v8357 = vand.u32 %v8356, 4294901760
    %8358 = vmatmul.mubr.f32.gmra.mrb[0].mxu0 %v8357
    %v8359 = vpop.f32.mrb[0].mxu0
    %v8360 = vadd.f32 0.0, %v8359
    %v8361 = vpop.f32.mrb[0].mxu0
    %8362 = vmatprep.mubr.f32.mxu0 0.0
    %v8363 = vand.u32 %v550, 4294901760
    %v8364 = vsub.f32 %v550, %v8363
    %v8365 = vand.u32 %v8364, 4294901760
    %v8366 = vsub.f32 %v8364, %v8365
    %v8367 = vand.u32 %v8366, 4294901760
    %8368 = vmatmul.mubr.f32.gmra.mrb[0].mxu0 %v8367
    %v8369 = vpop.f32.mrb[0].mxu0
    %v8370 = vadd.f32 0.0, %v8369
    %v8371 = vpop.f32.mrb[0].mxu0
    %8372 = vmatprep.mubr.f32.mxu0 0.0
    %v8373 = vand.u32 %v553, 4294901760
    %v8374 = vsub.f32 %v553, %v8373
    %v8375 = vand.u32 %v8374, 4294901760
    %v8376 = vsub.f32 %v8374, %v8375
    %v8377 = vand.u32 %v8376, 4294901760
    %8378 = vmatmul.mubr.f32.gmra.mrb[0].mxu0 %v8377
    %v8379 = vpop.f32.mrb[0].mxu0
    %v8380 = vadd.f32 0.0, %v8379
    %v8381 = vpop.f32.mrb[0].mxu0
    %8382 = vmatprep.mubr.f32.mxu0 0.0
    %v8383 = vand.u32 %v556, 4294901760
    %v8384 = vsub.f32 %v556, %v8383
    %v8385 = vand.u32 %v8384, 4294901760
    %v8386 = vsub.f32 %v8384, %v8385
    %v8387 = vand.u32 %v8386, 4294901760
    %8388 = vmatmul.mubr.f32.gmra.mrb[0].mxu0 %v8387
    %v8389 = vpop.f32.mrb[0].mxu0
    %v8390 = vadd.f32 0.0, %v8389
    %v8391 = vpop.f32.mrb[0].mxu0
    %8392 = vdwg.mxu0
    %8393 = vmatprep.subr.mxu0 0.0
    %v8394 = vand.u32 %v8277, 4294901760
    %v8395 = vsub.f32 %v8277, %v8394
    %v8396 = vand.u32 %v8395, 4294901760
    %v8397 = vsub.f32 %v8395, %v8396
    %v8398 = vand.u32 %v8397, 4294901760
    %8399 = vmatpush1.msra.mxu0 %v8398
    %8400 = vmatprep.subr.mxu0 0.0
    %v8401 = vand.u32 %v8283, 4294901760
    %v8402 = vsub.f32 %v8283, %v8401
    %v8403 = vand.u32 %v8402, 4294901760
    %v8404 = vsub.f32 %v8402, %v8403
    %v8405 = vand.u32 %v8404, 4294901760
    %8406 = vmatpush1.msra.mxu0 %v8405
    %8407 = vmatprep.subr.mxu0 0.0
    %8408 = vmatpush1.msra.mxu0 0.0
    %8409 = vmatprep.subr.mxu0 0.0
    %8410 = vmatpush1.msra.mxu0 0.0
    %8411 = vmatprep.subr.mxu0 0.0
    %8412 = vmatpush1.msra.mxu0 0.0
    %8413 = vmatprep.subr.mxu0 0.0
    %8414 = vmatpush1.msra.mxu0 0.0
    %8415 = vmatprep.subr.mxu0 0.0
    %8416 = vmatpush1.msra.mxu0 0.0
    %8417 = vmatprep.subr.mxu0 0.0
    %8418 = vmatpush1.msra.mxu0 0.0
    %8419 = vmatprep.subr.mxu0 0.0
    %8420 = vmatpush1.msra.mxu0 0.0
    %8421 = vmatprep.subr.mxu0 0.0
    %8422 = vmatpush1.msra.mxu0 0.0
    %8423 = vmatprep.subr.mxu0 0.0
    %8424 = vmatpush1.msra.mxu0 0.0
    %8425 = vmatprep.subr.mxu0 0.0
    %8426 = vmatpush1.msra.mxu0 0.0
    %8427 = vmatprep.subr.mxu0 0.0
    %8428 = vmatpush1.msra.mxu0 0.0
    %8429 = vmatprep.subr.mxu0 0.0
    %8430 = vmatpush1.msra.mxu0 0.0
    %8431 = vmatprep.subr.mxu0 0.0
    %8432 = vmatpush1.msra.mxu0 0.0
    %8433 = vmatprep.subr.mxu0 0.0
    %8434 = vmatpush1.msra.mxu0 0.0
    %8435 = vmatprep.subr.mxu0 0.0
    %8436 = vmatpush1.msra.mxu0 0.0
    %8437 = vmatprep.subr.mxu0 0.0
    %8438 = vmatpush1.msra.mxu0 0.0
    %8439 = vmatprep.subr.mxu0 0.0
    %8440 = vmatpush1.msra.mxu0 0.0
    %8441 = vmatprep.subr.mxu0 0.0
    %8442 = vmatpush1.msra.mxu0 0.0
    %8443 = vmatprep.subr.mxu0 0.0
    %8444 = vmatpush1.msra.mxu0 0.0
    %8445 = vmatprep.subr.mxu0 0.0
    %8446 = vmatpush1.msra.mxu0 0.0
    %8447 = vmatprep.subr.mxu0 0.0
    %8448 = vmatpush1.msra.mxu0 0.0
    %8449 = vmatprep.subr.mxu0 0.0
    %8450 = vmatpush1.msra.mxu0 0.0
    %8451 = vmatprep.subr.mxu0 0.0
    %8452 = vmatpush1.msra.mxu0 0.0
    %8453 = vmatprep.subr.mxu0 0.0
    %8454 = vmatpush1.msra.mxu0 0.0
    %8455 = vmatprep.subr.mxu0 0.0
    %8456 = vmatpush1.msra.mxu0 0.0
    %8457 = vmatprep.subr.mxu0 0.0
    %8458 = vmatpush1.msra.mxu0 0.0
    %8459 = vmatprep.subr.mxu0 0.0
    %8460 = vmatpush1.msra.mxu0 0.0
    %8461 = vmatprep.subr.mxu0 0.0
    %8462 = vmatpush1.msra.mxu0 0.0
    %8463 = vmatprep.subr.mxu0 0.0
    %8464 = vmatpush1.msra.mxu0 0.0
    %8465 = vmatprep.subr.mxu0 0.0
    %8466 = vmatpush1.msra.mxu0 0.0
    %8467 = vmatprep.mubr.f32.mxu0 0.0
    %v8468 = vand.u32 %v547, 4294901760
    %8469 = vmatmul.mubr.f32.gmra.mrb[0].mxu0 %v8468
    %v8470 = vpop.f32.mrb[0].mxu0
    %v8471 = vadd.f32 %v8360, %v8470
    %v8472 = vpop.f32.mrb[0].mxu0
    %8473 = vmatprep.mubr.f32.mxu0 0.0
    %v8474 = vand.u32 %v550, 4294901760
    %8475 = vmatmul.mubr.f32.gmra.mrb[0].mxu0 %v8474
    %v8476 = vpop.f32.mrb[0].mxu0
    %v8477 = vadd.f32 %v8370, %v8476
    %v8478 = vpop.f32.mrb[0].mxu0
    %8479 = vmatprep.mubr.f32.mxu0 0.0
    %v8480 = vand.u32 %v553, 4294901760
    %8481 = vmatmul.mubr.f32.gmra.mrb[0].mxu0 %v8480
    %v8482 = vpop.f32.mrb[0].mxu0
    %v8483 = vadd.f32 %v8380, %v8482
    %v8484 = vpop.f32.mrb[0].mxu0
    %8485 = vmatprep.mubr.f32.mxu0 0.0
    %v8486 = vand.u32 %v556, 4294901760
    %8487 = vmatmul.mubr.f32.gmra.mrb[0].mxu0 %v8486
    %v8488 = vpop.f32.mrb[0].mxu0
    %v8489 = vadd.f32 %v8390, %v8488
    %v8490 = vpop.f32.mrb[0].mxu0
    %8491 = vdwg.mxu0
    %8492 = vmatprep.subr.mxu0 0.0
    %v8493 = vand.u32 %v8277, 4294901760
    %v8494 = vsub.f32 %v8277, %v8493
    %8495 = vmatpush1.msra.mxu0 %v8494
    %8496 = vmatprep.subr.mxu0 0.0
    %v8497 = vand.u32 %v8283, 4294901760
    %v8498 = vsub.f32 %v8283, %v8497
    %8499 = vmatpush1.msra.mxu0 %v8498
    %8500 = vmatprep.subr.mxu0 0.0
    %8501 = vmatpush1.msra.mxu0 0.0
    %8502 = vmatprep.subr.mxu0 0.0
    %8503 = vmatpush1.msra.mxu0 0.0
    %8504 = vmatprep.subr.mxu0 0.0
    %8505 = vmatpush1.msra.mxu0 0.0
    %8506 = vmatprep.subr.mxu0 0.0
    %8507 = vmatpush1.msra.mxu0 0.0
    %8508 = vmatprep.subr.mxu0 0.0
    %8509 = vmatpush1.msra.mxu0 0.0
    %8510 = vmatprep.subr.mxu0 0.0
    %8511 = vmatpush1.msra.mxu0 0.0
    %8512 = vmatprep.subr.mxu0 0.0
    %8513 = vmatpush1.msra.mxu0 0.0
    %8514 = vmatprep.subr.mxu0 0.0
    %8515 = vmatpush1.msra.mxu0 0.0
    %8516 = vmatprep.subr.mxu0 0.0
    %8517 = vmatpush1.msra.mxu0 0.0
    %8518 = vmatprep.subr.mxu0 0.0
    %8519 = vmatpush1.msra.mxu0 0.0
    %8520 = vmatprep.subr.mxu0 0.0
    %8521 = vmatpush1.msra.mxu0 0.0
    %8522 = vmatprep.subr.mxu0 0.0
    %8523 = vmatpush1.msra.mxu0 0.0
    %8524 = vmatprep.subr.mxu0 0.0
    %8525 = vmatpush1.msra.mxu0 0.0
    %8526 = vmatprep.subr.mxu0 0.0
    %8527 = vmatpush1.msra.mxu0 0.0
    %8528 = vmatprep.subr.mxu0 0.0
    %8529 = vmatpush1.msra.mxu0 0.0
    %8530 = vmatprep.subr.mxu0 0.0
    %8531 = vmatpush1.msra.mxu0 0.0
    %8532 = vmatprep.subr.mxu0 0.0
    %8533 = vmatpush1.msra.mxu0 0.0
    %8534 = vmatprep.subr.mxu0 0.0
    %8535 = vmatpush1.msra.mxu0 0.0
    %8536 = vmatprep.subr.mxu0 0.0
    %8537 = vmatpush1.msra.mxu0 0.0
    %8538 = vmatprep.subr.mxu0 0.0
    %8539 = vmatpush1.msra.mxu0 0.0
    %8540 = vmatprep.subr.mxu0 0.0
    %8541 = vmatpush1.msra.mxu0 0.0
    %8542 = vmatprep.subr.mxu0 0.0
    %8543 = vmatpush1.msra.mxu0 0.0
    %8544 = vmatprep.subr.mxu0 0.0
    %8545 = vmatpush1.msra.mxu0 0.0
    %8546 = vmatprep.subr.mxu0 0.0
    %8547 = vmatpush1.msra.mxu0 0.0
    %8548 = vmatprep.subr.mxu0 0.0
    %8549 = vmatpush1.msra.mxu0 0.0
    %8550 = vmatprep.subr.mxu0 0.0
    %8551 = vmatpush1.msra.mxu0 0.0
    %8552 = vmatprep.subr.mxu0 0.0
    %8553 = vmatpush1.msra.mxu0 0.0
    %8554 = vmatprep.subr.mxu0 0.0
    %8555 = vmatpush1.msra.mxu0 0.0
    %8556 = vmatprep.subr.mxu0 0.0
    %8557 = vmatpush1.msra.mxu0 0.0
    %8558 = vmatprep.subr.mxu0 0.0
    %8559 = vmatpush1.msra.mxu0 0.0
    %8560 = vmatprep.mubr.f32.mxu0 0.0
    %v8561 = vand.u32 %v547, 4294901760
    %v8562 = vsub.f32 %v547, %v8561
    %8563 = vmatmul.mubr.f32.gmra.mrb[0].mxu0 %v8562
    %v8564 = vpop.f32.mrb[0].mxu0
    %v8565 = vadd.f32 %v8471, %v8564
    %v8566 = vpop.f32.mrb[0].mxu0
    %8567 = vmatprep.mubr.f32.mxu0 0.0
    %v8568 = vand.u32 %v550, 4294901760
    %v8569 = vsub.f32 %v550, %v8568
    %8570 = vmatmul.mubr.f32.gmra.mrb[0].mxu0 %v8569
    %v8571 = vpop.f32.mrb[0].mxu0
    %v8572 = vadd.f32 %v8477, %v8571
    %v8573 = vpop.f32.mrb[0].mxu0
    %8574 = vmatprep.mubr.f32.mxu0 0.0
    %v8575 = vand.u32 %v553, 4294901760
    %v8576 = vsub.f32 %v553, %v8575
    %8577 = vmatmul.mubr.f32.gmra.mrb[0].mxu0 %v8576
    %v8578 = vpop.f32.mrb[0].mxu0
    %v8579 = vadd.f32 %v8483, %v8578
    %v8580 = vpop.f32.mrb[0].mxu0
    %8581 = vmatprep.mubr.f32.mxu0 0.0
    %v8582 = vand.u32 %v556, 4294901760
    %v8583 = vsub.f32 %v556, %v8582
    %8584 = vmatmul.mubr.f32.gmra.mrb[0].mxu0 %v8583
    %v8585 = vpop.f32.mrb[0].mxu0
    %v8586 = vadd.f32 %v8489, %v8585
    %v8587 = vpop.f32.mrb[0].mxu0
    %8588 = vdwg.mxu0
    %8589 = vmatprep.subr.mxu0 0.0
    %v8590 = vand.u32 %v8277, 4294901760
    %8591 = vmatpush1.msra.mxu0 %v8590
    %8592 = vmatprep.subr.mxu0 0.0
    %v8593 = vand.u32 %v8283, 4294901760
    %8594 = vmatpush1.msra.mxu0 %v8593
    %8595 = vmatprep.subr.mxu0 0.0
    %8596 = vmatpush1.msra.mxu0 0.0
    %8597 = vmatprep.subr.mxu0 0.0
    %8598 = vmatpush1.msra.mxu0 0.0
    %8599 = vmatprep.subr.mxu0 0.0
    %8600 = vmatpush1.msra.mxu0 0.0
    %8601 = vmatprep.subr.mxu0 0.0
    %8602 = vmatpush1.msra.mxu0 0.0
    %8603 = vmatprep.subr.mxu0 0.0
    %8604 = vmatpush1.msra.mxu0 0.0
    %8605 = vmatprep.subr.mxu0 0.0
    %8606 = vmatpush1.msra.mxu0 0.0
    %8607 = vmatprep.subr.mxu0 0.0
    %8608 = vmatpush1.msra.mxu0 0.0
    %8609 = vmatprep.subr.mxu0 0.0
    %8610 = vmatpush1.msra.mxu0 0.0
    %8611 = vmatprep.subr.mxu0 0.0
    %8612 = vmatpush1.msra.mxu0 0.0
    %8613 = vmatprep.subr.mxu0 0.0
    %8614 = vmatpush1.msra.mxu0 0.0
    %8615 = vmatprep.subr.mxu0 0.0
    %8616 = vmatpush1.msra.mxu0 0.0
    %8617 = vmatprep.subr.mxu0 0.0
    %8618 = vmatpush1.msra.mxu0 0.0
    %8619 = vmatprep.subr.mxu0 0.0
    %8620 = vmatpush1.msra.mxu0 0.0
    %8621 = vmatprep.subr.mxu0 0.0
    %8622 = vmatpush1.msra.mxu0 0.0
    %8623 = vmatprep.subr.mxu0 0.0
    %8624 = vmatpush1.msra.mxu0 0.0
    %8625 = vmatprep.subr.mxu0 0.0
    %8626 = vmatpush1.msra.mxu0 0.0
    %8627 = vmatprep.subr.mxu0 0.0
    %8628 = vmatpush1.msra.mxu0 0.0
    %8629 = vmatprep.subr.mxu0 0.0
    %8630 = vmatpush1.msra.mxu0 0.0
    %8631 = vmatprep.subr.mxu0 0.0
    %8632 = vmatpush1.msra.mxu0 0.0
    %8633 = vmatprep.subr.mxu0 0.0
    %8634 = vmatpush1.msra.mxu0 0.0
    %8635 = vmatprep.subr.mxu0 0.0
    %8636 = vmatpush1.msra.mxu0 0.0
    %8637 = vmatprep.subr.mxu0 0.0
    %8638 = vmatpush1.msra.mxu0 0.0
    %8639 = vmatprep.subr.mxu0 0.0
    %8640 = vmatpush1.msra.mxu0 0.0
    %8641 = vmatprep.subr.mxu0 0.0
    %8642 = vmatpush1.msra.mxu0 0.0
    %8643 = vmatprep.subr.mxu0 0.0
    %8644 = vmatpush1.msra.mxu0 0.0
    %8645 = vmatprep.subr.mxu0 0.0
    %8646 = vmatpush1.msra.mxu0 0.0
    %8647 = vmatprep.subr.mxu0 0.0
    %8648 = vmatpush1.msra.mxu0 0.0
    %8649 = vmatprep.subr.mxu0 0.0
    %8650 = vmatpush1.msra.mxu0 0.0
    %8651 = vmatprep.subr.mxu0 0.0
    %8652 = vmatpush1.msra.mxu0 0.0
    %8653 = vmatprep.subr.mxu0 0.0
    %8654 = vmatpush1.msra.mxu0 0.0
    %8655 = vmatprep.mubr.f32.mxu0 0.0
    %v8656 = vand.u32 %v547, 4294901760
    %v8657 = vsub.f32 %v547, %v8656
    %v8658 = vand.u32 %v8657, 4294901760
    %8659 = vmatmul.mubr.f32.gmra.mrb[0].mxu0 %v8658
    %v8660 = vpop.f32.mrb[0].mxu0
    %v8661 = vadd.f32 %v8565, %v8660
    %v8662 = vpop.f32.mrb[0].mxu0
    %8663 = vmatprep.mubr.f32.mxu0 0.0
    %v8664 = vand.u32 %v550, 4294901760
    %v8665 = vsub.f32 %v550, %v8664
    %v8666 = vand.u32 %v8665, 4294901760
    %8667 = vmatmul.mubr.f32.gmra.mrb[0].mxu0 %v8666
    %v8668 = vpop.f32.mrb[0].mxu0
    %v8669 = vadd.f32 %v8572, %v8668
    %v8670 = vpop.f32.mrb[0].mxu0
    %8671 = vmatprep.mubr.f32.mxu0 0.0
    %v8672 = vand.u32 %v553, 4294901760
    %v8673 = vsub.f32 %v553, %v8672
    %v8674 = vand.u32 %v8673, 4294901760
    %8675 = vmatmul.mubr.f32.gmra.mrb[0].mxu0 %v8674
    %v8676 = vpop.f32.mrb[0].mxu0
    %v8677 = vadd.f32 %v8579, %v8676
    %v8678 = vpop.f32.mrb[0].mxu0
    %8679 = vmatprep.mubr.f32.mxu0 0.0
    %v8680 = vand.u32 %v556, 4294901760
    %v8681 = vsub.f32 %v556, %v8680
    %v8682 = vand.u32 %v8681, 4294901760
    %8683 = vmatmul.mubr.f32.gmra.mrb[0].mxu0 %v8682
    %v8684 = vpop.f32.mrb[0].mxu0
    %v8685 = vadd.f32 %v8586, %v8684
    %v8686 = vpop.f32.mrb[0].mxu0
    %8687 = vdwg.mxu0
    %8688 = vmatprep.subr.mxu0 0.0
    %v8689 = vand.u32 %v8277, 4294901760
    %v8690 = vsub.f32 %v8277, %v8689
    %v8691 = vand.u32 %v8690, 4294901760
    %8692 = vmatpush1.msra.mxu0 %v8691
    %8693 = vmatprep.subr.mxu0 0.0
    %v8694 = vand.u32 %v8283, 4294901760
    %v8695 = vsub.f32 %v8283, %v8694
    %v8696 = vand.u32 %v8695, 4294901760
    %8697 = vmatpush1.msra.mxu0 %v8696
    %8698 = vmatprep.subr.mxu0 0.0
    %8699 = vmatpush1.msra.mxu0 0.0
    %8700 = vmatprep.subr.mxu0 0.0
    %8701 = vmatpush1.msra.mxu0 0.0
    %8702 = vmatprep.subr.mxu0 0.0
    %8703 = vmatpush1.msra.mxu0 0.0
    %8704 = vmatprep.subr.mxu0 0.0
    %8705 = vmatpush1.msra.mxu0 0.0
    %8706 = vmatprep.subr.mxu0 0.0
    %8707 = vmatpush1.msra.mxu0 0.0
    %8708 = vmatprep.subr.mxu0 0.0
    %8709 = vmatpush1.msra.mxu0 0.0
    %8710 = vmatprep.subr.mxu0 0.0
    %8711 = vmatpush1.msra.mxu0 0.0
    %8712 = vmatprep.subr.mxu0 0.0
    %8713 = vmatpush1.msra.mxu0 0.0
    %8714 = vmatprep.subr.mxu0 0.0
    %8715 = vmatpush1.msra.mxu0 0.0
    %8716 = vmatprep.subr.mxu0 0.0
    %8717 = vmatpush1.msra.mxu0 0.0
    %8718 = vmatprep.subr.mxu0 0.0
    %8719 = vmatpush1.msra.mxu0 0.0
    %8720 = vmatprep.subr.mxu0 0.0
    %8721 = vmatpush1.msra.mxu0 0.0
    %8722 = vmatprep.subr.mxu0 0.0
    %8723 = vmatpush1.msra.mxu0 0.0
    %8724 = vmatprep.subr.mxu0 0.0
    %8725 = vmatpush1.msra.mxu0 0.0
    %8726 = vmatprep.subr.mxu0 0.0
    %8727 = vmatpush1.msra.mxu0 0.0
    %8728 = vmatprep.subr.mxu0 0.0
    %8729 = vmatpush1.msra.mxu0 0.0
    %8730 = vmatprep.subr.mxu0 0.0
    %8731 = vmatpush1.msra.mxu0 0.0
    %8732 = vmatprep.subr.mxu0 0.0
    %8733 = vmatpush1.msra.mxu0 0.0
    %8734 = vmatprep.subr.mxu0 0.0
    %8735 = vmatpush1.msra.mxu0 0.0
    %8736 = vmatprep.subr.mxu0 0.0
    %8737 = vmatpush1.msra.mxu0 0.0
    %8738 = vmatprep.subr.mxu0 0.0
    %8739 = vmatpush1.msra.mxu0 0.0
    %8740 = vmatprep.subr.mxu0 0.0
    %8741 = vmatpush1.msra.mxu0 0.0
    %8742 = vmatprep.subr.mxu0 0.0
    %8743 = vmatpush1.msra.mxu0 0.0
    %8744 = vmatprep.subr.mxu0 0.0
    %8745 = vmatpush1.msra.mxu0 0.0
    %8746 = vmatprep.subr.mxu0 0.0
    %8747 = vmatpush1.msra.mxu0 0.0
    %8748 = vmatprep.subr.mxu0 0.0
    %8749 = vmatpush1.msra.mxu0 0.0
    %8750 = vmatprep.subr.mxu0 0.0
    %8751 = vmatpush1.msra.mxu0 0.0
    %8752 = vmatprep.subr.mxu0 0.0
    %8753 = vmatpush1.msra.mxu0 0.0
    %8754 = vmatprep.subr.mxu0 0.0
    %8755 = vmatpush1.msra.mxu0 0.0
    %8756 = vmatprep.subr.mxu0 0.0
    %8757 = vmatpush1.msra.mxu0 0.0
    %8758 = vmatprep.mubr.f32.mxu0 0.0
    %v8759 = vand.u32 %v547, 4294901760
    %8760 = vmatmul.mubr.f32.gmra.mrb[0].mxu0 %v8759
    %v8761 = vpop.f32.mrb[0].mxu0
    %v8762 = vadd.f32 %v8661, %v8761
    %v8763 = vpop.f32.mrb[0].mxu0
    %8764 = vmatprep.mubr.f32.mxu0 0.0
    %v8765 = vand.u32 %v550, 4294901760
    %8766 = vmatmul.mubr.f32.gmra.mrb[0].mxu0 %v8765
    %v8767 = vpop.f32.mrb[0].mxu0
    %v8768 = vadd.f32 %v8669, %v8767
    %v8769 = vpop.f32.mrb[0].mxu0
    %8770 = vmatprep.mubr.f32.mxu0 0.0
    %v8771 = vand.u32 %v553, 4294901760
    %8772 = vmatmul.mubr.f32.gmra.mrb[0].mxu0 %v8771
    %v8773 = vpop.f32.mrb[0].mxu0
    %v8774 = vadd.f32 %v8677, %v8773
    %v8775 = vpop.f32.mrb[0].mxu0
    %8776 = vmatprep.mubr.f32.mxu0 0.0
    %v8777 = vand.u32 %v556, 4294901760
    %8778 = vmatmul.mubr.f32.gmra.mrb[0].mxu0 %v8777
    %v8779 = vpop.f32.mrb[0].mxu0
    %v8780 = vadd.f32 %v8685, %v8779
    %v8781 = vpop.f32.mrb[0].mxu0
    %8782 = vdwg.mxu0
    %8783 = vmatprep.subr.mxu0 0.0
    %v8784 = vand.u32 %v8277, 4294901760
    %8785 = vmatpush1.msra.mxu0 %v8784
    %8786 = vmatprep.subr.mxu0 0.0
    %v8787 = vand.u32 %v8283, 4294901760
    %8788 = vmatpush1.msra.mxu0 %v8787
    %8789 = vmatprep.subr.mxu0 0.0
    %8790 = vmatpush1.msra.mxu0 0.0
    %8791 = vmatprep.subr.mxu0 0.0
    %8792 = vmatpush1.msra.mxu0 0.0
    %8793 = vmatprep.subr.mxu0 0.0
    %8794 = vmatpush1.msra.mxu0 0.0
    %8795 = vmatprep.subr.mxu0 0.0
    %8796 = vmatpush1.msra.mxu0 0.0
    %8797 = vmatprep.subr.mxu0 0.0
    %8798 = vmatpush1.msra.mxu0 0.0
    %8799 = vmatprep.subr.mxu0 0.0
    %8800 = vmatpush1.msra.mxu0 0.0
    %8801 = vmatprep.subr.mxu0 0.0
    %8802 = vmatpush1.msra.mxu0 0.0
    %8803 = vmatprep.subr.mxu0 0.0
    %8804 = vmatpush1.msra.mxu0 0.0
    %8805 = vmatprep.subr.mxu0 0.0
    %8806 = vmatpush1.msra.mxu0 0.0
    %8807 = vmatprep.subr.mxu0 0.0
    %8808 = vmatpush1.msra.mxu0 0.0
    %8809 = vmatprep.subr.mxu0 0.0
    %8810 = vmatpush1.msra.mxu0 0.0
    %8811 = vmatprep.subr.mxu0 0.0
    %8812 = vmatpush1.msra.mxu0 0.0
    %8813 = vmatprep.subr.mxu0 0.0
    %8814 = vmatpush1.msra.mxu0 0.0
    %8815 = vmatprep.subr.mxu0 0.0
    %8816 = vmatpush1.msra.mxu0 0.0
    %8817 = vmatprep.subr.mxu0 0.0
    %8818 = vmatpush1.msra.mxu0 0.0
    %8819 = vmatprep.subr.mxu0 0.0
    %8820 = vmatpush1.msra.mxu0 0.0
    %8821 = vmatprep.subr.mxu0 0.0
    %8822 = vmatpush1.msra.mxu0 0.0
    %8823 = vmatprep.subr.mxu0 0.0
    %8824 = vmatpush1.msra.mxu0 0.0
    %8825 = vmatprep.subr.mxu0 0.0
    %8826 = vmatpush1.msra.mxu0 0.0
    %8827 = vmatprep.subr.mxu0 0.0
    %8828 = vmatpush1.msra.mxu0 0.0
    %8829 = vmatprep.subr.mxu0 0.0
    %8830 = vmatpush1.msra.mxu0 0.0
    %8831 = vmatprep.subr.mxu0 0.0
    %8832 = vmatpush1.msra.mxu0 0.0
    %8833 = vmatprep.subr.mxu0 0.0
    %8834 = vmatpush1.msra.mxu0 0.0
    %8835 = vmatprep.subr.mxu0 0.0
    %8836 = vmatpush1.msra.mxu0 0.0
    %8837 = vmatprep.subr.mxu0 0.0
    %8838 = vmatpush1.msra.mxu0 0.0
    %8839 = vmatprep.subr.mxu0 0.0
    %8840 = vmatpush1.msra.mxu0 0.0
    %8841 = vmatprep.subr.mxu0 0.0
    %8842 = vmatpush1.msra.mxu0 0.0
    %8843 = vmatprep.subr.mxu0 0.0
    %8844 = vmatpush1.msra.mxu0 0.0
    %8845 = vmatprep.subr.mxu0 0.0
    %8846 = vmatpush1.msra.mxu0 0.0
    %8847 = vmatprep.subr.mxu0 0.0
    %8848 = vmatpush1.msra.mxu0 0.0
    %8849 = vmatprep.mubr.f32.mxu0 0.0
    %v8850 = vand.u32 %v547, 4294901760
    %8851 = vmatmul.mubr.f32.gmra.mrb[0].mxu0 %v8850
    %v8852 = vpop.f32.mrb[0].mxu0
    %v8853 = vadd.f32 %v8762, %v8852
    %v8854 = vpop.f32.mrb[0].mxu0
    %8855 = vmatprep.mubr.f32.mxu0 0.0
    %v8856 = vand.u32 %v550, 4294901760
    %8857 = vmatmul.mubr.f32.gmra.mrb[0].mxu0 %v8856
    %v8858 = vpop.f32.mrb[0].mxu0
    %v8859 = vadd.f32 %v8768, %v8858
    %v8860 = vpop.f32.mrb[0].mxu0
    %8861 = vmatprep.mubr.f32.mxu0 0.0
    %v8862 = vand.u32 %v553, 4294901760
    %8863 = vmatmul.mubr.f32.gmra.mrb[0].mxu0 %v8862
    %v8864 = vpop.f32.mrb[0].mxu0
    %v8865 = vadd.f32 %v8774, %v8864
    %v8866 = vpop.f32.mrb[0].mxu0
    %8867 = vmatprep.mubr.f32.mxu0 0.0
    %v8868 = vand.u32 %v556, 4294901760
    %8869 = vmatmul.mubr.f32.gmra.mrb[0].mxu0 %v8868
    %v8870 = vpop.f32.mrb[0].mxu0
    %v8871 = vadd.f32 %v8780, %v8870
    %v8872 = vpop.f32.mrb[0].mxu0
    %8873 = vdwg.mxu0
    %s8874 = scalar_lea.vmem [#allocation5], 224
    %8875 = vst.msk [vmem:[%s8874] sm:$0xff] %vm1146, %v8853
    %8876 = vst.msk [vmem:[%s8874 + $0x8] sm:$0xff] %vm1146, %v8859
    %8877 = vst.msk [vmem:[%s8874 + $0x10] sm:$0xff] %vm1146, %v8865
    %8878 = vst.msk [vmem:[%s8874 + $0x18] sm:$0xff] %vm1146, %v8871
    // Predicated region
    $region18: #{tpu_custom_call.1} parent=1 // pred_check
      _
    $region19: #{tpu_custom_call.1} parent=1 // pred_check_branch
      %8880 = sbr.rel (0) target = $region21
    $region20: #{tpu_custom_call.1} parent=1 // pred_region
      %s8882 = ssub.s32 4096, 4096
      %8883 = vsyncadd [#allocation4], %s8882
      %s8884 = sshll.u32 [#allocation5], 4
      %s8885 = int_to_ptr.vmem [resolvable:$true] %s8884
      %8890 = dma.vmem_to_hbm [thread:$0]  %s8885, 4096, %s3, [#allocation4], 128, 128, 8
    $region21: #{tpu_custom_call.1} parent=1 // pred_fallthru
      _
    // Predicated region
    $region22: #{tpu_custom_call.1} parent=1 // pred_check
      _
    $region23: #{tpu_custom_call.1} parent=1 // pred_check_branch
      %8892 = sbr.rel (0) target = $region25
    $region24: #{tpu_custom_call.1} parent=1 // pred_region
      %8893 = dma.done [#allocation4], 4096
    $region25: #{tpu_custom_call.1} parent=1 // pred_fallthru
      _
    %8894 = vsyncpa [#allocation3], 1
    %8895 = vsyncpa [#allocation4], 1

</llo_original>
